<compile_context>
chip_gen: v7x
topology: tpu7x:2x2x1
jax: 0.10.0
libtpu: 0.0.40
codegen_flags: <defaults>
</compile_context>

<pallas_src>
import functools
import math

import numpy as np
import jax
import jax.numpy as jnp
from jax import lax
from jax.experimental import pallas as pl
from jax.experimental.pallas import tpu as pltpu


INPUT_DIM = 6
INPUT_PAD = 8                                              # pads K of the selection matmul
L_FOURIER = 10
COMBINED_DIM = INPUT_DIM + 2 * L_FOURIER * INPUT_DIM       # 6 + 120 = 126
COMBINED_PAD = 128                                         # lane-aligned width
HIDDEN_DIMS = (64, 256, 1024)
BN_EPS = 1e-5
NORM_EPS = 1e-12                                           # F.normalize default eps


def _build_fourier_tables():
    """(8,128) 0/1 selection matrix + (1,128) frequency / phase rows.

    lane j (j<6)        -> raw xn[j]                       (kept via jnp.where)
    lane 6+12l+j        -> sin(2^l * pi * xn[j])
    lane 6+12l+6+j      -> cos(2^l * pi * xn[j]) == sin(. + pi/2)
    lanes 126,127       -> 0 (zero sel column, freq=phase=0 -> sin(0)=0)
    """
    sel = np.zeros((INPUT_PAD, COMBINED_PAD), np.float32)
    freq = np.zeros((1, COMBINED_PAD), np.float32)
    phase = np.zeros((1, COMBINED_PAD), np.float32)
    for j in range(INPUT_DIM):
        sel[j, j] = 1.0
        freq[0, j] = 1.0
    for l in range(L_FOURIER):
        f = np.float32((2.0 ** l) * math.pi)
        base = INPUT_DIM + 2 * l * INPUT_DIM
        for j in range(INPUT_DIM):
            sel[j, base + j] = 1.0
            freq[0, base + j] = f
            sel[j, base + INPUT_DIM + j] = 1.0
            freq[0, base + INPUT_DIM + j] = f
            phase[0, base + INPUT_DIM + j] = np.float32(0.5 * math.pi)
    return sel, freq, phase


_SEL_NP, _FREQ_NP, _PHASE_NP = _build_fourier_tables()


def _bn_relu(z, g, b, inv_n, eps):
    """Train-mode BatchNorm1d (batch stats, biased variance) + ReLU, one pass."""
    s = jnp.sum(z, axis=0, keepdims=True)                  # (1, H)
    ss = jnp.sum(z * z, axis=0, keepdims=True)             # (1, H)
    mean = s * inv_n
    var = jnp.maximum(ss * inv_n - mean * mean, 0.0)       # clamp: rounding can go < 0
    scale = g * lax.rsqrt(var + eps)
    shift = b - mean * scale
    return jnp.maximum(z * scale + shift, 0.0)


def _pose_encoder_kernel(x_ref, sel_ref, freq_ref, phase_ref,
                         w1_ref, g1_ref, be1_ref,
                         w2_ref, g2_ref, be2_ref,
                         w3_hbm, g3_ref, be3_ref,
                         w4_hbm, b4_ref,
                         o_ref,
                         w3_buf, w4_buf, dma_sem, *, eps_bn, eps_norm):
    # Kick off the big weight DMAs immediately so they overlap the early compute.
    w3_cp = pltpu.make_async_copy(w3_hbm, w3_buf, dma_sem.at[0])
    w4_cp = pltpu.make_async_copy(w4_hbm, w4_buf, dma_sem.at[1])
    w3_cp.start()
    w4_cp.start()

    x = x_ref[...]                                          # (B, 8) f32; lanes 6,7 are zero
    B = x.shape[0]
    inv_n = 1.0 / B

    # torch.nn.functional.normalize(x, dim=-1): x / max(||x||_2, 1e-12), divide-free.
    sumsq = jnp.sum(x * x, axis=-1, keepdims=True)
    xn = x * lax.rsqrt(jnp.maximum(sumsq, eps_norm * eps_norm))

    # Lane-dense Fourier features: exact 0/1 selection matmul replicates xn across
    # lanes, then one full-lane sin (cos handled via the +pi/2 phase row).
    xr = jnp.dot(xn, sel_ref[...], precision=lax.Precision.HIGHEST,
                 preferred_element_type=jnp.float32)        # (B, 128)
    t = xr * freq_ref[...] + phase_ref[...]
    lane = lax.broadcasted_iota(jnp.int32, (B, COMBINED_PAD), 1)
    xc = jnp.where(lane < INPUT_DIM, xr, jnp.sin(t))        # first 6 lanes: raw xn; pad lanes: 0

    # Layer 1/2: small f32 weights; Linear bias dropped (exactly cancelled by BN mean-sub).
    h = jnp.dot(xc, w1_ref[...], preferred_element_type=jnp.float32)
    h = _bn_relu(h, g1_ref[...], be1_ref[...], inv_n, eps_bn)

    h = jnp.dot(h, w2_ref[...], preferred_element_type=jnp.float32)
    h = _bn_relu(h, g2_ref[...], be2_ref[...], inv_n, eps_bn)

    # Layer 3: bf16 weight (DMA'd while the code above ran), f32 accumulation.
    w3_cp.wait()
    h = jnp.dot(h.astype(jnp.bfloat16), w3_buf[...], preferred_element_type=jnp.float32)
    h = _bn_relu(h, g3_ref[...], be3_ref[...], inv_n, eps_bn)

    # Final Linear (keeps its bias).
    w4_cp.wait()
    out = jnp.dot(h.astype(jnp.bfloat16), w4_buf[...],
                  preferred_element_type=jnp.float32) + b4_ref[...]
    o_ref[...] = out.astype(o_ref.dtype)


def _pad_rows(w, rows):
    pad = rows - w.shape[0]
    return jnp.pad(w, ((0, pad), (0, 0))) if pad else w


@jax.jit
def pose_encoder_forward(x, params):
    """x: (B, 6, 1) float32.  params: PyTorch-layout weights (Linear W is (out, in))."""
    xb = x[..., 0].astype(jnp.float32)                      # squeeze(dim=-1) -> (B, 6)
    xb = jnp.pad(xb, ((0, 0), (0, INPUT_PAD - INPUT_DIM)))  # (B, 8); zero lanes keep ||x|| exact
    B = xb.shape[0]
    repr_dim = params["w4"].shape[0]

    def row(v):                                             # 1-D param -> (1, H) on lanes
        return v.reshape(1, -1).astype(jnp.float32)

    # Transpose Linear weights to (in, out); pad W1's input dim 126 -> 128 with zero rows.
    w1 = _pad_rows(params["w1"].T.astype(jnp.float32), COMBINED_PAD)   # (128, 64)   f32
    w2 = params["w2"].T.astype(jnp.float32)                            # (64, 256)   f32
    w3 = params["w3"].T.astype(jnp.bfloat16)                           # (256, 1024) bf16
    w4 = params["w4"].T.astype(jnp.bfloat16)                           # (1024, rep) bf16

    sel = jnp.asarray(_SEL_NP)
    freq = jnp.asarray(_FREQ_NP)
    phase = jnp.asarray(_PHASE_NP)

    kernel = functools.partial(_pose_encoder_kernel, eps_bn=BN_EPS, eps_norm=NORM_EPS)
    vmem = pl.BlockSpec(memory_space=pltpu.MemorySpace.VMEM)
    anyspace = pl.BlockSpec(memory_space=pl.ANY)            # big weights stay in HBM, manual DMA
    return pl.pallas_call(
        kernel,
        out_shape=jax.ShapeDtypeStruct((B, repr_dim), jnp.float32),
        in_specs=[vmem, vmem, vmem, vmem,
                  vmem, vmem, vmem,
                  vmem, vmem, vmem,
                  anyspace, vmem, vmem,
                  anyspace, vmem],
        out_specs=vmem,
        scratch_shapes=[pltpu.VMEM((HIDDEN_DIMS[1], HIDDEN_DIMS[2]), jnp.bfloat16),
                        pltpu.VMEM((HIDDEN_DIMS[2], repr_dim), jnp.bfloat16),
                        pltpu.SemaphoreType.DMA((2,))],
    )(xb, sel, freq, phase,
      w1, row(params["g1"]), row(params["be1"]),
      w2, row(params["g2"]), row(params["be2"]),
      w3, row(params["g3"]), row(params["be3"]),
      w4, row(params["b4"]))


def pose_encoder_reference(x, params):
    """Plain-JAX f32 reference mirroring the PyTorch forward (train-mode BN, no dropout)."""
    hp = jax.lax.Precision.HIGHEST
    xb = x[..., 0].astype(jnp.float32)
    norm = jnp.sqrt(jnp.sum(xb * xb, axis=-1, keepdims=True))
    xn = xb / jnp.maximum(norm, NORM_EPS)

    pieces = [xn]
    for l in range(L_FOURIER):
        f = (2.0 ** l) * math.pi
        pieces.append(jnp.sin(f * xn))
        pieces.append(jnp.cos(f * xn))
    h = jnp.concatenate(pieces, axis=-1)                    # (B, 126)

    def layer(h, w, b, g, be):
        z = jnp.dot(h, w.T, precision=hp) + b
        m = jnp.mean(z, axis=0, keepdims=True)
        v = jnp.mean((z - m) ** 2, axis=0, keepdims=True)
        z = (z - m) / jnp.sqrt(v + BN_EPS) * g + be
        return jnp.maximum(z, 0.0)

    h = layer(h, params["w1"], params["b1"], params["g1"], params["be1"])
    h = layer(h, params["w2"], params["b2"], params["g2"], params["be2"])
    h = layer(h, params["w3"], params["b3"], params["g3"], params["be3"])
    return jnp.dot(h, params["w4"].T, precision=hp) + params["b4"]


if __name__ == "__main__":
    B = 8
    REPR_DIM = 512                                          # module default

    key = jax.random.PRNGKey(0)
    ks = jax.random.split(key, 16)

    def lin(kw, kb, fan_in, fan_out):
        bound = 1.0 / math.sqrt(fan_in)
        w = jax.random.uniform(kw, (fan_out, fan_in), jnp.float32, -bound, bound)
        b = jax.random.uniform(kb, (fan_out,), jnp.float32, -bound, bound)
        return w, b

    x = jax.random.normal(ks[0], (B, INPUT_DIM, 1), dtype=jnp.float32)

    w1, b1 = lin(ks[1], ks[2], COMBINED_DIM, HIDDEN_DIMS[0])
    w2, b2 = lin(ks[3], ks[4], HIDDEN_DIMS[0], HIDDEN_DIMS[1])
    w3, b3 = lin(ks[5], ks[6], HIDDEN_DIMS[1], HIDDEN_DIMS[2])
    w4, b4 = lin(ks[7], ks[8], HIDDEN_DIMS[2], REPR_DIM)

    g1 = 1.0 + 0.1 * jax.random.normal(ks[9], (HIDDEN_DIMS[0],), jnp.float32)
    be1 = 0.1 * jax.random.normal(ks[10], (HIDDEN_DIMS[0],), jnp.float32)
    g2 = 1.0 + 0.1 * jax.random.normal(ks[11], (HIDDEN_DIMS[1],), jnp.float32)
    be2 = 0.1 * jax.random.normal(ks[12], (HIDDEN_DIMS[1],), jnp.float32)
    g3 = 1.0 + 0.1 * jax.random.normal(ks[13], (HIDDEN_DIMS[2],), jnp.float32)
    be3 = 0.1 * jax.random.normal(ks[14], (HIDDEN_DIMS[2],), jnp.float32)

    params = dict(w1=w1, b1=b1, g1=g1, be1=be1,
                  w2=w2, b2=b2, g2=g2, be2=be2,
                  w3=w3, b3=b3, g3=g3, be3=be3,
                  w4=w4, b4=b4)

    out = jax.block_until_ready(pose_encoder_forward(x, params))
    ref = pose_encoder_reference(x, params)

    assert out.shape == (B, REPR_DIM) and out.dtype == jnp.float32
    max_err = float(jnp.max(jnp.abs(out - ref)))
    # Tolerance accounts for the bf16 matmul operands in layers 3/4 (f32 accumulation).
    assert jnp.allclose(out, ref, atol=2e-2, rtol=2e-2), \
        f"mismatch vs reference (max abs err {max_err})"

    print("KERNEL_OK")
</pallas_src>

<mosaic_0001>
module attributes {stable_mosaic.version = 11 : i64} {
  func.func @_pose_encoder_kernel(%arg0: memref<8x8xf32, #tpu.memory_space<vmem>>, %arg1: memref<8x128xf32, #tpu.memory_space<vmem>>, %arg2: memref<1x128xf32, #tpu.memory_space<vmem>>, %arg3: memref<1x128xf32, #tpu.memory_space<vmem>>, %arg4: memref<128x64xf32, #tpu.memory_space<vmem>>, %arg5: memref<1x64xf32, #tpu.memory_space<vmem>>, %arg6: memref<1x64xf32, #tpu.memory_space<vmem>>, %arg7: memref<64x256xf32, #tpu.memory_space<vmem>>, %arg8: memref<1x256xf32, #tpu.memory_space<vmem>>, %arg9: memref<1x256xf32, #tpu.memory_space<vmem>>, %arg10: memref<256x1024xbf16, #tpu.memory_space<any>>, %arg11: memref<1x1024xf32, #tpu.memory_space<vmem>>, %arg12: memref<1x1024xf32, #tpu.memory_space<vmem>>, %arg13: memref<1024x512xbf16, #tpu.memory_space<any>>, %arg14: memref<1x512xf32, #tpu.memory_space<vmem>>, %arg15: memref<8x512xf32, #tpu.memory_space<vmem>>, %arg16: memref<256x1024xbf16, #tpu.memory_space<vmem>>, %arg17: memref<1024x512xbf16, #tpu.memory_space<vmem>>, %arg18: memref<2x!tpu.dma_semaphore, #tpu.memory_space<semaphore_mem>>) attributes {dimension_semantics = [], scalar_prefetch = 0 : i64, scratch_operands = 3 : i64, tpu.core_type = #tpu.core_type<tc>} {
    %c0_i32 = arith.constant 0 : i32
    %0 = tpu.memref_slice %arg18[%c0_i32] : memref<2x!tpu.dma_semaphore, #tpu.memory_space<semaphore_mem>> -> memref<1x!tpu.dma_semaphore, #tpu.memory_space<semaphore_mem>>
    %1 = tpu.memref_squeeze %0 : memref<1x!tpu.dma_semaphore, #tpu.memory_space<semaphore_mem>> -> memref<!tpu.dma_semaphore, #tpu.memory_space<semaphore_mem>>
    tpu.enqueue_dma source(%arg10 : memref<256x1024xbf16, #tpu.memory_space<any>>) target(%arg16 : memref<256x1024xbf16, #tpu.memory_space<vmem>>) target_semaphore(%1 : memref<!tpu.dma_semaphore, #tpu.memory_space<semaphore_mem>>)
    %c1_i32 = arith.constant 1 : i32
    %2 = tpu.memref_slice %arg18[%c1_i32] : memref<2x!tpu.dma_semaphore, #tpu.memory_space<semaphore_mem>> -> memref<1x!tpu.dma_semaphore, #tpu.memory_space<semaphore_mem>>
    %3 = tpu.memref_squeeze %2 : memref<1x!tpu.dma_semaphore, #tpu.memory_space<semaphore_mem>> -> memref<!tpu.dma_semaphore, #tpu.memory_space<semaphore_mem>>
    tpu.enqueue_dma source(%arg13 : memref<1024x512xbf16, #tpu.memory_space<any>>) target(%arg17 : memref<1024x512xbf16, #tpu.memory_space<vmem>>) target_semaphore(%3 : memref<!tpu.dma_semaphore, #tpu.memory_space<semaphore_mem>>)
    %c0 = arith.constant 0 : index
    %c0_0 = arith.constant 0 : index
    %4 = vector.load %arg0[%c0, %c0_0] : memref<8x8xf32, #tpu.memory_space<vmem>>, vector<8x8xf32>
    %5 = arith.mulf %4, %4 : vector<8x8xf32>
    %cst = arith.constant dense<0.000000e+00> : vector<8xf32>
    %6 = vector.multi_reduction <add>, %5, %cst [1] : vector<8x8xf32> to vector<8xf32>
    %7 = vector.shape_cast %6 : vector<8xf32> to vector<8x1xf32>
    %cst_1 = arith.constant 1.000000e-24 : f32
    %8 = vector.broadcast %cst_1 : f32 to vector<8x1xf32>
    %9 = arith.maximumf %7, %8 : vector<8x1xf32>
    %10 = math.rsqrt %9 : vector<8x1xf32>
    %11 = vector.broadcast %10 : vector<8x1xf32> to vector<8x8xf32>
    %12 = arith.mulf %4, %11 : vector<8x8xf32>
    %c0_2 = arith.constant 0 : index
    %c0_3 = arith.constant 0 : index
    %13 = vector.load %arg1[%c0_2, %c0_3] : memref<8x128xf32, #tpu.memory_space<vmem>>, vector<8x128xf32>
    %cst_4 = arith.constant dense<0.000000e+00> : vector<8x128xf32>
    %14 = tpu.matmul %12, %13, %cst_4 {dimension_numbers = #tpu.dot_dimension_numbers<[1], [0], [0], [1], [0, 0, 1, 1], [], []>, precision = #tpu.contract_precision<fp32>} : vector<8x8xf32>, vector<8x128xf32>, vector<8x128xf32> -> vector<8x128xf32>
    %c0_5 = arith.constant 0 : index
    %c0_6 = arith.constant 0 : index
    %15 = vector.load %arg2[%c0_5, %c0_6] : memref<1x128xf32, #tpu.memory_space<vmem>>, vector<1x128xf32>
    %16 = vector.broadcast %15 : vector<1x128xf32> to vector<8x128xf32>
    %17 = arith.mulf %14, %16 : vector<8x128xf32>
    %c0_7 = arith.constant 0 : index
    %c0_8 = arith.constant 0 : index
    %18 = vector.load %arg3[%c0_7, %c0_8] : memref<1x128xf32, #tpu.memory_space<vmem>>, vector<1x128xf32>
    %19 = vector.broadcast %18 : vector<1x128xf32> to vector<8x128xf32>
    %20 = arith.addf %17, %19 : vector<8x128xf32>
    %21 = tpu.iota {dimensions = array<i32: 1>} : vector<8x128xi32>
    %c6_i32 = arith.constant 6 : i32
    %22 = vector.broadcast %c6_i32 : i32 to vector<8x128xi32>
    %23 = arith.cmpi slt, %21, %22 : vector<8x128xi32>
    %24 = math.sin %20 : vector<8x128xf32>
    %25 = arith.select %23, %14, %24 : vector<8x128xi1>, vector<8x128xf32>
    %c0_9 = arith.constant 0 : index
    %c0_10 = arith.constant 0 : index
    %26 = vector.load %arg4[%c0_9, %c0_10] : memref<128x64xf32, #tpu.memory_space<vmem>>, vector<128x64xf32>
    %cst_11 = arith.constant dense<0.000000e+00> : vector<8x64xf32>
    %27 = tpu.matmul %25, %26, %cst_11 {dimension_numbers = #tpu.dot_dimension_numbers<[1], [0], [0], [1], [0, 0, 1, 1], [], []>} : vector<8x128xf32>, vector<128x64xf32>, vector<8x64xf32> -> vector<8x64xf32>
    %c0_12 = arith.constant 0 : index
    %c0_13 = arith.constant 0 : index
    %28 = vector.load %arg5[%c0_12, %c0_13] : memref<1x64xf32, #tpu.memory_space<vmem>>, vector<1x64xf32>
    %c0_14 = arith.constant 0 : index
    %c0_15 = arith.constant 0 : index
    %29 = vector.load %arg6[%c0_14, %c0_15] : memref<1x64xf32, #tpu.memory_space<vmem>>, vector<1x64xf32>
    %cst_16 = arith.constant dense<0.000000e+00> : vector<64xf32>
    %30 = vector.multi_reduction <add>, %27, %cst_16 [0] : vector<8x64xf32> to vector<64xf32>
    %31 = vector.shape_cast %30 : vector<64xf32> to vector<1x64xf32>
    %32 = arith.mulf %27, %27 : vector<8x64xf32>
    %cst_17 = arith.constant dense<0.000000e+00> : vector<64xf32>
    %33 = vector.multi_reduction <add>, %32, %cst_17 [0] : vector<8x64xf32> to vector<64xf32>
    %34 = vector.shape_cast %33 : vector<64xf32> to vector<1x64xf32>
    %cst_18 = arith.constant 1.250000e-01 : f32
    %35 = vector.broadcast %cst_18 : f32 to vector<1x64xf32>
    %36 = arith.mulf %31, %35 : vector<1x64xf32>
    %cst_19 = arith.constant 1.250000e-01 : f32
    %37 = vector.broadcast %cst_19 : f32 to vector<1x64xf32>
    %38 = arith.mulf %34, %37 : vector<1x64xf32>
    %39 = arith.mulf %36, %36 : vector<1x64xf32>
    %40 = arith.subf %38, %39 : vector<1x64xf32>
    %cst_20 = arith.constant 0.000000e+00 : f32
    %41 = vector.broadcast %cst_20 : f32 to vector<1x64xf32>
    %42 = arith.maximumf %40, %41 : vector<1x64xf32>
    %cst_21 = arith.constant 9.99999974E-6 : f32
    %43 = vector.broadcast %cst_21 : f32 to vector<1x64xf32>
    %44 = arith.addf %42, %43 : vector<1x64xf32>
    %45 = math.rsqrt %44 : vector<1x64xf32>
    %46 = arith.mulf %28, %45 : vector<1x64xf32>
    %47 = arith.mulf %36, %46 : vector<1x64xf32>
    %48 = arith.subf %29, %47 : vector<1x64xf32>
    %49 = vector.broadcast %46 : vector<1x64xf32> to vector<8x64xf32>
    %50 = arith.mulf %27, %49 : vector<8x64xf32>
    %51 = vector.broadcast %48 : vector<1x64xf32> to vector<8x64xf32>
    %52 = arith.addf %50, %51 : vector<8x64xf32>
    %cst_22 = arith.constant 0.000000e+00 : f32
    %53 = vector.broadcast %cst_22 : f32 to vector<8x64xf32>
    %54 = arith.maximumf %52, %53 : vector<8x64xf32>
    %c0_23 = arith.constant 0 : index
    %c0_24 = arith.constant 0 : index
    %55 = vector.load %arg7[%c0_23, %c0_24] : memref<64x256xf32, #tpu.memory_space<vmem>>, vector<64x256xf32>
    %cst_25 = arith.constant dense<0.000000e+00> : vector<8x256xf32>
    %56 = tpu.matmul %54, %55, %cst_25 {dimension_numbers = #tpu.dot_dimension_numbers<[1], [0], [0], [1], [0, 0, 1, 1], [], []>} : vector<8x64xf32>, vector<64x256xf32>, vector<8x256xf32> -> vector<8x256xf32>
    %c0_26 = arith.constant 0 : index
    %c0_27 = arith.constant 0 : index
    %57 = vector.load %arg8[%c0_26, %c0_27] : memref<1x256xf32, #tpu.memory_space<vmem>>, vector<1x256xf32>
    %c0_28 = arith.constant 0 : index
    %c0_29 = arith.constant 0 : index
    %58 = vector.load %arg9[%c0_28, %c0_29] : memref<1x256xf32, #tpu.memory_space<vmem>>, vector<1x256xf32>
    %cst_30 = arith.constant dense<0.000000e+00> : vector<256xf32>
    %59 = vector.multi_reduction <add>, %56, %cst_30 [0] : vector<8x256xf32> to vector<256xf32>
    %60 = vector.shape_cast %59 : vector<256xf32> to vector<1x256xf32>
    %61 = arith.mulf %56, %56 : vector<8x256xf32>
    %cst_31 = arith.constant dense<0.000000e+00> : vector<256xf32>
    %62 = vector.multi_reduction <add>, %61, %cst_31 [0] : vector<8x256xf32> to vector<256xf32>
    %63 = vector.shape_cast %62 : vector<256xf32> to vector<1x256xf32>
    %cst_32 = arith.constant 1.250000e-01 : f32
    %64 = vector.broadcast %cst_32 : f32 to vector<1x256xf32>
    %65 = arith.mulf %60, %64 : vector<1x256xf32>
    %cst_33 = arith.constant 1.250000e-01 : f32
    %66 = vector.broadcast %cst_33 : f32 to vector<1x256xf32>
    %67 = arith.mulf %63, %66 : vector<1x256xf32>
    %68 = arith.mulf %65, %65 : vector<1x256xf32>
    %69 = arith.subf %67, %68 : vector<1x256xf32>
    %cst_34 = arith.constant 0.000000e+00 : f32
    %70 = vector.broadcast %cst_34 : f32 to vector<1x256xf32>
    %71 = arith.maximumf %69, %70 : vector<1x256xf32>
    %cst_35 = arith.constant 9.99999974E-6 : f32
    %72 = vector.broadcast %cst_35 : f32 to vector<1x256xf32>
    %73 = arith.addf %71, %72 : vector<1x256xf32>
    %74 = math.rsqrt %73 : vector<1x256xf32>
    %75 = arith.mulf %57, %74 : vector<1x256xf32>
    %76 = arith.mulf %65, %75 : vector<1x256xf32>
    %77 = arith.subf %58, %76 : vector<1x256xf32>
    %78 = vector.broadcast %75 : vector<1x256xf32> to vector<8x256xf32>
    %79 = arith.mulf %56, %78 : vector<8x256xf32>
    %80 = vector.broadcast %77 : vector<1x256xf32> to vector<8x256xf32>
    %81 = arith.addf %79, %80 : vector<8x256xf32>
    %cst_36 = arith.constant 0.000000e+00 : f32
    %82 = vector.broadcast %cst_36 : f32 to vector<8x256xf32>
    %83 = arith.maximumf %81, %82 : vector<8x256xf32>
    %c0_i32_37 = arith.constant 0 : i32
    %84 = tpu.memref_slice %arg18[%c0_i32_37] : memref<2x!tpu.dma_semaphore, #tpu.memory_space<semaphore_mem>> -> memref<1x!tpu.dma_semaphore, #tpu.memory_space<semaphore_mem>>
    %85 = tpu.memref_squeeze %84 : memref<1x!tpu.dma_semaphore, #tpu.memory_space<semaphore_mem>> -> memref<!tpu.dma_semaphore, #tpu.memory_space<semaphore_mem>>
    tpu.wait_dma2 semaphore(%85 : memref<!tpu.dma_semaphore, #tpu.memory_space<semaphore_mem>>) src(%arg10 : memref<256x1024xbf16, #tpu.memory_space<any>>) dst(%arg16 : memref<256x1024xbf16, #tpu.memory_space<vmem>>)
    %86 = arith.truncf %83 : vector<8x256xf32> to vector<8x256xbf16>
    %c0_38 = arith.constant 0 : index
    %c0_39 = arith.constant 0 : index
    %87 = vector.load %arg16[%c0_38, %c0_39] : memref<256x1024xbf16, #tpu.memory_space<vmem>>, vector<256x1024xbf16>
    %cst_40 = arith.constant dense<0.000000e+00> : vector<8x1024xf32>
    %88 = tpu.matmul %86, %87, %cst_40 {dimension_numbers = #tpu.dot_dimension_numbers<[1], [0], [0], [1], [0, 0, 1, 1], [], []>} : vector<8x256xbf16>, vector<256x1024xbf16>, vector<8x1024xf32> -> vector<8x1024xf32>
    %c0_41 = arith.constant 0 : index
    %c0_42 = arith.constant 0 : index
    %89 = vector.load %arg11[%c0_41, %c0_42] : memref<1x1024xf32, #tpu.memory_space<vmem>>, vector<1x1024xf32>
    %c0_43 = arith.constant 0 : index
    %c0_44 = arith.constant 0 : index
    %90 = vector.load %arg12[%c0_43, %c0_44] : memref<1x1024xf32, #tpu.memory_space<vmem>>, vector<1x1024xf32>
    %cst_45 = arith.constant dense<0.000000e+00> : vector<1024xf32>
    %91 = vector.multi_reduction <add>, %88, %cst_45 [0] : vector<8x1024xf32> to vector<1024xf32>
    %92 = vector.shape_cast %91 : vector<1024xf32> to vector<1x1024xf32>
    %93 = arith.mulf %88, %88 : vector<8x1024xf32>
    %cst_46 = arith.constant dense<0.000000e+00> : vector<1024xf32>
    %94 = vector.multi_reduction <add>, %93, %cst_46 [0] : vector<8x1024xf32> to vector<1024xf32>
    %95 = vector.shape_cast %94 : vector<1024xf32> to vector<1x1024xf32>
    %cst_47 = arith.constant 1.250000e-01 : f32
    %96 = vector.broadcast %cst_47 : f32 to vector<1x1024xf32>
    %97 = arith.mulf %92, %96 : vector<1x1024xf32>
    %cst_48 = arith.constant 1.250000e-01 : f32
    %98 = vector.broadcast %cst_48 : f32 to vector<1x1024xf32>
    %99 = arith.mulf %95, %98 : vector<1x1024xf32>
    %100 = arith.mulf %97, %97 : vector<1x1024xf32>
    %101 = arith.subf %99, %100 : vector<1x1024xf32>
    %cst_49 = arith.constant 0.000000e+00 : f32
    %102 = vector.broadcast %cst_49 : f32 to vector<1x1024xf32>
    %103 = arith.maximumf %101, %102 : vector<1x1024xf32>
    %cst_50 = arith.constant 9.99999974E-6 : f32
    %104 = vector.broadcast %cst_50 : f32 to vector<1x1024xf32>
    %105 = arith.addf %103, %104 : vector<1x1024xf32>
    %106 = math.rsqrt %105 : vector<1x1024xf32>
    %107 = arith.mulf %89, %106 : vector<1x1024xf32>
    %108 = arith.mulf %97, %107 : vector<1x1024xf32>
    %109 = arith.subf %90, %108 : vector<1x1024xf32>
    %110 = vector.broadcast %107 : vector<1x1024xf32> to vector<8x1024xf32>
    %111 = arith.mulf %88, %110 : vector<8x1024xf32>
    %112 = vector.broadcast %109 : vector<1x1024xf32> to vector<8x1024xf32>
    %113 = arith.addf %111, %112 : vector<8x1024xf32>
    %cst_51 = arith.constant 0.000000e+00 : f32
    %114 = vector.broadcast %cst_51 : f32 to vector<8x1024xf32>
    %115 = arith.maximumf %113, %114 : vector<8x1024xf32>
    %c1_i32_52 = arith.constant 1 : i32
    %116 = tpu.memref_slice %arg18[%c1_i32_52] : memref<2x!tpu.dma_semaphore, #tpu.memory_space<semaphore_mem>> -> memref<1x!tpu.dma_semaphore, #tpu.memory_space<semaphore_mem>>
    %117 = tpu.memref_squeeze %116 : memref<1x!tpu.dma_semaphore, #tpu.memory_space<semaphore_mem>> -> memref<!tpu.dma_semaphore, #tpu.memory_space<semaphore_mem>>
    tpu.wait_dma2 semaphore(%117 : memref<!tpu.dma_semaphore, #tpu.memory_space<semaphore_mem>>) src(%arg13 : memref<1024x512xbf16, #tpu.memory_space<any>>) dst(%arg17 : memref<1024x512xbf16, #tpu.memory_space<vmem>>)
    %118 = arith.truncf %115 : vector<8x1024xf32> to vector<8x1024xbf16>
    %c0_53 = arith.constant 0 : index
    %c0_54 = arith.constant 0 : index
    %119 = vector.load %arg17[%c0_53, %c0_54] : memref<1024x512xbf16, #tpu.memory_space<vmem>>, vector<1024x512xbf16>
    %cst_55 = arith.constant dense<0.000000e+00> : vector<8x512xf32>
    %120 = tpu.matmul %118, %119, %cst_55 {dimension_numbers = #tpu.dot_dimension_numbers<[1], [0], [0], [1], [0, 0, 1, 1], [], []>} : vector<8x1024xbf16>, vector<1024x512xbf16>, vector<8x512xf32> -> vector<8x512xf32>
    %c0_56 = arith.constant 0 : index
    %c0_57 = arith.constant 0 : index
    %121 = vector.load %arg14[%c0_56, %c0_57] : memref<1x512xf32, #tpu.memory_space<vmem>>, vector<1x512xf32>
    %122 = vector.broadcast %121 : vector<1x512xf32> to vector<8x512xf32>
    %123 = arith.addf %120, %122 : vector<8x512xf32>
    %c0_58 = arith.constant 0 : index
    %c0_59 = arith.constant 0 : index
    %124 = vector.load %arg15[%c0_58, %c0_59] : memref<8x512xf32, #tpu.memory_space<vmem>>, vector<8x512xf32>
    tpu.vector_store %arg15[%c0_58, %c0_59], %123 {strides = array<i32>} : memref<8x512xf32, #tpu.memory_space<vmem>>, vector<8x512xf32>,
    return
  }
}

</mosaic_0001>

<llo_original>
// kernel: pose_encoder_forward.1
$region0: #{pose_encoder_forward.1}
  #allocation0 [shape = 'u32[]', space=smem, size = 0x4, offset = 0x4, fixed_abs, tag = 'smem constant byte address 0x4 - core index']
  #allocation1 [shape = 'u32[144,128]{1,0:T(1,128)}', space=vmem, size = 0x12000, scoped, tag = 'internal scratch']
  #allocation2 [shape = 'bf16[256,1024]{1,0:T(16,128)(2,1)}', space=vmem, size = 0x80000, scoped, tag = 'scratch operand']
  #allocation3 [shape = 'bf16[1024,512]{1,0:T(16,128)(2,1)}', space=vmem, size = 0x100000, scoped, tag = 'scratch operand']
  #allocation4 [shape = 's32[2]{0}', space=sflag, size = 0x8, scoped, tag = 'scratch operand']
  #allocation7 [shape = 's32[]', space=sflag, size = 0x4, offset = 0, fixed_abs, tag = 'sflag constant byte address 0x0 - dummy sync flag']
  #allocation8 [shape = 's32[]', space=sflag, size = 0x4, offset = 0, fixed_abs, tag = 'sflag constant byte address 0x0 - dummy sync flag']
  %s0 = inlined_call_operand.vmem [shape: f32[8,8], index: 0, kind: input, shape index: {}]
  %s1 = inlined_call_operand.vmem [shape: f32[8,128], index: 1, kind: input, shape index: {}]
  %s2 = inlined_call_operand.vmem [shape: f32[1,128], index: 2, kind: input, shape index: {}]
  %s3 = inlined_call_operand.vmem [shape: f32[1,128], index: 3, kind: input, shape index: {}]
  %s4 = inlined_call_operand.vmem [shape: f32[128,64], index: 4, kind: input, shape index: {}]
  %s5 = inlined_call_operand.vmem [shape: f32[1,64], index: 5, kind: input, shape index: {}]
  %s6 = inlined_call_operand.vmem [shape: f32[1,64], index: 6, kind: input, shape index: {}]
  %s7 = inlined_call_operand.vmem [shape: f32[64,256], index: 7, kind: input, shape index: {}]
  %s8 = inlined_call_operand.vmem [shape: f32[1,256], index: 8, kind: input, shape index: {}]
  %s9 = inlined_call_operand.vmem [shape: f32[1,256], index: 9, kind: input, shape index: {}]
  %s10 = inlined_call_operand.vmem [shape: bf16[256,1024], index: 10, kind: input, shape index: {}]
  %s11 = inlined_call_operand.vmem [shape: f32[1,1024], index: 11, kind: input, shape index: {}]
  %s12 = inlined_call_operand.vmem [shape: f32[1,1024], index: 12, kind: input, shape index: {}]
  %s13 = inlined_call_operand.vmem [shape: bf16[1024,512], index: 13, kind: input, shape index: {}]
  %s14 = inlined_call_operand.vmem [shape: f32[1,512], index: 14, kind: input, shape index: {}]
  %s15 = inlined_call_operand.hbm [shape: f32[8,512], index: 15, kind: output, shape index: {}]
  %s16 = sld [smem:[#allocation0]]
  $region147: #{pose_encoder_forward.1} parent=0
    _
  %s18 = ssub.s32 1, %s16
  %s19 = scalar_select 0, %s18, %s16
  $region1: #{pose_encoder_forward.1} parent=0
    #allocation5 [shape = 'u8[16384]{0}', space=vmem, size = 0x4000, scoped, tag = 'output window, operand 0, single buffered']
    #allocation6 [shape = 's32[1]{0}', space=sflag, size = 0x4, scoped, tag = 'scoped memory for pose_encoder_forward.1']
    %20 = vsyncpa [#allocation6], 0
    // Predicated region
    $region2: #{pose_encoder_forward.1} parent=1 // pred_check
      _
    $region3: #{pose_encoder_forward.1} parent=1 // pred_check_branch
      %22 = sbr.rel (0) target = $region5
    $region4: #{pose_encoder_forward.1} parent=1 // pred_region
      _
    $region5: #{pose_encoder_forward.1} parent=1 // pred_fallthru
      _
    // Predicated region
    $region6: #{pose_encoder_forward.1} parent=1 // pred_check
      _
    $region7: #{pose_encoder_forward.1} parent=1 // pred_check_branch
      %24 = sbr.rel (0) target = $region9
    $region8: #{pose_encoder_forward.1} parent=1 // pred_region
      _
    $region9: #{pose_encoder_forward.1} parent=1 // pred_fallthru
      _
    // Predicated region
    $region10: #{pose_encoder_forward.1} parent=1 // pred_check
      _
    $region11: #{pose_encoder_forward.1} parent=1 // pred_check_branch
      %26 = sbr.rel (0) target = $region13
    $region12: #{pose_encoder_forward.1} parent=1 // pred_region
      _
    $region13: #{pose_encoder_forward.1} parent=1 // pred_fallthru
      _
    // Predicated region
    $region14: #{pose_encoder_forward.1} parent=1 // pred_check
      _
    $region15: #{pose_encoder_forward.1} parent=1 // pred_check_branch
      %28 = sbr.rel (0) target = $region17
    $region16: #{pose_encoder_forward.1} parent=1 // pred_region
      _
    $region17: #{pose_encoder_forward.1} parent=1 // pred_fallthru
      _
    // Predicated region
    $region18: #{pose_encoder_forward.1} parent=1 // pred_check
      _
    $region19: #{pose_encoder_forward.1} parent=1 // pred_check_branch
      %30 = sbr.rel (0) target = $region21
    $region20: #{pose_encoder_forward.1} parent=1 // pred_region
      _
    $region21: #{pose_encoder_forward.1} parent=1 // pred_fallthru
      _
    // Predicated region
    $region22: #{pose_encoder_forward.1} parent=1 // pred_check
      _
    $region23: #{pose_encoder_forward.1} parent=1 // pred_check_branch
      %32 = sbr.rel (0) target = $region25
    $region24: #{pose_encoder_forward.1} parent=1 // pred_region
      _
    $region25: #{pose_encoder_forward.1} parent=1 // pred_fallthru
      _
    // Predicated region
    $region26: #{pose_encoder_forward.1} parent=1 // pred_check
      _
    $region27: #{pose_encoder_forward.1} parent=1 // pred_check_branch
      %34 = sbr.rel (0) target = $region29
    $region28: #{pose_encoder_forward.1} parent=1 // pred_region
      _
    $region29: #{pose_encoder_forward.1} parent=1 // pred_fallthru
      _
    // Predicated region
    $region30: #{pose_encoder_forward.1} parent=1 // pred_check
      _
    $region31: #{pose_encoder_forward.1} parent=1 // pred_check_branch
      %36 = sbr.rel (0) target = $region33
    $region32: #{pose_encoder_forward.1} parent=1 // pred_region
      _
    $region33: #{pose_encoder_forward.1} parent=1 // pred_fallthru
      _
    // Predicated region
    $region34: #{pose_encoder_forward.1} parent=1 // pred_check
      _
    $region35: #{pose_encoder_forward.1} parent=1 // pred_check_branch
      %38 = sbr.rel (0) target = $region37
    $region36: #{pose_encoder_forward.1} parent=1 // pred_region
      _
    $region37: #{pose_encoder_forward.1} parent=1 // pred_fallthru
      _
    // Predicated region
    $region38: #{pose_encoder_forward.1} parent=1 // pred_check
      _
    $region39: #{pose_encoder_forward.1} parent=1 // pred_check_branch
      %40 = sbr.rel (0) target = $region41
    $region40: #{pose_encoder_forward.1} parent=1 // pred_region
      _
    $region41: #{pose_encoder_forward.1} parent=1 // pred_fallthru
      _
    // Predicated region
    $region42: #{pose_encoder_forward.1} parent=1 // pred_check
      _
    $region43: #{pose_encoder_forward.1} parent=1 // pred_check_branch
      %42 = sbr.rel (0) target = $region45
    $region44: #{pose_encoder_forward.1} parent=1 // pred_region
      _
    $region45: #{pose_encoder_forward.1} parent=1 // pred_fallthru
      _
    // Predicated region
    $region46: #{pose_encoder_forward.1} parent=1 // pred_check
      _
    $region47: #{pose_encoder_forward.1} parent=1 // pred_check_branch
      %44 = sbr.rel (0) target = $region49
    $region48: #{pose_encoder_forward.1} parent=1 // pred_region
      _
    $region49: #{pose_encoder_forward.1} parent=1 // pred_fallthru
      _
    // Predicated region
    $region50: #{pose_encoder_forward.1} parent=1 // pred_check
      _
    $region51: #{pose_encoder_forward.1} parent=1 // pred_check_branch
      %46 = sbr.rel (0) target = $region53
    $region52: #{pose_encoder_forward.1} parent=1 // pred_region
      _
    $region53: #{pose_encoder_forward.1} parent=1 // pred_fallthru
      _
    %p48 = scmp.lt.u32.totalorder 4, 8
    %p49 = pneg %p48
    // Predicated region
    $region54: #{pose_encoder_forward.1} parent=1 // pred_check
      _
    $region55: #{pose_encoder_forward.1} parent=1 // pred_check_branch
      %51 = sbr.rel (%p48) target = $region57
    $region56: #{pose_encoder_forward.1} parent=1 // pred_region
      %s576 = sand.u32 4, 7
      %p577 = scmp.eq.s32.totalorder %s576, 0
      %p578 = pneg %p577
      // Predicated region
      $region69: #{pose_encoder_forward.1} parent=56 // pred_check
        _
      $region70: #{pose_encoder_forward.1} parent=56 // pred_check_branch
        %580 = sbr.rel (%p577) target = $region72
      $region71: #{pose_encoder_forward.1} parent=56 // pred_region
        %s581 = sand.u32 4, 7
        %s582 = ssub.s32 4, %s581
        %s583 = scalar_lea.vmem %s10, %s582
        %s584 = ssub.s32 4, %s581
        %s585 = scalar_lea.vmem [#allocation2], %s584
        loop: start=0, step=1, limit=1
        $region73: #{pose_encoder_forward.1} parent=71 // loop_pre_header
          _
        $region74: #{pose_encoder_forward.1} parent=71 // loop_header
          %s587 = sphi 0, %s591
          %p588 = scmp.ge.s32.totalorder %s587, 1
          %s592 = sphi %s10, %s10
          %s593 = sphi [#allocation2], [#allocation2]
        $region75: #{pose_encoder_forward.1} parent=71 // loop_header_branch
          %590 = sbr.rel (%p588) target = $region79
        $region76: #{pose_encoder_forward.1} parent=71 // loop_body
          _
        $region77: #{pose_encoder_forward.1} parent=71 // loop_footer
          %s591 = sadd.s32 1, %s587
        $region78: #{pose_encoder_forward.1} parent=71 // loop_footer_branch
          %586 = sbr.rel target = $region74
        $region79: #{pose_encoder_forward.1} parent=71 // loop_exit
          _
        %s594 = sshllo.u32 0, %s581
        loop: start=0, step=1, limit=1
        $region80: #{pose_encoder_forward.1} parent=71 // loop_pre_header
          _
        $region81: #{pose_encoder_forward.1} parent=71 // loop_header
          %s596 = sphi 0, %s600
          %p597 = scmp.ge.s32.totalorder %s596, 1
          %s601 = sphi %s583, %s583
          %s602 = sphi %s585, %s585
        $region82: #{pose_encoder_forward.1} parent=71 // loop_header_branch
          %599 = sbr.rel (%p597) target = $region86
        $region83: #{pose_encoder_forward.1} parent=71 // loop_body
          %v603 = vld [vmem:[%s601] sm:%s594]
          %604 = vst [vmem:[%s602] sm:%s594] %v603
          %v605 = vld [vmem:[%s601 + $0x20] sm:%s594]
          %606 = vst [vmem:[%s602 + $0x4] sm:%s594] %v605
          %v607 = vld [vmem:[%s601 + $0x4] sm:%s594]
          %608 = vst [vmem:[%s602 + $0x8] sm:%s594] %v607
          %v609 = vld [vmem:[%s601 + $0x24] sm:%s594]
          %610 = vst [vmem:[%s602 + $0xc] sm:%s594] %v609
          %v611 = vld [vmem:[%s601 + $0x8] sm:%s594]
          %612 = vst [vmem:[%s602 + $0x10] sm:%s594] %v611
          %v613 = vld [vmem:[%s601 + $0x28] sm:%s594]
          %614 = vst [vmem:[%s602 + $0x14] sm:%s594] %v613
          %v615 = vld [vmem:[%s601 + $0xc] sm:%s594]
          %616 = vst [vmem:[%s602 + $0x18] sm:%s594] %v615
          %v617 = vld [vmem:[%s601 + $0x2c] sm:%s594]
          %618 = vst [vmem:[%s602 + $0x1c] sm:%s594] %v617
          %v619 = vld [vmem:[%s601 + $0x10] sm:%s594]
          %620 = vst [vmem:[%s602 + $0x20] sm:%s594] %v619
          %v621 = vld [vmem:[%s601 + $0x30] sm:%s594]
          %622 = vst [vmem:[%s602 + $0x24] sm:%s594] %v621
          %v623 = vld [vmem:[%s601 + $0x14] sm:%s594]
          %624 = vst [vmem:[%s602 + $0x28] sm:%s594] %v623
          %v625 = vld [vmem:[%s601 + $0x34] sm:%s594]
          %626 = vst [vmem:[%s602 + $0x2c] sm:%s594] %v625
          %v627 = vld [vmem:[%s601 + $0x18] sm:%s594]
          %628 = vst [vmem:[%s602 + $0x30] sm:%s594] %v627
          %v629 = vld [vmem:[%s601 + $0x38] sm:%s594]
          %630 = vst [vmem:[%s602 + $0x34] sm:%s594] %v629
          %v631 = vld [vmem:[%s601 + $0x1c] sm:%s594]
          %632 = vst [vmem:[%s602 + $0x38] sm:%s594] %v631
          %v633 = vld [vmem:[%s601 + $0x3c] sm:%s594]
          %634 = vst [vmem:[%s602 + $0x3c] sm:%s594] %v633
          %v635 = vld [vmem:[%s601 + $0x40] sm:%s594]
          %636 = vst [vmem:[%s602 + $0x40] sm:%s594] %v635
          %v637 = vld [vmem:[%s601 + $0x60] sm:%s594]
          %638 = vst [vmem:[%s602 + $0x44] sm:%s594] %v637
          %v639 = vld [vmem:[%s601 + $0x44] sm:%s594]
          %640 = vst [vmem:[%s602 + $0x48] sm:%s594] %v639
          %v641 = vld [vmem:[%s601 + $0x64] sm:%s594]
          %642 = vst [vmem:[%s602 + $0x4c] sm:%s594] %v641
          %v643 = vld [vmem:[%s601 + $0x48] sm:%s594]
          %644 = vst [vmem:[%s602 + $0x50] sm:%s594] %v643
          %v645 = vld [vmem:[%s601 + $0x68] sm:%s594]
          %646 = vst [vmem:[%s602 + $0x54] sm:%s594] %v645
          %v647 = vld [vmem:[%s601 + $0x4c] sm:%s594]
          %648 = vst [vmem:[%s602 + $0x58] sm:%s594] %v647
          %v649 = vld [vmem:[%s601 + $0x6c] sm:%s594]
          %650 = vst [vmem:[%s602 + $0x5c] sm:%s594] %v649
          %v651 = vld [vmem:[%s601 + $0x50] sm:%s594]
          %652 = vst [vmem:[%s602 + $0x60] sm:%s594] %v651
          %v653 = vld [vmem:[%s601 + $0x70] sm:%s594]
          %654 = vst [vmem:[%s602 + $0x64] sm:%s594] %v653
          %v655 = vld [vmem:[%s601 + $0x54] sm:%s594]
          %656 = vst [vmem:[%s602 + $0x68] sm:%s594] %v655
          %v657 = vld [vmem:[%s601 + $0x74] sm:%s594]
          %658 = vst [vmem:[%s602 + $0x6c] sm:%s594] %v657
          %v659 = vld [vmem:[%s601 + $0x58] sm:%s594]
          %660 = vst [vmem:[%s602 + $0x70] sm:%s594] %v659
          %v661 = vld [vmem:[%s601 + $0x78] sm:%s594]
          %662 = vst [vmem:[%s602 + $0x74] sm:%s594] %v661
          %v663 = vld [vmem:[%s601 + $0x5c] sm:%s594]
          %664 = vst [vmem:[%s602 + $0x78] sm:%s594] %v663
          %v665 = vld [vmem:[%s601 + $0x7c] sm:%s594]
          %666 = vst [vmem:[%s602 + $0x7c] sm:%s594] %v665
          %v667 = vld [vmem:[%s601 + $0x80] sm:%s594]
          %668 = vst [vmem:[%s602 + $0x80] sm:%s594] %v667
          %v669 = vld [vmem:[%s601 + $0xa0] sm:%s594]
          %670 = vst [vmem:[%s602 + $0x84] sm:%s594] %v669
          %v671 = vld [vmem:[%s601 + $0x84] sm:%s594]
          %672 = vst [vmem:[%s602 + $0x88] sm:%s594] %v671
          %v673 = vld [vmem:[%s601 + $0xa4] sm:%s594]
          %674 = vst [vmem:[%s602 + $0x8c] sm:%s594] %v673
          %v675 = vld [vmem:[%s601 + $0x88] sm:%s594]
          %676 = vst [vmem:[%s602 + $0x90] sm:%s594] %v675
          %v677 = vld [vmem:[%s601 + $0xa8] sm:%s594]
          %678 = vst [vmem:[%s602 + $0x94] sm:%s594] %v677
          %v679 = vld [vmem:[%s601 + $0x8c] sm:%s594]
          %680 = vst [vmem:[%s602 + $0x98] sm:%s594] %v679
          %v681 = vld [vmem:[%s601 + $0xac] sm:%s594]
          %682 = vst [vmem:[%s602 + $0x9c] sm:%s594] %v681
          %v683 = vld [vmem:[%s601 + $0x90] sm:%s594]
          %684 = vst [vmem:[%s602 + $0xa0] sm:%s594] %v683
          %v685 = vld [vmem:[%s601 + $0xb0] sm:%s594]
          %686 = vst [vmem:[%s602 + $0xa4] sm:%s594] %v685
          %v687 = vld [vmem:[%s601 + $0x94] sm:%s594]
          %688 = vst [vmem:[%s602 + $0xa8] sm:%s594] %v687
          %v689 = vld [vmem:[%s601 + $0xb4] sm:%s594]
          %690 = vst [vmem:[%s602 + $0xac] sm:%s594] %v689
          %v691 = vld [vmem:[%s601 + $0x98] sm:%s594]
          %692 = vst [vmem:[%s602 + $0xb0] sm:%s594] %v691
          %v693 = vld [vmem:[%s601 + $0xb8] sm:%s594]
          %694 = vst [vmem:[%s602 + $0xb4] sm:%s594] %v693
          %v695 = vld [vmem:[%s601 + $0x9c] sm:%s594]
          %696 = vst [vmem:[%s602 + $0xb8] sm:%s594] %v695
          %v697 = vld [vmem:[%s601 + $0xbc] sm:%s594]
          %698 = vst [vmem:[%s602 + $0xbc] sm:%s594] %v697
          %v699 = vld [vmem:[%s601 + $0xc0] sm:%s594]
          %700 = vst [vmem:[%s602 + $0xc0] sm:%s594] %v699
          %v701 = vld [vmem:[%s601 + $0xe0] sm:%s594]
          %702 = vst [vmem:[%s602 + $0xc4] sm:%s594] %v701
          %v703 = vld [vmem:[%s601 + $0xc4] sm:%s594]
          %704 = vst [vmem:[%s602 + $0xc8] sm:%s594] %v703
          %v705 = vld [vmem:[%s601 + $0xe4] sm:%s594]
          %706 = vst [vmem:[%s602 + $0xcc] sm:%s594] %v705
          %v707 = vld [vmem:[%s601 + $0xc8] sm:%s594]
          %708 = vst [vmem:[%s602 + $0xd0] sm:%s594] %v707
          %v709 = vld [vmem:[%s601 + $0xe8] sm:%s594]
          %710 = vst [vmem:[%s602 + $0xd4] sm:%s594] %v709
          %v711 = vld [vmem:[%s601 + $0xcc] sm:%s594]
          %712 = vst [vmem:[%s602 + $0xd8] sm:%s594] %v711
          %v713 = vld [vmem:[%s601 + $0xec] sm:%s594]
          %714 = vst [vmem:[%s602 + $0xdc] sm:%s594] %v713
          %v715 = vld [vmem:[%s601 + $0xd0] sm:%s594]
          %716 = vst [vmem:[%s602 + $0xe0] sm:%s594] %v715
          %v717 = vld [vmem:[%s601 + $0xf0] sm:%s594]
          %718 = vst [vmem:[%s602 + $0xe4] sm:%s594] %v717
          %v719 = vld [vmem:[%s601 + $0xd4] sm:%s594]
          %720 = vst [vmem:[%s602 + $0xe8] sm:%s594] %v719
          %v721 = vld [vmem:[%s601 + $0xf4] sm:%s594]
          %722 = vst [vmem:[%s602 + $0xec] sm:%s594] %v721
          %v723 = vld [vmem:[%s601 + $0xd8] sm:%s594]
          %724 = vst [vmem:[%s602 + $0xf0] sm:%s594] %v723
          %v725 = vld [vmem:[%s601 + $0xf8] sm:%s594]
          %726 = vst [vmem:[%s602 + $0xf4] sm:%s594] %v725
          %v727 = vld [vmem:[%s601 + $0xdc] sm:%s594]
          %728 = vst [vmem:[%s602 + $0xf8] sm:%s594] %v727
          %v729 = vld [vmem:[%s601 + $0xfc] sm:%s594]
          %730 = vst [vmem:[%s602 + $0xfc] sm:%s594] %v729
          %v731 = vld [vmem:[%s601 + $0x100] sm:%s594]
          %732 = vst [vmem:[%s602 + $0x100] sm:%s594] %v731
          %v733 = vld [vmem:[%s601 + $0x120] sm:%s594]
          %734 = vst [vmem:[%s602 + $0x104] sm:%s594] %v733
          %v735 = vld [vmem:[%s601 + $0x104] sm:%s594]
          %736 = vst [vmem:[%s602 + $0x108] sm:%s594] %v735
          %v737 = vld [vmem:[%s601 + $0x124] sm:%s594]
          %738 = vst [vmem:[%s602 + $0x10c] sm:%s594] %v737
          %v739 = vld [vmem:[%s601 + $0x108] sm:%s594]
          %740 = vst [vmem:[%s602 + $0x110] sm:%s594] %v739
          %v741 = vld [vmem:[%s601 + $0x128] sm:%s594]
          %742 = vst [vmem:[%s602 + $0x114] sm:%s594] %v741
          %v743 = vld [vmem:[%s601 + $0x10c] sm:%s594]
          %744 = vst [vmem:[%s602 + $0x118] sm:%s594] %v743
          %v745 = vld [vmem:[%s601 + $0x12c] sm:%s594]
          %746 = vst [vmem:[%s602 + $0x11c] sm:%s594] %v745
          %v747 = vld [vmem:[%s601 + $0x110] sm:%s594]
          %748 = vst [vmem:[%s602 + $0x120] sm:%s594] %v747
          %v749 = vld [vmem:[%s601 + $0x130] sm:%s594]
          %750 = vst [vmem:[%s602 + $0x124] sm:%s594] %v749
          %v751 = vld [vmem:[%s601 + $0x114] sm:%s594]
          %752 = vst [vmem:[%s602 + $0x128] sm:%s594] %v751
          %v753 = vld [vmem:[%s601 + $0x134] sm:%s594]
          %754 = vst [vmem:[%s602 + $0x12c] sm:%s594] %v753
          %v755 = vld [vmem:[%s601 + $0x118] sm:%s594]
          %756 = vst [vmem:[%s602 + $0x130] sm:%s594] %v755
          %v757 = vld [vmem:[%s601 + $0x138] sm:%s594]
          %758 = vst [vmem:[%s602 + $0x134] sm:%s594] %v757
          %v759 = vld [vmem:[%s601 + $0x11c] sm:%s594]
          %760 = vst [vmem:[%s602 + $0x138] sm:%s594] %v759
          %v761 = vld [vmem:[%s601 + $0x13c] sm:%s594]
          %762 = vst [vmem:[%s602 + $0x13c] sm:%s594] %v761
          %v763 = vld [vmem:[%s601 + $0x140] sm:%s594]
          %764 = vst [vmem:[%s602 + $0x140] sm:%s594] %v763
          %v765 = vld [vmem:[%s601 + $0x160] sm:%s594]
          %766 = vst [vmem:[%s602 + $0x144] sm:%s594] %v765
          %v767 = vld [vmem:[%s601 + $0x144] sm:%s594]
          %768 = vst [vmem:[%s602 + $0x148] sm:%s594] %v767
          %v769 = vld [vmem:[%s601 + $0x164] sm:%s594]
          %770 = vst [vmem:[%s602 + $0x14c] sm:%s594] %v769
          %v771 = vld [vmem:[%s601 + $0x148] sm:%s594]
          %772 = vst [vmem:[%s602 + $0x150] sm:%s594] %v771
          %v773 = vld [vmem:[%s601 + $0x168] sm:%s594]
          %774 = vst [vmem:[%s602 + $0x154] sm:%s594] %v773
          %v775 = vld [vmem:[%s601 + $0x14c] sm:%s594]
          %776 = vst [vmem:[%s602 + $0x158] sm:%s594] %v775
          %v777 = vld [vmem:[%s601 + $0x16c] sm:%s594]
          %778 = vst [vmem:[%s602 + $0x15c] sm:%s594] %v777
          %v779 = vld [vmem:[%s601 + $0x150] sm:%s594]
          %780 = vst [vmem:[%s602 + $0x160] sm:%s594] %v779
          %v781 = vld [vmem:[%s601 + $0x170] sm:%s594]
          %782 = vst [vmem:[%s602 + $0x164] sm:%s594] %v781
          %v783 = vld [vmem:[%s601 + $0x154] sm:%s594]
          %784 = vst [vmem:[%s602 + $0x168] sm:%s594] %v783
          %v785 = vld [vmem:[%s601 + $0x174] sm:%s594]
          %786 = vst [vmem:[%s602 + $0x16c] sm:%s594] %v785
          %v787 = vld [vmem:[%s601 + $0x158] sm:%s594]
          %788 = vst [vmem:[%s602 + $0x170] sm:%s594] %v787
          %v789 = vld [vmem:[%s601 + $0x178] sm:%s594]
          %790 = vst [vmem:[%s602 + $0x174] sm:%s594] %v789
          %v791 = vld [vmem:[%s601 + $0x15c] sm:%s594]
          %792 = vst [vmem:[%s602 + $0x178] sm:%s594] %v791
          %v793 = vld [vmem:[%s601 + $0x17c] sm:%s594]
          %794 = vst [vmem:[%s602 + $0x17c] sm:%s594] %v793
          %v795 = vld [vmem:[%s601 + $0x180] sm:%s594]
          %796 = vst [vmem:[%s602 + $0x180] sm:%s594] %v795
          %v797 = vld [vmem:[%s601 + $0x1a0] sm:%s594]
          %798 = vst [vmem:[%s602 + $0x184] sm:%s594] %v797
          %v799 = vld [vmem:[%s601 + $0x184] sm:%s594]
          %800 = vst [vmem:[%s602 + $0x188] sm:%s594] %v799
          %v801 = vld [vmem:[%s601 + $0x1a4] sm:%s594]
          %802 = vst [vmem:[%s602 + $0x18c] sm:%s594] %v801
          %v803 = vld [vmem:[%s601 + $0x188] sm:%s594]
          %804 = vst [vmem:[%s602 + $0x190] sm:%s594] %v803
          %v805 = vld [vmem:[%s601 + $0x1a8] sm:%s594]
          %806 = vst [vmem:[%s602 + $0x194] sm:%s594] %v805
          %v807 = vld [vmem:[%s601 + $0x18c] sm:%s594]
          %808 = vst [vmem:[%s602 + $0x198] sm:%s594] %v807
          %v809 = vld [vmem:[%s601 + $0x1ac] sm:%s594]
          %810 = vst [vmem:[%s602 + $0x19c] sm:%s594] %v809
          %v811 = vld [vmem:[%s601 + $0x190] sm:%s594]
          %812 = vst [vmem:[%s602 + $0x1a0] sm:%s594] %v811
          %v813 = vld [vmem:[%s601 + $0x1b0] sm:%s594]
          %814 = vst [vmem:[%s602 + $0x1a4] sm:%s594] %v813
          %v815 = vld [vmem:[%s601 + $0x194] sm:%s594]
          %816 = vst [vmem:[%s602 + $0x1a8] sm:%s594] %v815
          %v817 = vld [vmem:[%s601 + $0x1b4] sm:%s594]
          %818 = vst [vmem:[%s602 + $0x1ac] sm:%s594] %v817
          %v819 = vld [vmem:[%s601 + $0x198] sm:%s594]
          %820 = vst [vmem:[%s602 + $0x1b0] sm:%s594] %v819
          %v821 = vld [vmem:[%s601 + $0x1b8] sm:%s594]
          %822 = vst [vmem:[%s602 + $0x1b4] sm:%s594] %v821
          %v823 = vld [vmem:[%s601 + $0x19c] sm:%s594]
          %824 = vst [vmem:[%s602 + $0x1b8] sm:%s594] %v823
          %v825 = vld [vmem:[%s601 + $0x1bc] sm:%s594]
          %826 = vst [vmem:[%s602 + $0x1bc] sm:%s594] %v825
          %v827 = vld [vmem:[%s601 + $0x1c0] sm:%s594]
          %828 = vst [vmem:[%s602 + $0x1c0] sm:%s594] %v827
          %v829 = vld [vmem:[%s601 + $0x1e0] sm:%s594]
          %830 = vst [vmem:[%s602 + $0x1c4] sm:%s594] %v829
          %v831 = vld [vmem:[%s601 + $0x1c4] sm:%s594]
          %832 = vst [vmem:[%s602 + $0x1c8] sm:%s594] %v831
          %v833 = vld [vmem:[%s601 + $0x1e4] sm:%s594]
          %834 = vst [vmem:[%s602 + $0x1cc] sm:%s594] %v833
          %v835 = vld [vmem:[%s601 + $0x1c8] sm:%s594]
          %836 = vst [vmem:[%s602 + $0x1d0] sm:%s594] %v835
          %v837 = vld [vmem:[%s601 + $0x1e8] sm:%s594]
          %838 = vst [vmem:[%s602 + $0x1d4] sm:%s594] %v837
          %v839 = vld [vmem:[%s601 + $0x1cc] sm:%s594]
          %840 = vst [vmem:[%s602 + $0x1d8] sm:%s594] %v839
          %v841 = vld [vmem:[%s601 + $0x1ec] sm:%s594]
          %842 = vst [vmem:[%s602 + $0x1dc] sm:%s594] %v841
          %v843 = vld [vmem:[%s601 + $0x1d0] sm:%s594]
          %844 = vst [vmem:[%s602 + $0x1e0] sm:%s594] %v843
          %v845 = vld [vmem:[%s601 + $0x1f0] sm:%s594]
          %846 = vst [vmem:[%s602 + $0x1e4] sm:%s594] %v845
          %v847 = vld [vmem:[%s601 + $0x1d4] sm:%s594]
          %848 = vst [vmem:[%s602 + $0x1e8] sm:%s594] %v847
          %v849 = vld [vmem:[%s601 + $0x1f4] sm:%s594]
          %850 = vst [vmem:[%s602 + $0x1ec] sm:%s594] %v849
          %v851 = vld [vmem:[%s601 + $0x1d8] sm:%s594]
          %852 = vst [vmem:[%s602 + $0x1f0] sm:%s594] %v851
          %v853 = vld [vmem:[%s601 + $0x1f8] sm:%s594]
          %854 = vst [vmem:[%s602 + $0x1f4] sm:%s594] %v853
          %v855 = vld [vmem:[%s601 + $0x1dc] sm:%s594]
          %856 = vst [vmem:[%s602 + $0x1f8] sm:%s594] %v855
          %v857 = vld [vmem:[%s601 + $0x1fc] sm:%s594]
          %858 = vst [vmem:[%s602 + $0x1fc] sm:%s594] %v857
          %v859 = vld [vmem:[%s601 + $0x200] sm:%s594]
          %860 = vst [vmem:[%s602 + $0x200] sm:%s594] %v859
          %v861 = vld [vmem:[%s601 + $0x220] sm:%s594]
          %862 = vst [vmem:[%s602 + $0x204] sm:%s594] %v861
          %v863 = vld [vmem:[%s601 + $0x204] sm:%s594]
          %864 = vst [vmem:[%s602 + $0x208] sm:%s594] %v863
          %v865 = vld [vmem:[%s601 + $0x224] sm:%s594]
          %866 = vst [vmem:[%s602 + $0x20c] sm:%s594] %v865
          %v867 = vld [vmem:[%s601 + $0x208] sm:%s594]
          %868 = vst [vmem:[%s602 + $0x210] sm:%s594] %v867
          %v869 = vld [vmem:[%s601 + $0x228] sm:%s594]
          %870 = vst [vmem:[%s602 + $0x214] sm:%s594] %v869
          %v871 = vld [vmem:[%s601 + $0x20c] sm:%s594]
          %872 = vst [vmem:[%s602 + $0x218] sm:%s594] %v871
          %v873 = vld [vmem:[%s601 + $0x22c] sm:%s594]
          %874 = vst [vmem:[%s602 + $0x21c] sm:%s594] %v873
          %v875 = vld [vmem:[%s601 + $0x210] sm:%s594]
          %876 = vst [vmem:[%s602 + $0x220] sm:%s594] %v875
          %v877 = vld [vmem:[%s601 + $0x230] sm:%s594]
          %878 = vst [vmem:[%s602 + $0x224] sm:%s594] %v877
          %v879 = vld [vmem:[%s601 + $0x214] sm:%s594]
          %880 = vst [vmem:[%s602 + $0x228] sm:%s594] %v879
          %v881 = vld [vmem:[%s601 + $0x234] sm:%s594]
          %882 = vst [vmem:[%s602 + $0x22c] sm:%s594] %v881
          %v883 = vld [vmem:[%s601 + $0x218] sm:%s594]
          %884 = vst [vmem:[%s602 + $0x230] sm:%s594] %v883
          %v885 = vld [vmem:[%s601 + $0x238] sm:%s594]
          %886 = vst [vmem:[%s602 + $0x234] sm:%s594] %v885
          %v887 = vld [vmem:[%s601 + $0x21c] sm:%s594]
          %888 = vst [vmem:[%s602 + $0x238] sm:%s594] %v887
          %v889 = vld [vmem:[%s601 + $0x23c] sm:%s594]
          %890 = vst [vmem:[%s602 + $0x23c] sm:%s594] %v889
          %v891 = vld [vmem:[%s601 + $0x240] sm:%s594]
          %892 = vst [vmem:[%s602 + $0x240] sm:%s594] %v891
          %v893 = vld [vmem:[%s601 + $0x260] sm:%s594]
          %894 = vst [vmem:[%s602 + $0x244] sm:%s594] %v893
          %v895 = vld [vmem:[%s601 + $0x244] sm:%s594]
          %896 = vst [vmem:[%s602 + $0x248] sm:%s594] %v895
          %v897 = vld [vmem:[%s601 + $0x264] sm:%s594]
          %898 = vst [vmem:[%s602 + $0x24c] sm:%s594] %v897
          %v899 = vld [vmem:[%s601 + $0x248] sm:%s594]
          %900 = vst [vmem:[%s602 + $0x250] sm:%s594] %v899
          %v901 = vld [vmem:[%s601 + $0x268] sm:%s594]
          %902 = vst [vmem:[%s602 + $0x254] sm:%s594] %v901
          %v903 = vld [vmem:[%s601 + $0x24c] sm:%s594]
          %904 = vst [vmem:[%s602 + $0x258] sm:%s594] %v903
          %v905 = vld [vmem:[%s601 + $0x26c] sm:%s594]
          %906 = vst [vmem:[%s602 + $0x25c] sm:%s594] %v905
          %v907 = vld [vmem:[%s601 + $0x250] sm:%s594]
          %908 = vst [vmem:[%s602 + $0x260] sm:%s594] %v907
          %v909 = vld [vmem:[%s601 + $0x270] sm:%s594]
          %910 = vst [vmem:[%s602 + $0x264] sm:%s594] %v909
          %v911 = vld [vmem:[%s601 + $0x254] sm:%s594]
          %912 = vst [vmem:[%s602 + $0x268] sm:%s594] %v911
          %v913 = vld [vmem:[%s601 + $0x274] sm:%s594]
          %914 = vst [vmem:[%s602 + $0x26c] sm:%s594] %v913
          %v915 = vld [vmem:[%s601 + $0x258] sm:%s594]
          %916 = vst [vmem:[%s602 + $0x270] sm:%s594] %v915
          %v917 = vld [vmem:[%s601 + $0x278] sm:%s594]
          %918 = vst [vmem:[%s602 + $0x274] sm:%s594] %v917
          %v919 = vld [vmem:[%s601 + $0x25c] sm:%s594]
          %920 = vst [vmem:[%s602 + $0x278] sm:%s594] %v919
          %v921 = vld [vmem:[%s601 + $0x27c] sm:%s594]
          %922 = vst [vmem:[%s602 + $0x27c] sm:%s594] %v921
          %v923 = vld [vmem:[%s601 + $0x280] sm:%s594]
          %924 = vst [vmem:[%s602 + $0x280] sm:%s594] %v923
          %v925 = vld [vmem:[%s601 + $0x2a0] sm:%s594]
          %926 = vst [vmem:[%s602 + $0x284] sm:%s594] %v925
          %v927 = vld [vmem:[%s601 + $0x284] sm:%s594]
          %928 = vst [vmem:[%s602 + $0x288] sm:%s594] %v927
          %v929 = vld [vmem:[%s601 + $0x2a4] sm:%s594]
          %930 = vst [vmem:[%s602 + $0x28c] sm:%s594] %v929
          %v931 = vld [vmem:[%s601 + $0x288] sm:%s594]
          %932 = vst [vmem:[%s602 + $0x290] sm:%s594] %v931
          %v933 = vld [vmem:[%s601 + $0x2a8] sm:%s594]
          %934 = vst [vmem:[%s602 + $0x294] sm:%s594] %v933
          %v935 = vld [vmem:[%s601 + $0x28c] sm:%s594]
          %936 = vst [vmem:[%s602 + $0x298] sm:%s594] %v935
          %v937 = vld [vmem:[%s601 + $0x2ac] sm:%s594]
          %938 = vst [vmem:[%s602 + $0x29c] sm:%s594] %v937
          %v939 = vld [vmem:[%s601 + $0x290] sm:%s594]
          %940 = vst [vmem:[%s602 + $0x2a0] sm:%s594] %v939
          %v941 = vld [vmem:[%s601 + $0x2b0] sm:%s594]
          %942 = vst [vmem:[%s602 + $0x2a4] sm:%s594] %v941
          %v943 = vld [vmem:[%s601 + $0x294] sm:%s594]
          %944 = vst [vmem:[%s602 + $0x2a8] sm:%s594] %v943
          %v945 = vld [vmem:[%s601 + $0x2b4] sm:%s594]
          %946 = vst [vmem:[%s602 + $0x2ac] sm:%s594] %v945
          %v947 = vld [vmem:[%s601 + $0x298] sm:%s594]
          %948 = vst [vmem:[%s602 + $0x2b0] sm:%s594] %v947
          %v949 = vld [vmem:[%s601 + $0x2b8] sm:%s594]
          %950 = vst [vmem:[%s602 + $0x2b4] sm:%s594] %v949
          %v951 = vld [vmem:[%s601 + $0x29c] sm:%s594]
          %952 = vst [vmem:[%s602 + $0x2b8] sm:%s594] %v951
          %v953 = vld [vmem:[%s601 + $0x2bc] sm:%s594]
          %954 = vst [vmem:[%s602 + $0x2bc] sm:%s594] %v953
          %v955 = vld [vmem:[%s601 + $0x2c0] sm:%s594]
          %956 = vst [vmem:[%s602 + $0x2c0] sm:%s594] %v955
          %v957 = vld [vmem:[%s601 + $0x2e0] sm:%s594]
          %958 = vst [vmem:[%s602 + $0x2c4] sm:%s594] %v957
          %v959 = vld [vmem:[%s601 + $0x2c4] sm:%s594]
          %960 = vst [vmem:[%s602 + $0x2c8] sm:%s594] %v959
          %v961 = vld [vmem:[%s601 + $0x2e4] sm:%s594]
          %962 = vst [vmem:[%s602 + $0x2cc] sm:%s594] %v961
          %v963 = vld [vmem:[%s601 + $0x2c8] sm:%s594]
          %964 = vst [vmem:[%s602 + $0x2d0] sm:%s594] %v963
          %v965 = vld [vmem:[%s601 + $0x2e8] sm:%s594]
          %966 = vst [vmem:[%s602 + $0x2d4] sm:%s594] %v965
          %v967 = vld [vmem:[%s601 + $0x2cc] sm:%s594]
          %968 = vst [vmem:[%s602 + $0x2d8] sm:%s594] %v967
          %v969 = vld [vmem:[%s601 + $0x2ec] sm:%s594]
          %970 = vst [vmem:[%s602 + $0x2dc] sm:%s594] %v969
          %v971 = vld [vmem:[%s601 + $0x2d0] sm:%s594]
          %972 = vst [vmem:[%s602 + $0x2e0] sm:%s594] %v971
          %v973 = vld [vmem:[%s601 + $0x2f0] sm:%s594]
          %974 = vst [vmem:[%s602 + $0x2e4] sm:%s594] %v973
          %v975 = vld [vmem:[%s601 + $0x2d4] sm:%s594]
          %976 = vst [vmem:[%s602 + $0x2e8] sm:%s594] %v975
          %v977 = vld [vmem:[%s601 + $0x2f4] sm:%s594]
          %978 = vst [vmem:[%s602 + $0x2ec] sm:%s594] %v977
          %v979 = vld [vmem:[%s601 + $0x2d8] sm:%s594]
          %980 = vst [vmem:[%s602 + $0x2f0] sm:%s594] %v979
          %v981 = vld [vmem:[%s601 + $0x2f8] sm:%s594]
          %982 = vst [vmem:[%s602 + $0x2f4] sm:%s594] %v981
          %v983 = vld [vmem:[%s601 + $0x2dc] sm:%s594]
          %984 = vst [vmem:[%s602 + $0x2f8] sm:%s594] %v983
          %v985 = vld [vmem:[%s601 + $0x2fc] sm:%s594]
          %986 = vst [vmem:[%s602 + $0x2fc] sm:%s594] %v985
          %v987 = vld [vmem:[%s601 + $0x300] sm:%s594]
          %988 = vst [vmem:[%s602 + $0x300] sm:%s594] %v987
          %v989 = vld [vmem:[%s601 + $0x320] sm:%s594]
          %990 = vst [vmem:[%s602 + $0x304] sm:%s594] %v989
          %v991 = vld [vmem:[%s601 + $0x304] sm:%s594]
          %992 = vst [vmem:[%s602 + $0x308] sm:%s594] %v991
          %v993 = vld [vmem:[%s601 + $0x324] sm:%s594]
          %994 = vst [vmem:[%s602 + $0x30c] sm:%s594] %v993
          %v995 = vld [vmem:[%s601 + $0x308] sm:%s594]
          %996 = vst [vmem:[%s602 + $0x310] sm:%s594] %v995
          %v997 = vld [vmem:[%s601 + $0x328] sm:%s594]
          %998 = vst [vmem:[%s602 + $0x314] sm:%s594] %v997
          %v999 = vld [vmem:[%s601 + $0x30c] sm:%s594]
          %1000 = vst [vmem:[%s602 + $0x318] sm:%s594] %v999
          %v1001 = vld [vmem:[%s601 + $0x32c] sm:%s594]
          %1002 = vst [vmem:[%s602 + $0x31c] sm:%s594] %v1001
          %v1003 = vld [vmem:[%s601 + $0x310] sm:%s594]
          %1004 = vst [vmem:[%s602 + $0x320] sm:%s594] %v1003
          %v1005 = vld [vmem:[%s601 + $0x330] sm:%s594]
          %1006 = vst [vmem:[%s602 + $0x324] sm:%s594] %v1005
          %v1007 = vld [vmem:[%s601 + $0x314] sm:%s594]
          %1008 = vst [vmem:[%s602 + $0x328] sm:%s594] %v1007
          %v1009 = vld [vmem:[%s601 + $0x334] sm:%s594]
          %1010 = vst [vmem:[%s602 + $0x32c] sm:%s594] %v1009
          %v1011 = vld [vmem:[%s601 + $0x318] sm:%s594]
          %1012 = vst [vmem:[%s602 + $0x330] sm:%s594] %v1011
          %v1013 = vld [vmem:[%s601 + $0x338] sm:%s594]
          %1014 = vst [vmem:[%s602 + $0x334] sm:%s594] %v1013
          %v1015 = vld [vmem:[%s601 + $0x31c] sm:%s594]
          %1016 = vst [vmem:[%s602 + $0x338] sm:%s594] %v1015
          %v1017 = vld [vmem:[%s601 + $0x33c] sm:%s594]
          %1018 = vst [vmem:[%s602 + $0x33c] sm:%s594] %v1017
          %v1019 = vld [vmem:[%s601 + $0x340] sm:%s594]
          %1020 = vst [vmem:[%s602 + $0x340] sm:%s594] %v1019
          %v1021 = vld [vmem:[%s601 + $0x360] sm:%s594]
          %1022 = vst [vmem:[%s602 + $0x344] sm:%s594] %v1021
          %v1023 = vld [vmem:[%s601 + $0x344] sm:%s594]
          %1024 = vst [vmem:[%s602 + $0x348] sm:%s594] %v1023
          %v1025 = vld [vmem:[%s601 + $0x364] sm:%s594]
          %1026 = vst [vmem:[%s602 + $0x34c] sm:%s594] %v1025
          %v1027 = vld [vmem:[%s601 + $0x348] sm:%s594]
          %1028 = vst [vmem:[%s602 + $0x350] sm:%s594] %v1027
          %v1029 = vld [vmem:[%s601 + $0x368] sm:%s594]
          %1030 = vst [vmem:[%s602 + $0x354] sm:%s594] %v1029
          %v1031 = vld [vmem:[%s601 + $0x34c] sm:%s594]
          %1032 = vst [vmem:[%s602 + $0x358] sm:%s594] %v1031
          %v1033 = vld [vmem:[%s601 + $0x36c] sm:%s594]
          %1034 = vst [vmem:[%s602 + $0x35c] sm:%s594] %v1033
          %v1035 = vld [vmem:[%s601 + $0x350] sm:%s594]
          %1036 = vst [vmem:[%s602 + $0x360] sm:%s594] %v1035
          %v1037 = vld [vmem:[%s601 + $0x370] sm:%s594]
          %1038 = vst [vmem:[%s602 + $0x364] sm:%s594] %v1037
          %v1039 = vld [vmem:[%s601 + $0x354] sm:%s594]
          %1040 = vst [vmem:[%s602 + $0x368] sm:%s594] %v1039
          %v1041 = vld [vmem:[%s601 + $0x374] sm:%s594]
          %1042 = vst [vmem:[%s602 + $0x36c] sm:%s594] %v1041
          %v1043 = vld [vmem:[%s601 + $0x358] sm:%s594]
          %1044 = vst [vmem:[%s602 + $0x370] sm:%s594] %v1043
          %v1045 = vld [vmem:[%s601 + $0x378] sm:%s594]
          %1046 = vst [vmem:[%s602 + $0x374] sm:%s594] %v1045
          %v1047 = vld [vmem:[%s601 + $0x35c] sm:%s594]
          %1048 = vst [vmem:[%s602 + $0x378] sm:%s594] %v1047
          %v1049 = vld [vmem:[%s601 + $0x37c] sm:%s594]
          %1050 = vst [vmem:[%s602 + $0x37c] sm:%s594] %v1049
          %v1051 = vld [vmem:[%s601 + $0x380] sm:%s594]
          %1052 = vst [vmem:[%s602 + $0x380] sm:%s594] %v1051
          %v1053 = vld [vmem:[%s601 + $0x3a0] sm:%s594]
          %1054 = vst [vmem:[%s602 + $0x384] sm:%s594] %v1053
          %v1055 = vld [vmem:[%s601 + $0x384] sm:%s594]
          %1056 = vst [vmem:[%s602 + $0x388] sm:%s594] %v1055
          %v1057 = vld [vmem:[%s601 + $0x3a4] sm:%s594]
          %1058 = vst [vmem:[%s602 + $0x38c] sm:%s594] %v1057
          %v1059 = vld [vmem:[%s601 + $0x388] sm:%s594]
          %1060 = vst [vmem:[%s602 + $0x390] sm:%s594] %v1059
          %v1061 = vld [vmem:[%s601 + $0x3a8] sm:%s594]
          %1062 = vst [vmem:[%s602 + $0x394] sm:%s594] %v1061
          %v1063 = vld [vmem:[%s601 + $0x38c] sm:%s594]
          %1064 = vst [vmem:[%s602 + $0x398] sm:%s594] %v1063
          %v1065 = vld [vmem:[%s601 + $0x3ac] sm:%s594]
          %1066 = vst [vmem:[%s602 + $0x39c] sm:%s594] %v1065
          %v1067 = vld [vmem:[%s601 + $0x390] sm:%s594]
          %1068 = vst [vmem:[%s602 + $0x3a0] sm:%s594] %v1067
          %v1069 = vld [vmem:[%s601 + $0x3b0] sm:%s594]
          %1070 = vst [vmem:[%s602 + $0x3a4] sm:%s594] %v1069
          %v1071 = vld [vmem:[%s601 + $0x394] sm:%s594]
          %1072 = vst [vmem:[%s602 + $0x3a8] sm:%s594] %v1071
          %v1073 = vld [vmem:[%s601 + $0x3b4] sm:%s594]
          %1074 = vst [vmem:[%s602 + $0x3ac] sm:%s594] %v1073
          %v1075 = vld [vmem:[%s601 + $0x398] sm:%s594]
          %1076 = vst [vmem:[%s602 + $0x3b0] sm:%s594] %v1075
          %v1077 = vld [vmem:[%s601 + $0x3b8] sm:%s594]
          %1078 = vst [vmem:[%s602 + $0x3b4] sm:%s594] %v1077
          %v1079 = vld [vmem:[%s601 + $0x39c] sm:%s594]
          %1080 = vst [vmem:[%s602 + $0x3b8] sm:%s594] %v1079
          %v1081 = vld [vmem:[%s601 + $0x3bc] sm:%s594]
          %1082 = vst [vmem:[%s602 + $0x3bc] sm:%s594] %v1081
          %v1083 = vld [vmem:[%s601 + $0x3c0] sm:%s594]
          %1084 = vst [vmem:[%s602 + $0x3c0] sm:%s594] %v1083
          %v1085 = vld [vmem:[%s601 + $0x3e0] sm:%s594]
          %1086 = vst [vmem:[%s602 + $0x3c4] sm:%s594] %v1085
          %v1087 = vld [vmem:[%s601 + $0x3c4] sm:%s594]
          %1088 = vst [vmem:[%s602 + $0x3c8] sm:%s594] %v1087
          %v1089 = vld [vmem:[%s601 + $0x3e4] sm:%s594]
          %1090 = vst [vmem:[%s602 + $0x3cc] sm:%s594] %v1089
          %v1091 = vld [vmem:[%s601 + $0x3c8] sm:%s594]
          %1092 = vst [vmem:[%s602 + $0x3d0] sm:%s594] %v1091
          %v1093 = vld [vmem:[%s601 + $0x3e8] sm:%s594]
          %1094 = vst [vmem:[%s602 + $0x3d4] sm:%s594] %v1093
          %v1095 = vld [vmem:[%s601 + $0x3cc] sm:%s594]
          %1096 = vst [vmem:[%s602 + $0x3d8] sm:%s594] %v1095
          %v1097 = vld [vmem:[%s601 + $0x3ec] sm:%s594]
          %1098 = vst [vmem:[%s602 + $0x3dc] sm:%s594] %v1097
          %v1099 = vld [vmem:[%s601 + $0x3d0] sm:%s594]
          %1100 = vst [vmem:[%s602 + $0x3e0] sm:%s594] %v1099
          %v1101 = vld [vmem:[%s601 + $0x3f0] sm:%s594]
          %1102 = vst [vmem:[%s602 + $0x3e4] sm:%s594] %v1101
          %v1103 = vld [vmem:[%s601 + $0x3d4] sm:%s594]
          %1104 = vst [vmem:[%s602 + $0x3e8] sm:%s594] %v1103
          %v1105 = vld [vmem:[%s601 + $0x3f4] sm:%s594]
          %1106 = vst [vmem:[%s602 + $0x3ec] sm:%s594] %v1105
          %v1107 = vld [vmem:[%s601 + $0x3d8] sm:%s594]
          %1108 = vst [vmem:[%s602 + $0x3f0] sm:%s594] %v1107
          %v1109 = vld [vmem:[%s601 + $0x3f8] sm:%s594]
          %1110 = vst [vmem:[%s602 + $0x3f4] sm:%s594] %v1109
          %v1111 = vld [vmem:[%s601 + $0x3dc] sm:%s594]
          %1112 = vst [vmem:[%s602 + $0x3f8] sm:%s594] %v1111
          %v1113 = vld [vmem:[%s601 + $0x3fc] sm:%s594]
          %1114 = vst [vmem:[%s602 + $0x3fc] sm:%s594] %v1113
        $region84: #{pose_encoder_forward.1} parent=71 // loop_footer
          %s600 = sadd.s32 1, %s596
        $region85: #{pose_encoder_forward.1} parent=71 // loop_footer_branch
          %595 = sbr.rel target = $region81
        $region86: #{pose_encoder_forward.1} parent=71 // loop_exit
          _
      $region72: #{pose_encoder_forward.1} parent=56 // pred_fallthru
        _
    $region57: #{pose_encoder_forward.1} parent=1 // pred_fallthru
      _
    // Predicated region
    $region58: #{pose_encoder_forward.1} parent=1 // pred_check
      %p52 = pneg %p48
    $region59: #{pose_encoder_forward.1} parent=1 // pred_check_branch
      %54 = sbr.rel (%p52) target = $region61
    $region60: #{pose_encoder_forward.1} parent=1 // pred_region
      %s55 = sshllo.u32 0, 4
      loop: start=0, step=1, limit=1
      $region62: #{pose_encoder_forward.1} parent=60 // loop_pre_header
        _
      $region63: #{pose_encoder_forward.1} parent=60 // loop_header
        %s57 = sphi 0, %s61
        %p58 = scmp.ge.s32.totalorder %s57, 1
        %s62 = sphi %s10, %s10
        %s63 = sphi [#allocation2], [#allocation2]
      $region64: #{pose_encoder_forward.1} parent=60 // loop_header_branch
        %60 = sbr.rel (%p58) target = $region68
      $region65: #{pose_encoder_forward.1} parent=60 // loop_body
        %v64 = vld [vmem:[%s62] sm:%s55]
        %65 = vst [vmem:[%s63] sm:%s55] %v64
        %v66 = vld [vmem:[%s62 + $0x20] sm:%s55]
        %67 = vst [vmem:[%s63 + $0x4] sm:%s55] %v66
        %v68 = vld [vmem:[%s62 + $0x4] sm:%s55]
        %69 = vst [vmem:[%s63 + $0x8] sm:%s55] %v68
        %v70 = vld [vmem:[%s62 + $0x24] sm:%s55]
        %71 = vst [vmem:[%s63 + $0xc] sm:%s55] %v70
        %v72 = vld [vmem:[%s62 + $0x8] sm:%s55]
        %73 = vst [vmem:[%s63 + $0x10] sm:%s55] %v72
        %v74 = vld [vmem:[%s62 + $0x28] sm:%s55]
        %75 = vst [vmem:[%s63 + $0x14] sm:%s55] %v74
        %v76 = vld [vmem:[%s62 + $0xc] sm:%s55]
        %77 = vst [vmem:[%s63 + $0x18] sm:%s55] %v76
        %v78 = vld [vmem:[%s62 + $0x2c] sm:%s55]
        %79 = vst [vmem:[%s63 + $0x1c] sm:%s55] %v78
        %v80 = vld [vmem:[%s62 + $0x10] sm:%s55]
        %81 = vst [vmem:[%s63 + $0x20] sm:%s55] %v80
        %v82 = vld [vmem:[%s62 + $0x30] sm:%s55]
        %83 = vst [vmem:[%s63 + $0x24] sm:%s55] %v82
        %v84 = vld [vmem:[%s62 + $0x14] sm:%s55]
        %85 = vst [vmem:[%s63 + $0x28] sm:%s55] %v84
        %v86 = vld [vmem:[%s62 + $0x34] sm:%s55]
        %87 = vst [vmem:[%s63 + $0x2c] sm:%s55] %v86
        %v88 = vld [vmem:[%s62 + $0x18] sm:%s55]
        %89 = vst [vmem:[%s63 + $0x30] sm:%s55] %v88
        %v90 = vld [vmem:[%s62 + $0x38] sm:%s55]
        %91 = vst [vmem:[%s63 + $0x34] sm:%s55] %v90
        %v92 = vld [vmem:[%s62 + $0x1c] sm:%s55]
        %93 = vst [vmem:[%s63 + $0x38] sm:%s55] %v92
        %v94 = vld [vmem:[%s62 + $0x3c] sm:%s55]
        %95 = vst [vmem:[%s63 + $0x3c] sm:%s55] %v94
        %v96 = vld [vmem:[%s62 + $0x40] sm:%s55]
        %97 = vst [vmem:[%s63 + $0x40] sm:%s55] %v96
        %v98 = vld [vmem:[%s62 + $0x60] sm:%s55]
        %99 = vst [vmem:[%s63 + $0x44] sm:%s55] %v98
        %v100 = vld [vmem:[%s62 + $0x44] sm:%s55]
        %101 = vst [vmem:[%s63 + $0x48] sm:%s55] %v100
        %v102 = vld [vmem:[%s62 + $0x64] sm:%s55]
        %103 = vst [vmem:[%s63 + $0x4c] sm:%s55] %v102
        %v104 = vld [vmem:[%s62 + $0x48] sm:%s55]
        %105 = vst [vmem:[%s63 + $0x50] sm:%s55] %v104
        %v106 = vld [vmem:[%s62 + $0x68] sm:%s55]
        %107 = vst [vmem:[%s63 + $0x54] sm:%s55] %v106
        %v108 = vld [vmem:[%s62 + $0x4c] sm:%s55]
        %109 = vst [vmem:[%s63 + $0x58] sm:%s55] %v108
        %v110 = vld [vmem:[%s62 + $0x6c] sm:%s55]
        %111 = vst [vmem:[%s63 + $0x5c] sm:%s55] %v110
        %v112 = vld [vmem:[%s62 + $0x50] sm:%s55]
        %113 = vst [vmem:[%s63 + $0x60] sm:%s55] %v112
        %v114 = vld [vmem:[%s62 + $0x70] sm:%s55]
        %115 = vst [vmem:[%s63 + $0x64] sm:%s55] %v114
        %v116 = vld [vmem:[%s62 + $0x54] sm:%s55]
        %117 = vst [vmem:[%s63 + $0x68] sm:%s55] %v116
        %v118 = vld [vmem:[%s62 + $0x74] sm:%s55]
        %119 = vst [vmem:[%s63 + $0x6c] sm:%s55] %v118
        %v120 = vld [vmem:[%s62 + $0x58] sm:%s55]
        %121 = vst [vmem:[%s63 + $0x70] sm:%s55] %v120
        %v122 = vld [vmem:[%s62 + $0x78] sm:%s55]
        %123 = vst [vmem:[%s63 + $0x74] sm:%s55] %v122
        %v124 = vld [vmem:[%s62 + $0x5c] sm:%s55]
        %125 = vst [vmem:[%s63 + $0x78] sm:%s55] %v124
        %v126 = vld [vmem:[%s62 + $0x7c] sm:%s55]
        %127 = vst [vmem:[%s63 + $0x7c] sm:%s55] %v126
        %v128 = vld [vmem:[%s62 + $0x80] sm:%s55]
        %129 = vst [vmem:[%s63 + $0x80] sm:%s55] %v128
        %v130 = vld [vmem:[%s62 + $0xa0] sm:%s55]
        %131 = vst [vmem:[%s63 + $0x84] sm:%s55] %v130
        %v132 = vld [vmem:[%s62 + $0x84] sm:%s55]
        %133 = vst [vmem:[%s63 + $0x88] sm:%s55] %v132
        %v134 = vld [vmem:[%s62 + $0xa4] sm:%s55]
        %135 = vst [vmem:[%s63 + $0x8c] sm:%s55] %v134
        %v136 = vld [vmem:[%s62 + $0x88] sm:%s55]
        %137 = vst [vmem:[%s63 + $0x90] sm:%s55] %v136
        %v138 = vld [vmem:[%s62 + $0xa8] sm:%s55]
        %139 = vst [vmem:[%s63 + $0x94] sm:%s55] %v138
        %v140 = vld [vmem:[%s62 + $0x8c] sm:%s55]
        %141 = vst [vmem:[%s63 + $0x98] sm:%s55] %v140
        %v142 = vld [vmem:[%s62 + $0xac] sm:%s55]
        %143 = vst [vmem:[%s63 + $0x9c] sm:%s55] %v142
        %v144 = vld [vmem:[%s62 + $0x90] sm:%s55]
        %145 = vst [vmem:[%s63 + $0xa0] sm:%s55] %v144
        %v146 = vld [vmem:[%s62 + $0xb0] sm:%s55]
        %147 = vst [vmem:[%s63 + $0xa4] sm:%s55] %v146
        %v148 = vld [vmem:[%s62 + $0x94] sm:%s55]
        %149 = vst [vmem:[%s63 + $0xa8] sm:%s55] %v148
        %v150 = vld [vmem:[%s62 + $0xb4] sm:%s55]
        %151 = vst [vmem:[%s63 + $0xac] sm:%s55] %v150
        %v152 = vld [vmem:[%s62 + $0x98] sm:%s55]
        %153 = vst [vmem:[%s63 + $0xb0] sm:%s55] %v152
        %v154 = vld [vmem:[%s62 + $0xb8] sm:%s55]
        %155 = vst [vmem:[%s63 + $0xb4] sm:%s55] %v154
        %v156 = vld [vmem:[%s62 + $0x9c] sm:%s55]
        %157 = vst [vmem:[%s63 + $0xb8] sm:%s55] %v156
        %v158 = vld [vmem:[%s62 + $0xbc] sm:%s55]
        %159 = vst [vmem:[%s63 + $0xbc] sm:%s55] %v158
        %v160 = vld [vmem:[%s62 + $0xc0] sm:%s55]
        %161 = vst [vmem:[%s63 + $0xc0] sm:%s55] %v160
        %v162 = vld [vmem:[%s62 + $0xe0] sm:%s55]
        %163 = vst [vmem:[%s63 + $0xc4] sm:%s55] %v162
        %v164 = vld [vmem:[%s62 + $0xc4] sm:%s55]
        %165 = vst [vmem:[%s63 + $0xc8] sm:%s55] %v164
        %v166 = vld [vmem:[%s62 + $0xe4] sm:%s55]
        %167 = vst [vmem:[%s63 + $0xcc] sm:%s55] %v166
        %v168 = vld [vmem:[%s62 + $0xc8] sm:%s55]
        %169 = vst [vmem:[%s63 + $0xd0] sm:%s55] %v168
        %v170 = vld [vmem:[%s62 + $0xe8] sm:%s55]
        %171 = vst [vmem:[%s63 + $0xd4] sm:%s55] %v170
        %v172 = vld [vmem:[%s62 + $0xcc] sm:%s55]
        %173 = vst [vmem:[%s63 + $0xd8] sm:%s55] %v172
        %v174 = vld [vmem:[%s62 + $0xec] sm:%s55]
        %175 = vst [vmem:[%s63 + $0xdc] sm:%s55] %v174
        %v176 = vld [vmem:[%s62 + $0xd0] sm:%s55]
        %177 = vst [vmem:[%s63 + $0xe0] sm:%s55] %v176
        %v178 = vld [vmem:[%s62 + $0xf0] sm:%s55]
        %179 = vst [vmem:[%s63 + $0xe4] sm:%s55] %v178
        %v180 = vld [vmem:[%s62 + $0xd4] sm:%s55]
        %181 = vst [vmem:[%s63 + $0xe8] sm:%s55] %v180
        %v182 = vld [vmem:[%s62 + $0xf4] sm:%s55]
        %183 = vst [vmem:[%s63 + $0xec] sm:%s55] %v182
        %v184 = vld [vmem:[%s62 + $0xd8] sm:%s55]
        %185 = vst [vmem:[%s63 + $0xf0] sm:%s55] %v184
        %v186 = vld [vmem:[%s62 + $0xf8] sm:%s55]
        %187 = vst [vmem:[%s63 + $0xf4] sm:%s55] %v186
        %v188 = vld [vmem:[%s62 + $0xdc] sm:%s55]
        %189 = vst [vmem:[%s63 + $0xf8] sm:%s55] %v188
        %v190 = vld [vmem:[%s62 + $0xfc] sm:%s55]
        %191 = vst [vmem:[%s63 + $0xfc] sm:%s55] %v190
        %v192 = vld [vmem:[%s62 + $0x100] sm:%s55]
        %193 = vst [vmem:[%s63 + $0x100] sm:%s55] %v192
        %v194 = vld [vmem:[%s62 + $0x120] sm:%s55]
        %195 = vst [vmem:[%s63 + $0x104] sm:%s55] %v194
        %v196 = vld [vmem:[%s62 + $0x104] sm:%s55]
        %197 = vst [vmem:[%s63 + $0x108] sm:%s55] %v196
        %v198 = vld [vmem:[%s62 + $0x124] sm:%s55]
        %199 = vst [vmem:[%s63 + $0x10c] sm:%s55] %v198
        %v200 = vld [vmem:[%s62 + $0x108] sm:%s55]
        %201 = vst [vmem:[%s63 + $0x110] sm:%s55] %v200
        %v202 = vld [vmem:[%s62 + $0x128] sm:%s55]
        %203 = vst [vmem:[%s63 + $0x114] sm:%s55] %v202
        %v204 = vld [vmem:[%s62 + $0x10c] sm:%s55]
        %205 = vst [vmem:[%s63 + $0x118] sm:%s55] %v204
        %v206 = vld [vmem:[%s62 + $0x12c] sm:%s55]
        %207 = vst [vmem:[%s63 + $0x11c] sm:%s55] %v206
        %v208 = vld [vmem:[%s62 + $0x110] sm:%s55]
        %209 = vst [vmem:[%s63 + $0x120] sm:%s55] %v208
        %v210 = vld [vmem:[%s62 + $0x130] sm:%s55]
        %211 = vst [vmem:[%s63 + $0x124] sm:%s55] %v210
        %v212 = vld [vmem:[%s62 + $0x114] sm:%s55]
        %213 = vst [vmem:[%s63 + $0x128] sm:%s55] %v212
        %v214 = vld [vmem:[%s62 + $0x134] sm:%s55]
        %215 = vst [vmem:[%s63 + $0x12c] sm:%s55] %v214
        %v216 = vld [vmem:[%s62 + $0x118] sm:%s55]
        %217 = vst [vmem:[%s63 + $0x130] sm:%s55] %v216
        %v218 = vld [vmem:[%s62 + $0x138] sm:%s55]
        %219 = vst [vmem:[%s63 + $0x134] sm:%s55] %v218
        %v220 = vld [vmem:[%s62 + $0x11c] sm:%s55]
        %221 = vst [vmem:[%s63 + $0x138] sm:%s55] %v220
        %v222 = vld [vmem:[%s62 + $0x13c] sm:%s55]
        %223 = vst [vmem:[%s63 + $0x13c] sm:%s55] %v222
        %v224 = vld [vmem:[%s62 + $0x140] sm:%s55]
        %225 = vst [vmem:[%s63 + $0x140] sm:%s55] %v224
        %v226 = vld [vmem:[%s62 + $0x160] sm:%s55]
        %227 = vst [vmem:[%s63 + $0x144] sm:%s55] %v226
        %v228 = vld [vmem:[%s62 + $0x144] sm:%s55]
        %229 = vst [vmem:[%s63 + $0x148] sm:%s55] %v228
        %v230 = vld [vmem:[%s62 + $0x164] sm:%s55]
        %231 = vst [vmem:[%s63 + $0x14c] sm:%s55] %v230
        %v232 = vld [vmem:[%s62 + $0x148] sm:%s55]
        %233 = vst [vmem:[%s63 + $0x150] sm:%s55] %v232
        %v234 = vld [vmem:[%s62 + $0x168] sm:%s55]
        %235 = vst [vmem:[%s63 + $0x154] sm:%s55] %v234
        %v236 = vld [vmem:[%s62 + $0x14c] sm:%s55]
        %237 = vst [vmem:[%s63 + $0x158] sm:%s55] %v236
        %v238 = vld [vmem:[%s62 + $0x16c] sm:%s55]
        %239 = vst [vmem:[%s63 + $0x15c] sm:%s55] %v238
        %v240 = vld [vmem:[%s62 + $0x150] sm:%s55]
        %241 = vst [vmem:[%s63 + $0x160] sm:%s55] %v240
        %v242 = vld [vmem:[%s62 + $0x170] sm:%s55]
        %243 = vst [vmem:[%s63 + $0x164] sm:%s55] %v242
        %v244 = vld [vmem:[%s62 + $0x154] sm:%s55]
        %245 = vst [vmem:[%s63 + $0x168] sm:%s55] %v244
        %v246 = vld [vmem:[%s62 + $0x174] sm:%s55]
        %247 = vst [vmem:[%s63 + $0x16c] sm:%s55] %v246
        %v248 = vld [vmem:[%s62 + $0x158] sm:%s55]
        %249 = vst [vmem:[%s63 + $0x170] sm:%s55] %v248
        %v250 = vld [vmem:[%s62 + $0x178] sm:%s55]
        %251 = vst [vmem:[%s63 + $0x174] sm:%s55] %v250
        %v252 = vld [vmem:[%s62 + $0x15c] sm:%s55]
        %253 = vst [vmem:[%s63 + $0x178] sm:%s55] %v252
        %v254 = vld [vmem:[%s62 + $0x17c] sm:%s55]
        %255 = vst [vmem:[%s63 + $0x17c] sm:%s55] %v254
        %v256 = vld [vmem:[%s62 + $0x180] sm:%s55]
        %257 = vst [vmem:[%s63 + $0x180] sm:%s55] %v256
        %v258 = vld [vmem:[%s62 + $0x1a0] sm:%s55]
        %259 = vst [vmem:[%s63 + $0x184] sm:%s55] %v258
        %v260 = vld [vmem:[%s62 + $0x184] sm:%s55]
        %261 = vst [vmem:[%s63 + $0x188] sm:%s55] %v260
        %v262 = vld [vmem:[%s62 + $0x1a4] sm:%s55]
        %263 = vst [vmem:[%s63 + $0x18c] sm:%s55] %v262
        %v264 = vld [vmem:[%s62 + $0x188] sm:%s55]
        %265 = vst [vmem:[%s63 + $0x190] sm:%s55] %v264
        %v266 = vld [vmem:[%s62 + $0x1a8] sm:%s55]
        %267 = vst [vmem:[%s63 + $0x194] sm:%s55] %v266
        %v268 = vld [vmem:[%s62 + $0x18c] sm:%s55]
        %269 = vst [vmem:[%s63 + $0x198] sm:%s55] %v268
        %v270 = vld [vmem:[%s62 + $0x1ac] sm:%s55]
        %271 = vst [vmem:[%s63 + $0x19c] sm:%s55] %v270
        %v272 = vld [vmem:[%s62 + $0x190] sm:%s55]
        %273 = vst [vmem:[%s63 + $0x1a0] sm:%s55] %v272
        %v274 = vld [vmem:[%s62 + $0x1b0] sm:%s55]
        %275 = vst [vmem:[%s63 + $0x1a4] sm:%s55] %v274
        %v276 = vld [vmem:[%s62 + $0x194] sm:%s55]
        %277 = vst [vmem:[%s63 + $0x1a8] sm:%s55] %v276
        %v278 = vld [vmem:[%s62 + $0x1b4] sm:%s55]
        %279 = vst [vmem:[%s63 + $0x1ac] sm:%s55] %v278
        %v280 = vld [vmem:[%s62 + $0x198] sm:%s55]
        %281 = vst [vmem:[%s63 + $0x1b0] sm:%s55] %v280
        %v282 = vld [vmem:[%s62 + $0x1b8] sm:%s55]
        %283 = vst [vmem:[%s63 + $0x1b4] sm:%s55] %v282
        %v284 = vld [vmem:[%s62 + $0x19c] sm:%s55]
        %285 = vst [vmem:[%s63 + $0x1b8] sm:%s55] %v284
        %v286 = vld [vmem:[%s62 + $0x1bc] sm:%s55]
        %287 = vst [vmem:[%s63 + $0x1bc] sm:%s55] %v286
        %v288 = vld [vmem:[%s62 + $0x1c0] sm:%s55]
        %289 = vst [vmem:[%s63 + $0x1c0] sm:%s55] %v288
        %v290 = vld [vmem:[%s62 + $0x1e0] sm:%s55]
        %291 = vst [vmem:[%s63 + $0x1c4] sm:%s55] %v290
        %v292 = vld [vmem:[%s62 + $0x1c4] sm:%s55]
        %293 = vst [vmem:[%s63 + $0x1c8] sm:%s55] %v292
        %v294 = vld [vmem:[%s62 + $0x1e4] sm:%s55]
        %295 = vst [vmem:[%s63 + $0x1cc] sm:%s55] %v294
        %v296 = vld [vmem:[%s62 + $0x1c8] sm:%s55]
        %297 = vst [vmem:[%s63 + $0x1d0] sm:%s55] %v296
        %v298 = vld [vmem:[%s62 + $0x1e8] sm:%s55]
        %299 = vst [vmem:[%s63 + $0x1d4] sm:%s55] %v298
        %v300 = vld [vmem:[%s62 + $0x1cc] sm:%s55]
        %301 = vst [vmem:[%s63 + $0x1d8] sm:%s55] %v300
        %v302 = vld [vmem:[%s62 + $0x1ec] sm:%s55]
        %303 = vst [vmem:[%s63 + $0x1dc] sm:%s55] %v302
        %v304 = vld [vmem:[%s62 + $0x1d0] sm:%s55]
        %305 = vst [vmem:[%s63 + $0x1e0] sm:%s55] %v304
        %v306 = vld [vmem:[%s62 + $0x1f0] sm:%s55]
        %307 = vst [vmem:[%s63 + $0x1e4] sm:%s55] %v306
        %v308 = vld [vmem:[%s62 + $0x1d4] sm:%s55]
        %309 = vst [vmem:[%s63 + $0x1e8] sm:%s55] %v308
        %v310 = vld [vmem:[%s62 + $0x1f4] sm:%s55]
        %311 = vst [vmem:[%s63 + $0x1ec] sm:%s55] %v310
        %v312 = vld [vmem:[%s62 + $0x1d8] sm:%s55]
        %313 = vst [vmem:[%s63 + $0x1f0] sm:%s55] %v312
        %v314 = vld [vmem:[%s62 + $0x1f8] sm:%s55]
        %315 = vst [vmem:[%s63 + $0x1f4] sm:%s55] %v314
        %v316 = vld [vmem:[%s62 + $0x1dc] sm:%s55]
        %317 = vst [vmem:[%s63 + $0x1f8] sm:%s55] %v316
        %v318 = vld [vmem:[%s62 + $0x1fc] sm:%s55]
        %319 = vst [vmem:[%s63 + $0x1fc] sm:%s55] %v318
        %v320 = vld [vmem:[%s62 + $0x200] sm:%s55]
        %321 = vst [vmem:[%s63 + $0x200] sm:%s55] %v320
        %v322 = vld [vmem:[%s62 + $0x220] sm:%s55]
        %323 = vst [vmem:[%s63 + $0x204] sm:%s55] %v322
        %v324 = vld [vmem:[%s62 + $0x204] sm:%s55]
        %325 = vst [vmem:[%s63 + $0x208] sm:%s55] %v324
        %v326 = vld [vmem:[%s62 + $0x224] sm:%s55]
        %327 = vst [vmem:[%s63 + $0x20c] sm:%s55] %v326
        %v328 = vld [vmem:[%s62 + $0x208] sm:%s55]
        %329 = vst [vmem:[%s63 + $0x210] sm:%s55] %v328
        %v330 = vld [vmem:[%s62 + $0x228] sm:%s55]
        %331 = vst [vmem:[%s63 + $0x214] sm:%s55] %v330
        %v332 = vld [vmem:[%s62 + $0x20c] sm:%s55]
        %333 = vst [vmem:[%s63 + $0x218] sm:%s55] %v332
        %v334 = vld [vmem:[%s62 + $0x22c] sm:%s55]
        %335 = vst [vmem:[%s63 + $0x21c] sm:%s55] %v334
        %v336 = vld [vmem:[%s62 + $0x210] sm:%s55]
        %337 = vst [vmem:[%s63 + $0x220] sm:%s55] %v336
        %v338 = vld [vmem:[%s62 + $0x230] sm:%s55]
        %339 = vst [vmem:[%s63 + $0x224] sm:%s55] %v338
        %v340 = vld [vmem:[%s62 + $0x214] sm:%s55]
        %341 = vst [vmem:[%s63 + $0x228] sm:%s55] %v340
        %v342 = vld [vmem:[%s62 + $0x234] sm:%s55]
        %343 = vst [vmem:[%s63 + $0x22c] sm:%s55] %v342
        %v344 = vld [vmem:[%s62 + $0x218] sm:%s55]
        %345 = vst [vmem:[%s63 + $0x230] sm:%s55] %v344
        %v346 = vld [vmem:[%s62 + $0x238] sm:%s55]
        %347 = vst [vmem:[%s63 + $0x234] sm:%s55] %v346
        %v348 = vld [vmem:[%s62 + $0x21c] sm:%s55]
        %349 = vst [vmem:[%s63 + $0x238] sm:%s55] %v348
        %v350 = vld [vmem:[%s62 + $0x23c] sm:%s55]
        %351 = vst [vmem:[%s63 + $0x23c] sm:%s55] %v350
        %v352 = vld [vmem:[%s62 + $0x240] sm:%s55]
        %353 = vst [vmem:[%s63 + $0x240] sm:%s55] %v352
        %v354 = vld [vmem:[%s62 + $0x260] sm:%s55]
        %355 = vst [vmem:[%s63 + $0x244] sm:%s55] %v354
        %v356 = vld [vmem:[%s62 + $0x244] sm:%s55]
        %357 = vst [vmem:[%s63 + $0x248] sm:%s55] %v356
        %v358 = vld [vmem:[%s62 + $0x264] sm:%s55]
        %359 = vst [vmem:[%s63 + $0x24c] sm:%s55] %v358
        %v360 = vld [vmem:[%s62 + $0x248] sm:%s55]
        %361 = vst [vmem:[%s63 + $0x250] sm:%s55] %v360
        %v362 = vld [vmem:[%s62 + $0x268] sm:%s55]
        %363 = vst [vmem:[%s63 + $0x254] sm:%s55] %v362
        %v364 = vld [vmem:[%s62 + $0x24c] sm:%s55]
        %365 = vst [vmem:[%s63 + $0x258] sm:%s55] %v364
        %v366 = vld [vmem:[%s62 + $0x26c] sm:%s55]
        %367 = vst [vmem:[%s63 + $0x25c] sm:%s55] %v366
        %v368 = vld [vmem:[%s62 + $0x250] sm:%s55]
        %369 = vst [vmem:[%s63 + $0x260] sm:%s55] %v368
        %v370 = vld [vmem:[%s62 + $0x270] sm:%s55]
        %371 = vst [vmem:[%s63 + $0x264] sm:%s55] %v370
        %v372 = vld [vmem:[%s62 + $0x254] sm:%s55]
        %373 = vst [vmem:[%s63 + $0x268] sm:%s55] %v372
        %v374 = vld [vmem:[%s62 + $0x274] sm:%s55]
        %375 = vst [vmem:[%s63 + $0x26c] sm:%s55] %v374
        %v376 = vld [vmem:[%s62 + $0x258] sm:%s55]
        %377 = vst [vmem:[%s63 + $0x270] sm:%s55] %v376
        %v378 = vld [vmem:[%s62 + $0x278] sm:%s55]
        %379 = vst [vmem:[%s63 + $0x274] sm:%s55] %v378
        %v380 = vld [vmem:[%s62 + $0x25c] sm:%s55]
        %381 = vst [vmem:[%s63 + $0x278] sm:%s55] %v380
        %v382 = vld [vmem:[%s62 + $0x27c] sm:%s55]
        %383 = vst [vmem:[%s63 + $0x27c] sm:%s55] %v382
        %v384 = vld [vmem:[%s62 + $0x280] sm:%s55]
        %385 = vst [vmem:[%s63 + $0x280] sm:%s55] %v384
        %v386 = vld [vmem:[%s62 + $0x2a0] sm:%s55]
        %387 = vst [vmem:[%s63 + $0x284] sm:%s55] %v386
        %v388 = vld [vmem:[%s62 + $0x284] sm:%s55]
        %389 = vst [vmem:[%s63 + $0x288] sm:%s55] %v388
        %v390 = vld [vmem:[%s62 + $0x2a4] sm:%s55]
        %391 = vst [vmem:[%s63 + $0x28c] sm:%s55] %v390
        %v392 = vld [vmem:[%s62 + $0x288] sm:%s55]
        %393 = vst [vmem:[%s63 + $0x290] sm:%s55] %v392
        %v394 = vld [vmem:[%s62 + $0x2a8] sm:%s55]
        %395 = vst [vmem:[%s63 + $0x294] sm:%s55] %v394
        %v396 = vld [vmem:[%s62 + $0x28c] sm:%s55]
        %397 = vst [vmem:[%s63 + $0x298] sm:%s55] %v396
        %v398 = vld [vmem:[%s62 + $0x2ac] sm:%s55]
        %399 = vst [vmem:[%s63 + $0x29c] sm:%s55] %v398
        %v400 = vld [vmem:[%s62 + $0x290] sm:%s55]
        %401 = vst [vmem:[%s63 + $0x2a0] sm:%s55] %v400
        %v402 = vld [vmem:[%s62 + $0x2b0] sm:%s55]
        %403 = vst [vmem:[%s63 + $0x2a4] sm:%s55] %v402
        %v404 = vld [vmem:[%s62 + $0x294] sm:%s55]
        %405 = vst [vmem:[%s63 + $0x2a8] sm:%s55] %v404
        %v406 = vld [vmem:[%s62 + $0x2b4] sm:%s55]
        %407 = vst [vmem:[%s63 + $0x2ac] sm:%s55] %v406
        %v408 = vld [vmem:[%s62 + $0x298] sm:%s55]
        %409 = vst [vmem:[%s63 + $0x2b0] sm:%s55] %v408
        %v410 = vld [vmem:[%s62 + $0x2b8] sm:%s55]
        %411 = vst [vmem:[%s63 + $0x2b4] sm:%s55] %v410
        %v412 = vld [vmem:[%s62 + $0x29c] sm:%s55]
        %413 = vst [vmem:[%s63 + $0x2b8] sm:%s55] %v412
        %v414 = vld [vmem:[%s62 + $0x2bc] sm:%s55]
        %415 = vst [vmem:[%s63 + $0x2bc] sm:%s55] %v414
        %v416 = vld [vmem:[%s62 + $0x2c0] sm:%s55]
        %417 = vst [vmem:[%s63 + $0x2c0] sm:%s55] %v416
        %v418 = vld [vmem:[%s62 + $0x2e0] sm:%s55]
        %419 = vst [vmem:[%s63 + $0x2c4] sm:%s55] %v418
        %v420 = vld [vmem:[%s62 + $0x2c4] sm:%s55]
        %421 = vst [vmem:[%s63 + $0x2c8] sm:%s55] %v420
        %v422 = vld [vmem:[%s62 + $0x2e4] sm:%s55]
        %423 = vst [vmem:[%s63 + $0x2cc] sm:%s55] %v422
        %v424 = vld [vmem:[%s62 + $0x2c8] sm:%s55]
        %425 = vst [vmem:[%s63 + $0x2d0] sm:%s55] %v424
        %v426 = vld [vmem:[%s62 + $0x2e8] sm:%s55]
        %427 = vst [vmem:[%s63 + $0x2d4] sm:%s55] %v426
        %v428 = vld [vmem:[%s62 + $0x2cc] sm:%s55]
        %429 = vst [vmem:[%s63 + $0x2d8] sm:%s55] %v428
        %v430 = vld [vmem:[%s62 + $0x2ec] sm:%s55]
        %431 = vst [vmem:[%s63 + $0x2dc] sm:%s55] %v430
        %v432 = vld [vmem:[%s62 + $0x2d0] sm:%s55]
        %433 = vst [vmem:[%s63 + $0x2e0] sm:%s55] %v432
        %v434 = vld [vmem:[%s62 + $0x2f0] sm:%s55]
        %435 = vst [vmem:[%s63 + $0x2e4] sm:%s55] %v434
        %v436 = vld [vmem:[%s62 + $0x2d4] sm:%s55]
        %437 = vst [vmem:[%s63 + $0x2e8] sm:%s55] %v436
        %v438 = vld [vmem:[%s62 + $0x2f4] sm:%s55]
        %439 = vst [vmem:[%s63 + $0x2ec] sm:%s55] %v438
        %v440 = vld [vmem:[%s62 + $0x2d8] sm:%s55]
        %441 = vst [vmem:[%s63 + $0x2f0] sm:%s55] %v440
        %v442 = vld [vmem:[%s62 + $0x2f8] sm:%s55]
        %443 = vst [vmem:[%s63 + $0x2f4] sm:%s55] %v442
        %v444 = vld [vmem:[%s62 + $0x2dc] sm:%s55]
        %445 = vst [vmem:[%s63 + $0x2f8] sm:%s55] %v444
        %v446 = vld [vmem:[%s62 + $0x2fc] sm:%s55]
        %447 = vst [vmem:[%s63 + $0x2fc] sm:%s55] %v446
        %v448 = vld [vmem:[%s62 + $0x300] sm:%s55]
        %449 = vst [vmem:[%s63 + $0x300] sm:%s55] %v448
        %v450 = vld [vmem:[%s62 + $0x320] sm:%s55]
        %451 = vst [vmem:[%s63 + $0x304] sm:%s55] %v450
        %v452 = vld [vmem:[%s62 + $0x304] sm:%s55]
        %453 = vst [vmem:[%s63 + $0x308] sm:%s55] %v452
        %v454 = vld [vmem:[%s62 + $0x324] sm:%s55]
        %455 = vst [vmem:[%s63 + $0x30c] sm:%s55] %v454
        %v456 = vld [vmem:[%s62 + $0x308] sm:%s55]
        %457 = vst [vmem:[%s63 + $0x310] sm:%s55] %v456
        %v458 = vld [vmem:[%s62 + $0x328] sm:%s55]
        %459 = vst [vmem:[%s63 + $0x314] sm:%s55] %v458
        %v460 = vld [vmem:[%s62 + $0x30c] sm:%s55]
        %461 = vst [vmem:[%s63 + $0x318] sm:%s55] %v460
        %v462 = vld [vmem:[%s62 + $0x32c] sm:%s55]
        %463 = vst [vmem:[%s63 + $0x31c] sm:%s55] %v462
        %v464 = vld [vmem:[%s62 + $0x310] sm:%s55]
        %465 = vst [vmem:[%s63 + $0x320] sm:%s55] %v464
        %v466 = vld [vmem:[%s62 + $0x330] sm:%s55]
        %467 = vst [vmem:[%s63 + $0x324] sm:%s55] %v466
        %v468 = vld [vmem:[%s62 + $0x314] sm:%s55]
        %469 = vst [vmem:[%s63 + $0x328] sm:%s55] %v468
        %v470 = vld [vmem:[%s62 + $0x334] sm:%s55]
        %471 = vst [vmem:[%s63 + $0x32c] sm:%s55] %v470
        %v472 = vld [vmem:[%s62 + $0x318] sm:%s55]
        %473 = vst [vmem:[%s63 + $0x330] sm:%s55] %v472
        %v474 = vld [vmem:[%s62 + $0x338] sm:%s55]
        %475 = vst [vmem:[%s63 + $0x334] sm:%s55] %v474
        %v476 = vld [vmem:[%s62 + $0x31c] sm:%s55]
        %477 = vst [vmem:[%s63 + $0x338] sm:%s55] %v476
        %v478 = vld [vmem:[%s62 + $0x33c] sm:%s55]
        %479 = vst [vmem:[%s63 + $0x33c] sm:%s55] %v478
        %v480 = vld [vmem:[%s62 + $0x340] sm:%s55]
        %481 = vst [vmem:[%s63 + $0x340] sm:%s55] %v480
        %v482 = vld [vmem:[%s62 + $0x360] sm:%s55]
        %483 = vst [vmem:[%s63 + $0x344] sm:%s55] %v482
        %v484 = vld [vmem:[%s62 + $0x344] sm:%s55]
        %485 = vst [vmem:[%s63 + $0x348] sm:%s55] %v484
        %v486 = vld [vmem:[%s62 + $0x364] sm:%s55]
        %487 = vst [vmem:[%s63 + $0x34c] sm:%s55] %v486
        %v488 = vld [vmem:[%s62 + $0x348] sm:%s55]
        %489 = vst [vmem:[%s63 + $0x350] sm:%s55] %v488
        %v490 = vld [vmem:[%s62 + $0x368] sm:%s55]
        %491 = vst [vmem:[%s63 + $0x354] sm:%s55] %v490
        %v492 = vld [vmem:[%s62 + $0x34c] sm:%s55]
        %493 = vst [vmem:[%s63 + $0x358] sm:%s55] %v492
        %v494 = vld [vmem:[%s62 + $0x36c] sm:%s55]
        %495 = vst [vmem:[%s63 + $0x35c] sm:%s55] %v494
        %v496 = vld [vmem:[%s62 + $0x350] sm:%s55]
        %497 = vst [vmem:[%s63 + $0x360] sm:%s55] %v496
        %v498 = vld [vmem:[%s62 + $0x370] sm:%s55]
        %499 = vst [vmem:[%s63 + $0x364] sm:%s55] %v498
        %v500 = vld [vmem:[%s62 + $0x354] sm:%s55]
        %501 = vst [vmem:[%s63 + $0x368] sm:%s55] %v500
        %v502 = vld [vmem:[%s62 + $0x374] sm:%s55]
        %503 = vst [vmem:[%s63 + $0x36c] sm:%s55] %v502
        %v504 = vld [vmem:[%s62 + $0x358] sm:%s55]
        %505 = vst [vmem:[%s63 + $0x370] sm:%s55] %v504
        %v506 = vld [vmem:[%s62 + $0x378] sm:%s55]
        %507 = vst [vmem:[%s63 + $0x374] sm:%s55] %v506
        %v508 = vld [vmem:[%s62 + $0x35c] sm:%s55]
        %509 = vst [vmem:[%s63 + $0x378] sm:%s55] %v508
        %v510 = vld [vmem:[%s62 + $0x37c] sm:%s55]
        %511 = vst [vmem:[%s63 + $0x37c] sm:%s55] %v510
        %v512 = vld [vmem:[%s62 + $0x380] sm:%s55]
        %513 = vst [vmem:[%s63 + $0x380] sm:%s55] %v512
        %v514 = vld [vmem:[%s62 + $0x3a0] sm:%s55]
        %515 = vst [vmem:[%s63 + $0x384] sm:%s55] %v514
        %v516 = vld [vmem:[%s62 + $0x384] sm:%s55]
        %517 = vst [vmem:[%s63 + $0x388] sm:%s55] %v516
        %v518 = vld [vmem:[%s62 + $0x3a4] sm:%s55]
        %519 = vst [vmem:[%s63 + $0x38c] sm:%s55] %v518
        %v520 = vld [vmem:[%s62 + $0x388] sm:%s55]
        %521 = vst [vmem:[%s63 + $0x390] sm:%s55] %v520
        %v522 = vld [vmem:[%s62 + $0x3a8] sm:%s55]
        %523 = vst [vmem:[%s63 + $0x394] sm:%s55] %v522
        %v524 = vld [vmem:[%s62 + $0x38c] sm:%s55]
        %525 = vst [vmem:[%s63 + $0x398] sm:%s55] %v524
        %v526 = vld [vmem:[%s62 + $0x3ac] sm:%s55]
        %527 = vst [vmem:[%s63 + $0x39c] sm:%s55] %v526
        %v528 = vld [vmem:[%s62 + $0x390] sm:%s55]
        %529 = vst [vmem:[%s63 + $0x3a0] sm:%s55] %v528
        %v530 = vld [vmem:[%s62 + $0x3b0] sm:%s55]
        %531 = vst [vmem:[%s63 + $0x3a4] sm:%s55] %v530
        %v532 = vld [vmem:[%s62 + $0x394] sm:%s55]
        %533 = vst [vmem:[%s63 + $0x3a8] sm:%s55] %v532
        %v534 = vld [vmem:[%s62 + $0x3b4] sm:%s55]
        %535 = vst [vmem:[%s63 + $0x3ac] sm:%s55] %v534
        %v536 = vld [vmem:[%s62 + $0x398] sm:%s55]
        %537 = vst [vmem:[%s63 + $0x3b0] sm:%s55] %v536
        %v538 = vld [vmem:[%s62 + $0x3b8] sm:%s55]
        %539 = vst [vmem:[%s63 + $0x3b4] sm:%s55] %v538
        %v540 = vld [vmem:[%s62 + $0x39c] sm:%s55]
        %541 = vst [vmem:[%s63 + $0x3b8] sm:%s55] %v540
        %v542 = vld [vmem:[%s62 + $0x3bc] sm:%s55]
        %543 = vst [vmem:[%s63 + $0x3bc] sm:%s55] %v542
        %v544 = vld [vmem:[%s62 + $0x3c0] sm:%s55]
        %545 = vst [vmem:[%s63 + $0x3c0] sm:%s55] %v544
        %v546 = vld [vmem:[%s62 + $0x3e0] sm:%s55]
        %547 = vst [vmem:[%s63 + $0x3c4] sm:%s55] %v546
        %v548 = vld [vmem:[%s62 + $0x3c4] sm:%s55]
        %549 = vst [vmem:[%s63 + $0x3c8] sm:%s55] %v548
        %v550 = vld [vmem:[%s62 + $0x3e4] sm:%s55]
        %551 = vst [vmem:[%s63 + $0x3cc] sm:%s55] %v550
        %v552 = vld [vmem:[%s62 + $0x3c8] sm:%s55]
        %553 = vst [vmem:[%s63 + $0x3d0] sm:%s55] %v552
        %v554 = vld [vmem:[%s62 + $0x3e8] sm:%s55]
        %555 = vst [vmem:[%s63 + $0x3d4] sm:%s55] %v554
        %v556 = vld [vmem:[%s62 + $0x3cc] sm:%s55]
        %557 = vst [vmem:[%s63 + $0x3d8] sm:%s55] %v556
        %v558 = vld [vmem:[%s62 + $0x3ec] sm:%s55]
        %559 = vst [vmem:[%s63 + $0x3dc] sm:%s55] %v558
        %v560 = vld [vmem:[%s62 + $0x3d0] sm:%s55]
        %561 = vst [vmem:[%s63 + $0x3e0] sm:%s55] %v560
        %v562 = vld [vmem:[%s62 + $0x3f0] sm:%s55]
        %563 = vst [vmem:[%s63 + $0x3e4] sm:%s55] %v562
        %v564 = vld [vmem:[%s62 + $0x3d4] sm:%s55]
        %565 = vst [vmem:[%s63 + $0x3e8] sm:%s55] %v564
        %v566 = vld [vmem:[%s62 + $0x3f4] sm:%s55]
        %567 = vst [vmem:[%s63 + $0x3ec] sm:%s55] %v566
        %v568 = vld [vmem:[%s62 + $0x3d8] sm:%s55]
        %569 = vst [vmem:[%s63 + $0x3f0] sm:%s55] %v568
        %v570 = vld [vmem:[%s62 + $0x3f8] sm:%s55]
        %571 = vst [vmem:[%s63 + $0x3f4] sm:%s55] %v570
        %v572 = vld [vmem:[%s62 + $0x3dc] sm:%s55]
        %573 = vst [vmem:[%s63 + $0x3f8] sm:%s55] %v572
        %v574 = vld [vmem:[%s62 + $0x3fc] sm:%s55]
        %575 = vst [vmem:[%s63 + $0x3fc] sm:%s55] %v574
      $region66: #{pose_encoder_forward.1} parent=60 // loop_footer
        %s61 = sadd.s32 1, %s57
      $region67: #{pose_encoder_forward.1} parent=60 // loop_footer_branch
        %56 = sbr.rel target = $region63
      $region68: #{pose_encoder_forward.1} parent=60 // loop_exit
        _
    $region61: #{pose_encoder_forward.1} parent=1 // pred_fallthru
      _
    // Predicated region
    $region87: #{pose_encoder_forward.1} parent=1 // pred_check
      _
    $region88: #{pose_encoder_forward.1} parent=1 // pred_check_branch
      %1117 = sbr.rel (0) target = $region90
    $region89: #{pose_encoder_forward.1} parent=1 // pred_region
      %1118 = vsyncadd [#allocation4], 16384
    $region90: #{pose_encoder_forward.1} parent=1 // pred_fallthru
      _
    %s1119 = scalar_lea.sflag [#allocation4], 1
    %p1121 = scmp.lt.u32.totalorder 4, 8
    %p1122 = pneg %p1121
    // Predicated region
    $region91: #{pose_encoder_forward.1} parent=1 // pred_check
      _
    $region92: #{pose_encoder_forward.1} parent=1 // pred_check_branch
      %1124 = sbr.rel (%p1121) target = $region94
    $region93: #{pose_encoder_forward.1} parent=1 // pred_region
      %s2161 = sand.u32 4, 7
      %p2162 = scmp.eq.s32.totalorder %s2161, 0
      // Predicated region
      $region106: #{pose_encoder_forward.1} parent=93 // pred_check
        %p2163 = pneg %p2162
      $region107: #{pose_encoder_forward.1} parent=93 // pred_check_branch
        %2165 = sbr.rel (%p2163) target = $region109
      $region108: #{pose_encoder_forward.1} parent=93 // pred_region
        %s2166 = sshrl.u32 4, 3
        // While loop
        $region110: #{pose_encoder_forward.1} parent=108 // loop_pre_header
          _
        $region111: #{pose_encoder_forward.1} parent=108 // loop_header
          %s2170 = sphi 0, %s2172
          %p2171 = scmp.ge.s32.totalorder %s2170, %s2166
          %s2175 = sphi 0, %s3204
          %s2176 = sphi %s13, %s3207
          %s2177 = sphi [#allocation3], %s3208
        $region112: #{pose_encoder_forward.1} parent=108 // loop_header_branch
          %2174 = sbr.rel (%p2171) target = $region116
        $region113: #{pose_encoder_forward.1} parent=108 // loop_body
          %v2178 = vld [vmem:[%s2176] sm:$0xff]
          %2179 = vst [vmem:[%s2177] sm:$0xff] %v2178
          %v2180 = vld [vmem:[%s2176 + $0x10] sm:$0xff]
          %2181 = vst [vmem:[%s2177 + $0x4] sm:$0xff] %v2180
          %v2182 = vld [vmem:[%s2176 + $0x4] sm:$0xff]
          %2183 = vst [vmem:[%s2177 + $0x8] sm:$0xff] %v2182
          %v2184 = vld [vmem:[%s2176 + $0x14] sm:$0xff]
          %2185 = vst [vmem:[%s2177 + $0xc] sm:$0xff] %v2184
          %v2186 = vld [vmem:[%s2176 + $0x8] sm:$0xff]
          %2187 = vst [vmem:[%s2177 + $0x10] sm:$0xff] %v2186
          %v2188 = vld [vmem:[%s2176 + $0x18] sm:$0xff]
          %2189 = vst [vmem:[%s2177 + $0x14] sm:$0xff] %v2188
          %v2190 = vld [vmem:[%s2176 + $0xc] sm:$0xff]
          %2191 = vst [vmem:[%s2177 + $0x18] sm:$0xff] %v2190
          %v2192 = vld [vmem:[%s2176 + $0x1c] sm:$0xff]
          %2193 = vst [vmem:[%s2177 + $0x1c] sm:$0xff] %v2192
          %v2194 = vld [vmem:[%s2176 + $0x20] sm:$0xff]
          %2195 = vst [vmem:[%s2177 + $0x20] sm:$0xff] %v2194
          %v2196 = vld [vmem:[%s2176 + $0x30] sm:$0xff]
          %2197 = vst [vmem:[%s2177 + $0x24] sm:$0xff] %v2196
          %v2198 = vld [vmem:[%s2176 + $0x24] sm:$0xff]
          %2199 = vst [vmem:[%s2177 + $0x28] sm:$0xff] %v2198
          %v2200 = vld [vmem:[%s2176 + $0x34] sm:$0xff]
          %2201 = vst [vmem:[%s2177 + $0x2c] sm:$0xff] %v2200
          %v2202 = vld [vmem:[%s2176 + $0x28] sm:$0xff]
          %2203 = vst [vmem:[%s2177 + $0x30] sm:$0xff] %v2202
          %v2204 = vld [vmem:[%s2176 + $0x38] sm:$0xff]
          %2205 = vst [vmem:[%s2177 + $0x34] sm:$0xff] %v2204
          %v2206 = vld [vmem:[%s2176 + $0x2c] sm:$0xff]
          %2207 = vst [vmem:[%s2177 + $0x38] sm:$0xff] %v2206
          %v2208 = vld [vmem:[%s2176 + $0x3c] sm:$0xff]
          %2209 = vst [vmem:[%s2177 + $0x3c] sm:$0xff] %v2208
          %v2210 = vld [vmem:[%s2176 + $0x40] sm:$0xff]
          %2211 = vst [vmem:[%s2177 + $0x40] sm:$0xff] %v2210
          %v2212 = vld [vmem:[%s2176 + $0x50] sm:$0xff]
          %2213 = vst [vmem:[%s2177 + $0x44] sm:$0xff] %v2212
          %v2214 = vld [vmem:[%s2176 + $0x44] sm:$0xff]
          %2215 = vst [vmem:[%s2177 + $0x48] sm:$0xff] %v2214
          %v2216 = vld [vmem:[%s2176 + $0x54] sm:$0xff]
          %2217 = vst [vmem:[%s2177 + $0x4c] sm:$0xff] %v2216
          %v2218 = vld [vmem:[%s2176 + $0x48] sm:$0xff]
          %2219 = vst [vmem:[%s2177 + $0x50] sm:$0xff] %v2218
          %v2220 = vld [vmem:[%s2176 + $0x58] sm:$0xff]
          %2221 = vst [vmem:[%s2177 + $0x54] sm:$0xff] %v2220
          %v2222 = vld [vmem:[%s2176 + $0x4c] sm:$0xff]
          %2223 = vst [vmem:[%s2177 + $0x58] sm:$0xff] %v2222
          %v2224 = vld [vmem:[%s2176 + $0x5c] sm:$0xff]
          %2225 = vst [vmem:[%s2177 + $0x5c] sm:$0xff] %v2224
          %v2226 = vld [vmem:[%s2176 + $0x60] sm:$0xff]
          %2227 = vst [vmem:[%s2177 + $0x60] sm:$0xff] %v2226
          %v2228 = vld [vmem:[%s2176 + $0x70] sm:$0xff]
          %2229 = vst [vmem:[%s2177 + $0x64] sm:$0xff] %v2228
          %v2230 = vld [vmem:[%s2176 + $0x64] sm:$0xff]
          %2231 = vst [vmem:[%s2177 + $0x68] sm:$0xff] %v2230
          %v2232 = vld [vmem:[%s2176 + $0x74] sm:$0xff]
          %2233 = vst [vmem:[%s2177 + $0x6c] sm:$0xff] %v2232
          %v2234 = vld [vmem:[%s2176 + $0x68] sm:$0xff]
          %2235 = vst [vmem:[%s2177 + $0x70] sm:$0xff] %v2234
          %v2236 = vld [vmem:[%s2176 + $0x78] sm:$0xff]
          %2237 = vst [vmem:[%s2177 + $0x74] sm:$0xff] %v2236
          %v2238 = vld [vmem:[%s2176 + $0x6c] sm:$0xff]
          %2239 = vst [vmem:[%s2177 + $0x78] sm:$0xff] %v2238
          %v2240 = vld [vmem:[%s2176 + $0x7c] sm:$0xff]
          %2241 = vst [vmem:[%s2177 + $0x7c] sm:$0xff] %v2240
          %v2242 = vld [vmem:[%s2176 + $0x80] sm:$0xff]
          %2243 = vst [vmem:[%s2177 + $0x80] sm:$0xff] %v2242
          %v2244 = vld [vmem:[%s2176 + $0x90] sm:$0xff]
          %2245 = vst [vmem:[%s2177 + $0x84] sm:$0xff] %v2244
          %v2246 = vld [vmem:[%s2176 + $0x84] sm:$0xff]
          %2247 = vst [vmem:[%s2177 + $0x88] sm:$0xff] %v2246
          %v2248 = vld [vmem:[%s2176 + $0x94] sm:$0xff]
          %2249 = vst [vmem:[%s2177 + $0x8c] sm:$0xff] %v2248
          %v2250 = vld [vmem:[%s2176 + $0x88] sm:$0xff]
          %2251 = vst [vmem:[%s2177 + $0x90] sm:$0xff] %v2250
          %v2252 = vld [vmem:[%s2176 + $0x98] sm:$0xff]
          %2253 = vst [vmem:[%s2177 + $0x94] sm:$0xff] %v2252
          %v2254 = vld [vmem:[%s2176 + $0x8c] sm:$0xff]
          %2255 = vst [vmem:[%s2177 + $0x98] sm:$0xff] %v2254
          %v2256 = vld [vmem:[%s2176 + $0x9c] sm:$0xff]
          %2257 = vst [vmem:[%s2177 + $0x9c] sm:$0xff] %v2256
          %v2258 = vld [vmem:[%s2176 + $0xa0] sm:$0xff]
          %2259 = vst [vmem:[%s2177 + $0xa0] sm:$0xff] %v2258
          %v2260 = vld [vmem:[%s2176 + $0xb0] sm:$0xff]
          %2261 = vst [vmem:[%s2177 + $0xa4] sm:$0xff] %v2260
          %v2262 = vld [vmem:[%s2176 + $0xa4] sm:$0xff]
          %2263 = vst [vmem:[%s2177 + $0xa8] sm:$0xff] %v2262
          %v2264 = vld [vmem:[%s2176 + $0xb4] sm:$0xff]
          %2265 = vst [vmem:[%s2177 + $0xac] sm:$0xff] %v2264
          %v2266 = vld [vmem:[%s2176 + $0xa8] sm:$0xff]
          %2267 = vst [vmem:[%s2177 + $0xb0] sm:$0xff] %v2266
          %v2268 = vld [vmem:[%s2176 + $0xb8] sm:$0xff]
          %2269 = vst [vmem:[%s2177 + $0xb4] sm:$0xff] %v2268
          %v2270 = vld [vmem:[%s2176 + $0xac] sm:$0xff]
          %2271 = vst [vmem:[%s2177 + $0xb8] sm:$0xff] %v2270
          %v2272 = vld [vmem:[%s2176 + $0xbc] sm:$0xff]
          %2273 = vst [vmem:[%s2177 + $0xbc] sm:$0xff] %v2272
          %v2274 = vld [vmem:[%s2176 + $0xc0] sm:$0xff]
          %2275 = vst [vmem:[%s2177 + $0xc0] sm:$0xff] %v2274
          %v2276 = vld [vmem:[%s2176 + $0xd0] sm:$0xff]
          %2277 = vst [vmem:[%s2177 + $0xc4] sm:$0xff] %v2276
          %v2278 = vld [vmem:[%s2176 + $0xc4] sm:$0xff]
          %2279 = vst [vmem:[%s2177 + $0xc8] sm:$0xff] %v2278
          %v2280 = vld [vmem:[%s2176 + $0xd4] sm:$0xff]
          %2281 = vst [vmem:[%s2177 + $0xcc] sm:$0xff] %v2280
          %v2282 = vld [vmem:[%s2176 + $0xc8] sm:$0xff]
          %2283 = vst [vmem:[%s2177 + $0xd0] sm:$0xff] %v2282
          %v2284 = vld [vmem:[%s2176 + $0xd8] sm:$0xff]
          %2285 = vst [vmem:[%s2177 + $0xd4] sm:$0xff] %v2284
          %v2286 = vld [vmem:[%s2176 + $0xcc] sm:$0xff]
          %2287 = vst [vmem:[%s2177 + $0xd8] sm:$0xff] %v2286
          %v2288 = vld [vmem:[%s2176 + $0xdc] sm:$0xff]
          %2289 = vst [vmem:[%s2177 + $0xdc] sm:$0xff] %v2288
          %v2290 = vld [vmem:[%s2176 + $0xe0] sm:$0xff]
          %2291 = vst [vmem:[%s2177 + $0xe0] sm:$0xff] %v2290
          %v2292 = vld [vmem:[%s2176 + $0xf0] sm:$0xff]
          %2293 = vst [vmem:[%s2177 + $0xe4] sm:$0xff] %v2292
          %v2294 = vld [vmem:[%s2176 + $0xe4] sm:$0xff]
          %2295 = vst [vmem:[%s2177 + $0xe8] sm:$0xff] %v2294
          %v2296 = vld [vmem:[%s2176 + $0xf4] sm:$0xff]
          %2297 = vst [vmem:[%s2177 + $0xec] sm:$0xff] %v2296
          %v2298 = vld [vmem:[%s2176 + $0xe8] sm:$0xff]
          %2299 = vst [vmem:[%s2177 + $0xf0] sm:$0xff] %v2298
          %v2300 = vld [vmem:[%s2176 + $0xf8] sm:$0xff]
          %2301 = vst [vmem:[%s2177 + $0xf4] sm:$0xff] %v2300
          %v2302 = vld [vmem:[%s2176 + $0xec] sm:$0xff]
          %2303 = vst [vmem:[%s2177 + $0xf8] sm:$0xff] %v2302
          %v2304 = vld [vmem:[%s2176 + $0xfc] sm:$0xff]
          %2305 = vst [vmem:[%s2177 + $0xfc] sm:$0xff] %v2304
          %v2306 = vld [vmem:[%s2176 + $0x100] sm:$0xff]
          %2307 = vst [vmem:[%s2177 + $0x100] sm:$0xff] %v2306
          %v2308 = vld [vmem:[%s2176 + $0x110] sm:$0xff]
          %2309 = vst [vmem:[%s2177 + $0x104] sm:$0xff] %v2308
          %v2310 = vld [vmem:[%s2176 + $0x104] sm:$0xff]
          %2311 = vst [vmem:[%s2177 + $0x108] sm:$0xff] %v2310
          %v2312 = vld [vmem:[%s2176 + $0x114] sm:$0xff]
          %2313 = vst [vmem:[%s2177 + $0x10c] sm:$0xff] %v2312
          %v2314 = vld [vmem:[%s2176 + $0x108] sm:$0xff]
          %2315 = vst [vmem:[%s2177 + $0x110] sm:$0xff] %v2314
          %v2316 = vld [vmem:[%s2176 + $0x118] sm:$0xff]
          %2317 = vst [vmem:[%s2177 + $0x114] sm:$0xff] %v2316
          %v2318 = vld [vmem:[%s2176 + $0x10c] sm:$0xff]
          %2319 = vst [vmem:[%s2177 + $0x118] sm:$0xff] %v2318
          %v2320 = vld [vmem:[%s2176 + $0x11c] sm:$0xff]
          %2321 = vst [vmem:[%s2177 + $0x11c] sm:$0xff] %v2320
          %v2322 = vld [vmem:[%s2176 + $0x120] sm:$0xff]
          %2323 = vst [vmem:[%s2177 + $0x120] sm:$0xff] %v2322
          %v2324 = vld [vmem:[%s2176 + $0x130] sm:$0xff]
          %2325 = vst [vmem:[%s2177 + $0x124] sm:$0xff] %v2324
          %v2326 = vld [vmem:[%s2176 + $0x124] sm:$0xff]
          %2327 = vst [vmem:[%s2177 + $0x128] sm:$0xff] %v2326
          %v2328 = vld [vmem:[%s2176 + $0x134] sm:$0xff]
          %2329 = vst [vmem:[%s2177 + $0x12c] sm:$0xff] %v2328
          %v2330 = vld [vmem:[%s2176 + $0x128] sm:$0xff]
          %2331 = vst [vmem:[%s2177 + $0x130] sm:$0xff] %v2330
          %v2332 = vld [vmem:[%s2176 + $0x138] sm:$0xff]
          %2333 = vst [vmem:[%s2177 + $0x134] sm:$0xff] %v2332
          %v2334 = vld [vmem:[%s2176 + $0x12c] sm:$0xff]
          %2335 = vst [vmem:[%s2177 + $0x138] sm:$0xff] %v2334
          %v2336 = vld [vmem:[%s2176 + $0x13c] sm:$0xff]
          %2337 = vst [vmem:[%s2177 + $0x13c] sm:$0xff] %v2336
          %v2338 = vld [vmem:[%s2176 + $0x140] sm:$0xff]
          %2339 = vst [vmem:[%s2177 + $0x140] sm:$0xff] %v2338
          %v2340 = vld [vmem:[%s2176 + $0x150] sm:$0xff]
          %2341 = vst [vmem:[%s2177 + $0x144] sm:$0xff] %v2340
          %v2342 = vld [vmem:[%s2176 + $0x144] sm:$0xff]
          %2343 = vst [vmem:[%s2177 + $0x148] sm:$0xff] %v2342
          %v2344 = vld [vmem:[%s2176 + $0x154] sm:$0xff]
          %2345 = vst [vmem:[%s2177 + $0x14c] sm:$0xff] %v2344
          %v2346 = vld [vmem:[%s2176 + $0x148] sm:$0xff]
          %2347 = vst [vmem:[%s2177 + $0x150] sm:$0xff] %v2346
          %v2348 = vld [vmem:[%s2176 + $0x158] sm:$0xff]
          %2349 = vst [vmem:[%s2177 + $0x154] sm:$0xff] %v2348
          %v2350 = vld [vmem:[%s2176 + $0x14c] sm:$0xff]
          %2351 = vst [vmem:[%s2177 + $0x158] sm:$0xff] %v2350
          %v2352 = vld [vmem:[%s2176 + $0x15c] sm:$0xff]
          %2353 = vst [vmem:[%s2177 + $0x15c] sm:$0xff] %v2352
          %v2354 = vld [vmem:[%s2176 + $0x160] sm:$0xff]
          %2355 = vst [vmem:[%s2177 + $0x160] sm:$0xff] %v2354
          %v2356 = vld [vmem:[%s2176 + $0x170] sm:$0xff]
          %2357 = vst [vmem:[%s2177 + $0x164] sm:$0xff] %v2356
          %v2358 = vld [vmem:[%s2176 + $0x164] sm:$0xff]
          %2359 = vst [vmem:[%s2177 + $0x168] sm:$0xff] %v2358
          %v2360 = vld [vmem:[%s2176 + $0x174] sm:$0xff]
          %2361 = vst [vmem:[%s2177 + $0x16c] sm:$0xff] %v2360
          %v2362 = vld [vmem:[%s2176 + $0x168] sm:$0xff]
          %2363 = vst [vmem:[%s2177 + $0x170] sm:$0xff] %v2362
          %v2364 = vld [vmem:[%s2176 + $0x178] sm:$0xff]
          %2365 = vst [vmem:[%s2177 + $0x174] sm:$0xff] %v2364
          %v2366 = vld [vmem:[%s2176 + $0x16c] sm:$0xff]
          %2367 = vst [vmem:[%s2177 + $0x178] sm:$0xff] %v2366
          %v2368 = vld [vmem:[%s2176 + $0x17c] sm:$0xff]
          %2369 = vst [vmem:[%s2177 + $0x17c] sm:$0xff] %v2368
          %v2370 = vld [vmem:[%s2176 + $0x180] sm:$0xff]
          %2371 = vst [vmem:[%s2177 + $0x180] sm:$0xff] %v2370
          %v2372 = vld [vmem:[%s2176 + $0x190] sm:$0xff]
          %2373 = vst [vmem:[%s2177 + $0x184] sm:$0xff] %v2372
          %v2374 = vld [vmem:[%s2176 + $0x184] sm:$0xff]
          %2375 = vst [vmem:[%s2177 + $0x188] sm:$0xff] %v2374
          %v2376 = vld [vmem:[%s2176 + $0x194] sm:$0xff]
          %2377 = vst [vmem:[%s2177 + $0x18c] sm:$0xff] %v2376
          %v2378 = vld [vmem:[%s2176 + $0x188] sm:$0xff]
          %2379 = vst [vmem:[%s2177 + $0x190] sm:$0xff] %v2378
          %v2380 = vld [vmem:[%s2176 + $0x198] sm:$0xff]
          %2381 = vst [vmem:[%s2177 + $0x194] sm:$0xff] %v2380
          %v2382 = vld [vmem:[%s2176 + $0x18c] sm:$0xff]
          %2383 = vst [vmem:[%s2177 + $0x198] sm:$0xff] %v2382
          %v2384 = vld [vmem:[%s2176 + $0x19c] sm:$0xff]
          %2385 = vst [vmem:[%s2177 + $0x19c] sm:$0xff] %v2384
          %v2386 = vld [vmem:[%s2176 + $0x1a0] sm:$0xff]
          %2387 = vst [vmem:[%s2177 + $0x1a0] sm:$0xff] %v2386
          %v2388 = vld [vmem:[%s2176 + $0x1b0] sm:$0xff]
          %2389 = vst [vmem:[%s2177 + $0x1a4] sm:$0xff] %v2388
          %v2390 = vld [vmem:[%s2176 + $0x1a4] sm:$0xff]
          %2391 = vst [vmem:[%s2177 + $0x1a8] sm:$0xff] %v2390
          %v2392 = vld [vmem:[%s2176 + $0x1b4] sm:$0xff]
          %2393 = vst [vmem:[%s2177 + $0x1ac] sm:$0xff] %v2392
          %v2394 = vld [vmem:[%s2176 + $0x1a8] sm:$0xff]
          %2395 = vst [vmem:[%s2177 + $0x1b0] sm:$0xff] %v2394
          %v2396 = vld [vmem:[%s2176 + $0x1b8] sm:$0xff]
          %2397 = vst [vmem:[%s2177 + $0x1b4] sm:$0xff] %v2396
          %v2398 = vld [vmem:[%s2176 + $0x1ac] sm:$0xff]
          %2399 = vst [vmem:[%s2177 + $0x1b8] sm:$0xff] %v2398
          %v2400 = vld [vmem:[%s2176 + $0x1bc] sm:$0xff]
          %2401 = vst [vmem:[%s2177 + $0x1bc] sm:$0xff] %v2400
          %v2402 = vld [vmem:[%s2176 + $0x1c0] sm:$0xff]
          %2403 = vst [vmem:[%s2177 + $0x1c0] sm:$0xff] %v2402
          %v2404 = vld [vmem:[%s2176 + $0x1d0] sm:$0xff]
          %2405 = vst [vmem:[%s2177 + $0x1c4] sm:$0xff] %v2404
          %v2406 = vld [vmem:[%s2176 + $0x1c4] sm:$0xff]
          %2407 = vst [vmem:[%s2177 + $0x1c8] sm:$0xff] %v2406
          %v2408 = vld [vmem:[%s2176 + $0x1d4] sm:$0xff]
          %2409 = vst [vmem:[%s2177 + $0x1cc] sm:$0xff] %v2408
          %v2410 = vld [vmem:[%s2176 + $0x1c8] sm:$0xff]
          %2411 = vst [vmem:[%s2177 + $0x1d0] sm:$0xff] %v2410
          %v2412 = vld [vmem:[%s2176 + $0x1d8] sm:$0xff]
          %2413 = vst [vmem:[%s2177 + $0x1d4] sm:$0xff] %v2412
          %v2414 = vld [vmem:[%s2176 + $0x1cc] sm:$0xff]
          %2415 = vst [vmem:[%s2177 + $0x1d8] sm:$0xff] %v2414
          %v2416 = vld [vmem:[%s2176 + $0x1dc] sm:$0xff]
          %2417 = vst [vmem:[%s2177 + $0x1dc] sm:$0xff] %v2416
          %v2418 = vld [vmem:[%s2176 + $0x1e0] sm:$0xff]
          %2419 = vst [vmem:[%s2177 + $0x1e0] sm:$0xff] %v2418
          %v2420 = vld [vmem:[%s2176 + $0x1f0] sm:$0xff]
          %2421 = vst [vmem:[%s2177 + $0x1e4] sm:$0xff] %v2420
          %v2422 = vld [vmem:[%s2176 + $0x1e4] sm:$0xff]
          %2423 = vst [vmem:[%s2177 + $0x1e8] sm:$0xff] %v2422
          %v2424 = vld [vmem:[%s2176 + $0x1f4] sm:$0xff]
          %2425 = vst [vmem:[%s2177 + $0x1ec] sm:$0xff] %v2424
          %v2426 = vld [vmem:[%s2176 + $0x1e8] sm:$0xff]
          %2427 = vst [vmem:[%s2177 + $0x1f0] sm:$0xff] %v2426
          %v2428 = vld [vmem:[%s2176 + $0x1f8] sm:$0xff]
          %2429 = vst [vmem:[%s2177 + $0x1f4] sm:$0xff] %v2428
          %v2430 = vld [vmem:[%s2176 + $0x1ec] sm:$0xff]
          %2431 = vst [vmem:[%s2177 + $0x1f8] sm:$0xff] %v2430
          %v2432 = vld [vmem:[%s2176 + $0x1fc] sm:$0xff]
          %2433 = vst [vmem:[%s2177 + $0x1fc] sm:$0xff] %v2432
          %v2434 = vld [vmem:[%s2176 + $0x200] sm:$0xff]
          %2435 = vst [vmem:[%s2177 + $0x200] sm:$0xff] %v2434
          %v2436 = vld [vmem:[%s2176 + $0x210] sm:$0xff]
          %2437 = vst [vmem:[%s2177 + $0x204] sm:$0xff] %v2436
          %v2438 = vld [vmem:[%s2176 + $0x204] sm:$0xff]
          %2439 = vst [vmem:[%s2177 + $0x208] sm:$0xff] %v2438
          %v2440 = vld [vmem:[%s2176 + $0x214] sm:$0xff]
          %2441 = vst [vmem:[%s2177 + $0x20c] sm:$0xff] %v2440
          %v2442 = vld [vmem:[%s2176 + $0x208] sm:$0xff]
          %2443 = vst [vmem:[%s2177 + $0x210] sm:$0xff] %v2442
          %v2444 = vld [vmem:[%s2176 + $0x218] sm:$0xff]
          %2445 = vst [vmem:[%s2177 + $0x214] sm:$0xff] %v2444
          %v2446 = vld [vmem:[%s2176 + $0x20c] sm:$0xff]
          %2447 = vst [vmem:[%s2177 + $0x218] sm:$0xff] %v2446
          %v2448 = vld [vmem:[%s2176 + $0x21c] sm:$0xff]
          %2449 = vst [vmem:[%s2177 + $0x21c] sm:$0xff] %v2448
          %v2450 = vld [vmem:[%s2176 + $0x220] sm:$0xff]
          %2451 = vst [vmem:[%s2177 + $0x220] sm:$0xff] %v2450
          %v2452 = vld [vmem:[%s2176 + $0x230] sm:$0xff]
          %2453 = vst [vmem:[%s2177 + $0x224] sm:$0xff] %v2452
          %v2454 = vld [vmem:[%s2176 + $0x224] sm:$0xff]
          %2455 = vst [vmem:[%s2177 + $0x228] sm:$0xff] %v2454
          %v2456 = vld [vmem:[%s2176 + $0x234] sm:$0xff]
          %2457 = vst [vmem:[%s2177 + $0x22c] sm:$0xff] %v2456
          %v2458 = vld [vmem:[%s2176 + $0x228] sm:$0xff]
          %2459 = vst [vmem:[%s2177 + $0x230] sm:$0xff] %v2458
          %v2460 = vld [vmem:[%s2176 + $0x238] sm:$0xff]
          %2461 = vst [vmem:[%s2177 + $0x234] sm:$0xff] %v2460
          %v2462 = vld [vmem:[%s2176 + $0x22c] sm:$0xff]
          %2463 = vst [vmem:[%s2177 + $0x238] sm:$0xff] %v2462
          %v2464 = vld [vmem:[%s2176 + $0x23c] sm:$0xff]
          %2465 = vst [vmem:[%s2177 + $0x23c] sm:$0xff] %v2464
          %v2466 = vld [vmem:[%s2176 + $0x240] sm:$0xff]
          %2467 = vst [vmem:[%s2177 + $0x240] sm:$0xff] %v2466
          %v2468 = vld [vmem:[%s2176 + $0x250] sm:$0xff]
          %2469 = vst [vmem:[%s2177 + $0x244] sm:$0xff] %v2468
          %v2470 = vld [vmem:[%s2176 + $0x244] sm:$0xff]
          %2471 = vst [vmem:[%s2177 + $0x248] sm:$0xff] %v2470
          %v2472 = vld [vmem:[%s2176 + $0x254] sm:$0xff]
          %2473 = vst [vmem:[%s2177 + $0x24c] sm:$0xff] %v2472
          %v2474 = vld [vmem:[%s2176 + $0x248] sm:$0xff]
          %2475 = vst [vmem:[%s2177 + $0x250] sm:$0xff] %v2474
          %v2476 = vld [vmem:[%s2176 + $0x258] sm:$0xff]
          %2477 = vst [vmem:[%s2177 + $0x254] sm:$0xff] %v2476
          %v2478 = vld [vmem:[%s2176 + $0x24c] sm:$0xff]
          %2479 = vst [vmem:[%s2177 + $0x258] sm:$0xff] %v2478
          %v2480 = vld [vmem:[%s2176 + $0x25c] sm:$0xff]
          %2481 = vst [vmem:[%s2177 + $0x25c] sm:$0xff] %v2480
          %v2482 = vld [vmem:[%s2176 + $0x260] sm:$0xff]
          %2483 = vst [vmem:[%s2177 + $0x260] sm:$0xff] %v2482
          %v2484 = vld [vmem:[%s2176 + $0x270] sm:$0xff]
          %2485 = vst [vmem:[%s2177 + $0x264] sm:$0xff] %v2484
          %v2486 = vld [vmem:[%s2176 + $0x264] sm:$0xff]
          %2487 = vst [vmem:[%s2177 + $0x268] sm:$0xff] %v2486
          %v2488 = vld [vmem:[%s2176 + $0x274] sm:$0xff]
          %2489 = vst [vmem:[%s2177 + $0x26c] sm:$0xff] %v2488
          %v2490 = vld [vmem:[%s2176 + $0x268] sm:$0xff]
          %2491 = vst [vmem:[%s2177 + $0x270] sm:$0xff] %v2490
          %v2492 = vld [vmem:[%s2176 + $0x278] sm:$0xff]
          %2493 = vst [vmem:[%s2177 + $0x274] sm:$0xff] %v2492
          %v2494 = vld [vmem:[%s2176 + $0x26c] sm:$0xff]
          %2495 = vst [vmem:[%s2177 + $0x278] sm:$0xff] %v2494
          %v2496 = vld [vmem:[%s2176 + $0x27c] sm:$0xff]
          %2497 = vst [vmem:[%s2177 + $0x27c] sm:$0xff] %v2496
          %v2498 = vld [vmem:[%s2176 + $0x280] sm:$0xff]
          %2499 = vst [vmem:[%s2177 + $0x280] sm:$0xff] %v2498
          %v2500 = vld [vmem:[%s2176 + $0x290] sm:$0xff]
          %2501 = vst [vmem:[%s2177 + $0x284] sm:$0xff] %v2500
          %v2502 = vld [vmem:[%s2176 + $0x284] sm:$0xff]
          %2503 = vst [vmem:[%s2177 + $0x288] sm:$0xff] %v2502
          %v2504 = vld [vmem:[%s2176 + $0x294] sm:$0xff]
          %2505 = vst [vmem:[%s2177 + $0x28c] sm:$0xff] %v2504
          %v2506 = vld [vmem:[%s2176 + $0x288] sm:$0xff]
          %2507 = vst [vmem:[%s2177 + $0x290] sm:$0xff] %v2506
          %v2508 = vld [vmem:[%s2176 + $0x298] sm:$0xff]
          %2509 = vst [vmem:[%s2177 + $0x294] sm:$0xff] %v2508
          %v2510 = vld [vmem:[%s2176 + $0x28c] sm:$0xff]
          %2511 = vst [vmem:[%s2177 + $0x298] sm:$0xff] %v2510
          %v2512 = vld [vmem:[%s2176 + $0x29c] sm:$0xff]
          %2513 = vst [vmem:[%s2177 + $0x29c] sm:$0xff] %v2512
          %v2514 = vld [vmem:[%s2176 + $0x2a0] sm:$0xff]
          %2515 = vst [vmem:[%s2177 + $0x2a0] sm:$0xff] %v2514
          %v2516 = vld [vmem:[%s2176 + $0x2b0] sm:$0xff]
          %2517 = vst [vmem:[%s2177 + $0x2a4] sm:$0xff] %v2516
          %v2518 = vld [vmem:[%s2176 + $0x2a4] sm:$0xff]
          %2519 = vst [vmem:[%s2177 + $0x2a8] sm:$0xff] %v2518
          %v2520 = vld [vmem:[%s2176 + $0x2b4] sm:$0xff]
          %2521 = vst [vmem:[%s2177 + $0x2ac] sm:$0xff] %v2520
          %v2522 = vld [vmem:[%s2176 + $0x2a8] sm:$0xff]
          %2523 = vst [vmem:[%s2177 + $0x2b0] sm:$0xff] %v2522
          %v2524 = vld [vmem:[%s2176 + $0x2b8] sm:$0xff]
          %2525 = vst [vmem:[%s2177 + $0x2b4] sm:$0xff] %v2524
          %v2526 = vld [vmem:[%s2176 + $0x2ac] sm:$0xff]
          %2527 = vst [vmem:[%s2177 + $0x2b8] sm:$0xff] %v2526
          %v2528 = vld [vmem:[%s2176 + $0x2bc] sm:$0xff]
          %2529 = vst [vmem:[%s2177 + $0x2bc] sm:$0xff] %v2528
          %v2530 = vld [vmem:[%s2176 + $0x2c0] sm:$0xff]
          %2531 = vst [vmem:[%s2177 + $0x2c0] sm:$0xff] %v2530
          %v2532 = vld [vmem:[%s2176 + $0x2d0] sm:$0xff]
          %2533 = vst [vmem:[%s2177 + $0x2c4] sm:$0xff] %v2532
          %v2534 = vld [vmem:[%s2176 + $0x2c4] sm:$0xff]
          %2535 = vst [vmem:[%s2177 + $0x2c8] sm:$0xff] %v2534
          %v2536 = vld [vmem:[%s2176 + $0x2d4] sm:$0xff]
          %2537 = vst [vmem:[%s2177 + $0x2cc] sm:$0xff] %v2536
          %v2538 = vld [vmem:[%s2176 + $0x2c8] sm:$0xff]
          %2539 = vst [vmem:[%s2177 + $0x2d0] sm:$0xff] %v2538
          %v2540 = vld [vmem:[%s2176 + $0x2d8] sm:$0xff]
          %2541 = vst [vmem:[%s2177 + $0x2d4] sm:$0xff] %v2540
          %v2542 = vld [vmem:[%s2176 + $0x2cc] sm:$0xff]
          %2543 = vst [vmem:[%s2177 + $0x2d8] sm:$0xff] %v2542
          %v2544 = vld [vmem:[%s2176 + $0x2dc] sm:$0xff]
          %2545 = vst [vmem:[%s2177 + $0x2dc] sm:$0xff] %v2544
          %v2546 = vld [vmem:[%s2176 + $0x2e0] sm:$0xff]
          %2547 = vst [vmem:[%s2177 + $0x2e0] sm:$0xff] %v2546
          %v2548 = vld [vmem:[%s2176 + $0x2f0] sm:$0xff]
          %2549 = vst [vmem:[%s2177 + $0x2e4] sm:$0xff] %v2548
          %v2550 = vld [vmem:[%s2176 + $0x2e4] sm:$0xff]
          %2551 = vst [vmem:[%s2177 + $0x2e8] sm:$0xff] %v2550
          %v2552 = vld [vmem:[%s2176 + $0x2f4] sm:$0xff]
          %2553 = vst [vmem:[%s2177 + $0x2ec] sm:$0xff] %v2552
          %v2554 = vld [vmem:[%s2176 + $0x2e8] sm:$0xff]
          %2555 = vst [vmem:[%s2177 + $0x2f0] sm:$0xff] %v2554
          %v2556 = vld [vmem:[%s2176 + $0x2f8] sm:$0xff]
          %2557 = vst [vmem:[%s2177 + $0x2f4] sm:$0xff] %v2556
          %v2558 = vld [vmem:[%s2176 + $0x2ec] sm:$0xff]
          %2559 = vst [vmem:[%s2177 + $0x2f8] sm:$0xff] %v2558
          %v2560 = vld [vmem:[%s2176 + $0x2fc] sm:$0xff]
          %2561 = vst [vmem:[%s2177 + $0x2fc] sm:$0xff] %v2560
          %v2562 = vld [vmem:[%s2176 + $0x300] sm:$0xff]
          %2563 = vst [vmem:[%s2177 + $0x300] sm:$0xff] %v2562
          %v2564 = vld [vmem:[%s2176 + $0x310] sm:$0xff]
          %2565 = vst [vmem:[%s2177 + $0x304] sm:$0xff] %v2564
          %v2566 = vld [vmem:[%s2176 + $0x304] sm:$0xff]
          %2567 = vst [vmem:[%s2177 + $0x308] sm:$0xff] %v2566
          %v2568 = vld [vmem:[%s2176 + $0x314] sm:$0xff]
          %2569 = vst [vmem:[%s2177 + $0x30c] sm:$0xff] %v2568
          %v2570 = vld [vmem:[%s2176 + $0x308] sm:$0xff]
          %2571 = vst [vmem:[%s2177 + $0x310] sm:$0xff] %v2570
          %v2572 = vld [vmem:[%s2176 + $0x318] sm:$0xff]
          %2573 = vst [vmem:[%s2177 + $0x314] sm:$0xff] %v2572
          %v2574 = vld [vmem:[%s2176 + $0x30c] sm:$0xff]
          %2575 = vst [vmem:[%s2177 + $0x318] sm:$0xff] %v2574
          %v2576 = vld [vmem:[%s2176 + $0x31c] sm:$0xff]
          %2577 = vst [vmem:[%s2177 + $0x31c] sm:$0xff] %v2576
          %v2578 = vld [vmem:[%s2176 + $0x320] sm:$0xff]
          %2579 = vst [vmem:[%s2177 + $0x320] sm:$0xff] %v2578
          %v2580 = vld [vmem:[%s2176 + $0x330] sm:$0xff]
          %2581 = vst [vmem:[%s2177 + $0x324] sm:$0xff] %v2580
          %v2582 = vld [vmem:[%s2176 + $0x324] sm:$0xff]
          %2583 = vst [vmem:[%s2177 + $0x328] sm:$0xff] %v2582
          %v2584 = vld [vmem:[%s2176 + $0x334] sm:$0xff]
          %2585 = vst [vmem:[%s2177 + $0x32c] sm:$0xff] %v2584
          %v2586 = vld [vmem:[%s2176 + $0x328] sm:$0xff]
          %2587 = vst [vmem:[%s2177 + $0x330] sm:$0xff] %v2586
          %v2588 = vld [vmem:[%s2176 + $0x338] sm:$0xff]
          %2589 = vst [vmem:[%s2177 + $0x334] sm:$0xff] %v2588
          %v2590 = vld [vmem:[%s2176 + $0x32c] sm:$0xff]
          %2591 = vst [vmem:[%s2177 + $0x338] sm:$0xff] %v2590
          %v2592 = vld [vmem:[%s2176 + $0x33c] sm:$0xff]
          %2593 = vst [vmem:[%s2177 + $0x33c] sm:$0xff] %v2592
          %v2594 = vld [vmem:[%s2176 + $0x340] sm:$0xff]
          %2595 = vst [vmem:[%s2177 + $0x340] sm:$0xff] %v2594
          %v2596 = vld [vmem:[%s2176 + $0x350] sm:$0xff]
          %2597 = vst [vmem:[%s2177 + $0x344] sm:$0xff] %v2596
          %v2598 = vld [vmem:[%s2176 + $0x344] sm:$0xff]
          %2599 = vst [vmem:[%s2177 + $0x348] sm:$0xff] %v2598
          %v2600 = vld [vmem:[%s2176 + $0x354] sm:$0xff]
          %2601 = vst [vmem:[%s2177 + $0x34c] sm:$0xff] %v2600
          %v2602 = vld [vmem:[%s2176 + $0x348] sm:$0xff]
          %2603 = vst [vmem:[%s2177 + $0x350] sm:$0xff] %v2602
          %v2604 = vld [vmem:[%s2176 + $0x358] sm:$0xff]
          %2605 = vst [vmem:[%s2177 + $0x354] sm:$0xff] %v2604
          %v2606 = vld [vmem:[%s2176 + $0x34c] sm:$0xff]
          %2607 = vst [vmem:[%s2177 + $0x358] sm:$0xff] %v2606
          %v2608 = vld [vmem:[%s2176 + $0x35c] sm:$0xff]
          %2609 = vst [vmem:[%s2177 + $0x35c] sm:$0xff] %v2608
          %v2610 = vld [vmem:[%s2176 + $0x360] sm:$0xff]
          %2611 = vst [vmem:[%s2177 + $0x360] sm:$0xff] %v2610
          %v2612 = vld [vmem:[%s2176 + $0x370] sm:$0xff]
          %2613 = vst [vmem:[%s2177 + $0x364] sm:$0xff] %v2612
          %v2614 = vld [vmem:[%s2176 + $0x364] sm:$0xff]
          %2615 = vst [vmem:[%s2177 + $0x368] sm:$0xff] %v2614
          %v2616 = vld [vmem:[%s2176 + $0x374] sm:$0xff]
          %2617 = vst [vmem:[%s2177 + $0x36c] sm:$0xff] %v2616
          %v2618 = vld [vmem:[%s2176 + $0x368] sm:$0xff]
          %2619 = vst [vmem:[%s2177 + $0x370] sm:$0xff] %v2618
          %v2620 = vld [vmem:[%s2176 + $0x378] sm:$0xff]
          %2621 = vst [vmem:[%s2177 + $0x374] sm:$0xff] %v2620
          %v2622 = vld [vmem:[%s2176 + $0x36c] sm:$0xff]
          %2623 = vst [vmem:[%s2177 + $0x378] sm:$0xff] %v2622
          %v2624 = vld [vmem:[%s2176 + $0x37c] sm:$0xff]
          %2625 = vst [vmem:[%s2177 + $0x37c] sm:$0xff] %v2624
          %v2626 = vld [vmem:[%s2176 + $0x380] sm:$0xff]
          %2627 = vst [vmem:[%s2177 + $0x380] sm:$0xff] %v2626
          %v2628 = vld [vmem:[%s2176 + $0x390] sm:$0xff]
          %2629 = vst [vmem:[%s2177 + $0x384] sm:$0xff] %v2628
          %v2630 = vld [vmem:[%s2176 + $0x384] sm:$0xff]
          %2631 = vst [vmem:[%s2177 + $0x388] sm:$0xff] %v2630
          %v2632 = vld [vmem:[%s2176 + $0x394] sm:$0xff]
          %2633 = vst [vmem:[%s2177 + $0x38c] sm:$0xff] %v2632
          %v2634 = vld [vmem:[%s2176 + $0x388] sm:$0xff]
          %2635 = vst [vmem:[%s2177 + $0x390] sm:$0xff] %v2634
          %v2636 = vld [vmem:[%s2176 + $0x398] sm:$0xff]
          %2637 = vst [vmem:[%s2177 + $0x394] sm:$0xff] %v2636
          %v2638 = vld [vmem:[%s2176 + $0x38c] sm:$0xff]
          %2639 = vst [vmem:[%s2177 + $0x398] sm:$0xff] %v2638
          %v2640 = vld [vmem:[%s2176 + $0x39c] sm:$0xff]
          %2641 = vst [vmem:[%s2177 + $0x39c] sm:$0xff] %v2640
          %v2642 = vld [vmem:[%s2176 + $0x3a0] sm:$0xff]
          %2643 = vst [vmem:[%s2177 + $0x3a0] sm:$0xff] %v2642
          %v2644 = vld [vmem:[%s2176 + $0x3b0] sm:$0xff]
          %2645 = vst [vmem:[%s2177 + $0x3a4] sm:$0xff] %v2644
          %v2646 = vld [vmem:[%s2176 + $0x3a4] sm:$0xff]
          %2647 = vst [vmem:[%s2177 + $0x3a8] sm:$0xff] %v2646
          %v2648 = vld [vmem:[%s2176 + $0x3b4] sm:$0xff]
          %2649 = vst [vmem:[%s2177 + $0x3ac] sm:$0xff] %v2648
          %v2650 = vld [vmem:[%s2176 + $0x3a8] sm:$0xff]
          %2651 = vst [vmem:[%s2177 + $0x3b0] sm:$0xff] %v2650
          %v2652 = vld [vmem:[%s2176 + $0x3b8] sm:$0xff]
          %2653 = vst [vmem:[%s2177 + $0x3b4] sm:$0xff] %v2652
          %v2654 = vld [vmem:[%s2176 + $0x3ac] sm:$0xff]
          %2655 = vst [vmem:[%s2177 + $0x3b8] sm:$0xff] %v2654
          %v2656 = vld [vmem:[%s2176 + $0x3bc] sm:$0xff]
          %2657 = vst [vmem:[%s2177 + $0x3bc] sm:$0xff] %v2656
          %v2658 = vld [vmem:[%s2176 + $0x3c0] sm:$0xff]
          %2659 = vst [vmem:[%s2177 + $0x3c0] sm:$0xff] %v2658
          %v2660 = vld [vmem:[%s2176 + $0x3d0] sm:$0xff]
          %2661 = vst [vmem:[%s2177 + $0x3c4] sm:$0xff] %v2660
          %v2662 = vld [vmem:[%s2176 + $0x3c4] sm:$0xff]
          %2663 = vst [vmem:[%s2177 + $0x3c8] sm:$0xff] %v2662
          %v2664 = vld [vmem:[%s2176 + $0x3d4] sm:$0xff]
          %2665 = vst [vmem:[%s2177 + $0x3cc] sm:$0xff] %v2664
          %v2666 = vld [vmem:[%s2176 + $0x3c8] sm:$0xff]
          %2667 = vst [vmem:[%s2177 + $0x3d0] sm:$0xff] %v2666
          %v2668 = vld [vmem:[%s2176 + $0x3d8] sm:$0xff]
          %2669 = vst [vmem:[%s2177 + $0x3d4] sm:$0xff] %v2668
          %v2670 = vld [vmem:[%s2176 + $0x3cc] sm:$0xff]
          %2671 = vst [vmem:[%s2177 + $0x3d8] sm:$0xff] %v2670
          %v2672 = vld [vmem:[%s2176 + $0x3dc] sm:$0xff]
          %2673 = vst [vmem:[%s2177 + $0x3dc] sm:$0xff] %v2672
          %v2674 = vld [vmem:[%s2176 + $0x3e0] sm:$0xff]
          %2675 = vst [vmem:[%s2177 + $0x3e0] sm:$0xff] %v2674
          %v2676 = vld [vmem:[%s2176 + $0x3f0] sm:$0xff]
          %2677 = vst [vmem:[%s2177 + $0x3e4] sm:$0xff] %v2676
          %v2678 = vld [vmem:[%s2176 + $0x3e4] sm:$0xff]
          %2679 = vst [vmem:[%s2177 + $0x3e8] sm:$0xff] %v2678
          %v2680 = vld [vmem:[%s2176 + $0x3f4] sm:$0xff]
          %2681 = vst [vmem:[%s2177 + $0x3ec] sm:$0xff] %v2680
          %v2682 = vld [vmem:[%s2176 + $0x3e8] sm:$0xff]
          %2683 = vst [vmem:[%s2177 + $0x3f0] sm:$0xff] %v2682
          %v2684 = vld [vmem:[%s2176 + $0x3f8] sm:$0xff]
          %2685 = vst [vmem:[%s2177 + $0x3f4] sm:$0xff] %v2684
          %v2686 = vld [vmem:[%s2176 + $0x3ec] sm:$0xff]
          %2687 = vst [vmem:[%s2177 + $0x3f8] sm:$0xff] %v2686
          %v2688 = vld [vmem:[%s2176 + $0x3fc] sm:$0xff]
          %2689 = vst [vmem:[%s2177 + $0x3fc] sm:$0xff] %v2688
          %v2690 = vld [vmem:[%s2176 + $0x400] sm:$0xff]
          %2691 = vst [vmem:[%s2177 + $0x400] sm:$0xff] %v2690
          %v2692 = vld [vmem:[%s2176 + $0x410] sm:$0xff]
          %2693 = vst [vmem:[%s2177 + $0x404] sm:$0xff] %v2692
          %v2694 = vld [vmem:[%s2176 + $0x404] sm:$0xff]
          %2695 = vst [vmem:[%s2177 + $0x408] sm:$0xff] %v2694
          %v2696 = vld [vmem:[%s2176 + $0x414] sm:$0xff]
          %2697 = vst [vmem:[%s2177 + $0x40c] sm:$0xff] %v2696
          %v2698 = vld [vmem:[%s2176 + $0x408] sm:$0xff]
          %2699 = vst [vmem:[%s2177 + $0x410] sm:$0xff] %v2698
          %v2700 = vld [vmem:[%s2176 + $0x418] sm:$0xff]
          %2701 = vst [vmem:[%s2177 + $0x414] sm:$0xff] %v2700
          %v2702 = vld [vmem:[%s2176 + $0x40c] sm:$0xff]
          %2703 = vst [vmem:[%s2177 + $0x418] sm:$0xff] %v2702
          %v2704 = vld [vmem:[%s2176 + $0x41c] sm:$0xff]
          %2705 = vst [vmem:[%s2177 + $0x41c] sm:$0xff] %v2704
          %v2706 = vld [vmem:[%s2176 + $0x420] sm:$0xff]
          %2707 = vst [vmem:[%s2177 + $0x420] sm:$0xff] %v2706
          %v2708 = vld [vmem:[%s2176 + $0x430] sm:$0xff]
          %2709 = vst [vmem:[%s2177 + $0x424] sm:$0xff] %v2708
          %v2710 = vld [vmem:[%s2176 + $0x424] sm:$0xff]
          %2711 = vst [vmem:[%s2177 + $0x428] sm:$0xff] %v2710
          %v2712 = vld [vmem:[%s2176 + $0x434] sm:$0xff]
          %2713 = vst [vmem:[%s2177 + $0x42c] sm:$0xff] %v2712
          %v2714 = vld [vmem:[%s2176 + $0x428] sm:$0xff]
          %2715 = vst [vmem:[%s2177 + $0x430] sm:$0xff] %v2714
          %v2716 = vld [vmem:[%s2176 + $0x438] sm:$0xff]
          %2717 = vst [vmem:[%s2177 + $0x434] sm:$0xff] %v2716
          %v2718 = vld [vmem:[%s2176 + $0x42c] sm:$0xff]
          %2719 = vst [vmem:[%s2177 + $0x438] sm:$0xff] %v2718
          %v2720 = vld [vmem:[%s2176 + $0x43c] sm:$0xff]
          %2721 = vst [vmem:[%s2177 + $0x43c] sm:$0xff] %v2720
          %v2722 = vld [vmem:[%s2176 + $0x440] sm:$0xff]
          %2723 = vst [vmem:[%s2177 + $0x440] sm:$0xff] %v2722
          %v2724 = vld [vmem:[%s2176 + $0x450] sm:$0xff]
          %2725 = vst [vmem:[%s2177 + $0x444] sm:$0xff] %v2724
          %v2726 = vld [vmem:[%s2176 + $0x444] sm:$0xff]
          %2727 = vst [vmem:[%s2177 + $0x448] sm:$0xff] %v2726
          %v2728 = vld [vmem:[%s2176 + $0x454] sm:$0xff]
          %2729 = vst [vmem:[%s2177 + $0x44c] sm:$0xff] %v2728
          %v2730 = vld [vmem:[%s2176 + $0x448] sm:$0xff]
          %2731 = vst [vmem:[%s2177 + $0x450] sm:$0xff] %v2730
          %v2732 = vld [vmem:[%s2176 + $0x458] sm:$0xff]
          %2733 = vst [vmem:[%s2177 + $0x454] sm:$0xff] %v2732
          %v2734 = vld [vmem:[%s2176 + $0x44c] sm:$0xff]
          %2735 = vst [vmem:[%s2177 + $0x458] sm:$0xff] %v2734
          %v2736 = vld [vmem:[%s2176 + $0x45c] sm:$0xff]
          %2737 = vst [vmem:[%s2177 + $0x45c] sm:$0xff] %v2736
          %v2738 = vld [vmem:[%s2176 + $0x460] sm:$0xff]
          %2739 = vst [vmem:[%s2177 + $0x460] sm:$0xff] %v2738
          %v2740 = vld [vmem:[%s2176 + $0x470] sm:$0xff]
          %2741 = vst [vmem:[%s2177 + $0x464] sm:$0xff] %v2740
          %v2742 = vld [vmem:[%s2176 + $0x464] sm:$0xff]
          %2743 = vst [vmem:[%s2177 + $0x468] sm:$0xff] %v2742
          %v2744 = vld [vmem:[%s2176 + $0x474] sm:$0xff]
          %2745 = vst [vmem:[%s2177 + $0x46c] sm:$0xff] %v2744
          %v2746 = vld [vmem:[%s2176 + $0x468] sm:$0xff]
          %2747 = vst [vmem:[%s2177 + $0x470] sm:$0xff] %v2746
          %v2748 = vld [vmem:[%s2176 + $0x478] sm:$0xff]
          %2749 = vst [vmem:[%s2177 + $0x474] sm:$0xff] %v2748
          %v2750 = vld [vmem:[%s2176 + $0x46c] sm:$0xff]
          %2751 = vst [vmem:[%s2177 + $0x478] sm:$0xff] %v2750
          %v2752 = vld [vmem:[%s2176 + $0x47c] sm:$0xff]
          %2753 = vst [vmem:[%s2177 + $0x47c] sm:$0xff] %v2752
          %v2754 = vld [vmem:[%s2176 + $0x480] sm:$0xff]
          %2755 = vst [vmem:[%s2177 + $0x480] sm:$0xff] %v2754
          %v2756 = vld [vmem:[%s2176 + $0x490] sm:$0xff]
          %2757 = vst [vmem:[%s2177 + $0x484] sm:$0xff] %v2756
          %v2758 = vld [vmem:[%s2176 + $0x484] sm:$0xff]
          %2759 = vst [vmem:[%s2177 + $0x488] sm:$0xff] %v2758
          %v2760 = vld [vmem:[%s2176 + $0x494] sm:$0xff]
          %2761 = vst [vmem:[%s2177 + $0x48c] sm:$0xff] %v2760
          %v2762 = vld [vmem:[%s2176 + $0x488] sm:$0xff]
          %2763 = vst [vmem:[%s2177 + $0x490] sm:$0xff] %v2762
          %v2764 = vld [vmem:[%s2176 + $0x498] sm:$0xff]
          %2765 = vst [vmem:[%s2177 + $0x494] sm:$0xff] %v2764
          %v2766 = vld [vmem:[%s2176 + $0x48c] sm:$0xff]
          %2767 = vst [vmem:[%s2177 + $0x498] sm:$0xff] %v2766
          %v2768 = vld [vmem:[%s2176 + $0x49c] sm:$0xff]
          %2769 = vst [vmem:[%s2177 + $0x49c] sm:$0xff] %v2768
          %v2770 = vld [vmem:[%s2176 + $0x4a0] sm:$0xff]
          %2771 = vst [vmem:[%s2177 + $0x4a0] sm:$0xff] %v2770
          %v2772 = vld [vmem:[%s2176 + $0x4b0] sm:$0xff]
          %2773 = vst [vmem:[%s2177 + $0x4a4] sm:$0xff] %v2772
          %v2774 = vld [vmem:[%s2176 + $0x4a4] sm:$0xff]
          %2775 = vst [vmem:[%s2177 + $0x4a8] sm:$0xff] %v2774
          %v2776 = vld [vmem:[%s2176 + $0x4b4] sm:$0xff]
          %2777 = vst [vmem:[%s2177 + $0x4ac] sm:$0xff] %v2776
          %v2778 = vld [vmem:[%s2176 + $0x4a8] sm:$0xff]
          %2779 = vst [vmem:[%s2177 + $0x4b0] sm:$0xff] %v2778
          %v2780 = vld [vmem:[%s2176 + $0x4b8] sm:$0xff]
          %2781 = vst [vmem:[%s2177 + $0x4b4] sm:$0xff] %v2780
          %v2782 = vld [vmem:[%s2176 + $0x4ac] sm:$0xff]
          %2783 = vst [vmem:[%s2177 + $0x4b8] sm:$0xff] %v2782
          %v2784 = vld [vmem:[%s2176 + $0x4bc] sm:$0xff]
          %2785 = vst [vmem:[%s2177 + $0x4bc] sm:$0xff] %v2784
          %v2786 = vld [vmem:[%s2176 + $0x4c0] sm:$0xff]
          %2787 = vst [vmem:[%s2177 + $0x4c0] sm:$0xff] %v2786
          %v2788 = vld [vmem:[%s2176 + $0x4d0] sm:$0xff]
          %2789 = vst [vmem:[%s2177 + $0x4c4] sm:$0xff] %v2788
          %v2790 = vld [vmem:[%s2176 + $0x4c4] sm:$0xff]
          %2791 = vst [vmem:[%s2177 + $0x4c8] sm:$0xff] %v2790
          %v2792 = vld [vmem:[%s2176 + $0x4d4] sm:$0xff]
          %2793 = vst [vmem:[%s2177 + $0x4cc] sm:$0xff] %v2792
          %v2794 = vld [vmem:[%s2176 + $0x4c8] sm:$0xff]
          %2795 = vst [vmem:[%s2177 + $0x4d0] sm:$0xff] %v2794
          %v2796 = vld [vmem:[%s2176 + $0x4d8] sm:$0xff]
          %2797 = vst [vmem:[%s2177 + $0x4d4] sm:$0xff] %v2796
          %v2798 = vld [vmem:[%s2176 + $0x4cc] sm:$0xff]
          %2799 = vst [vmem:[%s2177 + $0x4d8] sm:$0xff] %v2798
          %v2800 = vld [vmem:[%s2176 + $0x4dc] sm:$0xff]
          %2801 = vst [vmem:[%s2177 + $0x4dc] sm:$0xff] %v2800
          %v2802 = vld [vmem:[%s2176 + $0x4e0] sm:$0xff]
          %2803 = vst [vmem:[%s2177 + $0x4e0] sm:$0xff] %v2802
          %v2804 = vld [vmem:[%s2176 + $0x4f0] sm:$0xff]
          %2805 = vst [vmem:[%s2177 + $0x4e4] sm:$0xff] %v2804
          %v2806 = vld [vmem:[%s2176 + $0x4e4] sm:$0xff]
          %2807 = vst [vmem:[%s2177 + $0x4e8] sm:$0xff] %v2806
          %v2808 = vld [vmem:[%s2176 + $0x4f4] sm:$0xff]
          %2809 = vst [vmem:[%s2177 + $0x4ec] sm:$0xff] %v2808
          %v2810 = vld [vmem:[%s2176 + $0x4e8] sm:$0xff]
          %2811 = vst [vmem:[%s2177 + $0x4f0] sm:$0xff] %v2810
          %v2812 = vld [vmem:[%s2176 + $0x4f8] sm:$0xff]
          %2813 = vst [vmem:[%s2177 + $0x4f4] sm:$0xff] %v2812
          %v2814 = vld [vmem:[%s2176 + $0x4ec] sm:$0xff]
          %2815 = vst [vmem:[%s2177 + $0x4f8] sm:$0xff] %v2814
          %v2816 = vld [vmem:[%s2176 + $0x4fc] sm:$0xff]
          %2817 = vst [vmem:[%s2177 + $0x4fc] sm:$0xff] %v2816
          %v2818 = vld [vmem:[%s2176 + $0x500] sm:$0xff]
          %2819 = vst [vmem:[%s2177 + $0x500] sm:$0xff] %v2818
          %v2820 = vld [vmem:[%s2176 + $0x510] sm:$0xff]
          %2821 = vst [vmem:[%s2177 + $0x504] sm:$0xff] %v2820
          %v2822 = vld [vmem:[%s2176 + $0x504] sm:$0xff]
          %2823 = vst [vmem:[%s2177 + $0x508] sm:$0xff] %v2822
          %v2824 = vld [vmem:[%s2176 + $0x514] sm:$0xff]
          %2825 = vst [vmem:[%s2177 + $0x50c] sm:$0xff] %v2824
          %v2826 = vld [vmem:[%s2176 + $0x508] sm:$0xff]
          %2827 = vst [vmem:[%s2177 + $0x510] sm:$0xff] %v2826
          %v2828 = vld [vmem:[%s2176 + $0x518] sm:$0xff]
          %2829 = vst [vmem:[%s2177 + $0x514] sm:$0xff] %v2828
          %v2830 = vld [vmem:[%s2176 + $0x50c] sm:$0xff]
          %2831 = vst [vmem:[%s2177 + $0x518] sm:$0xff] %v2830
          %v2832 = vld [vmem:[%s2176 + $0x51c] sm:$0xff]
          %2833 = vst [vmem:[%s2177 + $0x51c] sm:$0xff] %v2832
          %v2834 = vld [vmem:[%s2176 + $0x520] sm:$0xff]
          %2835 = vst [vmem:[%s2177 + $0x520] sm:$0xff] %v2834
          %v2836 = vld [vmem:[%s2176 + $0x530] sm:$0xff]
          %2837 = vst [vmem:[%s2177 + $0x524] sm:$0xff] %v2836
          %v2838 = vld [vmem:[%s2176 + $0x524] sm:$0xff]
          %2839 = vst [vmem:[%s2177 + $0x528] sm:$0xff] %v2838
          %v2840 = vld [vmem:[%s2176 + $0x534] sm:$0xff]
          %2841 = vst [vmem:[%s2177 + $0x52c] sm:$0xff] %v2840
          %v2842 = vld [vmem:[%s2176 + $0x528] sm:$0xff]
          %2843 = vst [vmem:[%s2177 + $0x530] sm:$0xff] %v2842
          %v2844 = vld [vmem:[%s2176 + $0x538] sm:$0xff]
          %2845 = vst [vmem:[%s2177 + $0x534] sm:$0xff] %v2844
          %v2846 = vld [vmem:[%s2176 + $0x52c] sm:$0xff]
          %2847 = vst [vmem:[%s2177 + $0x538] sm:$0xff] %v2846
          %v2848 = vld [vmem:[%s2176 + $0x53c] sm:$0xff]
          %2849 = vst [vmem:[%s2177 + $0x53c] sm:$0xff] %v2848
          %v2850 = vld [vmem:[%s2176 + $0x540] sm:$0xff]
          %2851 = vst [vmem:[%s2177 + $0x540] sm:$0xff] %v2850
          %v2852 = vld [vmem:[%s2176 + $0x550] sm:$0xff]
          %2853 = vst [vmem:[%s2177 + $0x544] sm:$0xff] %v2852
          %v2854 = vld [vmem:[%s2176 + $0x544] sm:$0xff]
          %2855 = vst [vmem:[%s2177 + $0x548] sm:$0xff] %v2854
          %v2856 = vld [vmem:[%s2176 + $0x554] sm:$0xff]
          %2857 = vst [vmem:[%s2177 + $0x54c] sm:$0xff] %v2856
          %v2858 = vld [vmem:[%s2176 + $0x548] sm:$0xff]
          %2859 = vst [vmem:[%s2177 + $0x550] sm:$0xff] %v2858
          %v2860 = vld [vmem:[%s2176 + $0x558] sm:$0xff]
          %2861 = vst [vmem:[%s2177 + $0x554] sm:$0xff] %v2860
          %v2862 = vld [vmem:[%s2176 + $0x54c] sm:$0xff]
          %2863 = vst [vmem:[%s2177 + $0x558] sm:$0xff] %v2862
          %v2864 = vld [vmem:[%s2176 + $0x55c] sm:$0xff]
          %2865 = vst [vmem:[%s2177 + $0x55c] sm:$0xff] %v2864
          %v2866 = vld [vmem:[%s2176 + $0x560] sm:$0xff]
          %2867 = vst [vmem:[%s2177 + $0x560] sm:$0xff] %v2866
          %v2868 = vld [vmem:[%s2176 + $0x570] sm:$0xff]
          %2869 = vst [vmem:[%s2177 + $0x564] sm:$0xff] %v2868
          %v2870 = vld [vmem:[%s2176 + $0x564] sm:$0xff]
          %2871 = vst [vmem:[%s2177 + $0x568] sm:$0xff] %v2870
          %v2872 = vld [vmem:[%s2176 + $0x574] sm:$0xff]
          %2873 = vst [vmem:[%s2177 + $0x56c] sm:$0xff] %v2872
          %v2874 = vld [vmem:[%s2176 + $0x568] sm:$0xff]
          %2875 = vst [vmem:[%s2177 + $0x570] sm:$0xff] %v2874
          %v2876 = vld [vmem:[%s2176 + $0x578] sm:$0xff]
          %2877 = vst [vmem:[%s2177 + $0x574] sm:$0xff] %v2876
          %v2878 = vld [vmem:[%s2176 + $0x56c] sm:$0xff]
          %2879 = vst [vmem:[%s2177 + $0x578] sm:$0xff] %v2878
          %v2880 = vld [vmem:[%s2176 + $0x57c] sm:$0xff]
          %2881 = vst [vmem:[%s2177 + $0x57c] sm:$0xff] %v2880
          %v2882 = vld [vmem:[%s2176 + $0x580] sm:$0xff]
          %2883 = vst [vmem:[%s2177 + $0x580] sm:$0xff] %v2882
          %v2884 = vld [vmem:[%s2176 + $0x590] sm:$0xff]
          %2885 = vst [vmem:[%s2177 + $0x584] sm:$0xff] %v2884
          %v2886 = vld [vmem:[%s2176 + $0x584] sm:$0xff]
          %2887 = vst [vmem:[%s2177 + $0x588] sm:$0xff] %v2886
          %v2888 = vld [vmem:[%s2176 + $0x594] sm:$0xff]
          %2889 = vst [vmem:[%s2177 + $0x58c] sm:$0xff] %v2888
          %v2890 = vld [vmem:[%s2176 + $0x588] sm:$0xff]
          %2891 = vst [vmem:[%s2177 + $0x590] sm:$0xff] %v2890
          %v2892 = vld [vmem:[%s2176 + $0x598] sm:$0xff]
          %2893 = vst [vmem:[%s2177 + $0x594] sm:$0xff] %v2892
          %v2894 = vld [vmem:[%s2176 + $0x58c] sm:$0xff]
          %2895 = vst [vmem:[%s2177 + $0x598] sm:$0xff] %v2894
          %v2896 = vld [vmem:[%s2176 + $0x59c] sm:$0xff]
          %2897 = vst [vmem:[%s2177 + $0x59c] sm:$0xff] %v2896
          %v2898 = vld [vmem:[%s2176 + $0x5a0] sm:$0xff]
          %2899 = vst [vmem:[%s2177 + $0x5a0] sm:$0xff] %v2898
          %v2900 = vld [vmem:[%s2176 + $0x5b0] sm:$0xff]
          %2901 = vst [vmem:[%s2177 + $0x5a4] sm:$0xff] %v2900
          %v2902 = vld [vmem:[%s2176 + $0x5a4] sm:$0xff]
          %2903 = vst [vmem:[%s2177 + $0x5a8] sm:$0xff] %v2902
          %v2904 = vld [vmem:[%s2176 + $0x5b4] sm:$0xff]
          %2905 = vst [vmem:[%s2177 + $0x5ac] sm:$0xff] %v2904
          %v2906 = vld [vmem:[%s2176 + $0x5a8] sm:$0xff]
          %2907 = vst [vmem:[%s2177 + $0x5b0] sm:$0xff] %v2906
          %v2908 = vld [vmem:[%s2176 + $0x5b8] sm:$0xff]
          %2909 = vst [vmem:[%s2177 + $0x5b4] sm:$0xff] %v2908
          %v2910 = vld [vmem:[%s2176 + $0x5ac] sm:$0xff]
          %2911 = vst [vmem:[%s2177 + $0x5b8] sm:$0xff] %v2910
          %v2912 = vld [vmem:[%s2176 + $0x5bc] sm:$0xff]
          %2913 = vst [vmem:[%s2177 + $0x5bc] sm:$0xff] %v2912
          %v2914 = vld [vmem:[%s2176 + $0x5c0] sm:$0xff]
          %2915 = vst [vmem:[%s2177 + $0x5c0] sm:$0xff] %v2914
          %v2916 = vld [vmem:[%s2176 + $0x5d0] sm:$0xff]
          %2917 = vst [vmem:[%s2177 + $0x5c4] sm:$0xff] %v2916
          %v2918 = vld [vmem:[%s2176 + $0x5c4] sm:$0xff]
          %2919 = vst [vmem:[%s2177 + $0x5c8] sm:$0xff] %v2918
          %v2920 = vld [vmem:[%s2176 + $0x5d4] sm:$0xff]
          %2921 = vst [vmem:[%s2177 + $0x5cc] sm:$0xff] %v2920
          %v2922 = vld [vmem:[%s2176 + $0x5c8] sm:$0xff]
          %2923 = vst [vmem:[%s2177 + $0x5d0] sm:$0xff] %v2922
          %v2924 = vld [vmem:[%s2176 + $0x5d8] sm:$0xff]
          %2925 = vst [vmem:[%s2177 + $0x5d4] sm:$0xff] %v2924
          %v2926 = vld [vmem:[%s2176 + $0x5cc] sm:$0xff]
          %2927 = vst [vmem:[%s2177 + $0x5d8] sm:$0xff] %v2926
          %v2928 = vld [vmem:[%s2176 + $0x5dc] sm:$0xff]
          %2929 = vst [vmem:[%s2177 + $0x5dc] sm:$0xff] %v2928
          %v2930 = vld [vmem:[%s2176 + $0x5e0] sm:$0xff]
          %2931 = vst [vmem:[%s2177 + $0x5e0] sm:$0xff] %v2930
          %v2932 = vld [vmem:[%s2176 + $0x5f0] sm:$0xff]
          %2933 = vst [vmem:[%s2177 + $0x5e4] sm:$0xff] %v2932
          %v2934 = vld [vmem:[%s2176 + $0x5e4] sm:$0xff]
          %2935 = vst [vmem:[%s2177 + $0x5e8] sm:$0xff] %v2934
          %v2936 = vld [vmem:[%s2176 + $0x5f4] sm:$0xff]
          %2937 = vst [vmem:[%s2177 + $0x5ec] sm:$0xff] %v2936
          %v2938 = vld [vmem:[%s2176 + $0x5e8] sm:$0xff]
          %2939 = vst [vmem:[%s2177 + $0x5f0] sm:$0xff] %v2938
          %v2940 = vld [vmem:[%s2176 + $0x5f8] sm:$0xff]
          %2941 = vst [vmem:[%s2177 + $0x5f4] sm:$0xff] %v2940
          %v2942 = vld [vmem:[%s2176 + $0x5ec] sm:$0xff]
          %2943 = vst [vmem:[%s2177 + $0x5f8] sm:$0xff] %v2942
          %v2944 = vld [vmem:[%s2176 + $0x5fc] sm:$0xff]
          %2945 = vst [vmem:[%s2177 + $0x5fc] sm:$0xff] %v2944
          %v2946 = vld [vmem:[%s2176 + $0x600] sm:$0xff]
          %2947 = vst [vmem:[%s2177 + $0x600] sm:$0xff] %v2946
          %v2948 = vld [vmem:[%s2176 + $0x610] sm:$0xff]
          %2949 = vst [vmem:[%s2177 + $0x604] sm:$0xff] %v2948
          %v2950 = vld [vmem:[%s2176 + $0x604] sm:$0xff]
          %2951 = vst [vmem:[%s2177 + $0x608] sm:$0xff] %v2950
          %v2952 = vld [vmem:[%s2176 + $0x614] sm:$0xff]
          %2953 = vst [vmem:[%s2177 + $0x60c] sm:$0xff] %v2952
          %v2954 = vld [vmem:[%s2176 + $0x608] sm:$0xff]
          %2955 = vst [vmem:[%s2177 + $0x610] sm:$0xff] %v2954
          %v2956 = vld [vmem:[%s2176 + $0x618] sm:$0xff]
          %2957 = vst [vmem:[%s2177 + $0x614] sm:$0xff] %v2956
          %v2958 = vld [vmem:[%s2176 + $0x60c] sm:$0xff]
          %2959 = vst [vmem:[%s2177 + $0x618] sm:$0xff] %v2958
          %v2960 = vld [vmem:[%s2176 + $0x61c] sm:$0xff]
          %2961 = vst [vmem:[%s2177 + $0x61c] sm:$0xff] %v2960
          %v2962 = vld [vmem:[%s2176 + $0x620] sm:$0xff]
          %2963 = vst [vmem:[%s2177 + $0x620] sm:$0xff] %v2962
          %v2964 = vld [vmem:[%s2176 + $0x630] sm:$0xff]
          %2965 = vst [vmem:[%s2177 + $0x624] sm:$0xff] %v2964
          %v2966 = vld [vmem:[%s2176 + $0x624] sm:$0xff]
          %2967 = vst [vmem:[%s2177 + $0x628] sm:$0xff] %v2966
          %v2968 = vld [vmem:[%s2176 + $0x634] sm:$0xff]
          %2969 = vst [vmem:[%s2177 + $0x62c] sm:$0xff] %v2968
          %v2970 = vld [vmem:[%s2176 + $0x628] sm:$0xff]
          %2971 = vst [vmem:[%s2177 + $0x630] sm:$0xff] %v2970
          %v2972 = vld [vmem:[%s2176 + $0x638] sm:$0xff]
          %2973 = vst [vmem:[%s2177 + $0x634] sm:$0xff] %v2972
          %v2974 = vld [vmem:[%s2176 + $0x62c] sm:$0xff]
          %2975 = vst [vmem:[%s2177 + $0x638] sm:$0xff] %v2974
          %v2976 = vld [vmem:[%s2176 + $0x63c] sm:$0xff]
          %2977 = vst [vmem:[%s2177 + $0x63c] sm:$0xff] %v2976
          %v2978 = vld [vmem:[%s2176 + $0x640] sm:$0xff]
          %2979 = vst [vmem:[%s2177 + $0x640] sm:$0xff] %v2978
          %v2980 = vld [vmem:[%s2176 + $0x650] sm:$0xff]
          %2981 = vst [vmem:[%s2177 + $0x644] sm:$0xff] %v2980
          %v2982 = vld [vmem:[%s2176 + $0x644] sm:$0xff]
          %2983 = vst [vmem:[%s2177 + $0x648] sm:$0xff] %v2982
          %v2984 = vld [vmem:[%s2176 + $0x654] sm:$0xff]
          %2985 = vst [vmem:[%s2177 + $0x64c] sm:$0xff] %v2984
          %v2986 = vld [vmem:[%s2176 + $0x648] sm:$0xff]
          %2987 = vst [vmem:[%s2177 + $0x650] sm:$0xff] %v2986
          %v2988 = vld [vmem:[%s2176 + $0x658] sm:$0xff]
          %2989 = vst [vmem:[%s2177 + $0x654] sm:$0xff] %v2988
          %v2990 = vld [vmem:[%s2176 + $0x64c] sm:$0xff]
          %2991 = vst [vmem:[%s2177 + $0x658] sm:$0xff] %v2990
          %v2992 = vld [vmem:[%s2176 + $0x65c] sm:$0xff]
          %2993 = vst [vmem:[%s2177 + $0x65c] sm:$0xff] %v2992
          %v2994 = vld [vmem:[%s2176 + $0x660] sm:$0xff]
          %2995 = vst [vmem:[%s2177 + $0x660] sm:$0xff] %v2994
          %v2996 = vld [vmem:[%s2176 + $0x670] sm:$0xff]
          %2997 = vst [vmem:[%s2177 + $0x664] sm:$0xff] %v2996
          %v2998 = vld [vmem:[%s2176 + $0x664] sm:$0xff]
          %2999 = vst [vmem:[%s2177 + $0x668] sm:$0xff] %v2998
          %v3000 = vld [vmem:[%s2176 + $0x674] sm:$0xff]
          %3001 = vst [vmem:[%s2177 + $0x66c] sm:$0xff] %v3000
          %v3002 = vld [vmem:[%s2176 + $0x668] sm:$0xff]
          %3003 = vst [vmem:[%s2177 + $0x670] sm:$0xff] %v3002
          %v3004 = vld [vmem:[%s2176 + $0x678] sm:$0xff]
          %3005 = vst [vmem:[%s2177 + $0x674] sm:$0xff] %v3004
          %v3006 = vld [vmem:[%s2176 + $0x66c] sm:$0xff]
          %3007 = vst [vmem:[%s2177 + $0x678] sm:$0xff] %v3006
          %v3008 = vld [vmem:[%s2176 + $0x67c] sm:$0xff]
          %3009 = vst [vmem:[%s2177 + $0x67c] sm:$0xff] %v3008
          %v3010 = vld [vmem:[%s2176 + $0x680] sm:$0xff]
          %3011 = vst [vmem:[%s2177 + $0x680] sm:$0xff] %v3010
          %v3012 = vld [vmem:[%s2176 + $0x690] sm:$0xff]
          %3013 = vst [vmem:[%s2177 + $0x684] sm:$0xff] %v3012
          %v3014 = vld [vmem:[%s2176 + $0x684] sm:$0xff]
          %3015 = vst [vmem:[%s2177 + $0x688] sm:$0xff] %v3014
          %v3016 = vld [vmem:[%s2176 + $0x694] sm:$0xff]
          %3017 = vst [vmem:[%s2177 + $0x68c] sm:$0xff] %v3016
          %v3018 = vld [vmem:[%s2176 + $0x688] sm:$0xff]
          %3019 = vst [vmem:[%s2177 + $0x690] sm:$0xff] %v3018
          %v3020 = vld [vmem:[%s2176 + $0x698] sm:$0xff]
          %3021 = vst [vmem:[%s2177 + $0x694] sm:$0xff] %v3020
          %v3022 = vld [vmem:[%s2176 + $0x68c] sm:$0xff]
          %3023 = vst [vmem:[%s2177 + $0x698] sm:$0xff] %v3022
          %v3024 = vld [vmem:[%s2176 + $0x69c] sm:$0xff]
          %3025 = vst [vmem:[%s2177 + $0x69c] sm:$0xff] %v3024
          %v3026 = vld [vmem:[%s2176 + $0x6a0] sm:$0xff]
          %3027 = vst [vmem:[%s2177 + $0x6a0] sm:$0xff] %v3026
          %v3028 = vld [vmem:[%s2176 + $0x6b0] sm:$0xff]
          %3029 = vst [vmem:[%s2177 + $0x6a4] sm:$0xff] %v3028
          %v3030 = vld [vmem:[%s2176 + $0x6a4] sm:$0xff]
          %3031 = vst [vmem:[%s2177 + $0x6a8] sm:$0xff] %v3030
          %v3032 = vld [vmem:[%s2176 + $0x6b4] sm:$0xff]
          %3033 = vst [vmem:[%s2177 + $0x6ac] sm:$0xff] %v3032
          %v3034 = vld [vmem:[%s2176 + $0x6a8] sm:$0xff]
          %3035 = vst [vmem:[%s2177 + $0x6b0] sm:$0xff] %v3034
          %v3036 = vld [vmem:[%s2176 + $0x6b8] sm:$0xff]
          %3037 = vst [vmem:[%s2177 + $0x6b4] sm:$0xff] %v3036
          %v3038 = vld [vmem:[%s2176 + $0x6ac] sm:$0xff]
          %3039 = vst [vmem:[%s2177 + $0x6b8] sm:$0xff] %v3038
          %v3040 = vld [vmem:[%s2176 + $0x6bc] sm:$0xff]
          %3041 = vst [vmem:[%s2177 + $0x6bc] sm:$0xff] %v3040
          %v3042 = vld [vmem:[%s2176 + $0x6c0] sm:$0xff]
          %3043 = vst [vmem:[%s2177 + $0x6c0] sm:$0xff] %v3042
          %v3044 = vld [vmem:[%s2176 + $0x6d0] sm:$0xff]
          %3045 = vst [vmem:[%s2177 + $0x6c4] sm:$0xff] %v3044
          %v3046 = vld [vmem:[%s2176 + $0x6c4] sm:$0xff]
          %3047 = vst [vmem:[%s2177 + $0x6c8] sm:$0xff] %v3046
          %v3048 = vld [vmem:[%s2176 + $0x6d4] sm:$0xff]
          %3049 = vst [vmem:[%s2177 + $0x6cc] sm:$0xff] %v3048
          %v3050 = vld [vmem:[%s2176 + $0x6c8] sm:$0xff]
          %3051 = vst [vmem:[%s2177 + $0x6d0] sm:$0xff] %v3050
          %v3052 = vld [vmem:[%s2176 + $0x6d8] sm:$0xff]
          %3053 = vst [vmem:[%s2177 + $0x6d4] sm:$0xff] %v3052
          %v3054 = vld [vmem:[%s2176 + $0x6cc] sm:$0xff]
          %3055 = vst [vmem:[%s2177 + $0x6d8] sm:$0xff] %v3054
          %v3056 = vld [vmem:[%s2176 + $0x6dc] sm:$0xff]
          %3057 = vst [vmem:[%s2177 + $0x6dc] sm:$0xff] %v3056
          %v3058 = vld [vmem:[%s2176 + $0x6e0] sm:$0xff]
          %3059 = vst [vmem:[%s2177 + $0x6e0] sm:$0xff] %v3058
          %v3060 = vld [vmem:[%s2176 + $0x6f0] sm:$0xff]
          %3061 = vst [vmem:[%s2177 + $0x6e4] sm:$0xff] %v3060
          %v3062 = vld [vmem:[%s2176 + $0x6e4] sm:$0xff]
          %3063 = vst [vmem:[%s2177 + $0x6e8] sm:$0xff] %v3062
          %v3064 = vld [vmem:[%s2176 + $0x6f4] sm:$0xff]
          %3065 = vst [vmem:[%s2177 + $0x6ec] sm:$0xff] %v3064
          %v3066 = vld [vmem:[%s2176 + $0x6e8] sm:$0xff]
          %3067 = vst [vmem:[%s2177 + $0x6f0] sm:$0xff] %v3066
          %v3068 = vld [vmem:[%s2176 + $0x6f8] sm:$0xff]
          %3069 = vst [vmem:[%s2177 + $0x6f4] sm:$0xff] %v3068
          %v3070 = vld [vmem:[%s2176 + $0x6ec] sm:$0xff]
          %3071 = vst [vmem:[%s2177 + $0x6f8] sm:$0xff] %v3070
          %v3072 = vld [vmem:[%s2176 + $0x6fc] sm:$0xff]
          %3073 = vst [vmem:[%s2177 + $0x6fc] sm:$0xff] %v3072
          %v3074 = vld [vmem:[%s2176 + $0x700] sm:$0xff]
          %3075 = vst [vmem:[%s2177 + $0x700] sm:$0xff] %v3074
          %v3076 = vld [vmem:[%s2176 + $0x710] sm:$0xff]
          %3077 = vst [vmem:[%s2177 + $0x704] sm:$0xff] %v3076
          %v3078 = vld [vmem:[%s2176 + $0x704] sm:$0xff]
          %3079 = vst [vmem:[%s2177 + $0x708] sm:$0xff] %v3078
          %v3080 = vld [vmem:[%s2176 + $0x714] sm:$0xff]
          %3081 = vst [vmem:[%s2177 + $0x70c] sm:$0xff] %v3080
          %v3082 = vld [vmem:[%s2176 + $0x708] sm:$0xff]
          %3083 = vst [vmem:[%s2177 + $0x710] sm:$0xff] %v3082
          %v3084 = vld [vmem:[%s2176 + $0x718] sm:$0xff]
          %3085 = vst [vmem:[%s2177 + $0x714] sm:$0xff] %v3084
          %v3086 = vld [vmem:[%s2176 + $0x70c] sm:$0xff]
          %3087 = vst [vmem:[%s2177 + $0x718] sm:$0xff] %v3086
          %v3088 = vld [vmem:[%s2176 + $0x71c] sm:$0xff]
          %3089 = vst [vmem:[%s2177 + $0x71c] sm:$0xff] %v3088
          %v3090 = vld [vmem:[%s2176 + $0x720] sm:$0xff]
          %3091 = vst [vmem:[%s2177 + $0x720] sm:$0xff] %v3090
          %v3092 = vld [vmem:[%s2176 + $0x730] sm:$0xff]
          %3093 = vst [vmem:[%s2177 + $0x724] sm:$0xff] %v3092
          %v3094 = vld [vmem:[%s2176 + $0x724] sm:$0xff]
          %3095 = vst [vmem:[%s2177 + $0x728] sm:$0xff] %v3094
          %v3096 = vld [vmem:[%s2176 + $0x734] sm:$0xff]
          %3097 = vst [vmem:[%s2177 + $0x72c] sm:$0xff] %v3096
          %v3098 = vld [vmem:[%s2176 + $0x728] sm:$0xff]
          %3099 = vst [vmem:[%s2177 + $0x730] sm:$0xff] %v3098
          %v3100 = vld [vmem:[%s2176 + $0x738] sm:$0xff]
          %3101 = vst [vmem:[%s2177 + $0x734] sm:$0xff] %v3100
          %v3102 = vld [vmem:[%s2176 + $0x72c] sm:$0xff]
          %3103 = vst [vmem:[%s2177 + $0x738] sm:$0xff] %v3102
          %v3104 = vld [vmem:[%s2176 + $0x73c] sm:$0xff]
          %3105 = vst [vmem:[%s2177 + $0x73c] sm:$0xff] %v3104
          %v3106 = vld [vmem:[%s2176 + $0x740] sm:$0xff]
          %3107 = vst [vmem:[%s2177 + $0x740] sm:$0xff] %v3106
          %v3108 = vld [vmem:[%s2176 + $0x750] sm:$0xff]
          %3109 = vst [vmem:[%s2177 + $0x744] sm:$0xff] %v3108
          %v3110 = vld [vmem:[%s2176 + $0x744] sm:$0xff]
          %3111 = vst [vmem:[%s2177 + $0x748] sm:$0xff] %v3110
          %v3112 = vld [vmem:[%s2176 + $0x754] sm:$0xff]
          %3113 = vst [vmem:[%s2177 + $0x74c] sm:$0xff] %v3112
          %v3114 = vld [vmem:[%s2176 + $0x748] sm:$0xff]
          %3115 = vst [vmem:[%s2177 + $0x750] sm:$0xff] %v3114
          %v3116 = vld [vmem:[%s2176 + $0x758] sm:$0xff]
          %3117 = vst [vmem:[%s2177 + $0x754] sm:$0xff] %v3116
          %v3118 = vld [vmem:[%s2176 + $0x74c] sm:$0xff]
          %3119 = vst [vmem:[%s2177 + $0x758] sm:$0xff] %v3118
          %v3120 = vld [vmem:[%s2176 + $0x75c] sm:$0xff]
          %3121 = vst [vmem:[%s2177 + $0x75c] sm:$0xff] %v3120
          %v3122 = vld [vmem:[%s2176 + $0x760] sm:$0xff]
          %3123 = vst [vmem:[%s2177 + $0x760] sm:$0xff] %v3122
          %v3124 = vld [vmem:[%s2176 + $0x770] sm:$0xff]
          %3125 = vst [vmem:[%s2177 + $0x764] sm:$0xff] %v3124
          %v3126 = vld [vmem:[%s2176 + $0x764] sm:$0xff]
          %3127 = vst [vmem:[%s2177 + $0x768] sm:$0xff] %v3126
          %v3128 = vld [vmem:[%s2176 + $0x774] sm:$0xff]
          %3129 = vst [vmem:[%s2177 + $0x76c] sm:$0xff] %v3128
          %v3130 = vld [vmem:[%s2176 + $0x768] sm:$0xff]
          %3131 = vst [vmem:[%s2177 + $0x770] sm:$0xff] %v3130
          %v3132 = vld [vmem:[%s2176 + $0x778] sm:$0xff]
          %3133 = vst [vmem:[%s2177 + $0x774] sm:$0xff] %v3132
          %v3134 = vld [vmem:[%s2176 + $0x76c] sm:$0xff]
          %3135 = vst [vmem:[%s2177 + $0x778] sm:$0xff] %v3134
          %v3136 = vld [vmem:[%s2176 + $0x77c] sm:$0xff]
          %3137 = vst [vmem:[%s2177 + $0x77c] sm:$0xff] %v3136
          %v3138 = vld [vmem:[%s2176 + $0x780] sm:$0xff]
          %3139 = vst [vmem:[%s2177 + $0x780] sm:$0xff] %v3138
          %v3140 = vld [vmem:[%s2176 + $0x790] sm:$0xff]
          %3141 = vst [vmem:[%s2177 + $0x784] sm:$0xff] %v3140
          %v3142 = vld [vmem:[%s2176 + $0x784] sm:$0xff]
          %3143 = vst [vmem:[%s2177 + $0x788] sm:$0xff] %v3142
          %v3144 = vld [vmem:[%s2176 + $0x794] sm:$0xff]
          %3145 = vst [vmem:[%s2177 + $0x78c] sm:$0xff] %v3144
          %v3146 = vld [vmem:[%s2176 + $0x788] sm:$0xff]
          %3147 = vst [vmem:[%s2177 + $0x790] sm:$0xff] %v3146
          %v3148 = vld [vmem:[%s2176 + $0x798] sm:$0xff]
          %3149 = vst [vmem:[%s2177 + $0x794] sm:$0xff] %v3148
          %v3150 = vld [vmem:[%s2176 + $0x78c] sm:$0xff]
          %3151 = vst [vmem:[%s2177 + $0x798] sm:$0xff] %v3150
          %v3152 = vld [vmem:[%s2176 + $0x79c] sm:$0xff]
          %3153 = vst [vmem:[%s2177 + $0x79c] sm:$0xff] %v3152
          %v3154 = vld [vmem:[%s2176 + $0x7a0] sm:$0xff]
          %3155 = vst [vmem:[%s2177 + $0x7a0] sm:$0xff] %v3154
          %v3156 = vld [vmem:[%s2176 + $0x7b0] sm:$0xff]
          %3157 = vst [vmem:[%s2177 + $0x7a4] sm:$0xff] %v3156
          %v3158 = vld [vmem:[%s2176 + $0x7a4] sm:$0xff]
          %3159 = vst [vmem:[%s2177 + $0x7a8] sm:$0xff] %v3158
          %v3160 = vld [vmem:[%s2176 + $0x7b4] sm:$0xff]
          %3161 = vst [vmem:[%s2177 + $0x7ac] sm:$0xff] %v3160
          %v3162 = vld [vmem:[%s2176 + $0x7a8] sm:$0xff]
          %3163 = vst [vmem:[%s2177 + $0x7b0] sm:$0xff] %v3162
          %v3164 = vld [vmem:[%s2176 + $0x7b8] sm:$0xff]
          %3165 = vst [vmem:[%s2177 + $0x7b4] sm:$0xff] %v3164
          %v3166 = vld [vmem:[%s2176 + $0x7ac] sm:$0xff]
          %3167 = vst [vmem:[%s2177 + $0x7b8] sm:$0xff] %v3166
          %v3168 = vld [vmem:[%s2176 + $0x7bc] sm:$0xff]
          %3169 = vst [vmem:[%s2177 + $0x7bc] sm:$0xff] %v3168
          %v3170 = vld [vmem:[%s2176 + $0x7c0] sm:$0xff]
          %3171 = vst [vmem:[%s2177 + $0x7c0] sm:$0xff] %v3170
          %v3172 = vld [vmem:[%s2176 + $0x7d0] sm:$0xff]
          %3173 = vst [vmem:[%s2177 + $0x7c4] sm:$0xff] %v3172
          %v3174 = vld [vmem:[%s2176 + $0x7c4] sm:$0xff]
          %3175 = vst [vmem:[%s2177 + $0x7c8] sm:$0xff] %v3174
          %v3176 = vld [vmem:[%s2176 + $0x7d4] sm:$0xff]
          %3177 = vst [vmem:[%s2177 + $0x7cc] sm:$0xff] %v3176
          %v3178 = vld [vmem:[%s2176 + $0x7c8] sm:$0xff]
          %3179 = vst [vmem:[%s2177 + $0x7d0] sm:$0xff] %v3178
          %v3180 = vld [vmem:[%s2176 + $0x7d8] sm:$0xff]
          %3181 = vst [vmem:[%s2177 + $0x7d4] sm:$0xff] %v3180
          %v3182 = vld [vmem:[%s2176 + $0x7cc] sm:$0xff]
          %3183 = vst [vmem:[%s2177 + $0x7d8] sm:$0xff] %v3182
          %v3184 = vld [vmem:[%s2176 + $0x7dc] sm:$0xff]
          %3185 = vst [vmem:[%s2177 + $0x7dc] sm:$0xff] %v3184
          %v3186 = vld [vmem:[%s2176 + $0x7e0] sm:$0xff]
          %3187 = vst [vmem:[%s2177 + $0x7e0] sm:$0xff] %v3186
          %v3188 = vld [vmem:[%s2176 + $0x7f0] sm:$0xff]
          %3189 = vst [vmem:[%s2177 + $0x7e4] sm:$0xff] %v3188
          %v3190 = vld [vmem:[%s2176 + $0x7e4] sm:$0xff]
          %3191 = vst [vmem:[%s2177 + $0x7e8] sm:$0xff] %v3190
          %v3192 = vld [vmem:[%s2176 + $0x7f4] sm:$0xff]
          %3193 = vst [vmem:[%s2177 + $0x7ec] sm:$0xff] %v3192
          %v3194 = vld [vmem:[%s2176 + $0x7e8] sm:$0xff]
          %3195 = vst [vmem:[%s2177 + $0x7f0] sm:$0xff] %v3194
          %v3196 = vld [vmem:[%s2176 + $0x7f8] sm:$0xff]
          %3197 = vst [vmem:[%s2177 + $0x7f4] sm:$0xff] %v3196
          %v3198 = vld [vmem:[%s2176 + $0x7ec] sm:$0xff]
          %3199 = vst [vmem:[%s2177 + $0x7f8] sm:$0xff] %v3198
          %v3200 = vld [vmem:[%s2176 + $0x7fc] sm:$0xff]
          %3201 = vst [vmem:[%s2177 + $0x7fc] sm:$0xff] %v3200
          %s3202 = sadd.s32 1, %s2175
          %p3203 = scmp.ge.s32.totalorder %s3202, %s2166
          %s3204 = scalar_select %p3203, 0, %s3202
          %s3205 = smul.u32 %s3204, 8
          %s3206 = smul.u32 %s3204, 8
          %s3207 = scalar_lea.vmem %s13, %s3205
          %s3208 = scalar_lea.vmem [#allocation3], %s3206
        $region114: #{pose_encoder_forward.1} parent=108 // loop_footer
          %s2172 = sadd.s32 %s2170, 1
        $region115: #{pose_encoder_forward.1} parent=108 // loop_footer_branch
          %2169 = sbr.rel target = $region111
        $region116: #{pose_encoder_forward.1} parent=108 // loop_exit
          _
      $region109: #{pose_encoder_forward.1} parent=93 // pred_fallthru
        _
      %p3209 = pneg %p2162
      // Predicated region
      $region117: #{pose_encoder_forward.1} parent=93 // pred_check
        _
      $region118: #{pose_encoder_forward.1} parent=93 // pred_check_branch
        %3211 = sbr.rel (%p2162) target = $region120
      $region119: #{pose_encoder_forward.1} parent=93 // pred_region
        %s3212 = sand.u32 4, 7
        %s3213 = ssub.s32 4, %s3212
        %s3214 = scalar_lea.vmem %s13, %s3213
        %s3215 = ssub.s32 4, %s3212
        %s3216 = scalar_lea.vmem [#allocation3], %s3215
        %s3217 = sshrl.u32 4, 3
        // While loop
        $region121: #{pose_encoder_forward.1} parent=119 // loop_pre_header
          _
        $region122: #{pose_encoder_forward.1} parent=119 // loop_header
          %s3221 = sphi 0, %s3223
          %p3222 = scmp.ge.s32.totalorder %s3221, %s3217
          %s3226 = sphi 0, %s4255
          %s3227 = sphi %s13, %s4258
          %s3228 = sphi [#allocation3], %s4259
        $region123: #{pose_encoder_forward.1} parent=119 // loop_header_branch
          %3225 = sbr.rel (%p3222) target = $region127
        $region124: #{pose_encoder_forward.1} parent=119 // loop_body
          %v3229 = vld [vmem:[%s3227] sm:$0xff]
          %3230 = vst [vmem:[%s3228] sm:$0xff] %v3229
          %v3231 = vld [vmem:[%s3227 + $0x10] sm:$0xff]
          %3232 = vst [vmem:[%s3228 + $0x4] sm:$0xff] %v3231
          %v3233 = vld [vmem:[%s3227 + $0x4] sm:$0xff]
          %3234 = vst [vmem:[%s3228 + $0x8] sm:$0xff] %v3233
          %v3235 = vld [vmem:[%s3227 + $0x14] sm:$0xff]
          %3236 = vst [vmem:[%s3228 + $0xc] sm:$0xff] %v3235
          %v3237 = vld [vmem:[%s3227 + $0x8] sm:$0xff]
          %3238 = vst [vmem:[%s3228 + $0x10] sm:$0xff] %v3237
          %v3239 = vld [vmem:[%s3227 + $0x18] sm:$0xff]
          %3240 = vst [vmem:[%s3228 + $0x14] sm:$0xff] %v3239
          %v3241 = vld [vmem:[%s3227 + $0xc] sm:$0xff]
          %3242 = vst [vmem:[%s3228 + $0x18] sm:$0xff] %v3241
          %v3243 = vld [vmem:[%s3227 + $0x1c] sm:$0xff]
          %3244 = vst [vmem:[%s3228 + $0x1c] sm:$0xff] %v3243
          %v3245 = vld [vmem:[%s3227 + $0x20] sm:$0xff]
          %3246 = vst [vmem:[%s3228 + $0x20] sm:$0xff] %v3245
          %v3247 = vld [vmem:[%s3227 + $0x30] sm:$0xff]
          %3248 = vst [vmem:[%s3228 + $0x24] sm:$0xff] %v3247
          %v3249 = vld [vmem:[%s3227 + $0x24] sm:$0xff]
          %3250 = vst [vmem:[%s3228 + $0x28] sm:$0xff] %v3249
          %v3251 = vld [vmem:[%s3227 + $0x34] sm:$0xff]
          %3252 = vst [vmem:[%s3228 + $0x2c] sm:$0xff] %v3251
          %v3253 = vld [vmem:[%s3227 + $0x28] sm:$0xff]
          %3254 = vst [vmem:[%s3228 + $0x30] sm:$0xff] %v3253
          %v3255 = vld [vmem:[%s3227 + $0x38] sm:$0xff]
          %3256 = vst [vmem:[%s3228 + $0x34] sm:$0xff] %v3255
          %v3257 = vld [vmem:[%s3227 + $0x2c] sm:$0xff]
          %3258 = vst [vmem:[%s3228 + $0x38] sm:$0xff] %v3257
          %v3259 = vld [vmem:[%s3227 + $0x3c] sm:$0xff]
          %3260 = vst [vmem:[%s3228 + $0x3c] sm:$0xff] %v3259
          %v3261 = vld [vmem:[%s3227 + $0x40] sm:$0xff]
          %3262 = vst [vmem:[%s3228 + $0x40] sm:$0xff] %v3261
          %v3263 = vld [vmem:[%s3227 + $0x50] sm:$0xff]
          %3264 = vst [vmem:[%s3228 + $0x44] sm:$0xff] %v3263
          %v3265 = vld [vmem:[%s3227 + $0x44] sm:$0xff]
          %3266 = vst [vmem:[%s3228 + $0x48] sm:$0xff] %v3265
          %v3267 = vld [vmem:[%s3227 + $0x54] sm:$0xff]
          %3268 = vst [vmem:[%s3228 + $0x4c] sm:$0xff] %v3267
          %v3269 = vld [vmem:[%s3227 + $0x48] sm:$0xff]
          %3270 = vst [vmem:[%s3228 + $0x50] sm:$0xff] %v3269
          %v3271 = vld [vmem:[%s3227 + $0x58] sm:$0xff]
          %3272 = vst [vmem:[%s3228 + $0x54] sm:$0xff] %v3271
          %v3273 = vld [vmem:[%s3227 + $0x4c] sm:$0xff]
          %3274 = vst [vmem:[%s3228 + $0x58] sm:$0xff] %v3273
          %v3275 = vld [vmem:[%s3227 + $0x5c] sm:$0xff]
          %3276 = vst [vmem:[%s3228 + $0x5c] sm:$0xff] %v3275
          %v3277 = vld [vmem:[%s3227 + $0x60] sm:$0xff]
          %3278 = vst [vmem:[%s3228 + $0x60] sm:$0xff] %v3277
          %v3279 = vld [vmem:[%s3227 + $0x70] sm:$0xff]
          %3280 = vst [vmem:[%s3228 + $0x64] sm:$0xff] %v3279
          %v3281 = vld [vmem:[%s3227 + $0x64] sm:$0xff]
          %3282 = vst [vmem:[%s3228 + $0x68] sm:$0xff] %v3281
          %v3283 = vld [vmem:[%s3227 + $0x74] sm:$0xff]
          %3284 = vst [vmem:[%s3228 + $0x6c] sm:$0xff] %v3283
          %v3285 = vld [vmem:[%s3227 + $0x68] sm:$0xff]
          %3286 = vst [vmem:[%s3228 + $0x70] sm:$0xff] %v3285
          %v3287 = vld [vmem:[%s3227 + $0x78] sm:$0xff]
          %3288 = vst [vmem:[%s3228 + $0x74] sm:$0xff] %v3287
          %v3289 = vld [vmem:[%s3227 + $0x6c] sm:$0xff]
          %3290 = vst [vmem:[%s3228 + $0x78] sm:$0xff] %v3289
          %v3291 = vld [vmem:[%s3227 + $0x7c] sm:$0xff]
          %3292 = vst [vmem:[%s3228 + $0x7c] sm:$0xff] %v3291
          %v3293 = vld [vmem:[%s3227 + $0x80] sm:$0xff]
          %3294 = vst [vmem:[%s3228 + $0x80] sm:$0xff] %v3293
          %v3295 = vld [vmem:[%s3227 + $0x90] sm:$0xff]
          %3296 = vst [vmem:[%s3228 + $0x84] sm:$0xff] %v3295
          %v3297 = vld [vmem:[%s3227 + $0x84] sm:$0xff]
          %3298 = vst [vmem:[%s3228 + $0x88] sm:$0xff] %v3297
          %v3299 = vld [vmem:[%s3227 + $0x94] sm:$0xff]
          %3300 = vst [vmem:[%s3228 + $0x8c] sm:$0xff] %v3299
          %v3301 = vld [vmem:[%s3227 + $0x88] sm:$0xff]
          %3302 = vst [vmem:[%s3228 + $0x90] sm:$0xff] %v3301
          %v3303 = vld [vmem:[%s3227 + $0x98] sm:$0xff]
          %3304 = vst [vmem:[%s3228 + $0x94] sm:$0xff] %v3303
          %v3305 = vld [vmem:[%s3227 + $0x8c] sm:$0xff]
          %3306 = vst [vmem:[%s3228 + $0x98] sm:$0xff] %v3305
          %v3307 = vld [vmem:[%s3227 + $0x9c] sm:$0xff]
          %3308 = vst [vmem:[%s3228 + $0x9c] sm:$0xff] %v3307
          %v3309 = vld [vmem:[%s3227 + $0xa0] sm:$0xff]
          %3310 = vst [vmem:[%s3228 + $0xa0] sm:$0xff] %v3309
          %v3311 = vld [vmem:[%s3227 + $0xb0] sm:$0xff]
          %3312 = vst [vmem:[%s3228 + $0xa4] sm:$0xff] %v3311
          %v3313 = vld [vmem:[%s3227 + $0xa4] sm:$0xff]
          %3314 = vst [vmem:[%s3228 + $0xa8] sm:$0xff] %v3313
          %v3315 = vld [vmem:[%s3227 + $0xb4] sm:$0xff]
          %3316 = vst [vmem:[%s3228 + $0xac] sm:$0xff] %v3315
          %v3317 = vld [vmem:[%s3227 + $0xa8] sm:$0xff]
          %3318 = vst [vmem:[%s3228 + $0xb0] sm:$0xff] %v3317
          %v3319 = vld [vmem:[%s3227 + $0xb8] sm:$0xff]
          %3320 = vst [vmem:[%s3228 + $0xb4] sm:$0xff] %v3319
          %v3321 = vld [vmem:[%s3227 + $0xac] sm:$0xff]
          %3322 = vst [vmem:[%s3228 + $0xb8] sm:$0xff] %v3321
          %v3323 = vld [vmem:[%s3227 + $0xbc] sm:$0xff]
          %3324 = vst [vmem:[%s3228 + $0xbc] sm:$0xff] %v3323
          %v3325 = vld [vmem:[%s3227 + $0xc0] sm:$0xff]
          %3326 = vst [vmem:[%s3228 + $0xc0] sm:$0xff] %v3325
          %v3327 = vld [vmem:[%s3227 + $0xd0] sm:$0xff]
          %3328 = vst [vmem:[%s3228 + $0xc4] sm:$0xff] %v3327
          %v3329 = vld [vmem:[%s3227 + $0xc4] sm:$0xff]
          %3330 = vst [vmem:[%s3228 + $0xc8] sm:$0xff] %v3329
          %v3331 = vld [vmem:[%s3227 + $0xd4] sm:$0xff]
          %3332 = vst [vmem:[%s3228 + $0xcc] sm:$0xff] %v3331
          %v3333 = vld [vmem:[%s3227 + $0xc8] sm:$0xff]
          %3334 = vst [vmem:[%s3228 + $0xd0] sm:$0xff] %v3333
          %v3335 = vld [vmem:[%s3227 + $0xd8] sm:$0xff]
          %3336 = vst [vmem:[%s3228 + $0xd4] sm:$0xff] %v3335
          %v3337 = vld [vmem:[%s3227 + $0xcc] sm:$0xff]
          %3338 = vst [vmem:[%s3228 + $0xd8] sm:$0xff] %v3337
          %v3339 = vld [vmem:[%s3227 + $0xdc] sm:$0xff]
          %3340 = vst [vmem:[%s3228 + $0xdc] sm:$0xff] %v3339
          %v3341 = vld [vmem:[%s3227 + $0xe0] sm:$0xff]
          %3342 = vst [vmem:[%s3228 + $0xe0] sm:$0xff] %v3341
          %v3343 = vld [vmem:[%s3227 + $0xf0] sm:$0xff]
          %3344 = vst [vmem:[%s3228 + $0xe4] sm:$0xff] %v3343
          %v3345 = vld [vmem:[%s3227 + $0xe4] sm:$0xff]
          %3346 = vst [vmem:[%s3228 + $0xe8] sm:$0xff] %v3345
          %v3347 = vld [vmem:[%s3227 + $0xf4] sm:$0xff]
          %3348 = vst [vmem:[%s3228 + $0xec] sm:$0xff] %v3347
          %v3349 = vld [vmem:[%s3227 + $0xe8] sm:$0xff]
          %3350 = vst [vmem:[%s3228 + $0xf0] sm:$0xff] %v3349
          %v3351 = vld [vmem:[%s3227 + $0xf8] sm:$0xff]
          %3352 = vst [vmem:[%s3228 + $0xf4] sm:$0xff] %v3351
          %v3353 = vld [vmem:[%s3227 + $0xec] sm:$0xff]
          %3354 = vst [vmem:[%s3228 + $0xf8] sm:$0xff] %v3353
          %v3355 = vld [vmem:[%s3227 + $0xfc] sm:$0xff]
          %3356 = vst [vmem:[%s3228 + $0xfc] sm:$0xff] %v3355
          %v3357 = vld [vmem:[%s3227 + $0x100] sm:$0xff]
          %3358 = vst [vmem:[%s3228 + $0x100] sm:$0xff] %v3357
          %v3359 = vld [vmem:[%s3227 + $0x110] sm:$0xff]
          %3360 = vst [vmem:[%s3228 + $0x104] sm:$0xff] %v3359
          %v3361 = vld [vmem:[%s3227 + $0x104] sm:$0xff]
          %3362 = vst [vmem:[%s3228 + $0x108] sm:$0xff] %v3361
          %v3363 = vld [vmem:[%s3227 + $0x114] sm:$0xff]
          %3364 = vst [vmem:[%s3228 + $0x10c] sm:$0xff] %v3363
          %v3365 = vld [vmem:[%s3227 + $0x108] sm:$0xff]
          %3366 = vst [vmem:[%s3228 + $0x110] sm:$0xff] %v3365
          %v3367 = vld [vmem:[%s3227 + $0x118] sm:$0xff]
          %3368 = vst [vmem:[%s3228 + $0x114] sm:$0xff] %v3367
          %v3369 = vld [vmem:[%s3227 + $0x10c] sm:$0xff]
          %3370 = vst [vmem:[%s3228 + $0x118] sm:$0xff] %v3369
          %v3371 = vld [vmem:[%s3227 + $0x11c] sm:$0xff]
          %3372 = vst [vmem:[%s3228 + $0x11c] sm:$0xff] %v3371
          %v3373 = vld [vmem:[%s3227 + $0x120] sm:$0xff]
          %3374 = vst [vmem:[%s3228 + $0x120] sm:$0xff] %v3373
          %v3375 = vld [vmem:[%s3227 + $0x130] sm:$0xff]
          %3376 = vst [vmem:[%s3228 + $0x124] sm:$0xff] %v3375
          %v3377 = vld [vmem:[%s3227 + $0x124] sm:$0xff]
          %3378 = vst [vmem:[%s3228 + $0x128] sm:$0xff] %v3377
          %v3379 = vld [vmem:[%s3227 + $0x134] sm:$0xff]
          %3380 = vst [vmem:[%s3228 + $0x12c] sm:$0xff] %v3379
          %v3381 = vld [vmem:[%s3227 + $0x128] sm:$0xff]
          %3382 = vst [vmem:[%s3228 + $0x130] sm:$0xff] %v3381
          %v3383 = vld [vmem:[%s3227 + $0x138] sm:$0xff]
          %3384 = vst [vmem:[%s3228 + $0x134] sm:$0xff] %v3383
          %v3385 = vld [vmem:[%s3227 + $0x12c] sm:$0xff]
          %3386 = vst [vmem:[%s3228 + $0x138] sm:$0xff] %v3385
          %v3387 = vld [vmem:[%s3227 + $0x13c] sm:$0xff]
          %3388 = vst [vmem:[%s3228 + $0x13c] sm:$0xff] %v3387
          %v3389 = vld [vmem:[%s3227 + $0x140] sm:$0xff]
          %3390 = vst [vmem:[%s3228 + $0x140] sm:$0xff] %v3389
          %v3391 = vld [vmem:[%s3227 + $0x150] sm:$0xff]
          %3392 = vst [vmem:[%s3228 + $0x144] sm:$0xff] %v3391
          %v3393 = vld [vmem:[%s3227 + $0x144] sm:$0xff]
          %3394 = vst [vmem:[%s3228 + $0x148] sm:$0xff] %v3393
          %v3395 = vld [vmem:[%s3227 + $0x154] sm:$0xff]
          %3396 = vst [vmem:[%s3228 + $0x14c] sm:$0xff] %v3395
          %v3397 = vld [vmem:[%s3227 + $0x148] sm:$0xff]
          %3398 = vst [vmem:[%s3228 + $0x150] sm:$0xff] %v3397
          %v3399 = vld [vmem:[%s3227 + $0x158] sm:$0xff]
          %3400 = vst [vmem:[%s3228 + $0x154] sm:$0xff] %v3399
          %v3401 = vld [vmem:[%s3227 + $0x14c] sm:$0xff]
          %3402 = vst [vmem:[%s3228 + $0x158] sm:$0xff] %v3401
          %v3403 = vld [vmem:[%s3227 + $0x15c] sm:$0xff]
          %3404 = vst [vmem:[%s3228 + $0x15c] sm:$0xff] %v3403
          %v3405 = vld [vmem:[%s3227 + $0x160] sm:$0xff]
          %3406 = vst [vmem:[%s3228 + $0x160] sm:$0xff] %v3405
          %v3407 = vld [vmem:[%s3227 + $0x170] sm:$0xff]
          %3408 = vst [vmem:[%s3228 + $0x164] sm:$0xff] %v3407
          %v3409 = vld [vmem:[%s3227 + $0x164] sm:$0xff]
          %3410 = vst [vmem:[%s3228 + $0x168] sm:$0xff] %v3409
          %v3411 = vld [vmem:[%s3227 + $0x174] sm:$0xff]
          %3412 = vst [vmem:[%s3228 + $0x16c] sm:$0xff] %v3411
          %v3413 = vld [vmem:[%s3227 + $0x168] sm:$0xff]
          %3414 = vst [vmem:[%s3228 + $0x170] sm:$0xff] %v3413
          %v3415 = vld [vmem:[%s3227 + $0x178] sm:$0xff]
          %3416 = vst [vmem:[%s3228 + $0x174] sm:$0xff] %v3415
          %v3417 = vld [vmem:[%s3227 + $0x16c] sm:$0xff]
          %3418 = vst [vmem:[%s3228 + $0x178] sm:$0xff] %v3417
          %v3419 = vld [vmem:[%s3227 + $0x17c] sm:$0xff]
          %3420 = vst [vmem:[%s3228 + $0x17c] sm:$0xff] %v3419
          %v3421 = vld [vmem:[%s3227 + $0x180] sm:$0xff]
          %3422 = vst [vmem:[%s3228 + $0x180] sm:$0xff] %v3421
          %v3423 = vld [vmem:[%s3227 + $0x190] sm:$0xff]
          %3424 = vst [vmem:[%s3228 + $0x184] sm:$0xff] %v3423
          %v3425 = vld [vmem:[%s3227 + $0x184] sm:$0xff]
          %3426 = vst [vmem:[%s3228 + $0x188] sm:$0xff] %v3425
          %v3427 = vld [vmem:[%s3227 + $0x194] sm:$0xff]
          %3428 = vst [vmem:[%s3228 + $0x18c] sm:$0xff] %v3427
          %v3429 = vld [vmem:[%s3227 + $0x188] sm:$0xff]
          %3430 = vst [vmem:[%s3228 + $0x190] sm:$0xff] %v3429
          %v3431 = vld [vmem:[%s3227 + $0x198] sm:$0xff]
          %3432 = vst [vmem:[%s3228 + $0x194] sm:$0xff] %v3431
          %v3433 = vld [vmem:[%s3227 + $0x18c] sm:$0xff]
          %3434 = vst [vmem:[%s3228 + $0x198] sm:$0xff] %v3433
          %v3435 = vld [vmem:[%s3227 + $0x19c] sm:$0xff]
          %3436 = vst [vmem:[%s3228 + $0x19c] sm:$0xff] %v3435
          %v3437 = vld [vmem:[%s3227 + $0x1a0] sm:$0xff]
          %3438 = vst [vmem:[%s3228 + $0x1a0] sm:$0xff] %v3437
          %v3439 = vld [vmem:[%s3227 + $0x1b0] sm:$0xff]
          %3440 = vst [vmem:[%s3228 + $0x1a4] sm:$0xff] %v3439
          %v3441 = vld [vmem:[%s3227 + $0x1a4] sm:$0xff]
          %3442 = vst [vmem:[%s3228 + $0x1a8] sm:$0xff] %v3441
          %v3443 = vld [vmem:[%s3227 + $0x1b4] sm:$0xff]
          %3444 = vst [vmem:[%s3228 + $0x1ac] sm:$0xff] %v3443
          %v3445 = vld [vmem:[%s3227 + $0x1a8] sm:$0xff]
          %3446 = vst [vmem:[%s3228 + $0x1b0] sm:$0xff] %v3445
          %v3447 = vld [vmem:[%s3227 + $0x1b8] sm:$0xff]
          %3448 = vst [vmem:[%s3228 + $0x1b4] sm:$0xff] %v3447
          %v3449 = vld [vmem:[%s3227 + $0x1ac] sm:$0xff]
          %3450 = vst [vmem:[%s3228 + $0x1b8] sm:$0xff] %v3449
          %v3451 = vld [vmem:[%s3227 + $0x1bc] sm:$0xff]
          %3452 = vst [vmem:[%s3228 + $0x1bc] sm:$0xff] %v3451
          %v3453 = vld [vmem:[%s3227 + $0x1c0] sm:$0xff]
          %3454 = vst [vmem:[%s3228 + $0x1c0] sm:$0xff] %v3453
          %v3455 = vld [vmem:[%s3227 + $0x1d0] sm:$0xff]
          %3456 = vst [vmem:[%s3228 + $0x1c4] sm:$0xff] %v3455
          %v3457 = vld [vmem:[%s3227 + $0x1c4] sm:$0xff]
          %3458 = vst [vmem:[%s3228 + $0x1c8] sm:$0xff] %v3457
          %v3459 = vld [vmem:[%s3227 + $0x1d4] sm:$0xff]
          %3460 = vst [vmem:[%s3228 + $0x1cc] sm:$0xff] %v3459
          %v3461 = vld [vmem:[%s3227 + $0x1c8] sm:$0xff]
          %3462 = vst [vmem:[%s3228 + $0x1d0] sm:$0xff] %v3461
          %v3463 = vld [vmem:[%s3227 + $0x1d8] sm:$0xff]
          %3464 = vst [vmem:[%s3228 + $0x1d4] sm:$0xff] %v3463
          %v3465 = vld [vmem:[%s3227 + $0x1cc] sm:$0xff]
          %3466 = vst [vmem:[%s3228 + $0x1d8] sm:$0xff] %v3465
          %v3467 = vld [vmem:[%s3227 + $0x1dc] sm:$0xff]
          %3468 = vst [vmem:[%s3228 + $0x1dc] sm:$0xff] %v3467
          %v3469 = vld [vmem:[%s3227 + $0x1e0] sm:$0xff]
          %3470 = vst [vmem:[%s3228 + $0x1e0] sm:$0xff] %v3469
          %v3471 = vld [vmem:[%s3227 + $0x1f0] sm:$0xff]
          %3472 = vst [vmem:[%s3228 + $0x1e4] sm:$0xff] %v3471
          %v3473 = vld [vmem:[%s3227 + $0x1e4] sm:$0xff]
          %3474 = vst [vmem:[%s3228 + $0x1e8] sm:$0xff] %v3473
          %v3475 = vld [vmem:[%s3227 + $0x1f4] sm:$0xff]
          %3476 = vst [vmem:[%s3228 + $0x1ec] sm:$0xff] %v3475
          %v3477 = vld [vmem:[%s3227 + $0x1e8] sm:$0xff]
          %3478 = vst [vmem:[%s3228 + $0x1f0] sm:$0xff] %v3477
          %v3479 = vld [vmem:[%s3227 + $0x1f8] sm:$0xff]
          %3480 = vst [vmem:[%s3228 + $0x1f4] sm:$0xff] %v3479
          %v3481 = vld [vmem:[%s3227 + $0x1ec] sm:$0xff]
          %3482 = vst [vmem:[%s3228 + $0x1f8] sm:$0xff] %v3481
          %v3483 = vld [vmem:[%s3227 + $0x1fc] sm:$0xff]
          %3484 = vst [vmem:[%s3228 + $0x1fc] sm:$0xff] %v3483
          %v3485 = vld [vmem:[%s3227 + $0x200] sm:$0xff]
          %3486 = vst [vmem:[%s3228 + $0x200] sm:$0xff] %v3485
          %v3487 = vld [vmem:[%s3227 + $0x210] sm:$0xff]
          %3488 = vst [vmem:[%s3228 + $0x204] sm:$0xff] %v3487
          %v3489 = vld [vmem:[%s3227 + $0x204] sm:$0xff]
          %3490 = vst [vmem:[%s3228 + $0x208] sm:$0xff] %v3489
          %v3491 = vld [vmem:[%s3227 + $0x214] sm:$0xff]
          %3492 = vst [vmem:[%s3228 + $0x20c] sm:$0xff] %v3491
          %v3493 = vld [vmem:[%s3227 + $0x208] sm:$0xff]
          %3494 = vst [vmem:[%s3228 + $0x210] sm:$0xff] %v3493
          %v3495 = vld [vmem:[%s3227 + $0x218] sm:$0xff]
          %3496 = vst [vmem:[%s3228 + $0x214] sm:$0xff] %v3495
          %v3497 = vld [vmem:[%s3227 + $0x20c] sm:$0xff]
          %3498 = vst [vmem:[%s3228 + $0x218] sm:$0xff] %v3497
          %v3499 = vld [vmem:[%s3227 + $0x21c] sm:$0xff]
          %3500 = vst [vmem:[%s3228 + $0x21c] sm:$0xff] %v3499
          %v3501 = vld [vmem:[%s3227 + $0x220] sm:$0xff]
          %3502 = vst [vmem:[%s3228 + $0x220] sm:$0xff] %v3501
          %v3503 = vld [vmem:[%s3227 + $0x230] sm:$0xff]
          %3504 = vst [vmem:[%s3228 + $0x224] sm:$0xff] %v3503
          %v3505 = vld [vmem:[%s3227 + $0x224] sm:$0xff]
          %3506 = vst [vmem:[%s3228 + $0x228] sm:$0xff] %v3505
          %v3507 = vld [vmem:[%s3227 + $0x234] sm:$0xff]
          %3508 = vst [vmem:[%s3228 + $0x22c] sm:$0xff] %v3507
          %v3509 = vld [vmem:[%s3227 + $0x228] sm:$0xff]
          %3510 = vst [vmem:[%s3228 + $0x230] sm:$0xff] %v3509
          %v3511 = vld [vmem:[%s3227 + $0x238] sm:$0xff]
          %3512 = vst [vmem:[%s3228 + $0x234] sm:$0xff] %v3511
          %v3513 = vld [vmem:[%s3227 + $0x22c] sm:$0xff]
          %3514 = vst [vmem:[%s3228 + $0x238] sm:$0xff] %v3513
          %v3515 = vld [vmem:[%s3227 + $0x23c] sm:$0xff]
          %3516 = vst [vmem:[%s3228 + $0x23c] sm:$0xff] %v3515
          %v3517 = vld [vmem:[%s3227 + $0x240] sm:$0xff]
          %3518 = vst [vmem:[%s3228 + $0x240] sm:$0xff] %v3517
          %v3519 = vld [vmem:[%s3227 + $0x250] sm:$0xff]
          %3520 = vst [vmem:[%s3228 + $0x244] sm:$0xff] %v3519
          %v3521 = vld [vmem:[%s3227 + $0x244] sm:$0xff]
          %3522 = vst [vmem:[%s3228 + $0x248] sm:$0xff] %v3521
          %v3523 = vld [vmem:[%s3227 + $0x254] sm:$0xff]
          %3524 = vst [vmem:[%s3228 + $0x24c] sm:$0xff] %v3523
          %v3525 = vld [vmem:[%s3227 + $0x248] sm:$0xff]
          %3526 = vst [vmem:[%s3228 + $0x250] sm:$0xff] %v3525
          %v3527 = vld [vmem:[%s3227 + $0x258] sm:$0xff]
          %3528 = vst [vmem:[%s3228 + $0x254] sm:$0xff] %v3527
          %v3529 = vld [vmem:[%s3227 + $0x24c] sm:$0xff]
          %3530 = vst [vmem:[%s3228 + $0x258] sm:$0xff] %v3529
          %v3531 = vld [vmem:[%s3227 + $0x25c] sm:$0xff]
          %3532 = vst [vmem:[%s3228 + $0x25c] sm:$0xff] %v3531
          %v3533 = vld [vmem:[%s3227 + $0x260] sm:$0xff]
          %3534 = vst [vmem:[%s3228 + $0x260] sm:$0xff] %v3533
          %v3535 = vld [vmem:[%s3227 + $0x270] sm:$0xff]
          %3536 = vst [vmem:[%s3228 + $0x264] sm:$0xff] %v3535
          %v3537 = vld [vmem:[%s3227 + $0x264] sm:$0xff]
          %3538 = vst [vmem:[%s3228 + $0x268] sm:$0xff] %v3537
          %v3539 = vld [vmem:[%s3227 + $0x274] sm:$0xff]
          %3540 = vst [vmem:[%s3228 + $0x26c] sm:$0xff] %v3539
          %v3541 = vld [vmem:[%s3227 + $0x268] sm:$0xff]
          %3542 = vst [vmem:[%s3228 + $0x270] sm:$0xff] %v3541
          %v3543 = vld [vmem:[%s3227 + $0x278] sm:$0xff]
          %3544 = vst [vmem:[%s3228 + $0x274] sm:$0xff] %v3543
          %v3545 = vld [vmem:[%s3227 + $0x26c] sm:$0xff]
          %3546 = vst [vmem:[%s3228 + $0x278] sm:$0xff] %v3545
          %v3547 = vld [vmem:[%s3227 + $0x27c] sm:$0xff]
          %3548 = vst [vmem:[%s3228 + $0x27c] sm:$0xff] %v3547
          %v3549 = vld [vmem:[%s3227 + $0x280] sm:$0xff]
          %3550 = vst [vmem:[%s3228 + $0x280] sm:$0xff] %v3549
          %v3551 = vld [vmem:[%s3227 + $0x290] sm:$0xff]
          %3552 = vst [vmem:[%s3228 + $0x284] sm:$0xff] %v3551
          %v3553 = vld [vmem:[%s3227 + $0x284] sm:$0xff]
          %3554 = vst [vmem:[%s3228 + $0x288] sm:$0xff] %v3553
          %v3555 = vld [vmem:[%s3227 + $0x294] sm:$0xff]
          %3556 = vst [vmem:[%s3228 + $0x28c] sm:$0xff] %v3555
          %v3557 = vld [vmem:[%s3227 + $0x288] sm:$0xff]
          %3558 = vst [vmem:[%s3228 + $0x290] sm:$0xff] %v3557
          %v3559 = vld [vmem:[%s3227 + $0x298] sm:$0xff]
          %3560 = vst [vmem:[%s3228 + $0x294] sm:$0xff] %v3559
          %v3561 = vld [vmem:[%s3227 + $0x28c] sm:$0xff]
          %3562 = vst [vmem:[%s3228 + $0x298] sm:$0xff] %v3561
          %v3563 = vld [vmem:[%s3227 + $0x29c] sm:$0xff]
          %3564 = vst [vmem:[%s3228 + $0x29c] sm:$0xff] %v3563
          %v3565 = vld [vmem:[%s3227 + $0x2a0] sm:$0xff]
          %3566 = vst [vmem:[%s3228 + $0x2a0] sm:$0xff] %v3565
          %v3567 = vld [vmem:[%s3227 + $0x2b0] sm:$0xff]
          %3568 = vst [vmem:[%s3228 + $0x2a4] sm:$0xff] %v3567
          %v3569 = vld [vmem:[%s3227 + $0x2a4] sm:$0xff]
          %3570 = vst [vmem:[%s3228 + $0x2a8] sm:$0xff] %v3569
          %v3571 = vld [vmem:[%s3227 + $0x2b4] sm:$0xff]
          %3572 = vst [vmem:[%s3228 + $0x2ac] sm:$0xff] %v3571
          %v3573 = vld [vmem:[%s3227 + $0x2a8] sm:$0xff]
          %3574 = vst [vmem:[%s3228 + $0x2b0] sm:$0xff] %v3573
          %v3575 = vld [vmem:[%s3227 + $0x2b8] sm:$0xff]
          %3576 = vst [vmem:[%s3228 + $0x2b4] sm:$0xff] %v3575
          %v3577 = vld [vmem:[%s3227 + $0x2ac] sm:$0xff]
          %3578 = vst [vmem:[%s3228 + $0x2b8] sm:$0xff] %v3577
          %v3579 = vld [vmem:[%s3227 + $0x2bc] sm:$0xff]
          %3580 = vst [vmem:[%s3228 + $0x2bc] sm:$0xff] %v3579
          %v3581 = vld [vmem:[%s3227 + $0x2c0] sm:$0xff]
          %3582 = vst [vmem:[%s3228 + $0x2c0] sm:$0xff] %v3581
          %v3583 = vld [vmem:[%s3227 + $0x2d0] sm:$0xff]
          %3584 = vst [vmem:[%s3228 + $0x2c4] sm:$0xff] %v3583
          %v3585 = vld [vmem:[%s3227 + $0x2c4] sm:$0xff]
          %3586 = vst [vmem:[%s3228 + $0x2c8] sm:$0xff] %v3585
          %v3587 = vld [vmem:[%s3227 + $0x2d4] sm:$0xff]
          %3588 = vst [vmem:[%s3228 + $0x2cc] sm:$0xff] %v3587
          %v3589 = vld [vmem:[%s3227 + $0x2c8] sm:$0xff]
          %3590 = vst [vmem:[%s3228 + $0x2d0] sm:$0xff] %v3589
          %v3591 = vld [vmem:[%s3227 + $0x2d8] sm:$0xff]
          %3592 = vst [vmem:[%s3228 + $0x2d4] sm:$0xff] %v3591
          %v3593 = vld [vmem:[%s3227 + $0x2cc] sm:$0xff]
          %3594 = vst [vmem:[%s3228 + $0x2d8] sm:$0xff] %v3593
          %v3595 = vld [vmem:[%s3227 + $0x2dc] sm:$0xff]
          %3596 = vst [vmem:[%s3228 + $0x2dc] sm:$0xff] %v3595
          %v3597 = vld [vmem:[%s3227 + $0x2e0] sm:$0xff]
          %3598 = vst [vmem:[%s3228 + $0x2e0] sm:$0xff] %v3597
          %v3599 = vld [vmem:[%s3227 + $0x2f0] sm:$0xff]
          %3600 = vst [vmem:[%s3228 + $0x2e4] sm:$0xff] %v3599
          %v3601 = vld [vmem:[%s3227 + $0x2e4] sm:$0xff]
          %3602 = vst [vmem:[%s3228 + $0x2e8] sm:$0xff] %v3601
          %v3603 = vld [vmem:[%s3227 + $0x2f4] sm:$0xff]
          %3604 = vst [vmem:[%s3228 + $0x2ec] sm:$0xff] %v3603
          %v3605 = vld [vmem:[%s3227 + $0x2e8] sm:$0xff]
          %3606 = vst [vmem:[%s3228 + $0x2f0] sm:$0xff] %v3605
          %v3607 = vld [vmem:[%s3227 + $0x2f8] sm:$0xff]
          %3608 = vst [vmem:[%s3228 + $0x2f4] sm:$0xff] %v3607
          %v3609 = vld [vmem:[%s3227 + $0x2ec] sm:$0xff]
          %3610 = vst [vmem:[%s3228 + $0x2f8] sm:$0xff] %v3609
          %v3611 = vld [vmem:[%s3227 + $0x2fc] sm:$0xff]
          %3612 = vst [vmem:[%s3228 + $0x2fc] sm:$0xff] %v3611
          %v3613 = vld [vmem:[%s3227 + $0x300] sm:$0xff]
          %3614 = vst [vmem:[%s3228 + $0x300] sm:$0xff] %v3613
          %v3615 = vld [vmem:[%s3227 + $0x310] sm:$0xff]
          %3616 = vst [vmem:[%s3228 + $0x304] sm:$0xff] %v3615
          %v3617 = vld [vmem:[%s3227 + $0x304] sm:$0xff]
          %3618 = vst [vmem:[%s3228 + $0x308] sm:$0xff] %v3617
          %v3619 = vld [vmem:[%s3227 + $0x314] sm:$0xff]
          %3620 = vst [vmem:[%s3228 + $0x30c] sm:$0xff] %v3619
          %v3621 = vld [vmem:[%s3227 + $0x308] sm:$0xff]
          %3622 = vst [vmem:[%s3228 + $0x310] sm:$0xff] %v3621
          %v3623 = vld [vmem:[%s3227 + $0x318] sm:$0xff]
          %3624 = vst [vmem:[%s3228 + $0x314] sm:$0xff] %v3623
          %v3625 = vld [vmem:[%s3227 + $0x30c] sm:$0xff]
          %3626 = vst [vmem:[%s3228 + $0x318] sm:$0xff] %v3625
          %v3627 = vld [vmem:[%s3227 + $0x31c] sm:$0xff]
          %3628 = vst [vmem:[%s3228 + $0x31c] sm:$0xff] %v3627
          %v3629 = vld [vmem:[%s3227 + $0x320] sm:$0xff]
          %3630 = vst [vmem:[%s3228 + $0x320] sm:$0xff] %v3629
          %v3631 = vld [vmem:[%s3227 + $0x330] sm:$0xff]
          %3632 = vst [vmem:[%s3228 + $0x324] sm:$0xff] %v3631
          %v3633 = vld [vmem:[%s3227 + $0x324] sm:$0xff]
          %3634 = vst [vmem:[%s3228 + $0x328] sm:$0xff] %v3633
          %v3635 = vld [vmem:[%s3227 + $0x334] sm:$0xff]
          %3636 = vst [vmem:[%s3228 + $0x32c] sm:$0xff] %v3635
          %v3637 = vld [vmem:[%s3227 + $0x328] sm:$0xff]
          %3638 = vst [vmem:[%s3228 + $0x330] sm:$0xff] %v3637
          %v3639 = vld [vmem:[%s3227 + $0x338] sm:$0xff]
          %3640 = vst [vmem:[%s3228 + $0x334] sm:$0xff] %v3639
          %v3641 = vld [vmem:[%s3227 + $0x32c] sm:$0xff]
          %3642 = vst [vmem:[%s3228 + $0x338] sm:$0xff] %v3641
          %v3643 = vld [vmem:[%s3227 + $0x33c] sm:$0xff]
          %3644 = vst [vmem:[%s3228 + $0x33c] sm:$0xff] %v3643
          %v3645 = vld [vmem:[%s3227 + $0x340] sm:$0xff]
          %3646 = vst [vmem:[%s3228 + $0x340] sm:$0xff] %v3645
          %v3647 = vld [vmem:[%s3227 + $0x350] sm:$0xff]
          %3648 = vst [vmem:[%s3228 + $0x344] sm:$0xff] %v3647
          %v3649 = vld [vmem:[%s3227 + $0x344] sm:$0xff]
          %3650 = vst [vmem:[%s3228 + $0x348] sm:$0xff] %v3649
          %v3651 = vld [vmem:[%s3227 + $0x354] sm:$0xff]
          %3652 = vst [vmem:[%s3228 + $0x34c] sm:$0xff] %v3651
          %v3653 = vld [vmem:[%s3227 + $0x348] sm:$0xff]
          %3654 = vst [vmem:[%s3228 + $0x350] sm:$0xff] %v3653
          %v3655 = vld [vmem:[%s3227 + $0x358] sm:$0xff]
          %3656 = vst [vmem:[%s3228 + $0x354] sm:$0xff] %v3655
          %v3657 = vld [vmem:[%s3227 + $0x34c] sm:$0xff]
          %3658 = vst [vmem:[%s3228 + $0x358] sm:$0xff] %v3657
          %v3659 = vld [vmem:[%s3227 + $0x35c] sm:$0xff]
          %3660 = vst [vmem:[%s3228 + $0x35c] sm:$0xff] %v3659
          %v3661 = vld [vmem:[%s3227 + $0x360] sm:$0xff]
          %3662 = vst [vmem:[%s3228 + $0x360] sm:$0xff] %v3661
          %v3663 = vld [vmem:[%s3227 + $0x370] sm:$0xff]
          %3664 = vst [vmem:[%s3228 + $0x364] sm:$0xff] %v3663
          %v3665 = vld [vmem:[%s3227 + $0x364] sm:$0xff]
          %3666 = vst [vmem:[%s3228 + $0x368] sm:$0xff] %v3665
          %v3667 = vld [vmem:[%s3227 + $0x374] sm:$0xff]
          %3668 = vst [vmem:[%s3228 + $0x36c] sm:$0xff] %v3667
          %v3669 = vld [vmem:[%s3227 + $0x368] sm:$0xff]
          %3670 = vst [vmem:[%s3228 + $0x370] sm:$0xff] %v3669
          %v3671 = vld [vmem:[%s3227 + $0x378] sm:$0xff]
          %3672 = vst [vmem:[%s3228 + $0x374] sm:$0xff] %v3671
          %v3673 = vld [vmem:[%s3227 + $0x36c] sm:$0xff]
          %3674 = vst [vmem:[%s3228 + $0x378] sm:$0xff] %v3673
          %v3675 = vld [vmem:[%s3227 + $0x37c] sm:$0xff]
          %3676 = vst [vmem:[%s3228 + $0x37c] sm:$0xff] %v3675
          %v3677 = vld [vmem:[%s3227 + $0x380] sm:$0xff]
          %3678 = vst [vmem:[%s3228 + $0x380] sm:$0xff] %v3677
          %v3679 = vld [vmem:[%s3227 + $0x390] sm:$0xff]
          %3680 = vst [vmem:[%s3228 + $0x384] sm:$0xff] %v3679
          %v3681 = vld [vmem:[%s3227 + $0x384] sm:$0xff]
          %3682 = vst [vmem:[%s3228 + $0x388] sm:$0xff] %v3681
          %v3683 = vld [vmem:[%s3227 + $0x394] sm:$0xff]
          %3684 = vst [vmem:[%s3228 + $0x38c] sm:$0xff] %v3683
          %v3685 = vld [vmem:[%s3227 + $0x388] sm:$0xff]
          %3686 = vst [vmem:[%s3228 + $0x390] sm:$0xff] %v3685
          %v3687 = vld [vmem:[%s3227 + $0x398] sm:$0xff]
          %3688 = vst [vmem:[%s3228 + $0x394] sm:$0xff] %v3687
          %v3689 = vld [vmem:[%s3227 + $0x38c] sm:$0xff]
          %3690 = vst [vmem:[%s3228 + $0x398] sm:$0xff] %v3689
          %v3691 = vld [vmem:[%s3227 + $0x39c] sm:$0xff]
          %3692 = vst [vmem:[%s3228 + $0x39c] sm:$0xff] %v3691
          %v3693 = vld [vmem:[%s3227 + $0x3a0] sm:$0xff]
          %3694 = vst [vmem:[%s3228 + $0x3a0] sm:$0xff] %v3693
          %v3695 = vld [vmem:[%s3227 + $0x3b0] sm:$0xff]
          %3696 = vst [vmem:[%s3228 + $0x3a4] sm:$0xff] %v3695
          %v3697 = vld [vmem:[%s3227 + $0x3a4] sm:$0xff]
          %3698 = vst [vmem:[%s3228 + $0x3a8] sm:$0xff] %v3697
          %v3699 = vld [vmem:[%s3227 + $0x3b4] sm:$0xff]
          %3700 = vst [vmem:[%s3228 + $0x3ac] sm:$0xff] %v3699
          %v3701 = vld [vmem:[%s3227 + $0x3a8] sm:$0xff]
          %3702 = vst [vmem:[%s3228 + $0x3b0] sm:$0xff] %v3701
          %v3703 = vld [vmem:[%s3227 + $0x3b8] sm:$0xff]
          %3704 = vst [vmem:[%s3228 + $0x3b4] sm:$0xff] %v3703
          %v3705 = vld [vmem:[%s3227 + $0x3ac] sm:$0xff]
          %3706 = vst [vmem:[%s3228 + $0x3b8] sm:$0xff] %v3705
          %v3707 = vld [vmem:[%s3227 + $0x3bc] sm:$0xff]
          %3708 = vst [vmem:[%s3228 + $0x3bc] sm:$0xff] %v3707
          %v3709 = vld [vmem:[%s3227 + $0x3c0] sm:$0xff]
          %3710 = vst [vmem:[%s3228 + $0x3c0] sm:$0xff] %v3709
          %v3711 = vld [vmem:[%s3227 + $0x3d0] sm:$0xff]
          %3712 = vst [vmem:[%s3228 + $0x3c4] sm:$0xff] %v3711
          %v3713 = vld [vmem:[%s3227 + $0x3c4] sm:$0xff]
          %3714 = vst [vmem:[%s3228 + $0x3c8] sm:$0xff] %v3713
          %v3715 = vld [vmem:[%s3227 + $0x3d4] sm:$0xff]
          %3716 = vst [vmem:[%s3228 + $0x3cc] sm:$0xff] %v3715
          %v3717 = vld [vmem:[%s3227 + $0x3c8] sm:$0xff]
          %3718 = vst [vmem:[%s3228 + $0x3d0] sm:$0xff] %v3717
          %v3719 = vld [vmem:[%s3227 + $0x3d8] sm:$0xff]
          %3720 = vst [vmem:[%s3228 + $0x3d4] sm:$0xff] %v3719
          %v3721 = vld [vmem:[%s3227 + $0x3cc] sm:$0xff]
          %3722 = vst [vmem:[%s3228 + $0x3d8] sm:$0xff] %v3721
          %v3723 = vld [vmem:[%s3227 + $0x3dc] sm:$0xff]
          %3724 = vst [vmem:[%s3228 + $0x3dc] sm:$0xff] %v3723
          %v3725 = vld [vmem:[%s3227 + $0x3e0] sm:$0xff]
          %3726 = vst [vmem:[%s3228 + $0x3e0] sm:$0xff] %v3725
          %v3727 = vld [vmem:[%s3227 + $0x3f0] sm:$0xff]
          %3728 = vst [vmem:[%s3228 + $0x3e4] sm:$0xff] %v3727
          %v3729 = vld [vmem:[%s3227 + $0x3e4] sm:$0xff]
          %3730 = vst [vmem:[%s3228 + $0x3e8] sm:$0xff] %v3729
          %v3731 = vld [vmem:[%s3227 + $0x3f4] sm:$0xff]
          %3732 = vst [vmem:[%s3228 + $0x3ec] sm:$0xff] %v3731
          %v3733 = vld [vmem:[%s3227 + $0x3e8] sm:$0xff]
          %3734 = vst [vmem:[%s3228 + $0x3f0] sm:$0xff] %v3733
          %v3735 = vld [vmem:[%s3227 + $0x3f8] sm:$0xff]
          %3736 = vst [vmem:[%s3228 + $0x3f4] sm:$0xff] %v3735
          %v3737 = vld [vmem:[%s3227 + $0x3ec] sm:$0xff]
          %3738 = vst [vmem:[%s3228 + $0x3f8] sm:$0xff] %v3737
          %v3739 = vld [vmem:[%s3227 + $0x3fc] sm:$0xff]
          %3740 = vst [vmem:[%s3228 + $0x3fc] sm:$0xff] %v3739
          %v3741 = vld [vmem:[%s3227 + $0x400] sm:$0xff]
          %3742 = vst [vmem:[%s3228 + $0x400] sm:$0xff] %v3741
          %v3743 = vld [vmem:[%s3227 + $0x410] sm:$0xff]
          %3744 = vst [vmem:[%s3228 + $0x404] sm:$0xff] %v3743
          %v3745 = vld [vmem:[%s3227 + $0x404] sm:$0xff]
          %3746 = vst [vmem:[%s3228 + $0x408] sm:$0xff] %v3745
          %v3747 = vld [vmem:[%s3227 + $0x414] sm:$0xff]
          %3748 = vst [vmem:[%s3228 + $0x40c] sm:$0xff] %v3747
          %v3749 = vld [vmem:[%s3227 + $0x408] sm:$0xff]
          %3750 = vst [vmem:[%s3228 + $0x410] sm:$0xff] %v3749
          %v3751 = vld [vmem:[%s3227 + $0x418] sm:$0xff]
          %3752 = vst [vmem:[%s3228 + $0x414] sm:$0xff] %v3751
          %v3753 = vld [vmem:[%s3227 + $0x40c] sm:$0xff]
          %3754 = vst [vmem:[%s3228 + $0x418] sm:$0xff] %v3753
          %v3755 = vld [vmem:[%s3227 + $0x41c] sm:$0xff]
          %3756 = vst [vmem:[%s3228 + $0x41c] sm:$0xff] %v3755
          %v3757 = vld [vmem:[%s3227 + $0x420] sm:$0xff]
          %3758 = vst [vmem:[%s3228 + $0x420] sm:$0xff] %v3757
          %v3759 = vld [vmem:[%s3227 + $0x430] sm:$0xff]
          %3760 = vst [vmem:[%s3228 + $0x424] sm:$0xff] %v3759
          %v3761 = vld [vmem:[%s3227 + $0x424] sm:$0xff]
          %3762 = vst [vmem:[%s3228 + $0x428] sm:$0xff] %v3761
          %v3763 = vld [vmem:[%s3227 + $0x434] sm:$0xff]
          %3764 = vst [vmem:[%s3228 + $0x42c] sm:$0xff] %v3763
          %v3765 = vld [vmem:[%s3227 + $0x428] sm:$0xff]
          %3766 = vst [vmem:[%s3228 + $0x430] sm:$0xff] %v3765
          %v3767 = vld [vmem:[%s3227 + $0x438] sm:$0xff]
          %3768 = vst [vmem:[%s3228 + $0x434] sm:$0xff] %v3767
          %v3769 = vld [vmem:[%s3227 + $0x42c] sm:$0xff]
          %3770 = vst [vmem:[%s3228 + $0x438] sm:$0xff] %v3769
          %v3771 = vld [vmem:[%s3227 + $0x43c] sm:$0xff]
          %3772 = vst [vmem:[%s3228 + $0x43c] sm:$0xff] %v3771
          %v3773 = vld [vmem:[%s3227 + $0x440] sm:$0xff]
          %3774 = vst [vmem:[%s3228 + $0x440] sm:$0xff] %v3773
          %v3775 = vld [vmem:[%s3227 + $0x450] sm:$0xff]
          %3776 = vst [vmem:[%s3228 + $0x444] sm:$0xff] %v3775
          %v3777 = vld [vmem:[%s3227 + $0x444] sm:$0xff]
          %3778 = vst [vmem:[%s3228 + $0x448] sm:$0xff] %v3777
          %v3779 = vld [vmem:[%s3227 + $0x454] sm:$0xff]
          %3780 = vst [vmem:[%s3228 + $0x44c] sm:$0xff] %v3779
          %v3781 = vld [vmem:[%s3227 + $0x448] sm:$0xff]
          %3782 = vst [vmem:[%s3228 + $0x450] sm:$0xff] %v3781
          %v3783 = vld [vmem:[%s3227 + $0x458] sm:$0xff]
          %3784 = vst [vmem:[%s3228 + $0x454] sm:$0xff] %v3783
          %v3785 = vld [vmem:[%s3227 + $0x44c] sm:$0xff]
          %3786 = vst [vmem:[%s3228 + $0x458] sm:$0xff] %v3785
          %v3787 = vld [vmem:[%s3227 + $0x45c] sm:$0xff]
          %3788 = vst [vmem:[%s3228 + $0x45c] sm:$0xff] %v3787
          %v3789 = vld [vmem:[%s3227 + $0x460] sm:$0xff]
          %3790 = vst [vmem:[%s3228 + $0x460] sm:$0xff] %v3789
          %v3791 = vld [vmem:[%s3227 + $0x470] sm:$0xff]
          %3792 = vst [vmem:[%s3228 + $0x464] sm:$0xff] %v3791
          %v3793 = vld [vmem:[%s3227 + $0x464] sm:$0xff]
          %3794 = vst [vmem:[%s3228 + $0x468] sm:$0xff] %v3793
          %v3795 = vld [vmem:[%s3227 + $0x474] sm:$0xff]
          %3796 = vst [vmem:[%s3228 + $0x46c] sm:$0xff] %v3795
          %v3797 = vld [vmem:[%s3227 + $0x468] sm:$0xff]
          %3798 = vst [vmem:[%s3228 + $0x470] sm:$0xff] %v3797
          %v3799 = vld [vmem:[%s3227 + $0x478] sm:$0xff]
          %3800 = vst [vmem:[%s3228 + $0x474] sm:$0xff] %v3799
          %v3801 = vld [vmem:[%s3227 + $0x46c] sm:$0xff]
          %3802 = vst [vmem:[%s3228 + $0x478] sm:$0xff] %v3801
          %v3803 = vld [vmem:[%s3227 + $0x47c] sm:$0xff]
          %3804 = vst [vmem:[%s3228 + $0x47c] sm:$0xff] %v3803
          %v3805 = vld [vmem:[%s3227 + $0x480] sm:$0xff]
          %3806 = vst [vmem:[%s3228 + $0x480] sm:$0xff] %v3805
          %v3807 = vld [vmem:[%s3227 + $0x490] sm:$0xff]
          %3808 = vst [vmem:[%s3228 + $0x484] sm:$0xff] %v3807
          %v3809 = vld [vmem:[%s3227 + $0x484] sm:$0xff]
          %3810 = vst [vmem:[%s3228 + $0x488] sm:$0xff] %v3809
          %v3811 = vld [vmem:[%s3227 + $0x494] sm:$0xff]
          %3812 = vst [vmem:[%s3228 + $0x48c] sm:$0xff] %v3811
          %v3813 = vld [vmem:[%s3227 + $0x488] sm:$0xff]
          %3814 = vst [vmem:[%s3228 + $0x490] sm:$0xff] %v3813
          %v3815 = vld [vmem:[%s3227 + $0x498] sm:$0xff]
          %3816 = vst [vmem:[%s3228 + $0x494] sm:$0xff] %v3815
          %v3817 = vld [vmem:[%s3227 + $0x48c] sm:$0xff]
          %3818 = vst [vmem:[%s3228 + $0x498] sm:$0xff] %v3817
          %v3819 = vld [vmem:[%s3227 + $0x49c] sm:$0xff]
          %3820 = vst [vmem:[%s3228 + $0x49c] sm:$0xff] %v3819
          %v3821 = vld [vmem:[%s3227 + $0x4a0] sm:$0xff]
          %3822 = vst [vmem:[%s3228 + $0x4a0] sm:$0xff] %v3821
          %v3823 = vld [vmem:[%s3227 + $0x4b0] sm:$0xff]
          %3824 = vst [vmem:[%s3228 + $0x4a4] sm:$0xff] %v3823
          %v3825 = vld [vmem:[%s3227 + $0x4a4] sm:$0xff]
          %3826 = vst [vmem:[%s3228 + $0x4a8] sm:$0xff] %v3825
          %v3827 = vld [vmem:[%s3227 + $0x4b4] sm:$0xff]
          %3828 = vst [vmem:[%s3228 + $0x4ac] sm:$0xff] %v3827
          %v3829 = vld [vmem:[%s3227 + $0x4a8] sm:$0xff]
          %3830 = vst [vmem:[%s3228 + $0x4b0] sm:$0xff] %v3829
          %v3831 = vld [vmem:[%s3227 + $0x4b8] sm:$0xff]
          %3832 = vst [vmem:[%s3228 + $0x4b4] sm:$0xff] %v3831
          %v3833 = vld [vmem:[%s3227 + $0x4ac] sm:$0xff]
          %3834 = vst [vmem:[%s3228 + $0x4b8] sm:$0xff] %v3833
          %v3835 = vld [vmem:[%s3227 + $0x4bc] sm:$0xff]
          %3836 = vst [vmem:[%s3228 + $0x4bc] sm:$0xff] %v3835
          %v3837 = vld [vmem:[%s3227 + $0x4c0] sm:$0xff]
          %3838 = vst [vmem:[%s3228 + $0x4c0] sm:$0xff] %v3837
          %v3839 = vld [vmem:[%s3227 + $0x4d0] sm:$0xff]
          %3840 = vst [vmem:[%s3228 + $0x4c4] sm:$0xff] %v3839
          %v3841 = vld [vmem:[%s3227 + $0x4c4] sm:$0xff]
          %3842 = vst [vmem:[%s3228 + $0x4c8] sm:$0xff] %v3841
          %v3843 = vld [vmem:[%s3227 + $0x4d4] sm:$0xff]
          %3844 = vst [vmem:[%s3228 + $0x4cc] sm:$0xff] %v3843
          %v3845 = vld [vmem:[%s3227 + $0x4c8] sm:$0xff]
          %3846 = vst [vmem:[%s3228 + $0x4d0] sm:$0xff] %v3845
          %v3847 = vld [vmem:[%s3227 + $0x4d8] sm:$0xff]
          %3848 = vst [vmem:[%s3228 + $0x4d4] sm:$0xff] %v3847
          %v3849 = vld [vmem:[%s3227 + $0x4cc] sm:$0xff]
          %3850 = vst [vmem:[%s3228 + $0x4d8] sm:$0xff] %v3849
          %v3851 = vld [vmem:[%s3227 + $0x4dc] sm:$0xff]
          %3852 = vst [vmem:[%s3228 + $0x4dc] sm:$0xff] %v3851
          %v3853 = vld [vmem:[%s3227 + $0x4e0] sm:$0xff]
          %3854 = vst [vmem:[%s3228 + $0x4e0] sm:$0xff] %v3853
          %v3855 = vld [vmem:[%s3227 + $0x4f0] sm:$0xff]
          %3856 = vst [vmem:[%s3228 + $0x4e4] sm:$0xff] %v3855
          %v3857 = vld [vmem:[%s3227 + $0x4e4] sm:$0xff]
          %3858 = vst [vmem:[%s3228 + $0x4e8] sm:$0xff] %v3857
          %v3859 = vld [vmem:[%s3227 + $0x4f4] sm:$0xff]
          %3860 = vst [vmem:[%s3228 + $0x4ec] sm:$0xff] %v3859
          %v3861 = vld [vmem:[%s3227 + $0x4e8] sm:$0xff]
          %3862 = vst [vmem:[%s3228 + $0x4f0] sm:$0xff] %v3861
          %v3863 = vld [vmem:[%s3227 + $0x4f8] sm:$0xff]
          %3864 = vst [vmem:[%s3228 + $0x4f4] sm:$0xff] %v3863
          %v3865 = vld [vmem:[%s3227 + $0x4ec] sm:$0xff]
          %3866 = vst [vmem:[%s3228 + $0x4f8] sm:$0xff] %v3865
          %v3867 = vld [vmem:[%s3227 + $0x4fc] sm:$0xff]
          %3868 = vst [vmem:[%s3228 + $0x4fc] sm:$0xff] %v3867
          %v3869 = vld [vmem:[%s3227 + $0x500] sm:$0xff]
          %3870 = vst [vmem:[%s3228 + $0x500] sm:$0xff] %v3869
          %v3871 = vld [vmem:[%s3227 + $0x510] sm:$0xff]
          %3872 = vst [vmem:[%s3228 + $0x504] sm:$0xff] %v3871
          %v3873 = vld [vmem:[%s3227 + $0x504] sm:$0xff]
          %3874 = vst [vmem:[%s3228 + $0x508] sm:$0xff] %v3873
          %v3875 = vld [vmem:[%s3227 + $0x514] sm:$0xff]
          %3876 = vst [vmem:[%s3228 + $0x50c] sm:$0xff] %v3875
          %v3877 = vld [vmem:[%s3227 + $0x508] sm:$0xff]
          %3878 = vst [vmem:[%s3228 + $0x510] sm:$0xff] %v3877
          %v3879 = vld [vmem:[%s3227 + $0x518] sm:$0xff]
          %3880 = vst [vmem:[%s3228 + $0x514] sm:$0xff] %v3879
          %v3881 = vld [vmem:[%s3227 + $0x50c] sm:$0xff]
          %3882 = vst [vmem:[%s3228 + $0x518] sm:$0xff] %v3881
          %v3883 = vld [vmem:[%s3227 + $0x51c] sm:$0xff]
          %3884 = vst [vmem:[%s3228 + $0x51c] sm:$0xff] %v3883
          %v3885 = vld [vmem:[%s3227 + $0x520] sm:$0xff]
          %3886 = vst [vmem:[%s3228 + $0x520] sm:$0xff] %v3885
          %v3887 = vld [vmem:[%s3227 + $0x530] sm:$0xff]
          %3888 = vst [vmem:[%s3228 + $0x524] sm:$0xff] %v3887
          %v3889 = vld [vmem:[%s3227 + $0x524] sm:$0xff]
          %3890 = vst [vmem:[%s3228 + $0x528] sm:$0xff] %v3889
          %v3891 = vld [vmem:[%s3227 + $0x534] sm:$0xff]
          %3892 = vst [vmem:[%s3228 + $0x52c] sm:$0xff] %v3891
          %v3893 = vld [vmem:[%s3227 + $0x528] sm:$0xff]
          %3894 = vst [vmem:[%s3228 + $0x530] sm:$0xff] %v3893
          %v3895 = vld [vmem:[%s3227 + $0x538] sm:$0xff]
          %3896 = vst [vmem:[%s3228 + $0x534] sm:$0xff] %v3895
          %v3897 = vld [vmem:[%s3227 + $0x52c] sm:$0xff]
          %3898 = vst [vmem:[%s3228 + $0x538] sm:$0xff] %v3897
          %v3899 = vld [vmem:[%s3227 + $0x53c] sm:$0xff]
          %3900 = vst [vmem:[%s3228 + $0x53c] sm:$0xff] %v3899
          %v3901 = vld [vmem:[%s3227 + $0x540] sm:$0xff]
          %3902 = vst [vmem:[%s3228 + $0x540] sm:$0xff] %v3901
          %v3903 = vld [vmem:[%s3227 + $0x550] sm:$0xff]
          %3904 = vst [vmem:[%s3228 + $0x544] sm:$0xff] %v3903
          %v3905 = vld [vmem:[%s3227 + $0x544] sm:$0xff]
          %3906 = vst [vmem:[%s3228 + $0x548] sm:$0xff] %v3905
          %v3907 = vld [vmem:[%s3227 + $0x554] sm:$0xff]
          %3908 = vst [vmem:[%s3228 + $0x54c] sm:$0xff] %v3907
          %v3909 = vld [vmem:[%s3227 + $0x548] sm:$0xff]
          %3910 = vst [vmem:[%s3228 + $0x550] sm:$0xff] %v3909
          %v3911 = vld [vmem:[%s3227 + $0x558] sm:$0xff]
          %3912 = vst [vmem:[%s3228 + $0x554] sm:$0xff] %v3911
          %v3913 = vld [vmem:[%s3227 + $0x54c] sm:$0xff]
          %3914 = vst [vmem:[%s3228 + $0x558] sm:$0xff] %v3913
          %v3915 = vld [vmem:[%s3227 + $0x55c] sm:$0xff]
          %3916 = vst [vmem:[%s3228 + $0x55c] sm:$0xff] %v3915
          %v3917 = vld [vmem:[%s3227 + $0x560] sm:$0xff]
          %3918 = vst [vmem:[%s3228 + $0x560] sm:$0xff] %v3917
          %v3919 = vld [vmem:[%s3227 + $0x570] sm:$0xff]
          %3920 = vst [vmem:[%s3228 + $0x564] sm:$0xff] %v3919
          %v3921 = vld [vmem:[%s3227 + $0x564] sm:$0xff]
          %3922 = vst [vmem:[%s3228 + $0x568] sm:$0xff] %v3921
          %v3923 = vld [vmem:[%s3227 + $0x574] sm:$0xff]
          %3924 = vst [vmem:[%s3228 + $0x56c] sm:$0xff] %v3923
          %v3925 = vld [vmem:[%s3227 + $0x568] sm:$0xff]
          %3926 = vst [vmem:[%s3228 + $0x570] sm:$0xff] %v3925
          %v3927 = vld [vmem:[%s3227 + $0x578] sm:$0xff]
          %3928 = vst [vmem:[%s3228 + $0x574] sm:$0xff] %v3927
          %v3929 = vld [vmem:[%s3227 + $0x56c] sm:$0xff]
          %3930 = vst [vmem:[%s3228 + $0x578] sm:$0xff] %v3929
          %v3931 = vld [vmem:[%s3227 + $0x57c] sm:$0xff]
          %3932 = vst [vmem:[%s3228 + $0x57c] sm:$0xff] %v3931
          %v3933 = vld [vmem:[%s3227 + $0x580] sm:$0xff]
          %3934 = vst [vmem:[%s3228 + $0x580] sm:$0xff] %v3933
          %v3935 = vld [vmem:[%s3227 + $0x590] sm:$0xff]
          %3936 = vst [vmem:[%s3228 + $0x584] sm:$0xff] %v3935
          %v3937 = vld [vmem:[%s3227 + $0x584] sm:$0xff]
          %3938 = vst [vmem:[%s3228 + $0x588] sm:$0xff] %v3937
          %v3939 = vld [vmem:[%s3227 + $0x594] sm:$0xff]
          %3940 = vst [vmem:[%s3228 + $0x58c] sm:$0xff] %v3939
          %v3941 = vld [vmem:[%s3227 + $0x588] sm:$0xff]
          %3942 = vst [vmem:[%s3228 + $0x590] sm:$0xff] %v3941
          %v3943 = vld [vmem:[%s3227 + $0x598] sm:$0xff]
          %3944 = vst [vmem:[%s3228 + $0x594] sm:$0xff] %v3943
          %v3945 = vld [vmem:[%s3227 + $0x58c] sm:$0xff]
          %3946 = vst [vmem:[%s3228 + $0x598] sm:$0xff] %v3945
          %v3947 = vld [vmem:[%s3227 + $0x59c] sm:$0xff]
          %3948 = vst [vmem:[%s3228 + $0x59c] sm:$0xff] %v3947
          %v3949 = vld [vmem:[%s3227 + $0x5a0] sm:$0xff]
          %3950 = vst [vmem:[%s3228 + $0x5a0] sm:$0xff] %v3949
          %v3951 = vld [vmem:[%s3227 + $0x5b0] sm:$0xff]
          %3952 = vst [vmem:[%s3228 + $0x5a4] sm:$0xff] %v3951
          %v3953 = vld [vmem:[%s3227 + $0x5a4] sm:$0xff]
          %3954 = vst [vmem:[%s3228 + $0x5a8] sm:$0xff] %v3953
          %v3955 = vld [vmem:[%s3227 + $0x5b4] sm:$0xff]
          %3956 = vst [vmem:[%s3228 + $0x5ac] sm:$0xff] %v3955
          %v3957 = vld [vmem:[%s3227 + $0x5a8] sm:$0xff]
          %3958 = vst [vmem:[%s3228 + $0x5b0] sm:$0xff] %v3957
          %v3959 = vld [vmem:[%s3227 + $0x5b8] sm:$0xff]
          %3960 = vst [vmem:[%s3228 + $0x5b4] sm:$0xff] %v3959
          %v3961 = vld [vmem:[%s3227 + $0x5ac] sm:$0xff]
          %3962 = vst [vmem:[%s3228 + $0x5b8] sm:$0xff] %v3961
          %v3963 = vld [vmem:[%s3227 + $0x5bc] sm:$0xff]
          %3964 = vst [vmem:[%s3228 + $0x5bc] sm:$0xff] %v3963
          %v3965 = vld [vmem:[%s3227 + $0x5c0] sm:$0xff]
          %3966 = vst [vmem:[%s3228 + $0x5c0] sm:$0xff] %v3965
          %v3967 = vld [vmem:[%s3227 + $0x5d0] sm:$0xff]
          %3968 = vst [vmem:[%s3228 + $0x5c4] sm:$0xff] %v3967
          %v3969 = vld [vmem:[%s3227 + $0x5c4] sm:$0xff]
          %3970 = vst [vmem:[%s3228 + $0x5c8] sm:$0xff] %v3969
          %v3971 = vld [vmem:[%s3227 + $0x5d4] sm:$0xff]
          %3972 = vst [vmem:[%s3228 + $0x5cc] sm:$0xff] %v3971
          %v3973 = vld [vmem:[%s3227 + $0x5c8] sm:$0xff]
          %3974 = vst [vmem:[%s3228 + $0x5d0] sm:$0xff] %v3973
          %v3975 = vld [vmem:[%s3227 + $0x5d8] sm:$0xff]
          %3976 = vst [vmem:[%s3228 + $0x5d4] sm:$0xff] %v3975
          %v3977 = vld [vmem:[%s3227 + $0x5cc] sm:$0xff]
          %3978 = vst [vmem:[%s3228 + $0x5d8] sm:$0xff] %v3977
          %v3979 = vld [vmem:[%s3227 + $0x5dc] sm:$0xff]
          %3980 = vst [vmem:[%s3228 + $0x5dc] sm:$0xff] %v3979
          %v3981 = vld [vmem:[%s3227 + $0x5e0] sm:$0xff]
          %3982 = vst [vmem:[%s3228 + $0x5e0] sm:$0xff] %v3981
          %v3983 = vld [vmem:[%s3227 + $0x5f0] sm:$0xff]
          %3984 = vst [vmem:[%s3228 + $0x5e4] sm:$0xff] %v3983
          %v3985 = vld [vmem:[%s3227 + $0x5e4] sm:$0xff]
          %3986 = vst [vmem:[%s3228 + $0x5e8] sm:$0xff] %v3985
          %v3987 = vld [vmem:[%s3227 + $0x5f4] sm:$0xff]
          %3988 = vst [vmem:[%s3228 + $0x5ec] sm:$0xff] %v3987
          %v3989 = vld [vmem:[%s3227 + $0x5e8] sm:$0xff]
          %3990 = vst [vmem:[%s3228 + $0x5f0] sm:$0xff] %v3989
          %v3991 = vld [vmem:[%s3227 + $0x5f8] sm:$0xff]
          %3992 = vst [vmem:[%s3228 + $0x5f4] sm:$0xff] %v3991
          %v3993 = vld [vmem:[%s3227 + $0x5ec] sm:$0xff]
          %3994 = vst [vmem:[%s3228 + $0x5f8] sm:$0xff] %v3993
          %v3995 = vld [vmem:[%s3227 + $0x5fc] sm:$0xff]
          %3996 = vst [vmem:[%s3228 + $0x5fc] sm:$0xff] %v3995
          %v3997 = vld [vmem:[%s3227 + $0x600] sm:$0xff]
          %3998 = vst [vmem:[%s3228 + $0x600] sm:$0xff] %v3997
          %v3999 = vld [vmem:[%s3227 + $0x610] sm:$0xff]
          %4000 = vst [vmem:[%s3228 + $0x604] sm:$0xff] %v3999
          %v4001 = vld [vmem:[%s3227 + $0x604] sm:$0xff]
          %4002 = vst [vmem:[%s3228 + $0x608] sm:$0xff] %v4001
          %v4003 = vld [vmem:[%s3227 + $0x614] sm:$0xff]
          %4004 = vst [vmem:[%s3228 + $0x60c] sm:$0xff] %v4003
          %v4005 = vld [vmem:[%s3227 + $0x608] sm:$0xff]
          %4006 = vst [vmem:[%s3228 + $0x610] sm:$0xff] %v4005
          %v4007 = vld [vmem:[%s3227 + $0x618] sm:$0xff]
          %4008 = vst [vmem:[%s3228 + $0x614] sm:$0xff] %v4007
          %v4009 = vld [vmem:[%s3227 + $0x60c] sm:$0xff]
          %4010 = vst [vmem:[%s3228 + $0x618] sm:$0xff] %v4009
          %v4011 = vld [vmem:[%s3227 + $0x61c] sm:$0xff]
          %4012 = vst [vmem:[%s3228 + $0x61c] sm:$0xff] %v4011
          %v4013 = vld [vmem:[%s3227 + $0x620] sm:$0xff]
          %4014 = vst [vmem:[%s3228 + $0x620] sm:$0xff] %v4013
          %v4015 = vld [vmem:[%s3227 + $0x630] sm:$0xff]
          %4016 = vst [vmem:[%s3228 + $0x624] sm:$0xff] %v4015
          %v4017 = vld [vmem:[%s3227 + $0x624] sm:$0xff]
          %4018 = vst [vmem:[%s3228 + $0x628] sm:$0xff] %v4017
          %v4019 = vld [vmem:[%s3227 + $0x634] sm:$0xff]
          %4020 = vst [vmem:[%s3228 + $0x62c] sm:$0xff] %v4019
          %v4021 = vld [vmem:[%s3227 + $0x628] sm:$0xff]
          %4022 = vst [vmem:[%s3228 + $0x630] sm:$0xff] %v4021
          %v4023 = vld [vmem:[%s3227 + $0x638] sm:$0xff]
          %4024 = vst [vmem:[%s3228 + $0x634] sm:$0xff] %v4023
          %v4025 = vld [vmem:[%s3227 + $0x62c] sm:$0xff]
          %4026 = vst [vmem:[%s3228 + $0x638] sm:$0xff] %v4025
          %v4027 = vld [vmem:[%s3227 + $0x63c] sm:$0xff]
          %4028 = vst [vmem:[%s3228 + $0x63c] sm:$0xff] %v4027
          %v4029 = vld [vmem:[%s3227 + $0x640] sm:$0xff]
          %4030 = vst [vmem:[%s3228 + $0x640] sm:$0xff] %v4029
          %v4031 = vld [vmem:[%s3227 + $0x650] sm:$0xff]
          %4032 = vst [vmem:[%s3228 + $0x644] sm:$0xff] %v4031
          %v4033 = vld [vmem:[%s3227 + $0x644] sm:$0xff]
          %4034 = vst [vmem:[%s3228 + $0x648] sm:$0xff] %v4033
          %v4035 = vld [vmem:[%s3227 + $0x654] sm:$0xff]
          %4036 = vst [vmem:[%s3228 + $0x64c] sm:$0xff] %v4035
          %v4037 = vld [vmem:[%s3227 + $0x648] sm:$0xff]
          %4038 = vst [vmem:[%s3228 + $0x650] sm:$0xff] %v4037
          %v4039 = vld [vmem:[%s3227 + $0x658] sm:$0xff]
          %4040 = vst [vmem:[%s3228 + $0x654] sm:$0xff] %v4039
          %v4041 = vld [vmem:[%s3227 + $0x64c] sm:$0xff]
          %4042 = vst [vmem:[%s3228 + $0x658] sm:$0xff] %v4041
          %v4043 = vld [vmem:[%s3227 + $0x65c] sm:$0xff]
          %4044 = vst [vmem:[%s3228 + $0x65c] sm:$0xff] %v4043
          %v4045 = vld [vmem:[%s3227 + $0x660] sm:$0xff]
          %4046 = vst [vmem:[%s3228 + $0x660] sm:$0xff] %v4045
          %v4047 = vld [vmem:[%s3227 + $0x670] sm:$0xff]
          %4048 = vst [vmem:[%s3228 + $0x664] sm:$0xff] %v4047
          %v4049 = vld [vmem:[%s3227 + $0x664] sm:$0xff]
          %4050 = vst [vmem:[%s3228 + $0x668] sm:$0xff] %v4049
          %v4051 = vld [vmem:[%s3227 + $0x674] sm:$0xff]
          %4052 = vst [vmem:[%s3228 + $0x66c] sm:$0xff] %v4051
          %v4053 = vld [vmem:[%s3227 + $0x668] sm:$0xff]
          %4054 = vst [vmem:[%s3228 + $0x670] sm:$0xff] %v4053
          %v4055 = vld [vmem:[%s3227 + $0x678] sm:$0xff]
          %4056 = vst [vmem:[%s3228 + $0x674] sm:$0xff] %v4055
          %v4057 = vld [vmem:[%s3227 + $0x66c] sm:$0xff]
          %4058 = vst [vmem:[%s3228 + $0x678] sm:$0xff] %v4057
          %v4059 = vld [vmem:[%s3227 + $0x67c] sm:$0xff]
          %4060 = vst [vmem:[%s3228 + $0x67c] sm:$0xff] %v4059
          %v4061 = vld [vmem:[%s3227 + $0x680] sm:$0xff]
          %4062 = vst [vmem:[%s3228 + $0x680] sm:$0xff] %v4061
          %v4063 = vld [vmem:[%s3227 + $0x690] sm:$0xff]
          %4064 = vst [vmem:[%s3228 + $0x684] sm:$0xff] %v4063
          %v4065 = vld [vmem:[%s3227 + $0x684] sm:$0xff]
          %4066 = vst [vmem:[%s3228 + $0x688] sm:$0xff] %v4065
          %v4067 = vld [vmem:[%s3227 + $0x694] sm:$0xff]
          %4068 = vst [vmem:[%s3228 + $0x68c] sm:$0xff] %v4067
          %v4069 = vld [vmem:[%s3227 + $0x688] sm:$0xff]
          %4070 = vst [vmem:[%s3228 + $0x690] sm:$0xff] %v4069
          %v4071 = vld [vmem:[%s3227 + $0x698] sm:$0xff]
          %4072 = vst [vmem:[%s3228 + $0x694] sm:$0xff] %v4071
          %v4073 = vld [vmem:[%s3227 + $0x68c] sm:$0xff]
          %4074 = vst [vmem:[%s3228 + $0x698] sm:$0xff] %v4073
          %v4075 = vld [vmem:[%s3227 + $0x69c] sm:$0xff]
          %4076 = vst [vmem:[%s3228 + $0x69c] sm:$0xff] %v4075
          %v4077 = vld [vmem:[%s3227 + $0x6a0] sm:$0xff]
          %4078 = vst [vmem:[%s3228 + $0x6a0] sm:$0xff] %v4077
          %v4079 = vld [vmem:[%s3227 + $0x6b0] sm:$0xff]
          %4080 = vst [vmem:[%s3228 + $0x6a4] sm:$0xff] %v4079
          %v4081 = vld [vmem:[%s3227 + $0x6a4] sm:$0xff]
          %4082 = vst [vmem:[%s3228 + $0x6a8] sm:$0xff] %v4081
          %v4083 = vld [vmem:[%s3227 + $0x6b4] sm:$0xff]
          %4084 = vst [vmem:[%s3228 + $0x6ac] sm:$0xff] %v4083
          %v4085 = vld [vmem:[%s3227 + $0x6a8] sm:$0xff]
          %4086 = vst [vmem:[%s3228 + $0x6b0] sm:$0xff] %v4085
          %v4087 = vld [vmem:[%s3227 + $0x6b8] sm:$0xff]
          %4088 = vst [vmem:[%s3228 + $0x6b4] sm:$0xff] %v4087
          %v4089 = vld [vmem:[%s3227 + $0x6ac] sm:$0xff]
          %4090 = vst [vmem:[%s3228 + $0x6b8] sm:$0xff] %v4089
          %v4091 = vld [vmem:[%s3227 + $0x6bc] sm:$0xff]
          %4092 = vst [vmem:[%s3228 + $0x6bc] sm:$0xff] %v4091
          %v4093 = vld [vmem:[%s3227 + $0x6c0] sm:$0xff]
          %4094 = vst [vmem:[%s3228 + $0x6c0] sm:$0xff] %v4093
          %v4095 = vld [vmem:[%s3227 + $0x6d0] sm:$0xff]
          %4096 = vst [vmem:[%s3228 + $0x6c4] sm:$0xff] %v4095
          %v4097 = vld [vmem:[%s3227 + $0x6c4] sm:$0xff]
          %4098 = vst [vmem:[%s3228 + $0x6c8] sm:$0xff] %v4097
          %v4099 = vld [vmem:[%s3227 + $0x6d4] sm:$0xff]
          %4100 = vst [vmem:[%s3228 + $0x6cc] sm:$0xff] %v4099
          %v4101 = vld [vmem:[%s3227 + $0x6c8] sm:$0xff]
          %4102 = vst [vmem:[%s3228 + $0x6d0] sm:$0xff] %v4101
          %v4103 = vld [vmem:[%s3227 + $0x6d8] sm:$0xff]
          %4104 = vst [vmem:[%s3228 + $0x6d4] sm:$0xff] %v4103
          %v4105 = vld [vmem:[%s3227 + $0x6cc] sm:$0xff]
          %4106 = vst [vmem:[%s3228 + $0x6d8] sm:$0xff] %v4105
          %v4107 = vld [vmem:[%s3227 + $0x6dc] sm:$0xff]
          %4108 = vst [vmem:[%s3228 + $0x6dc] sm:$0xff] %v4107
          %v4109 = vld [vmem:[%s3227 + $0x6e0] sm:$0xff]
          %4110 = vst [vmem:[%s3228 + $0x6e0] sm:$0xff] %v4109
          %v4111 = vld [vmem:[%s3227 + $0x6f0] sm:$0xff]
          %4112 = vst [vmem:[%s3228 + $0x6e4] sm:$0xff] %v4111
          %v4113 = vld [vmem:[%s3227 + $0x6e4] sm:$0xff]
          %4114 = vst [vmem:[%s3228 + $0x6e8] sm:$0xff] %v4113
          %v4115 = vld [vmem:[%s3227 + $0x6f4] sm:$0xff]
          %4116 = vst [vmem:[%s3228 + $0x6ec] sm:$0xff] %v4115
          %v4117 = vld [vmem:[%s3227 + $0x6e8] sm:$0xff]
          %4118 = vst [vmem:[%s3228 + $0x6f0] sm:$0xff] %v4117
          %v4119 = vld [vmem:[%s3227 + $0x6f8] sm:$0xff]
          %4120 = vst [vmem:[%s3228 + $0x6f4] sm:$0xff] %v4119
          %v4121 = vld [vmem:[%s3227 + $0x6ec] sm:$0xff]
          %4122 = vst [vmem:[%s3228 + $0x6f8] sm:$0xff] %v4121
          %v4123 = vld [vmem:[%s3227 + $0x6fc] sm:$0xff]
          %4124 = vst [vmem:[%s3228 + $0x6fc] sm:$0xff] %v4123
          %v4125 = vld [vmem:[%s3227 + $0x700] sm:$0xff]
          %4126 = vst [vmem:[%s3228 + $0x700] sm:$0xff] %v4125
          %v4127 = vld [vmem:[%s3227 + $0x710] sm:$0xff]
          %4128 = vst [vmem:[%s3228 + $0x704] sm:$0xff] %v4127
          %v4129 = vld [vmem:[%s3227 + $0x704] sm:$0xff]
          %4130 = vst [vmem:[%s3228 + $0x708] sm:$0xff] %v4129
          %v4131 = vld [vmem:[%s3227 + $0x714] sm:$0xff]
          %4132 = vst [vmem:[%s3228 + $0x70c] sm:$0xff] %v4131
          %v4133 = vld [vmem:[%s3227 + $0x708] sm:$0xff]
          %4134 = vst [vmem:[%s3228 + $0x710] sm:$0xff] %v4133
          %v4135 = vld [vmem:[%s3227 + $0x718] sm:$0xff]
          %4136 = vst [vmem:[%s3228 + $0x714] sm:$0xff] %v4135
          %v4137 = vld [vmem:[%s3227 + $0x70c] sm:$0xff]
          %4138 = vst [vmem:[%s3228 + $0x718] sm:$0xff] %v4137
          %v4139 = vld [vmem:[%s3227 + $0x71c] sm:$0xff]
          %4140 = vst [vmem:[%s3228 + $0x71c] sm:$0xff] %v4139
          %v4141 = vld [vmem:[%s3227 + $0x720] sm:$0xff]
          %4142 = vst [vmem:[%s3228 + $0x720] sm:$0xff] %v4141
          %v4143 = vld [vmem:[%s3227 + $0x730] sm:$0xff]
          %4144 = vst [vmem:[%s3228 + $0x724] sm:$0xff] %v4143
          %v4145 = vld [vmem:[%s3227 + $0x724] sm:$0xff]
          %4146 = vst [vmem:[%s3228 + $0x728] sm:$0xff] %v4145
          %v4147 = vld [vmem:[%s3227 + $0x734] sm:$0xff]
          %4148 = vst [vmem:[%s3228 + $0x72c] sm:$0xff] %v4147
          %v4149 = vld [vmem:[%s3227 + $0x728] sm:$0xff]
          %4150 = vst [vmem:[%s3228 + $0x730] sm:$0xff] %v4149
          %v4151 = vld [vmem:[%s3227 + $0x738] sm:$0xff]
          %4152 = vst [vmem:[%s3228 + $0x734] sm:$0xff] %v4151
          %v4153 = vld [vmem:[%s3227 + $0x72c] sm:$0xff]
          %4154 = vst [vmem:[%s3228 + $0x738] sm:$0xff] %v4153
          %v4155 = vld [vmem:[%s3227 + $0x73c] sm:$0xff]
          %4156 = vst [vmem:[%s3228 + $0x73c] sm:$0xff] %v4155
          %v4157 = vld [vmem:[%s3227 + $0x740] sm:$0xff]
          %4158 = vst [vmem:[%s3228 + $0x740] sm:$0xff] %v4157
          %v4159 = vld [vmem:[%s3227 + $0x750] sm:$0xff]
          %4160 = vst [vmem:[%s3228 + $0x744] sm:$0xff] %v4159
          %v4161 = vld [vmem:[%s3227 + $0x744] sm:$0xff]
          %4162 = vst [vmem:[%s3228 + $0x748] sm:$0xff] %v4161
          %v4163 = vld [vmem:[%s3227 + $0x754] sm:$0xff]
          %4164 = vst [vmem:[%s3228 + $0x74c] sm:$0xff] %v4163
          %v4165 = vld [vmem:[%s3227 + $0x748] sm:$0xff]
          %4166 = vst [vmem:[%s3228 + $0x750] sm:$0xff] %v4165
          %v4167 = vld [vmem:[%s3227 + $0x758] sm:$0xff]
          %4168 = vst [vmem:[%s3228 + $0x754] sm:$0xff] %v4167
          %v4169 = vld [vmem:[%s3227 + $0x74c] sm:$0xff]
          %4170 = vst [vmem:[%s3228 + $0x758] sm:$0xff] %v4169
          %v4171 = vld [vmem:[%s3227 + $0x75c] sm:$0xff]
          %4172 = vst [vmem:[%s3228 + $0x75c] sm:$0xff] %v4171
          %v4173 = vld [vmem:[%s3227 + $0x760] sm:$0xff]
          %4174 = vst [vmem:[%s3228 + $0x760] sm:$0xff] %v4173
          %v4175 = vld [vmem:[%s3227 + $0x770] sm:$0xff]
          %4176 = vst [vmem:[%s3228 + $0x764] sm:$0xff] %v4175
          %v4177 = vld [vmem:[%s3227 + $0x764] sm:$0xff]
          %4178 = vst [vmem:[%s3228 + $0x768] sm:$0xff] %v4177
          %v4179 = vld [vmem:[%s3227 + $0x774] sm:$0xff]
          %4180 = vst [vmem:[%s3228 + $0x76c] sm:$0xff] %v4179
          %v4181 = vld [vmem:[%s3227 + $0x768] sm:$0xff]
          %4182 = vst [vmem:[%s3228 + $0x770] sm:$0xff] %v4181
          %v4183 = vld [vmem:[%s3227 + $0x778] sm:$0xff]
          %4184 = vst [vmem:[%s3228 + $0x774] sm:$0xff] %v4183
          %v4185 = vld [vmem:[%s3227 + $0x76c] sm:$0xff]
          %4186 = vst [vmem:[%s3228 + $0x778] sm:$0xff] %v4185
          %v4187 = vld [vmem:[%s3227 + $0x77c] sm:$0xff]
          %4188 = vst [vmem:[%s3228 + $0x77c] sm:$0xff] %v4187
          %v4189 = vld [vmem:[%s3227 + $0x780] sm:$0xff]
          %4190 = vst [vmem:[%s3228 + $0x780] sm:$0xff] %v4189
          %v4191 = vld [vmem:[%s3227 + $0x790] sm:$0xff]
          %4192 = vst [vmem:[%s3228 + $0x784] sm:$0xff] %v4191
          %v4193 = vld [vmem:[%s3227 + $0x784] sm:$0xff]
          %4194 = vst [vmem:[%s3228 + $0x788] sm:$0xff] %v4193
          %v4195 = vld [vmem:[%s3227 + $0x794] sm:$0xff]
          %4196 = vst [vmem:[%s3228 + $0x78c] sm:$0xff] %v4195
          %v4197 = vld [vmem:[%s3227 + $0x788] sm:$0xff]
          %4198 = vst [vmem:[%s3228 + $0x790] sm:$0xff] %v4197
          %v4199 = vld [vmem:[%s3227 + $0x798] sm:$0xff]
          %4200 = vst [vmem:[%s3228 + $0x794] sm:$0xff] %v4199
          %v4201 = vld [vmem:[%s3227 + $0x78c] sm:$0xff]
          %4202 = vst [vmem:[%s3228 + $0x798] sm:$0xff] %v4201
          %v4203 = vld [vmem:[%s3227 + $0x79c] sm:$0xff]
          %4204 = vst [vmem:[%s3228 + $0x79c] sm:$0xff] %v4203
          %v4205 = vld [vmem:[%s3227 + $0x7a0] sm:$0xff]
          %4206 = vst [vmem:[%s3228 + $0x7a0] sm:$0xff] %v4205
          %v4207 = vld [vmem:[%s3227 + $0x7b0] sm:$0xff]
          %4208 = vst [vmem:[%s3228 + $0x7a4] sm:$0xff] %v4207
          %v4209 = vld [vmem:[%s3227 + $0x7a4] sm:$0xff]
          %4210 = vst [vmem:[%s3228 + $0x7a8] sm:$0xff] %v4209
          %v4211 = vld [vmem:[%s3227 + $0x7b4] sm:$0xff]
          %4212 = vst [vmem:[%s3228 + $0x7ac] sm:$0xff] %v4211
          %v4213 = vld [vmem:[%s3227 + $0x7a8] sm:$0xff]
          %4214 = vst [vmem:[%s3228 + $0x7b0] sm:$0xff] %v4213
          %v4215 = vld [vmem:[%s3227 + $0x7b8] sm:$0xff]
          %4216 = vst [vmem:[%s3228 + $0x7b4] sm:$0xff] %v4215
          %v4217 = vld [vmem:[%s3227 + $0x7ac] sm:$0xff]
          %4218 = vst [vmem:[%s3228 + $0x7b8] sm:$0xff] %v4217
          %v4219 = vld [vmem:[%s3227 + $0x7bc] sm:$0xff]
          %4220 = vst [vmem:[%s3228 + $0x7bc] sm:$0xff] %v4219
          %v4221 = vld [vmem:[%s3227 + $0x7c0] sm:$0xff]
          %4222 = vst [vmem:[%s3228 + $0x7c0] sm:$0xff] %v4221
          %v4223 = vld [vmem:[%s3227 + $0x7d0] sm:$0xff]
          %4224 = vst [vmem:[%s3228 + $0x7c4] sm:$0xff] %v4223
          %v4225 = vld [vmem:[%s3227 + $0x7c4] sm:$0xff]
          %4226 = vst [vmem:[%s3228 + $0x7c8] sm:$0xff] %v4225
          %v4227 = vld [vmem:[%s3227 + $0x7d4] sm:$0xff]
          %4228 = vst [vmem:[%s3228 + $0x7cc] sm:$0xff] %v4227
          %v4229 = vld [vmem:[%s3227 + $0x7c8] sm:$0xff]
          %4230 = vst [vmem:[%s3228 + $0x7d0] sm:$0xff] %v4229
          %v4231 = vld [vmem:[%s3227 + $0x7d8] sm:$0xff]
          %4232 = vst [vmem:[%s3228 + $0x7d4] sm:$0xff] %v4231
          %v4233 = vld [vmem:[%s3227 + $0x7cc] sm:$0xff]
          %4234 = vst [vmem:[%s3228 + $0x7d8] sm:$0xff] %v4233
          %v4235 = vld [vmem:[%s3227 + $0x7dc] sm:$0xff]
          %4236 = vst [vmem:[%s3228 + $0x7dc] sm:$0xff] %v4235
          %v4237 = vld [vmem:[%s3227 + $0x7e0] sm:$0xff]
          %4238 = vst [vmem:[%s3228 + $0x7e0] sm:$0xff] %v4237
          %v4239 = vld [vmem:[%s3227 + $0x7f0] sm:$0xff]
          %4240 = vst [vmem:[%s3228 + $0x7e4] sm:$0xff] %v4239
          %v4241 = vld [vmem:[%s3227 + $0x7e4] sm:$0xff]
          %4242 = vst [vmem:[%s3228 + $0x7e8] sm:$0xff] %v4241
          %v4243 = vld [vmem:[%s3227 + $0x7f4] sm:$0xff]
          %4244 = vst [vmem:[%s3228 + $0x7ec] sm:$0xff] %v4243
          %v4245 = vld [vmem:[%s3227 + $0x7e8] sm:$0xff]
          %4246 = vst [vmem:[%s3228 + $0x7f0] sm:$0xff] %v4245
          %v4247 = vld [vmem:[%s3227 + $0x7f8] sm:$0xff]
          %4248 = vst [vmem:[%s3228 + $0x7f4] sm:$0xff] %v4247
          %v4249 = vld [vmem:[%s3227 + $0x7ec] sm:$0xff]
          %4250 = vst [vmem:[%s3228 + $0x7f8] sm:$0xff] %v4249
          %v4251 = vld [vmem:[%s3227 + $0x7fc] sm:$0xff]
          %4252 = vst [vmem:[%s3228 + $0x7fc] sm:$0xff] %v4251
          %s4253 = sadd.s32 1, %s3226
          %p4254 = scmp.ge.s32.totalorder %s4253, %s3217
          %s4255 = scalar_select %p4254, 0, %s4253
          %s4256 = smul.u32 %s4255, 8
          %s4257 = smul.u32 %s4255, 8
          %s4258 = scalar_lea.vmem %s13, %s4256
          %s4259 = scalar_lea.vmem [#allocation3], %s4257
        $region125: #{pose_encoder_forward.1} parent=119 // loop_footer
          %s3223 = sadd.s32 %s3221, 1
        $region126: #{pose_encoder_forward.1} parent=119 // loop_footer_branch
          %3220 = sbr.rel target = $region122
        $region127: #{pose_encoder_forward.1} parent=119 // loop_exit
          _
        %s4260 = sshllo.u32 0, %s3212
        loop: start=0, step=1, limit=1
        $region128: #{pose_encoder_forward.1} parent=119 // loop_pre_header
          _
        $region129: #{pose_encoder_forward.1} parent=119 // loop_header
          %s4262 = sphi 0, %s4266
          %p4263 = scmp.ge.s32.totalorder %s4262, 1
          %s4267 = sphi %s3214, %s3214
          %s4268 = sphi %s3216, %s3216
        $region130: #{pose_encoder_forward.1} parent=119 // loop_header_branch
          %4265 = sbr.rel (%p4263) target = $region134
        $region131: #{pose_encoder_forward.1} parent=119 // loop_body
          %v4269 = vld [vmem:[%s4267] sm:%s4260]
          %4270 = vst [vmem:[%s4268] sm:%s4260] %v4269
          %v4271 = vld [vmem:[%s4267 + $0x10] sm:%s4260]
          %4272 = vst [vmem:[%s4268 + $0x4] sm:%s4260] %v4271
          %v4273 = vld [vmem:[%s4267 + $0x4] sm:%s4260]
          %4274 = vst [vmem:[%s4268 + $0x8] sm:%s4260] %v4273
          %v4275 = vld [vmem:[%s4267 + $0x14] sm:%s4260]
          %4276 = vst [vmem:[%s4268 + $0xc] sm:%s4260] %v4275
          %v4277 = vld [vmem:[%s4267 + $0x8] sm:%s4260]
          %4278 = vst [vmem:[%s4268 + $0x10] sm:%s4260] %v4277
          %v4279 = vld [vmem:[%s4267 + $0x18] sm:%s4260]
          %4280 = vst [vmem:[%s4268 + $0x14] sm:%s4260] %v4279
          %v4281 = vld [vmem:[%s4267 + $0xc] sm:%s4260]
          %4282 = vst [vmem:[%s4268 + $0x18] sm:%s4260] %v4281
          %v4283 = vld [vmem:[%s4267 + $0x1c] sm:%s4260]
          %4284 = vst [vmem:[%s4268 + $0x1c] sm:%s4260] %v4283
          %v4285 = vld [vmem:[%s4267 + $0x20] sm:%s4260]
          %4286 = vst [vmem:[%s4268 + $0x20] sm:%s4260] %v4285
          %v4287 = vld [vmem:[%s4267 + $0x30] sm:%s4260]
          %4288 = vst [vmem:[%s4268 + $0x24] sm:%s4260] %v4287
          %v4289 = vld [vmem:[%s4267 + $0x24] sm:%s4260]
          %4290 = vst [vmem:[%s4268 + $0x28] sm:%s4260] %v4289
          %v4291 = vld [vmem:[%s4267 + $0x34] sm:%s4260]
          %4292 = vst [vmem:[%s4268 + $0x2c] sm:%s4260] %v4291
          %v4293 = vld [vmem:[%s4267 + $0x28] sm:%s4260]
          %4294 = vst [vmem:[%s4268 + $0x30] sm:%s4260] %v4293
          %v4295 = vld [vmem:[%s4267 + $0x38] sm:%s4260]
          %4296 = vst [vmem:[%s4268 + $0x34] sm:%s4260] %v4295
          %v4297 = vld [vmem:[%s4267 + $0x2c] sm:%s4260]
          %4298 = vst [vmem:[%s4268 + $0x38] sm:%s4260] %v4297
          %v4299 = vld [vmem:[%s4267 + $0x3c] sm:%s4260]
          %4300 = vst [vmem:[%s4268 + $0x3c] sm:%s4260] %v4299
          %v4301 = vld [vmem:[%s4267 + $0x40] sm:%s4260]
          %4302 = vst [vmem:[%s4268 + $0x40] sm:%s4260] %v4301
          %v4303 = vld [vmem:[%s4267 + $0x50] sm:%s4260]
          %4304 = vst [vmem:[%s4268 + $0x44] sm:%s4260] %v4303
          %v4305 = vld [vmem:[%s4267 + $0x44] sm:%s4260]
          %4306 = vst [vmem:[%s4268 + $0x48] sm:%s4260] %v4305
          %v4307 = vld [vmem:[%s4267 + $0x54] sm:%s4260]
          %4308 = vst [vmem:[%s4268 + $0x4c] sm:%s4260] %v4307
          %v4309 = vld [vmem:[%s4267 + $0x48] sm:%s4260]
          %4310 = vst [vmem:[%s4268 + $0x50] sm:%s4260] %v4309
          %v4311 = vld [vmem:[%s4267 + $0x58] sm:%s4260]
          %4312 = vst [vmem:[%s4268 + $0x54] sm:%s4260] %v4311
          %v4313 = vld [vmem:[%s4267 + $0x4c] sm:%s4260]
          %4314 = vst [vmem:[%s4268 + $0x58] sm:%s4260] %v4313
          %v4315 = vld [vmem:[%s4267 + $0x5c] sm:%s4260]
          %4316 = vst [vmem:[%s4268 + $0x5c] sm:%s4260] %v4315
          %v4317 = vld [vmem:[%s4267 + $0x60] sm:%s4260]
          %4318 = vst [vmem:[%s4268 + $0x60] sm:%s4260] %v4317
          %v4319 = vld [vmem:[%s4267 + $0x70] sm:%s4260]
          %4320 = vst [vmem:[%s4268 + $0x64] sm:%s4260] %v4319
          %v4321 = vld [vmem:[%s4267 + $0x64] sm:%s4260]
          %4322 = vst [vmem:[%s4268 + $0x68] sm:%s4260] %v4321
          %v4323 = vld [vmem:[%s4267 + $0x74] sm:%s4260]
          %4324 = vst [vmem:[%s4268 + $0x6c] sm:%s4260] %v4323
          %v4325 = vld [vmem:[%s4267 + $0x68] sm:%s4260]
          %4326 = vst [vmem:[%s4268 + $0x70] sm:%s4260] %v4325
          %v4327 = vld [vmem:[%s4267 + $0x78] sm:%s4260]
          %4328 = vst [vmem:[%s4268 + $0x74] sm:%s4260] %v4327
          %v4329 = vld [vmem:[%s4267 + $0x6c] sm:%s4260]
          %4330 = vst [vmem:[%s4268 + $0x78] sm:%s4260] %v4329
          %v4331 = vld [vmem:[%s4267 + $0x7c] sm:%s4260]
          %4332 = vst [vmem:[%s4268 + $0x7c] sm:%s4260] %v4331
          %v4333 = vld [vmem:[%s4267 + $0x80] sm:%s4260]
          %4334 = vst [vmem:[%s4268 + $0x80] sm:%s4260] %v4333
          %v4335 = vld [vmem:[%s4267 + $0x90] sm:%s4260]
          %4336 = vst [vmem:[%s4268 + $0x84] sm:%s4260] %v4335
          %v4337 = vld [vmem:[%s4267 + $0x84] sm:%s4260]
          %4338 = vst [vmem:[%s4268 + $0x88] sm:%s4260] %v4337
          %v4339 = vld [vmem:[%s4267 + $0x94] sm:%s4260]
          %4340 = vst [vmem:[%s4268 + $0x8c] sm:%s4260] %v4339
          %v4341 = vld [vmem:[%s4267 + $0x88] sm:%s4260]
          %4342 = vst [vmem:[%s4268 + $0x90] sm:%s4260] %v4341
          %v4343 = vld [vmem:[%s4267 + $0x98] sm:%s4260]
          %4344 = vst [vmem:[%s4268 + $0x94] sm:%s4260] %v4343
          %v4345 = vld [vmem:[%s4267 + $0x8c] sm:%s4260]
          %4346 = vst [vmem:[%s4268 + $0x98] sm:%s4260] %v4345
          %v4347 = vld [vmem:[%s4267 + $0x9c] sm:%s4260]
          %4348 = vst [vmem:[%s4268 + $0x9c] sm:%s4260] %v4347
          %v4349 = vld [vmem:[%s4267 + $0xa0] sm:%s4260]
          %4350 = vst [vmem:[%s4268 + $0xa0] sm:%s4260] %v4349
          %v4351 = vld [vmem:[%s4267 + $0xb0] sm:%s4260]
          %4352 = vst [vmem:[%s4268 + $0xa4] sm:%s4260] %v4351
          %v4353 = vld [vmem:[%s4267 + $0xa4] sm:%s4260]
          %4354 = vst [vmem:[%s4268 + $0xa8] sm:%s4260] %v4353
          %v4355 = vld [vmem:[%s4267 + $0xb4] sm:%s4260]
          %4356 = vst [vmem:[%s4268 + $0xac] sm:%s4260] %v4355
          %v4357 = vld [vmem:[%s4267 + $0xa8] sm:%s4260]
          %4358 = vst [vmem:[%s4268 + $0xb0] sm:%s4260] %v4357
          %v4359 = vld [vmem:[%s4267 + $0xb8] sm:%s4260]
          %4360 = vst [vmem:[%s4268 + $0xb4] sm:%s4260] %v4359
          %v4361 = vld [vmem:[%s4267 + $0xac] sm:%s4260]
          %4362 = vst [vmem:[%s4268 + $0xb8] sm:%s4260] %v4361
          %v4363 = vld [vmem:[%s4267 + $0xbc] sm:%s4260]
          %4364 = vst [vmem:[%s4268 + $0xbc] sm:%s4260] %v4363
          %v4365 = vld [vmem:[%s4267 + $0xc0] sm:%s4260]
          %4366 = vst [vmem:[%s4268 + $0xc0] sm:%s4260] %v4365
          %v4367 = vld [vmem:[%s4267 + $0xd0] sm:%s4260]
          %4368 = vst [vmem:[%s4268 + $0xc4] sm:%s4260] %v4367
          %v4369 = vld [vmem:[%s4267 + $0xc4] sm:%s4260]
          %4370 = vst [vmem:[%s4268 + $0xc8] sm:%s4260] %v4369
          %v4371 = vld [vmem:[%s4267 + $0xd4] sm:%s4260]
          %4372 = vst [vmem:[%s4268 + $0xcc] sm:%s4260] %v4371
          %v4373 = vld [vmem:[%s4267 + $0xc8] sm:%s4260]
          %4374 = vst [vmem:[%s4268 + $0xd0] sm:%s4260] %v4373
          %v4375 = vld [vmem:[%s4267 + $0xd8] sm:%s4260]
          %4376 = vst [vmem:[%s4268 + $0xd4] sm:%s4260] %v4375
          %v4377 = vld [vmem:[%s4267 + $0xcc] sm:%s4260]
          %4378 = vst [vmem:[%s4268 + $0xd8] sm:%s4260] %v4377
          %v4379 = vld [vmem:[%s4267 + $0xdc] sm:%s4260]
          %4380 = vst [vmem:[%s4268 + $0xdc] sm:%s4260] %v4379
          %v4381 = vld [vmem:[%s4267 + $0xe0] sm:%s4260]
          %4382 = vst [vmem:[%s4268 + $0xe0] sm:%s4260] %v4381
          %v4383 = vld [vmem:[%s4267 + $0xf0] sm:%s4260]
          %4384 = vst [vmem:[%s4268 + $0xe4] sm:%s4260] %v4383
          %v4385 = vld [vmem:[%s4267 + $0xe4] sm:%s4260]
          %4386 = vst [vmem:[%s4268 + $0xe8] sm:%s4260] %v4385
          %v4387 = vld [vmem:[%s4267 + $0xf4] sm:%s4260]
          %4388 = vst [vmem:[%s4268 + $0xec] sm:%s4260] %v4387
          %v4389 = vld [vmem:[%s4267 + $0xe8] sm:%s4260]
          %4390 = vst [vmem:[%s4268 + $0xf0] sm:%s4260] %v4389
          %v4391 = vld [vmem:[%s4267 + $0xf8] sm:%s4260]
          %4392 = vst [vmem:[%s4268 + $0xf4] sm:%s4260] %v4391
          %v4393 = vld [vmem:[%s4267 + $0xec] sm:%s4260]
          %4394 = vst [vmem:[%s4268 + $0xf8] sm:%s4260] %v4393
          %v4395 = vld [vmem:[%s4267 + $0xfc] sm:%s4260]
          %4396 = vst [vmem:[%s4268 + $0xfc] sm:%s4260] %v4395
          %v4397 = vld [vmem:[%s4267 + $0x100] sm:%s4260]
          %4398 = vst [vmem:[%s4268 + $0x100] sm:%s4260] %v4397
          %v4399 = vld [vmem:[%s4267 + $0x110] sm:%s4260]
          %4400 = vst [vmem:[%s4268 + $0x104] sm:%s4260] %v4399
          %v4401 = vld [vmem:[%s4267 + $0x104] sm:%s4260]
          %4402 = vst [vmem:[%s4268 + $0x108] sm:%s4260] %v4401
          %v4403 = vld [vmem:[%s4267 + $0x114] sm:%s4260]
          %4404 = vst [vmem:[%s4268 + $0x10c] sm:%s4260] %v4403
          %v4405 = vld [vmem:[%s4267 + $0x108] sm:%s4260]
          %4406 = vst [vmem:[%s4268 + $0x110] sm:%s4260] %v4405
          %v4407 = vld [vmem:[%s4267 + $0x118] sm:%s4260]
          %4408 = vst [vmem:[%s4268 + $0x114] sm:%s4260] %v4407
          %v4409 = vld [vmem:[%s4267 + $0x10c] sm:%s4260]
          %4410 = vst [vmem:[%s4268 + $0x118] sm:%s4260] %v4409
          %v4411 = vld [vmem:[%s4267 + $0x11c] sm:%s4260]
          %4412 = vst [vmem:[%s4268 + $0x11c] sm:%s4260] %v4411
          %v4413 = vld [vmem:[%s4267 + $0x120] sm:%s4260]
          %4414 = vst [vmem:[%s4268 + $0x120] sm:%s4260] %v4413
          %v4415 = vld [vmem:[%s4267 + $0x130] sm:%s4260]
          %4416 = vst [vmem:[%s4268 + $0x124] sm:%s4260] %v4415
          %v4417 = vld [vmem:[%s4267 + $0x124] sm:%s4260]
          %4418 = vst [vmem:[%s4268 + $0x128] sm:%s4260] %v4417
          %v4419 = vld [vmem:[%s4267 + $0x134] sm:%s4260]
          %4420 = vst [vmem:[%s4268 + $0x12c] sm:%s4260] %v4419
          %v4421 = vld [vmem:[%s4267 + $0x128] sm:%s4260]
          %4422 = vst [vmem:[%s4268 + $0x130] sm:%s4260] %v4421
          %v4423 = vld [vmem:[%s4267 + $0x138] sm:%s4260]
          %4424 = vst [vmem:[%s4268 + $0x134] sm:%s4260] %v4423
          %v4425 = vld [vmem:[%s4267 + $0x12c] sm:%s4260]
          %4426 = vst [vmem:[%s4268 + $0x138] sm:%s4260] %v4425
          %v4427 = vld [vmem:[%s4267 + $0x13c] sm:%s4260]
          %4428 = vst [vmem:[%s4268 + $0x13c] sm:%s4260] %v4427
          %v4429 = vld [vmem:[%s4267 + $0x140] sm:%s4260]
          %4430 = vst [vmem:[%s4268 + $0x140] sm:%s4260] %v4429
          %v4431 = vld [vmem:[%s4267 + $0x150] sm:%s4260]
          %4432 = vst [vmem:[%s4268 + $0x144] sm:%s4260] %v4431
          %v4433 = vld [vmem:[%s4267 + $0x144] sm:%s4260]
          %4434 = vst [vmem:[%s4268 + $0x148] sm:%s4260] %v4433
          %v4435 = vld [vmem:[%s4267 + $0x154] sm:%s4260]
          %4436 = vst [vmem:[%s4268 + $0x14c] sm:%s4260] %v4435
          %v4437 = vld [vmem:[%s4267 + $0x148] sm:%s4260]
          %4438 = vst [vmem:[%s4268 + $0x150] sm:%s4260] %v4437
          %v4439 = vld [vmem:[%s4267 + $0x158] sm:%s4260]
          %4440 = vst [vmem:[%s4268 + $0x154] sm:%s4260] %v4439
          %v4441 = vld [vmem:[%s4267 + $0x14c] sm:%s4260]
          %4442 = vst [vmem:[%s4268 + $0x158] sm:%s4260] %v4441
          %v4443 = vld [vmem:[%s4267 + $0x15c] sm:%s4260]
          %4444 = vst [vmem:[%s4268 + $0x15c] sm:%s4260] %v4443
          %v4445 = vld [vmem:[%s4267 + $0x160] sm:%s4260]
          %4446 = vst [vmem:[%s4268 + $0x160] sm:%s4260] %v4445
          %v4447 = vld [vmem:[%s4267 + $0x170] sm:%s4260]
          %4448 = vst [vmem:[%s4268 + $0x164] sm:%s4260] %v4447
          %v4449 = vld [vmem:[%s4267 + $0x164] sm:%s4260]
          %4450 = vst [vmem:[%s4268 + $0x168] sm:%s4260] %v4449
          %v4451 = vld [vmem:[%s4267 + $0x174] sm:%s4260]
          %4452 = vst [vmem:[%s4268 + $0x16c] sm:%s4260] %v4451
          %v4453 = vld [vmem:[%s4267 + $0x168] sm:%s4260]
          %4454 = vst [vmem:[%s4268 + $0x170] sm:%s4260] %v4453
          %v4455 = vld [vmem:[%s4267 + $0x178] sm:%s4260]
          %4456 = vst [vmem:[%s4268 + $0x174] sm:%s4260] %v4455
          %v4457 = vld [vmem:[%s4267 + $0x16c] sm:%s4260]
          %4458 = vst [vmem:[%s4268 + $0x178] sm:%s4260] %v4457
          %v4459 = vld [vmem:[%s4267 + $0x17c] sm:%s4260]
          %4460 = vst [vmem:[%s4268 + $0x17c] sm:%s4260] %v4459
          %v4461 = vld [vmem:[%s4267 + $0x180] sm:%s4260]
          %4462 = vst [vmem:[%s4268 + $0x180] sm:%s4260] %v4461
          %v4463 = vld [vmem:[%s4267 + $0x190] sm:%s4260]
          %4464 = vst [vmem:[%s4268 + $0x184] sm:%s4260] %v4463
          %v4465 = vld [vmem:[%s4267 + $0x184] sm:%s4260]
          %4466 = vst [vmem:[%s4268 + $0x188] sm:%s4260] %v4465
          %v4467 = vld [vmem:[%s4267 + $0x194] sm:%s4260]
          %4468 = vst [vmem:[%s4268 + $0x18c] sm:%s4260] %v4467
          %v4469 = vld [vmem:[%s4267 + $0x188] sm:%s4260]
          %4470 = vst [vmem:[%s4268 + $0x190] sm:%s4260] %v4469
          %v4471 = vld [vmem:[%s4267 + $0x198] sm:%s4260]
          %4472 = vst [vmem:[%s4268 + $0x194] sm:%s4260] %v4471
          %v4473 = vld [vmem:[%s4267 + $0x18c] sm:%s4260]
          %4474 = vst [vmem:[%s4268 + $0x198] sm:%s4260] %v4473
          %v4475 = vld [vmem:[%s4267 + $0x19c] sm:%s4260]
          %4476 = vst [vmem:[%s4268 + $0x19c] sm:%s4260] %v4475
          %v4477 = vld [vmem:[%s4267 + $0x1a0] sm:%s4260]
          %4478 = vst [vmem:[%s4268 + $0x1a0] sm:%s4260] %v4477
          %v4479 = vld [vmem:[%s4267 + $0x1b0] sm:%s4260]
          %4480 = vst [vmem:[%s4268 + $0x1a4] sm:%s4260] %v4479
          %v4481 = vld [vmem:[%s4267 + $0x1a4] sm:%s4260]
          %4482 = vst [vmem:[%s4268 + $0x1a8] sm:%s4260] %v4481
          %v4483 = vld [vmem:[%s4267 + $0x1b4] sm:%s4260]
          %4484 = vst [vmem:[%s4268 + $0x1ac] sm:%s4260] %v4483
          %v4485 = vld [vmem:[%s4267 + $0x1a8] sm:%s4260]
          %4486 = vst [vmem:[%s4268 + $0x1b0] sm:%s4260] %v4485
          %v4487 = vld [vmem:[%s4267 + $0x1b8] sm:%s4260]
          %4488 = vst [vmem:[%s4268 + $0x1b4] sm:%s4260] %v4487
          %v4489 = vld [vmem:[%s4267 + $0x1ac] sm:%s4260]
          %4490 = vst [vmem:[%s4268 + $0x1b8] sm:%s4260] %v4489
          %v4491 = vld [vmem:[%s4267 + $0x1bc] sm:%s4260]
          %4492 = vst [vmem:[%s4268 + $0x1bc] sm:%s4260] %v4491
          %v4493 = vld [vmem:[%s4267 + $0x1c0] sm:%s4260]
          %4494 = vst [vmem:[%s4268 + $0x1c0] sm:%s4260] %v4493
          %v4495 = vld [vmem:[%s4267 + $0x1d0] sm:%s4260]
          %4496 = vst [vmem:[%s4268 + $0x1c4] sm:%s4260] %v4495
          %v4497 = vld [vmem:[%s4267 + $0x1c4] sm:%s4260]
          %4498 = vst [vmem:[%s4268 + $0x1c8] sm:%s4260] %v4497
          %v4499 = vld [vmem:[%s4267 + $0x1d4] sm:%s4260]
          %4500 = vst [vmem:[%s4268 + $0x1cc] sm:%s4260] %v4499
          %v4501 = vld [vmem:[%s4267 + $0x1c8] sm:%s4260]
          %4502 = vst [vmem:[%s4268 + $0x1d0] sm:%s4260] %v4501
          %v4503 = vld [vmem:[%s4267 + $0x1d8] sm:%s4260]
          %4504 = vst [vmem:[%s4268 + $0x1d4] sm:%s4260] %v4503
          %v4505 = vld [vmem:[%s4267 + $0x1cc] sm:%s4260]
          %4506 = vst [vmem:[%s4268 + $0x1d8] sm:%s4260] %v4505
          %v4507 = vld [vmem:[%s4267 + $0x1dc] sm:%s4260]
          %4508 = vst [vmem:[%s4268 + $0x1dc] sm:%s4260] %v4507
          %v4509 = vld [vmem:[%s4267 + $0x1e0] sm:%s4260]
          %4510 = vst [vmem:[%s4268 + $0x1e0] sm:%s4260] %v4509
          %v4511 = vld [vmem:[%s4267 + $0x1f0] sm:%s4260]
          %4512 = vst [vmem:[%s4268 + $0x1e4] sm:%s4260] %v4511
          %v4513 = vld [vmem:[%s4267 + $0x1e4] sm:%s4260]
          %4514 = vst [vmem:[%s4268 + $0x1e8] sm:%s4260] %v4513
          %v4515 = vld [vmem:[%s4267 + $0x1f4] sm:%s4260]
          %4516 = vst [vmem:[%s4268 + $0x1ec] sm:%s4260] %v4515
          %v4517 = vld [vmem:[%s4267 + $0x1e8] sm:%s4260]
          %4518 = vst [vmem:[%s4268 + $0x1f0] sm:%s4260] %v4517
          %v4519 = vld [vmem:[%s4267 + $0x1f8] sm:%s4260]
          %4520 = vst [vmem:[%s4268 + $0x1f4] sm:%s4260] %v4519
          %v4521 = vld [vmem:[%s4267 + $0x1ec] sm:%s4260]
          %4522 = vst [vmem:[%s4268 + $0x1f8] sm:%s4260] %v4521
          %v4523 = vld [vmem:[%s4267 + $0x1fc] sm:%s4260]
          %4524 = vst [vmem:[%s4268 + $0x1fc] sm:%s4260] %v4523
          %v4525 = vld [vmem:[%s4267 + $0x200] sm:%s4260]
          %4526 = vst [vmem:[%s4268 + $0x200] sm:%s4260] %v4525
          %v4527 = vld [vmem:[%s4267 + $0x210] sm:%s4260]
          %4528 = vst [vmem:[%s4268 + $0x204] sm:%s4260] %v4527
          %v4529 = vld [vmem:[%s4267 + $0x204] sm:%s4260]
          %4530 = vst [vmem:[%s4268 + $0x208] sm:%s4260] %v4529
          %v4531 = vld [vmem:[%s4267 + $0x214] sm:%s4260]
          %4532 = vst [vmem:[%s4268 + $0x20c] sm:%s4260] %v4531
          %v4533 = vld [vmem:[%s4267 + $0x208] sm:%s4260]
          %4534 = vst [vmem:[%s4268 + $0x210] sm:%s4260] %v4533
          %v4535 = vld [vmem:[%s4267 + $0x218] sm:%s4260]
          %4536 = vst [vmem:[%s4268 + $0x214] sm:%s4260] %v4535
          %v4537 = vld [vmem:[%s4267 + $0x20c] sm:%s4260]
          %4538 = vst [vmem:[%s4268 + $0x218] sm:%s4260] %v4537
          %v4539 = vld [vmem:[%s4267 + $0x21c] sm:%s4260]
          %4540 = vst [vmem:[%s4268 + $0x21c] sm:%s4260] %v4539
          %v4541 = vld [vmem:[%s4267 + $0x220] sm:%s4260]
          %4542 = vst [vmem:[%s4268 + $0x220] sm:%s4260] %v4541
          %v4543 = vld [vmem:[%s4267 + $0x230] sm:%s4260]
          %4544 = vst [vmem:[%s4268 + $0x224] sm:%s4260] %v4543
          %v4545 = vld [vmem:[%s4267 + $0x224] sm:%s4260]
          %4546 = vst [vmem:[%s4268 + $0x228] sm:%s4260] %v4545
          %v4547 = vld [vmem:[%s4267 + $0x234] sm:%s4260]
          %4548 = vst [vmem:[%s4268 + $0x22c] sm:%s4260] %v4547
          %v4549 = vld [vmem:[%s4267 + $0x228] sm:%s4260]
          %4550 = vst [vmem:[%s4268 + $0x230] sm:%s4260] %v4549
          %v4551 = vld [vmem:[%s4267 + $0x238] sm:%s4260]
          %4552 = vst [vmem:[%s4268 + $0x234] sm:%s4260] %v4551
          %v4553 = vld [vmem:[%s4267 + $0x22c] sm:%s4260]
          %4554 = vst [vmem:[%s4268 + $0x238] sm:%s4260] %v4553
          %v4555 = vld [vmem:[%s4267 + $0x23c] sm:%s4260]
          %4556 = vst [vmem:[%s4268 + $0x23c] sm:%s4260] %v4555
          %v4557 = vld [vmem:[%s4267 + $0x240] sm:%s4260]
          %4558 = vst [vmem:[%s4268 + $0x240] sm:%s4260] %v4557
          %v4559 = vld [vmem:[%s4267 + $0x250] sm:%s4260]
          %4560 = vst [vmem:[%s4268 + $0x244] sm:%s4260] %v4559
          %v4561 = vld [vmem:[%s4267 + $0x244] sm:%s4260]
          %4562 = vst [vmem:[%s4268 + $0x248] sm:%s4260] %v4561
          %v4563 = vld [vmem:[%s4267 + $0x254] sm:%s4260]
          %4564 = vst [vmem:[%s4268 + $0x24c] sm:%s4260] %v4563
          %v4565 = vld [vmem:[%s4267 + $0x248] sm:%s4260]
          %4566 = vst [vmem:[%s4268 + $0x250] sm:%s4260] %v4565
          %v4567 = vld [vmem:[%s4267 + $0x258] sm:%s4260]
          %4568 = vst [vmem:[%s4268 + $0x254] sm:%s4260] %v4567
          %v4569 = vld [vmem:[%s4267 + $0x24c] sm:%s4260]
          %4570 = vst [vmem:[%s4268 + $0x258] sm:%s4260] %v4569
          %v4571 = vld [vmem:[%s4267 + $0x25c] sm:%s4260]
          %4572 = vst [vmem:[%s4268 + $0x25c] sm:%s4260] %v4571
          %v4573 = vld [vmem:[%s4267 + $0x260] sm:%s4260]
          %4574 = vst [vmem:[%s4268 + $0x260] sm:%s4260] %v4573
          %v4575 = vld [vmem:[%s4267 + $0x270] sm:%s4260]
          %4576 = vst [vmem:[%s4268 + $0x264] sm:%s4260] %v4575
          %v4577 = vld [vmem:[%s4267 + $0x264] sm:%s4260]
          %4578 = vst [vmem:[%s4268 + $0x268] sm:%s4260] %v4577
          %v4579 = vld [vmem:[%s4267 + $0x274] sm:%s4260]
          %4580 = vst [vmem:[%s4268 + $0x26c] sm:%s4260] %v4579
          %v4581 = vld [vmem:[%s4267 + $0x268] sm:%s4260]
          %4582 = vst [vmem:[%s4268 + $0x270] sm:%s4260] %v4581
          %v4583 = vld [vmem:[%s4267 + $0x278] sm:%s4260]
          %4584 = vst [vmem:[%s4268 + $0x274] sm:%s4260] %v4583
          %v4585 = vld [vmem:[%s4267 + $0x26c] sm:%s4260]
          %4586 = vst [vmem:[%s4268 + $0x278] sm:%s4260] %v4585
          %v4587 = vld [vmem:[%s4267 + $0x27c] sm:%s4260]
          %4588 = vst [vmem:[%s4268 + $0x27c] sm:%s4260] %v4587
          %v4589 = vld [vmem:[%s4267 + $0x280] sm:%s4260]
          %4590 = vst [vmem:[%s4268 + $0x280] sm:%s4260] %v4589
          %v4591 = vld [vmem:[%s4267 + $0x290] sm:%s4260]
          %4592 = vst [vmem:[%s4268 + $0x284] sm:%s4260] %v4591
          %v4593 = vld [vmem:[%s4267 + $0x284] sm:%s4260]
          %4594 = vst [vmem:[%s4268 + $0x288] sm:%s4260] %v4593
          %v4595 = vld [vmem:[%s4267 + $0x294] sm:%s4260]
          %4596 = vst [vmem:[%s4268 + $0x28c] sm:%s4260] %v4595
          %v4597 = vld [vmem:[%s4267 + $0x288] sm:%s4260]
          %4598 = vst [vmem:[%s4268 + $0x290] sm:%s4260] %v4597
          %v4599 = vld [vmem:[%s4267 + $0x298] sm:%s4260]
          %4600 = vst [vmem:[%s4268 + $0x294] sm:%s4260] %v4599
          %v4601 = vld [vmem:[%s4267 + $0x28c] sm:%s4260]
          %4602 = vst [vmem:[%s4268 + $0x298] sm:%s4260] %v4601
          %v4603 = vld [vmem:[%s4267 + $0x29c] sm:%s4260]
          %4604 = vst [vmem:[%s4268 + $0x29c] sm:%s4260] %v4603
          %v4605 = vld [vmem:[%s4267 + $0x2a0] sm:%s4260]
          %4606 = vst [vmem:[%s4268 + $0x2a0] sm:%s4260] %v4605
          %v4607 = vld [vmem:[%s4267 + $0x2b0] sm:%s4260]
          %4608 = vst [vmem:[%s4268 + $0x2a4] sm:%s4260] %v4607
          %v4609 = vld [vmem:[%s4267 + $0x2a4] sm:%s4260]
          %4610 = vst [vmem:[%s4268 + $0x2a8] sm:%s4260] %v4609
          %v4611 = vld [vmem:[%s4267 + $0x2b4] sm:%s4260]
          %4612 = vst [vmem:[%s4268 + $0x2ac] sm:%s4260] %v4611
          %v4613 = vld [vmem:[%s4267 + $0x2a8] sm:%s4260]
          %4614 = vst [vmem:[%s4268 + $0x2b0] sm:%s4260] %v4613
          %v4615 = vld [vmem:[%s4267 + $0x2b8] sm:%s4260]
          %4616 = vst [vmem:[%s4268 + $0x2b4] sm:%s4260] %v4615
          %v4617 = vld [vmem:[%s4267 + $0x2ac] sm:%s4260]
          %4618 = vst [vmem:[%s4268 + $0x2b8] sm:%s4260] %v4617
          %v4619 = vld [vmem:[%s4267 + $0x2bc] sm:%s4260]
          %4620 = vst [vmem:[%s4268 + $0x2bc] sm:%s4260] %v4619
          %v4621 = vld [vmem:[%s4267 + $0x2c0] sm:%s4260]
          %4622 = vst [vmem:[%s4268 + $0x2c0] sm:%s4260] %v4621
          %v4623 = vld [vmem:[%s4267 + $0x2d0] sm:%s4260]
          %4624 = vst [vmem:[%s4268 + $0x2c4] sm:%s4260] %v4623
          %v4625 = vld [vmem:[%s4267 + $0x2c4] sm:%s4260]
          %4626 = vst [vmem:[%s4268 + $0x2c8] sm:%s4260] %v4625
          %v4627 = vld [vmem:[%s4267 + $0x2d4] sm:%s4260]
          %4628 = vst [vmem:[%s4268 + $0x2cc] sm:%s4260] %v4627
          %v4629 = vld [vmem:[%s4267 + $0x2c8] sm:%s4260]
          %4630 = vst [vmem:[%s4268 + $0x2d0] sm:%s4260] %v4629
          %v4631 = vld [vmem:[%s4267 + $0x2d8] sm:%s4260]
          %4632 = vst [vmem:[%s4268 + $0x2d4] sm:%s4260] %v4631
          %v4633 = vld [vmem:[%s4267 + $0x2cc] sm:%s4260]
          %4634 = vst [vmem:[%s4268 + $0x2d8] sm:%s4260] %v4633
          %v4635 = vld [vmem:[%s4267 + $0x2dc] sm:%s4260]
          %4636 = vst [vmem:[%s4268 + $0x2dc] sm:%s4260] %v4635
          %v4637 = vld [vmem:[%s4267 + $0x2e0] sm:%s4260]
          %4638 = vst [vmem:[%s4268 + $0x2e0] sm:%s4260] %v4637
          %v4639 = vld [vmem:[%s4267 + $0x2f0] sm:%s4260]
          %4640 = vst [vmem:[%s4268 + $0x2e4] sm:%s4260] %v4639
          %v4641 = vld [vmem:[%s4267 + $0x2e4] sm:%s4260]
          %4642 = vst [vmem:[%s4268 + $0x2e8] sm:%s4260] %v4641
          %v4643 = vld [vmem:[%s4267 + $0x2f4] sm:%s4260]
          %4644 = vst [vmem:[%s4268 + $0x2ec] sm:%s4260] %v4643
          %v4645 = vld [vmem:[%s4267 + $0x2e8] sm:%s4260]
          %4646 = vst [vmem:[%s4268 + $0x2f0] sm:%s4260] %v4645
          %v4647 = vld [vmem:[%s4267 + $0x2f8] sm:%s4260]
          %4648 = vst [vmem:[%s4268 + $0x2f4] sm:%s4260] %v4647
          %v4649 = vld [vmem:[%s4267 + $0x2ec] sm:%s4260]
          %4650 = vst [vmem:[%s4268 + $0x2f8] sm:%s4260] %v4649
          %v4651 = vld [vmem:[%s4267 + $0x2fc] sm:%s4260]
          %4652 = vst [vmem:[%s4268 + $0x2fc] sm:%s4260] %v4651
          %v4653 = vld [vmem:[%s4267 + $0x300] sm:%s4260]
          %4654 = vst [vmem:[%s4268 + $0x300] sm:%s4260] %v4653
          %v4655 = vld [vmem:[%s4267 + $0x310] sm:%s4260]
          %4656 = vst [vmem:[%s4268 + $0x304] sm:%s4260] %v4655
          %v4657 = vld [vmem:[%s4267 + $0x304] sm:%s4260]
          %4658 = vst [vmem:[%s4268 + $0x308] sm:%s4260] %v4657
          %v4659 = vld [vmem:[%s4267 + $0x314] sm:%s4260]
          %4660 = vst [vmem:[%s4268 + $0x30c] sm:%s4260] %v4659
          %v4661 = vld [vmem:[%s4267 + $0x308] sm:%s4260]
          %4662 = vst [vmem:[%s4268 + $0x310] sm:%s4260] %v4661
          %v4663 = vld [vmem:[%s4267 + $0x318] sm:%s4260]
          %4664 = vst [vmem:[%s4268 + $0x314] sm:%s4260] %v4663
          %v4665 = vld [vmem:[%s4267 + $0x30c] sm:%s4260]
          %4666 = vst [vmem:[%s4268 + $0x318] sm:%s4260] %v4665
          %v4667 = vld [vmem:[%s4267 + $0x31c] sm:%s4260]
          %4668 = vst [vmem:[%s4268 + $0x31c] sm:%s4260] %v4667
          %v4669 = vld [vmem:[%s4267 + $0x320] sm:%s4260]
          %4670 = vst [vmem:[%s4268 + $0x320] sm:%s4260] %v4669
          %v4671 = vld [vmem:[%s4267 + $0x330] sm:%s4260]
          %4672 = vst [vmem:[%s4268 + $0x324] sm:%s4260] %v4671
          %v4673 = vld [vmem:[%s4267 + $0x324] sm:%s4260]
          %4674 = vst [vmem:[%s4268 + $0x328] sm:%s4260] %v4673
          %v4675 = vld [vmem:[%s4267 + $0x334] sm:%s4260]
          %4676 = vst [vmem:[%s4268 + $0x32c] sm:%s4260] %v4675
          %v4677 = vld [vmem:[%s4267 + $0x328] sm:%s4260]
          %4678 = vst [vmem:[%s4268 + $0x330] sm:%s4260] %v4677
          %v4679 = vld [vmem:[%s4267 + $0x338] sm:%s4260]
          %4680 = vst [vmem:[%s4268 + $0x334] sm:%s4260] %v4679
          %v4681 = vld [vmem:[%s4267 + $0x32c] sm:%s4260]
          %4682 = vst [vmem:[%s4268 + $0x338] sm:%s4260] %v4681
          %v4683 = vld [vmem:[%s4267 + $0x33c] sm:%s4260]
          %4684 = vst [vmem:[%s4268 + $0x33c] sm:%s4260] %v4683
          %v4685 = vld [vmem:[%s4267 + $0x340] sm:%s4260]
          %4686 = vst [vmem:[%s4268 + $0x340] sm:%s4260] %v4685
          %v4687 = vld [vmem:[%s4267 + $0x350] sm:%s4260]
          %4688 = vst [vmem:[%s4268 + $0x344] sm:%s4260] %v4687
          %v4689 = vld [vmem:[%s4267 + $0x344] sm:%s4260]
          %4690 = vst [vmem:[%s4268 + $0x348] sm:%s4260] %v4689
          %v4691 = vld [vmem:[%s4267 + $0x354] sm:%s4260]
          %4692 = vst [vmem:[%s4268 + $0x34c] sm:%s4260] %v4691
          %v4693 = vld [vmem:[%s4267 + $0x348] sm:%s4260]
          %4694 = vst [vmem:[%s4268 + $0x350] sm:%s4260] %v4693
          %v4695 = vld [vmem:[%s4267 + $0x358] sm:%s4260]
          %4696 = vst [vmem:[%s4268 + $0x354] sm:%s4260] %v4695
          %v4697 = vld [vmem:[%s4267 + $0x34c] sm:%s4260]
          %4698 = vst [vmem:[%s4268 + $0x358] sm:%s4260] %v4697
          %v4699 = vld [vmem:[%s4267 + $0x35c] sm:%s4260]
          %4700 = vst [vmem:[%s4268 + $0x35c] sm:%s4260] %v4699
          %v4701 = vld [vmem:[%s4267 + $0x360] sm:%s4260]
          %4702 = vst [vmem:[%s4268 + $0x360] sm:%s4260] %v4701
          %v4703 = vld [vmem:[%s4267 + $0x370] sm:%s4260]
          %4704 = vst [vmem:[%s4268 + $0x364] sm:%s4260] %v4703
          %v4705 = vld [vmem:[%s4267 + $0x364] sm:%s4260]
          %4706 = vst [vmem:[%s4268 + $0x368] sm:%s4260] %v4705
          %v4707 = vld [vmem:[%s4267 + $0x374] sm:%s4260]
          %4708 = vst [vmem:[%s4268 + $0x36c] sm:%s4260] %v4707
          %v4709 = vld [vmem:[%s4267 + $0x368] sm:%s4260]
          %4710 = vst [vmem:[%s4268 + $0x370] sm:%s4260] %v4709
          %v4711 = vld [vmem:[%s4267 + $0x378] sm:%s4260]
          %4712 = vst [vmem:[%s4268 + $0x374] sm:%s4260] %v4711
          %v4713 = vld [vmem:[%s4267 + $0x36c] sm:%s4260]
          %4714 = vst [vmem:[%s4268 + $0x378] sm:%s4260] %v4713
          %v4715 = vld [vmem:[%s4267 + $0x37c] sm:%s4260]
          %4716 = vst [vmem:[%s4268 + $0x37c] sm:%s4260] %v4715
          %v4717 = vld [vmem:[%s4267 + $0x380] sm:%s4260]
          %4718 = vst [vmem:[%s4268 + $0x380] sm:%s4260] %v4717
          %v4719 = vld [vmem:[%s4267 + $0x390] sm:%s4260]
          %4720 = vst [vmem:[%s4268 + $0x384] sm:%s4260] %v4719
          %v4721 = vld [vmem:[%s4267 + $0x384] sm:%s4260]
          %4722 = vst [vmem:[%s4268 + $0x388] sm:%s4260] %v4721
          %v4723 = vld [vmem:[%s4267 + $0x394] sm:%s4260]
          %4724 = vst [vmem:[%s4268 + $0x38c] sm:%s4260] %v4723
          %v4725 = vld [vmem:[%s4267 + $0x388] sm:%s4260]
          %4726 = vst [vmem:[%s4268 + $0x390] sm:%s4260] %v4725
          %v4727 = vld [vmem:[%s4267 + $0x398] sm:%s4260]
          %4728 = vst [vmem:[%s4268 + $0x394] sm:%s4260] %v4727
          %v4729 = vld [vmem:[%s4267 + $0x38c] sm:%s4260]
          %4730 = vst [vmem:[%s4268 + $0x398] sm:%s4260] %v4729
          %v4731 = vld [vmem:[%s4267 + $0x39c] sm:%s4260]
          %4732 = vst [vmem:[%s4268 + $0x39c] sm:%s4260] %v4731
          %v4733 = vld [vmem:[%s4267 + $0x3a0] sm:%s4260]
          %4734 = vst [vmem:[%s4268 + $0x3a0] sm:%s4260] %v4733
          %v4735 = vld [vmem:[%s4267 + $0x3b0] sm:%s4260]
          %4736 = vst [vmem:[%s4268 + $0x3a4] sm:%s4260] %v4735
          %v4737 = vld [vmem:[%s4267 + $0x3a4] sm:%s4260]
          %4738 = vst [vmem:[%s4268 + $0x3a8] sm:%s4260] %v4737
          %v4739 = vld [vmem:[%s4267 + $0x3b4] sm:%s4260]
          %4740 = vst [vmem:[%s4268 + $0x3ac] sm:%s4260] %v4739
          %v4741 = vld [vmem:[%s4267 + $0x3a8] sm:%s4260]
          %4742 = vst [vmem:[%s4268 + $0x3b0] sm:%s4260] %v4741
          %v4743 = vld [vmem:[%s4267 + $0x3b8] sm:%s4260]
          %4744 = vst [vmem:[%s4268 + $0x3b4] sm:%s4260] %v4743
          %v4745 = vld [vmem:[%s4267 + $0x3ac] sm:%s4260]
          %4746 = vst [vmem:[%s4268 + $0x3b8] sm:%s4260] %v4745
          %v4747 = vld [vmem:[%s4267 + $0x3bc] sm:%s4260]
          %4748 = vst [vmem:[%s4268 + $0x3bc] sm:%s4260] %v4747
          %v4749 = vld [vmem:[%s4267 + $0x3c0] sm:%s4260]
          %4750 = vst [vmem:[%s4268 + $0x3c0] sm:%s4260] %v4749
          %v4751 = vld [vmem:[%s4267 + $0x3d0] sm:%s4260]
          %4752 = vst [vmem:[%s4268 + $0x3c4] sm:%s4260] %v4751
          %v4753 = vld [vmem:[%s4267 + $0x3c4] sm:%s4260]
          %4754 = vst [vmem:[%s4268 + $0x3c8] sm:%s4260] %v4753
          %v4755 = vld [vmem:[%s4267 + $0x3d4] sm:%s4260]
          %4756 = vst [vmem:[%s4268 + $0x3cc] sm:%s4260] %v4755
          %v4757 = vld [vmem:[%s4267 + $0x3c8] sm:%s4260]
          %4758 = vst [vmem:[%s4268 + $0x3d0] sm:%s4260] %v4757
          %v4759 = vld [vmem:[%s4267 + $0x3d8] sm:%s4260]
          %4760 = vst [vmem:[%s4268 + $0x3d4] sm:%s4260] %v4759
          %v4761 = vld [vmem:[%s4267 + $0x3cc] sm:%s4260]
          %4762 = vst [vmem:[%s4268 + $0x3d8] sm:%s4260] %v4761
          %v4763 = vld [vmem:[%s4267 + $0x3dc] sm:%s4260]
          %4764 = vst [vmem:[%s4268 + $0x3dc] sm:%s4260] %v4763
          %v4765 = vld [vmem:[%s4267 + $0x3e0] sm:%s4260]
          %4766 = vst [vmem:[%s4268 + $0x3e0] sm:%s4260] %v4765
          %v4767 = vld [vmem:[%s4267 + $0x3f0] sm:%s4260]
          %4768 = vst [vmem:[%s4268 + $0x3e4] sm:%s4260] %v4767
          %v4769 = vld [vmem:[%s4267 + $0x3e4] sm:%s4260]
          %4770 = vst [vmem:[%s4268 + $0x3e8] sm:%s4260] %v4769
          %v4771 = vld [vmem:[%s4267 + $0x3f4] sm:%s4260]
          %4772 = vst [vmem:[%s4268 + $0x3ec] sm:%s4260] %v4771
          %v4773 = vld [vmem:[%s4267 + $0x3e8] sm:%s4260]
          %4774 = vst [vmem:[%s4268 + $0x3f0] sm:%s4260] %v4773
          %v4775 = vld [vmem:[%s4267 + $0x3f8] sm:%s4260]
          %4776 = vst [vmem:[%s4268 + $0x3f4] sm:%s4260] %v4775
          %v4777 = vld [vmem:[%s4267 + $0x3ec] sm:%s4260]
          %4778 = vst [vmem:[%s4268 + $0x3f8] sm:%s4260] %v4777
          %v4779 = vld [vmem:[%s4267 + $0x3fc] sm:%s4260]
          %4780 = vst [vmem:[%s4268 + $0x3fc] sm:%s4260] %v4779
          %v4781 = vld [vmem:[%s4267 + $0x400] sm:%s4260]
          %4782 = vst [vmem:[%s4268 + $0x400] sm:%s4260] %v4781
          %v4783 = vld [vmem:[%s4267 + $0x410] sm:%s4260]
          %4784 = vst [vmem:[%s4268 + $0x404] sm:%s4260] %v4783
          %v4785 = vld [vmem:[%s4267 + $0x404] sm:%s4260]
          %4786 = vst [vmem:[%s4268 + $0x408] sm:%s4260] %v4785
          %v4787 = vld [vmem:[%s4267 + $0x414] sm:%s4260]
          %4788 = vst [vmem:[%s4268 + $0x40c] sm:%s4260] %v4787
          %v4789 = vld [vmem:[%s4267 + $0x408] sm:%s4260]
          %4790 = vst [vmem:[%s4268 + $0x410] sm:%s4260] %v4789
          %v4791 = vld [vmem:[%s4267 + $0x418] sm:%s4260]
          %4792 = vst [vmem:[%s4268 + $0x414] sm:%s4260] %v4791
          %v4793 = vld [vmem:[%s4267 + $0x40c] sm:%s4260]
          %4794 = vst [vmem:[%s4268 + $0x418] sm:%s4260] %v4793
          %v4795 = vld [vmem:[%s4267 + $0x41c] sm:%s4260]
          %4796 = vst [vmem:[%s4268 + $0x41c] sm:%s4260] %v4795
          %v4797 = vld [vmem:[%s4267 + $0x420] sm:%s4260]
          %4798 = vst [vmem:[%s4268 + $0x420] sm:%s4260] %v4797
          %v4799 = vld [vmem:[%s4267 + $0x430] sm:%s4260]
          %4800 = vst [vmem:[%s4268 + $0x424] sm:%s4260] %v4799
          %v4801 = vld [vmem:[%s4267 + $0x424] sm:%s4260]
          %4802 = vst [vmem:[%s4268 + $0x428] sm:%s4260] %v4801
          %v4803 = vld [vmem:[%s4267 + $0x434] sm:%s4260]
          %4804 = vst [vmem:[%s4268 + $0x42c] sm:%s4260] %v4803
          %v4805 = vld [vmem:[%s4267 + $0x428] sm:%s4260]
          %4806 = vst [vmem:[%s4268 + $0x430] sm:%s4260] %v4805
          %v4807 = vld [vmem:[%s4267 + $0x438] sm:%s4260]
          %4808 = vst [vmem:[%s4268 + $0x434] sm:%s4260] %v4807
          %v4809 = vld [vmem:[%s4267 + $0x42c] sm:%s4260]
          %4810 = vst [vmem:[%s4268 + $0x438] sm:%s4260] %v4809
          %v4811 = vld [vmem:[%s4267 + $0x43c] sm:%s4260]
          %4812 = vst [vmem:[%s4268 + $0x43c] sm:%s4260] %v4811
          %v4813 = vld [vmem:[%s4267 + $0x440] sm:%s4260]
          %4814 = vst [vmem:[%s4268 + $0x440] sm:%s4260] %v4813
          %v4815 = vld [vmem:[%s4267 + $0x450] sm:%s4260]
          %4816 = vst [vmem:[%s4268 + $0x444] sm:%s4260] %v4815
          %v4817 = vld [vmem:[%s4267 + $0x444] sm:%s4260]
          %4818 = vst [vmem:[%s4268 + $0x448] sm:%s4260] %v4817
          %v4819 = vld [vmem:[%s4267 + $0x454] sm:%s4260]
          %4820 = vst [vmem:[%s4268 + $0x44c] sm:%s4260] %v4819
          %v4821 = vld [vmem:[%s4267 + $0x448] sm:%s4260]
          %4822 = vst [vmem:[%s4268 + $0x450] sm:%s4260] %v4821
          %v4823 = vld [vmem:[%s4267 + $0x458] sm:%s4260]
          %4824 = vst [vmem:[%s4268 + $0x454] sm:%s4260] %v4823
          %v4825 = vld [vmem:[%s4267 + $0x44c] sm:%s4260]
          %4826 = vst [vmem:[%s4268 + $0x458] sm:%s4260] %v4825
          %v4827 = vld [vmem:[%s4267 + $0x45c] sm:%s4260]
          %4828 = vst [vmem:[%s4268 + $0x45c] sm:%s4260] %v4827
          %v4829 = vld [vmem:[%s4267 + $0x460] sm:%s4260]
          %4830 = vst [vmem:[%s4268 + $0x460] sm:%s4260] %v4829
          %v4831 = vld [vmem:[%s4267 + $0x470] sm:%s4260]
          %4832 = vst [vmem:[%s4268 + $0x464] sm:%s4260] %v4831
          %v4833 = vld [vmem:[%s4267 + $0x464] sm:%s4260]
          %4834 = vst [vmem:[%s4268 + $0x468] sm:%s4260] %v4833
          %v4835 = vld [vmem:[%s4267 + $0x474] sm:%s4260]
          %4836 = vst [vmem:[%s4268 + $0x46c] sm:%s4260] %v4835
          %v4837 = vld [vmem:[%s4267 + $0x468] sm:%s4260]
          %4838 = vst [vmem:[%s4268 + $0x470] sm:%s4260] %v4837
          %v4839 = vld [vmem:[%s4267 + $0x478] sm:%s4260]
          %4840 = vst [vmem:[%s4268 + $0x474] sm:%s4260] %v4839
          %v4841 = vld [vmem:[%s4267 + $0x46c] sm:%s4260]
          %4842 = vst [vmem:[%s4268 + $0x478] sm:%s4260] %v4841
          %v4843 = vld [vmem:[%s4267 + $0x47c] sm:%s4260]
          %4844 = vst [vmem:[%s4268 + $0x47c] sm:%s4260] %v4843
          %v4845 = vld [vmem:[%s4267 + $0x480] sm:%s4260]
          %4846 = vst [vmem:[%s4268 + $0x480] sm:%s4260] %v4845
          %v4847 = vld [vmem:[%s4267 + $0x490] sm:%s4260]
          %4848 = vst [vmem:[%s4268 + $0x484] sm:%s4260] %v4847
          %v4849 = vld [vmem:[%s4267 + $0x484] sm:%s4260]
          %4850 = vst [vmem:[%s4268 + $0x488] sm:%s4260] %v4849
          %v4851 = vld [vmem:[%s4267 + $0x494] sm:%s4260]
          %4852 = vst [vmem:[%s4268 + $0x48c] sm:%s4260] %v4851
          %v4853 = vld [vmem:[%s4267 + $0x488] sm:%s4260]
          %4854 = vst [vmem:[%s4268 + $0x490] sm:%s4260] %v4853
          %v4855 = vld [vmem:[%s4267 + $0x498] sm:%s4260]
          %4856 = vst [vmem:[%s4268 + $0x494] sm:%s4260] %v4855
          %v4857 = vld [vmem:[%s4267 + $0x48c] sm:%s4260]
          %4858 = vst [vmem:[%s4268 + $0x498] sm:%s4260] %v4857
          %v4859 = vld [vmem:[%s4267 + $0x49c] sm:%s4260]
          %4860 = vst [vmem:[%s4268 + $0x49c] sm:%s4260] %v4859
          %v4861 = vld [vmem:[%s4267 + $0x4a0] sm:%s4260]
          %4862 = vst [vmem:[%s4268 + $0x4a0] sm:%s4260] %v4861
          %v4863 = vld [vmem:[%s4267 + $0x4b0] sm:%s4260]
          %4864 = vst [vmem:[%s4268 + $0x4a4] sm:%s4260] %v4863
          %v4865 = vld [vmem:[%s4267 + $0x4a4] sm:%s4260]
          %4866 = vst [vmem:[%s4268 + $0x4a8] sm:%s4260] %v4865
          %v4867 = vld [vmem:[%s4267 + $0x4b4] sm:%s4260]
          %4868 = vst [vmem:[%s4268 + $0x4ac] sm:%s4260] %v4867
          %v4869 = vld [vmem:[%s4267 + $0x4a8] sm:%s4260]
          %4870 = vst [vmem:[%s4268 + $0x4b0] sm:%s4260] %v4869
          %v4871 = vld [vmem:[%s4267 + $0x4b8] sm:%s4260]
          %4872 = vst [vmem:[%s4268 + $0x4b4] sm:%s4260] %v4871
          %v4873 = vld [vmem:[%s4267 + $0x4ac] sm:%s4260]
          %4874 = vst [vmem:[%s4268 + $0x4b8] sm:%s4260] %v4873
          %v4875 = vld [vmem:[%s4267 + $0x4bc] sm:%s4260]
          %4876 = vst [vmem:[%s4268 + $0x4bc] sm:%s4260] %v4875
          %v4877 = vld [vmem:[%s4267 + $0x4c0] sm:%s4260]
          %4878 = vst [vmem:[%s4268 + $0x4c0] sm:%s4260] %v4877
          %v4879 = vld [vmem:[%s4267 + $0x4d0] sm:%s4260]
          %4880 = vst [vmem:[%s4268 + $0x4c4] sm:%s4260] %v4879
          %v4881 = vld [vmem:[%s4267 + $0x4c4] sm:%s4260]
          %4882 = vst [vmem:[%s4268 + $0x4c8] sm:%s4260] %v4881
          %v4883 = vld [vmem:[%s4267 + $0x4d4] sm:%s4260]
          %4884 = vst [vmem:[%s4268 + $0x4cc] sm:%s4260] %v4883
          %v4885 = vld [vmem:[%s4267 + $0x4c8] sm:%s4260]
          %4886 = vst [vmem:[%s4268 + $0x4d0] sm:%s4260] %v4885
          %v4887 = vld [vmem:[%s4267 + $0x4d8] sm:%s4260]
          %4888 = vst [vmem:[%s4268 + $0x4d4] sm:%s4260] %v4887
          %v4889 = vld [vmem:[%s4267 + $0x4cc] sm:%s4260]
          %4890 = vst [vmem:[%s4268 + $0x4d8] sm:%s4260] %v4889
          %v4891 = vld [vmem:[%s4267 + $0x4dc] sm:%s4260]
          %4892 = vst [vmem:[%s4268 + $0x4dc] sm:%s4260] %v4891
          %v4893 = vld [vmem:[%s4267 + $0x4e0] sm:%s4260]
          %4894 = vst [vmem:[%s4268 + $0x4e0] sm:%s4260] %v4893
          %v4895 = vld [vmem:[%s4267 + $0x4f0] sm:%s4260]
          %4896 = vst [vmem:[%s4268 + $0x4e4] sm:%s4260] %v4895
          %v4897 = vld [vmem:[%s4267 + $0x4e4] sm:%s4260]
          %4898 = vst [vmem:[%s4268 + $0x4e8] sm:%s4260] %v4897
          %v4899 = vld [vmem:[%s4267 + $0x4f4] sm:%s4260]
          %4900 = vst [vmem:[%s4268 + $0x4ec] sm:%s4260] %v4899
          %v4901 = vld [vmem:[%s4267 + $0x4e8] sm:%s4260]
          %4902 = vst [vmem:[%s4268 + $0x4f0] sm:%s4260] %v4901
          %v4903 = vld [vmem:[%s4267 + $0x4f8] sm:%s4260]
          %4904 = vst [vmem:[%s4268 + $0x4f4] sm:%s4260] %v4903
          %v4905 = vld [vmem:[%s4267 + $0x4ec] sm:%s4260]
          %4906 = vst [vmem:[%s4268 + $0x4f8] sm:%s4260] %v4905
          %v4907 = vld [vmem:[%s4267 + $0x4fc] sm:%s4260]
          %4908 = vst [vmem:[%s4268 + $0x4fc] sm:%s4260] %v4907
          %v4909 = vld [vmem:[%s4267 + $0x500] sm:%s4260]
          %4910 = vst [vmem:[%s4268 + $0x500] sm:%s4260] %v4909
          %v4911 = vld [vmem:[%s4267 + $0x510] sm:%s4260]
          %4912 = vst [vmem:[%s4268 + $0x504] sm:%s4260] %v4911
          %v4913 = vld [vmem:[%s4267 + $0x504] sm:%s4260]
          %4914 = vst [vmem:[%s4268 + $0x508] sm:%s4260] %v4913
          %v4915 = vld [vmem:[%s4267 + $0x514] sm:%s4260]
          %4916 = vst [vmem:[%s4268 + $0x50c] sm:%s4260] %v4915
          %v4917 = vld [vmem:[%s4267 + $0x508] sm:%s4260]
          %4918 = vst [vmem:[%s4268 + $0x510] sm:%s4260] %v4917
          %v4919 = vld [vmem:[%s4267 + $0x518] sm:%s4260]
          %4920 = vst [vmem:[%s4268 + $0x514] sm:%s4260] %v4919
          %v4921 = vld [vmem:[%s4267 + $0x50c] sm:%s4260]
          %4922 = vst [vmem:[%s4268 + $0x518] sm:%s4260] %v4921
          %v4923 = vld [vmem:[%s4267 + $0x51c] sm:%s4260]
          %4924 = vst [vmem:[%s4268 + $0x51c] sm:%s4260] %v4923
          %v4925 = vld [vmem:[%s4267 + $0x520] sm:%s4260]
          %4926 = vst [vmem:[%s4268 + $0x520] sm:%s4260] %v4925
          %v4927 = vld [vmem:[%s4267 + $0x530] sm:%s4260]
          %4928 = vst [vmem:[%s4268 + $0x524] sm:%s4260] %v4927
          %v4929 = vld [vmem:[%s4267 + $0x524] sm:%s4260]
          %4930 = vst [vmem:[%s4268 + $0x528] sm:%s4260] %v4929
          %v4931 = vld [vmem:[%s4267 + $0x534] sm:%s4260]
          %4932 = vst [vmem:[%s4268 + $0x52c] sm:%s4260] %v4931
          %v4933 = vld [vmem:[%s4267 + $0x528] sm:%s4260]
          %4934 = vst [vmem:[%s4268 + $0x530] sm:%s4260] %v4933
          %v4935 = vld [vmem:[%s4267 + $0x538] sm:%s4260]
          %4936 = vst [vmem:[%s4268 + $0x534] sm:%s4260] %v4935
          %v4937 = vld [vmem:[%s4267 + $0x52c] sm:%s4260]
          %4938 = vst [vmem:[%s4268 + $0x538] sm:%s4260] %v4937
          %v4939 = vld [vmem:[%s4267 + $0x53c] sm:%s4260]
          %4940 = vst [vmem:[%s4268 + $0x53c] sm:%s4260] %v4939
          %v4941 = vld [vmem:[%s4267 + $0x540] sm:%s4260]
          %4942 = vst [vmem:[%s4268 + $0x540] sm:%s4260] %v4941
          %v4943 = vld [vmem:[%s4267 + $0x550] sm:%s4260]
          %4944 = vst [vmem:[%s4268 + $0x544] sm:%s4260] %v4943
          %v4945 = vld [vmem:[%s4267 + $0x544] sm:%s4260]
          %4946 = vst [vmem:[%s4268 + $0x548] sm:%s4260] %v4945
          %v4947 = vld [vmem:[%s4267 + $0x554] sm:%s4260]
          %4948 = vst [vmem:[%s4268 + $0x54c] sm:%s4260] %v4947
          %v4949 = vld [vmem:[%s4267 + $0x548] sm:%s4260]
          %4950 = vst [vmem:[%s4268 + $0x550] sm:%s4260] %v4949
          %v4951 = vld [vmem:[%s4267 + $0x558] sm:%s4260]
          %4952 = vst [vmem:[%s4268 + $0x554] sm:%s4260] %v4951
          %v4953 = vld [vmem:[%s4267 + $0x54c] sm:%s4260]
          %4954 = vst [vmem:[%s4268 + $0x558] sm:%s4260] %v4953
          %v4955 = vld [vmem:[%s4267 + $0x55c] sm:%s4260]
          %4956 = vst [vmem:[%s4268 + $0x55c] sm:%s4260] %v4955
          %v4957 = vld [vmem:[%s4267 + $0x560] sm:%s4260]
          %4958 = vst [vmem:[%s4268 + $0x560] sm:%s4260] %v4957
          %v4959 = vld [vmem:[%s4267 + $0x570] sm:%s4260]
          %4960 = vst [vmem:[%s4268 + $0x564] sm:%s4260] %v4959
          %v4961 = vld [vmem:[%s4267 + $0x564] sm:%s4260]
          %4962 = vst [vmem:[%s4268 + $0x568] sm:%s4260] %v4961
          %v4963 = vld [vmem:[%s4267 + $0x574] sm:%s4260]
          %4964 = vst [vmem:[%s4268 + $0x56c] sm:%s4260] %v4963
          %v4965 = vld [vmem:[%s4267 + $0x568] sm:%s4260]
          %4966 = vst [vmem:[%s4268 + $0x570] sm:%s4260] %v4965
          %v4967 = vld [vmem:[%s4267 + $0x578] sm:%s4260]
          %4968 = vst [vmem:[%s4268 + $0x574] sm:%s4260] %v4967
          %v4969 = vld [vmem:[%s4267 + $0x56c] sm:%s4260]
          %4970 = vst [vmem:[%s4268 + $0x578] sm:%s4260] %v4969
          %v4971 = vld [vmem:[%s4267 + $0x57c] sm:%s4260]
          %4972 = vst [vmem:[%s4268 + $0x57c] sm:%s4260] %v4971
          %v4973 = vld [vmem:[%s4267 + $0x580] sm:%s4260]
          %4974 = vst [vmem:[%s4268 + $0x580] sm:%s4260] %v4973
          %v4975 = vld [vmem:[%s4267 + $0x590] sm:%s4260]
          %4976 = vst [vmem:[%s4268 + $0x584] sm:%s4260] %v4975
          %v4977 = vld [vmem:[%s4267 + $0x584] sm:%s4260]
          %4978 = vst [vmem:[%s4268 + $0x588] sm:%s4260] %v4977
          %v4979 = vld [vmem:[%s4267 + $0x594] sm:%s4260]
          %4980 = vst [vmem:[%s4268 + $0x58c] sm:%s4260] %v4979
          %v4981 = vld [vmem:[%s4267 + $0x588] sm:%s4260]
          %4982 = vst [vmem:[%s4268 + $0x590] sm:%s4260] %v4981
          %v4983 = vld [vmem:[%s4267 + $0x598] sm:%s4260]
          %4984 = vst [vmem:[%s4268 + $0x594] sm:%s4260] %v4983
          %v4985 = vld [vmem:[%s4267 + $0x58c] sm:%s4260]
          %4986 = vst [vmem:[%s4268 + $0x598] sm:%s4260] %v4985
          %v4987 = vld [vmem:[%s4267 + $0x59c] sm:%s4260]
          %4988 = vst [vmem:[%s4268 + $0x59c] sm:%s4260] %v4987
          %v4989 = vld [vmem:[%s4267 + $0x5a0] sm:%s4260]
          %4990 = vst [vmem:[%s4268 + $0x5a0] sm:%s4260] %v4989
          %v4991 = vld [vmem:[%s4267 + $0x5b0] sm:%s4260]
          %4992 = vst [vmem:[%s4268 + $0x5a4] sm:%s4260] %v4991
          %v4993 = vld [vmem:[%s4267 + $0x5a4] sm:%s4260]
          %4994 = vst [vmem:[%s4268 + $0x5a8] sm:%s4260] %v4993
          %v4995 = vld [vmem:[%s4267 + $0x5b4] sm:%s4260]
          %4996 = vst [vmem:[%s4268 + $0x5ac] sm:%s4260] %v4995
          %v4997 = vld [vmem:[%s4267 + $0x5a8] sm:%s4260]
          %4998 = vst [vmem:[%s4268 + $0x5b0] sm:%s4260] %v4997
          %v4999 = vld [vmem:[%s4267 + $0x5b8] sm:%s4260]
          %5000 = vst [vmem:[%s4268 + $0x5b4] sm:%s4260] %v4999
          %v5001 = vld [vmem:[%s4267 + $0x5ac] sm:%s4260]
          %5002 = vst [vmem:[%s4268 + $0x5b8] sm:%s4260] %v5001
          %v5003 = vld [vmem:[%s4267 + $0x5bc] sm:%s4260]
          %5004 = vst [vmem:[%s4268 + $0x5bc] sm:%s4260] %v5003
          %v5005 = vld [vmem:[%s4267 + $0x5c0] sm:%s4260]
          %5006 = vst [vmem:[%s4268 + $0x5c0] sm:%s4260] %v5005
          %v5007 = vld [vmem:[%s4267 + $0x5d0] sm:%s4260]
          %5008 = vst [vmem:[%s4268 + $0x5c4] sm:%s4260] %v5007
          %v5009 = vld [vmem:[%s4267 + $0x5c4] sm:%s4260]
          %5010 = vst [vmem:[%s4268 + $0x5c8] sm:%s4260] %v5009
          %v5011 = vld [vmem:[%s4267 + $0x5d4] sm:%s4260]
          %5012 = vst [vmem:[%s4268 + $0x5cc] sm:%s4260] %v5011
          %v5013 = vld [vmem:[%s4267 + $0x5c8] sm:%s4260]
          %5014 = vst [vmem:[%s4268 + $0x5d0] sm:%s4260] %v5013
          %v5015 = vld [vmem:[%s4267 + $0x5d8] sm:%s4260]
          %5016 = vst [vmem:[%s4268 + $0x5d4] sm:%s4260] %v5015
          %v5017 = vld [vmem:[%s4267 + $0x5cc] sm:%s4260]
          %5018 = vst [vmem:[%s4268 + $0x5d8] sm:%s4260] %v5017
          %v5019 = vld [vmem:[%s4267 + $0x5dc] sm:%s4260]
          %5020 = vst [vmem:[%s4268 + $0x5dc] sm:%s4260] %v5019
          %v5021 = vld [vmem:[%s4267 + $0x5e0] sm:%s4260]
          %5022 = vst [vmem:[%s4268 + $0x5e0] sm:%s4260] %v5021
          %v5023 = vld [vmem:[%s4267 + $0x5f0] sm:%s4260]
          %5024 = vst [vmem:[%s4268 + $0x5e4] sm:%s4260] %v5023
          %v5025 = vld [vmem:[%s4267 + $0x5e4] sm:%s4260]
          %5026 = vst [vmem:[%s4268 + $0x5e8] sm:%s4260] %v5025
          %v5027 = vld [vmem:[%s4267 + $0x5f4] sm:%s4260]
          %5028 = vst [vmem:[%s4268 + $0x5ec] sm:%s4260] %v5027
          %v5029 = vld [vmem:[%s4267 + $0x5e8] sm:%s4260]
          %5030 = vst [vmem:[%s4268 + $0x5f0] sm:%s4260] %v5029
          %v5031 = vld [vmem:[%s4267 + $0x5f8] sm:%s4260]
          %5032 = vst [vmem:[%s4268 + $0x5f4] sm:%s4260] %v5031
          %v5033 = vld [vmem:[%s4267 + $0x5ec] sm:%s4260]
          %5034 = vst [vmem:[%s4268 + $0x5f8] sm:%s4260] %v5033
          %v5035 = vld [vmem:[%s4267 + $0x5fc] sm:%s4260]
          %5036 = vst [vmem:[%s4268 + $0x5fc] sm:%s4260] %v5035
          %v5037 = vld [vmem:[%s4267 + $0x600] sm:%s4260]
          %5038 = vst [vmem:[%s4268 + $0x600] sm:%s4260] %v5037
          %v5039 = vld [vmem:[%s4267 + $0x610] sm:%s4260]
          %5040 = vst [vmem:[%s4268 + $0x604] sm:%s4260] %v5039
          %v5041 = vld [vmem:[%s4267 + $0x604] sm:%s4260]
          %5042 = vst [vmem:[%s4268 + $0x608] sm:%s4260] %v5041
          %v5043 = vld [vmem:[%s4267 + $0x614] sm:%s4260]
          %5044 = vst [vmem:[%s4268 + $0x60c] sm:%s4260] %v5043
          %v5045 = vld [vmem:[%s4267 + $0x608] sm:%s4260]
          %5046 = vst [vmem:[%s4268 + $0x610] sm:%s4260] %v5045
          %v5047 = vld [vmem:[%s4267 + $0x618] sm:%s4260]
          %5048 = vst [vmem:[%s4268 + $0x614] sm:%s4260] %v5047
          %v5049 = vld [vmem:[%s4267 + $0x60c] sm:%s4260]
          %5050 = vst [vmem:[%s4268 + $0x618] sm:%s4260] %v5049
          %v5051 = vld [vmem:[%s4267 + $0x61c] sm:%s4260]
          %5052 = vst [vmem:[%s4268 + $0x61c] sm:%s4260] %v5051
          %v5053 = vld [vmem:[%s4267 + $0x620] sm:%s4260]
          %5054 = vst [vmem:[%s4268 + $0x620] sm:%s4260] %v5053
          %v5055 = vld [vmem:[%s4267 + $0x630] sm:%s4260]
          %5056 = vst [vmem:[%s4268 + $0x624] sm:%s4260] %v5055
          %v5057 = vld [vmem:[%s4267 + $0x624] sm:%s4260]
          %5058 = vst [vmem:[%s4268 + $0x628] sm:%s4260] %v5057
          %v5059 = vld [vmem:[%s4267 + $0x634] sm:%s4260]
          %5060 = vst [vmem:[%s4268 + $0x62c] sm:%s4260] %v5059
          %v5061 = vld [vmem:[%s4267 + $0x628] sm:%s4260]
          %5062 = vst [vmem:[%s4268 + $0x630] sm:%s4260] %v5061
          %v5063 = vld [vmem:[%s4267 + $0x638] sm:%s4260]
          %5064 = vst [vmem:[%s4268 + $0x634] sm:%s4260] %v5063
          %v5065 = vld [vmem:[%s4267 + $0x62c] sm:%s4260]
          %5066 = vst [vmem:[%s4268 + $0x638] sm:%s4260] %v5065
          %v5067 = vld [vmem:[%s4267 + $0x63c] sm:%s4260]
          %5068 = vst [vmem:[%s4268 + $0x63c] sm:%s4260] %v5067
          %v5069 = vld [vmem:[%s4267 + $0x640] sm:%s4260]
          %5070 = vst [vmem:[%s4268 + $0x640] sm:%s4260] %v5069
          %v5071 = vld [vmem:[%s4267 + $0x650] sm:%s4260]
          %5072 = vst [vmem:[%s4268 + $0x644] sm:%s4260] %v5071
          %v5073 = vld [vmem:[%s4267 + $0x644] sm:%s4260]
          %5074 = vst [vmem:[%s4268 + $0x648] sm:%s4260] %v5073
          %v5075 = vld [vmem:[%s4267 + $0x654] sm:%s4260]
          %5076 = vst [vmem:[%s4268 + $0x64c] sm:%s4260] %v5075
          %v5077 = vld [vmem:[%s4267 + $0x648] sm:%s4260]
          %5078 = vst [vmem:[%s4268 + $0x650] sm:%s4260] %v5077
          %v5079 = vld [vmem:[%s4267 + $0x658] sm:%s4260]
          %5080 = vst [vmem:[%s4268 + $0x654] sm:%s4260] %v5079
          %v5081 = vld [vmem:[%s4267 + $0x64c] sm:%s4260]
          %5082 = vst [vmem:[%s4268 + $0x658] sm:%s4260] %v5081
          %v5083 = vld [vmem:[%s4267 + $0x65c] sm:%s4260]
          %5084 = vst [vmem:[%s4268 + $0x65c] sm:%s4260] %v5083
          %v5085 = vld [vmem:[%s4267 + $0x660] sm:%s4260]
          %5086 = vst [vmem:[%s4268 + $0x660] sm:%s4260] %v5085
          %v5087 = vld [vmem:[%s4267 + $0x670] sm:%s4260]
          %5088 = vst [vmem:[%s4268 + $0x664] sm:%s4260] %v5087
          %v5089 = vld [vmem:[%s4267 + $0x664] sm:%s4260]
          %5090 = vst [vmem:[%s4268 + $0x668] sm:%s4260] %v5089
          %v5091 = vld [vmem:[%s4267 + $0x674] sm:%s4260]
          %5092 = vst [vmem:[%s4268 + $0x66c] sm:%s4260] %v5091
          %v5093 = vld [vmem:[%s4267 + $0x668] sm:%s4260]
          %5094 = vst [vmem:[%s4268 + $0x670] sm:%s4260] %v5093
          %v5095 = vld [vmem:[%s4267 + $0x678] sm:%s4260]
          %5096 = vst [vmem:[%s4268 + $0x674] sm:%s4260] %v5095
          %v5097 = vld [vmem:[%s4267 + $0x66c] sm:%s4260]
          %5098 = vst [vmem:[%s4268 + $0x678] sm:%s4260] %v5097
          %v5099 = vld [vmem:[%s4267 + $0x67c] sm:%s4260]
          %5100 = vst [vmem:[%s4268 + $0x67c] sm:%s4260] %v5099
          %v5101 = vld [vmem:[%s4267 + $0x680] sm:%s4260]
          %5102 = vst [vmem:[%s4268 + $0x680] sm:%s4260] %v5101
          %v5103 = vld [vmem:[%s4267 + $0x690] sm:%s4260]
          %5104 = vst [vmem:[%s4268 + $0x684] sm:%s4260] %v5103
          %v5105 = vld [vmem:[%s4267 + $0x684] sm:%s4260]
          %5106 = vst [vmem:[%s4268 + $0x688] sm:%s4260] %v5105
          %v5107 = vld [vmem:[%s4267 + $0x694] sm:%s4260]
          %5108 = vst [vmem:[%s4268 + $0x68c] sm:%s4260] %v5107
          %v5109 = vld [vmem:[%s4267 + $0x688] sm:%s4260]
          %5110 = vst [vmem:[%s4268 + $0x690] sm:%s4260] %v5109
          %v5111 = vld [vmem:[%s4267 + $0x698] sm:%s4260]
          %5112 = vst [vmem:[%s4268 + $0x694] sm:%s4260] %v5111
          %v5113 = vld [vmem:[%s4267 + $0x68c] sm:%s4260]
          %5114 = vst [vmem:[%s4268 + $0x698] sm:%s4260] %v5113
          %v5115 = vld [vmem:[%s4267 + $0x69c] sm:%s4260]
          %5116 = vst [vmem:[%s4268 + $0x69c] sm:%s4260] %v5115
          %v5117 = vld [vmem:[%s4267 + $0x6a0] sm:%s4260]
          %5118 = vst [vmem:[%s4268 + $0x6a0] sm:%s4260] %v5117
          %v5119 = vld [vmem:[%s4267 + $0x6b0] sm:%s4260]
          %5120 = vst [vmem:[%s4268 + $0x6a4] sm:%s4260] %v5119
          %v5121 = vld [vmem:[%s4267 + $0x6a4] sm:%s4260]
          %5122 = vst [vmem:[%s4268 + $0x6a8] sm:%s4260] %v5121
          %v5123 = vld [vmem:[%s4267 + $0x6b4] sm:%s4260]
          %5124 = vst [vmem:[%s4268 + $0x6ac] sm:%s4260] %v5123
          %v5125 = vld [vmem:[%s4267 + $0x6a8] sm:%s4260]
          %5126 = vst [vmem:[%s4268 + $0x6b0] sm:%s4260] %v5125
          %v5127 = vld [vmem:[%s4267 + $0x6b8] sm:%s4260]
          %5128 = vst [vmem:[%s4268 + $0x6b4] sm:%s4260] %v5127
          %v5129 = vld [vmem:[%s4267 + $0x6ac] sm:%s4260]
          %5130 = vst [vmem:[%s4268 + $0x6b8] sm:%s4260] %v5129
          %v5131 = vld [vmem:[%s4267 + $0x6bc] sm:%s4260]
          %5132 = vst [vmem:[%s4268 + $0x6bc] sm:%s4260] %v5131
          %v5133 = vld [vmem:[%s4267 + $0x6c0] sm:%s4260]
          %5134 = vst [vmem:[%s4268 + $0x6c0] sm:%s4260] %v5133
          %v5135 = vld [vmem:[%s4267 + $0x6d0] sm:%s4260]
          %5136 = vst [vmem:[%s4268 + $0x6c4] sm:%s4260] %v5135
          %v5137 = vld [vmem:[%s4267 + $0x6c4] sm:%s4260]
          %5138 = vst [vmem:[%s4268 + $0x6c8] sm:%s4260] %v5137
          %v5139 = vld [vmem:[%s4267 + $0x6d4] sm:%s4260]
          %5140 = vst [vmem:[%s4268 + $0x6cc] sm:%s4260] %v5139
          %v5141 = vld [vmem:[%s4267 + $0x6c8] sm:%s4260]
          %5142 = vst [vmem:[%s4268 + $0x6d0] sm:%s4260] %v5141
          %v5143 = vld [vmem:[%s4267 + $0x6d8] sm:%s4260]
          %5144 = vst [vmem:[%s4268 + $0x6d4] sm:%s4260] %v5143
          %v5145 = vld [vmem:[%s4267 + $0x6cc] sm:%s4260]
          %5146 = vst [vmem:[%s4268 + $0x6d8] sm:%s4260] %v5145
          %v5147 = vld [vmem:[%s4267 + $0x6dc] sm:%s4260]
          %5148 = vst [vmem:[%s4268 + $0x6dc] sm:%s4260] %v5147
          %v5149 = vld [vmem:[%s4267 + $0x6e0] sm:%s4260]
          %5150 = vst [vmem:[%s4268 + $0x6e0] sm:%s4260] %v5149
          %v5151 = vld [vmem:[%s4267 + $0x6f0] sm:%s4260]
          %5152 = vst [vmem:[%s4268 + $0x6e4] sm:%s4260] %v5151
          %v5153 = vld [vmem:[%s4267 + $0x6e4] sm:%s4260]
          %5154 = vst [vmem:[%s4268 + $0x6e8] sm:%s4260] %v5153
          %v5155 = vld [vmem:[%s4267 + $0x6f4] sm:%s4260]
          %5156 = vst [vmem:[%s4268 + $0x6ec] sm:%s4260] %v5155
          %v5157 = vld [vmem:[%s4267 + $0x6e8] sm:%s4260]
          %5158 = vst [vmem:[%s4268 + $0x6f0] sm:%s4260] %v5157
          %v5159 = vld [vmem:[%s4267 + $0x6f8] sm:%s4260]
          %5160 = vst [vmem:[%s4268 + $0x6f4] sm:%s4260] %v5159
          %v5161 = vld [vmem:[%s4267 + $0x6ec] sm:%s4260]
          %5162 = vst [vmem:[%s4268 + $0x6f8] sm:%s4260] %v5161
          %v5163 = vld [vmem:[%s4267 + $0x6fc] sm:%s4260]
          %5164 = vst [vmem:[%s4268 + $0x6fc] sm:%s4260] %v5163
          %v5165 = vld [vmem:[%s4267 + $0x700] sm:%s4260]
          %5166 = vst [vmem:[%s4268 + $0x700] sm:%s4260] %v5165
          %v5167 = vld [vmem:[%s4267 + $0x710] sm:%s4260]
          %5168 = vst [vmem:[%s4268 + $0x704] sm:%s4260] %v5167
          %v5169 = vld [vmem:[%s4267 + $0x704] sm:%s4260]
          %5170 = vst [vmem:[%s4268 + $0x708] sm:%s4260] %v5169
          %v5171 = vld [vmem:[%s4267 + $0x714] sm:%s4260]
          %5172 = vst [vmem:[%s4268 + $0x70c] sm:%s4260] %v5171
          %v5173 = vld [vmem:[%s4267 + $0x708] sm:%s4260]
          %5174 = vst [vmem:[%s4268 + $0x710] sm:%s4260] %v5173
          %v5175 = vld [vmem:[%s4267 + $0x718] sm:%s4260]
          %5176 = vst [vmem:[%s4268 + $0x714] sm:%s4260] %v5175
          %v5177 = vld [vmem:[%s4267 + $0x70c] sm:%s4260]
          %5178 = vst [vmem:[%s4268 + $0x718] sm:%s4260] %v5177
          %v5179 = vld [vmem:[%s4267 + $0x71c] sm:%s4260]
          %5180 = vst [vmem:[%s4268 + $0x71c] sm:%s4260] %v5179
          %v5181 = vld [vmem:[%s4267 + $0x720] sm:%s4260]
          %5182 = vst [vmem:[%s4268 + $0x720] sm:%s4260] %v5181
          %v5183 = vld [vmem:[%s4267 + $0x730] sm:%s4260]
          %5184 = vst [vmem:[%s4268 + $0x724] sm:%s4260] %v5183
          %v5185 = vld [vmem:[%s4267 + $0x724] sm:%s4260]
          %5186 = vst [vmem:[%s4268 + $0x728] sm:%s4260] %v5185
          %v5187 = vld [vmem:[%s4267 + $0x734] sm:%s4260]
          %5188 = vst [vmem:[%s4268 + $0x72c] sm:%s4260] %v5187
          %v5189 = vld [vmem:[%s4267 + $0x728] sm:%s4260]
          %5190 = vst [vmem:[%s4268 + $0x730] sm:%s4260] %v5189
          %v5191 = vld [vmem:[%s4267 + $0x738] sm:%s4260]
          %5192 = vst [vmem:[%s4268 + $0x734] sm:%s4260] %v5191
          %v5193 = vld [vmem:[%s4267 + $0x72c] sm:%s4260]
          %5194 = vst [vmem:[%s4268 + $0x738] sm:%s4260] %v5193
          %v5195 = vld [vmem:[%s4267 + $0x73c] sm:%s4260]
          %5196 = vst [vmem:[%s4268 + $0x73c] sm:%s4260] %v5195
          %v5197 = vld [vmem:[%s4267 + $0x740] sm:%s4260]
          %5198 = vst [vmem:[%s4268 + $0x740] sm:%s4260] %v5197
          %v5199 = vld [vmem:[%s4267 + $0x750] sm:%s4260]
          %5200 = vst [vmem:[%s4268 + $0x744] sm:%s4260] %v5199
          %v5201 = vld [vmem:[%s4267 + $0x744] sm:%s4260]
          %5202 = vst [vmem:[%s4268 + $0x748] sm:%s4260] %v5201
          %v5203 = vld [vmem:[%s4267 + $0x754] sm:%s4260]
          %5204 = vst [vmem:[%s4268 + $0x74c] sm:%s4260] %v5203
          %v5205 = vld [vmem:[%s4267 + $0x748] sm:%s4260]
          %5206 = vst [vmem:[%s4268 + $0x750] sm:%s4260] %v5205
          %v5207 = vld [vmem:[%s4267 + $0x758] sm:%s4260]
          %5208 = vst [vmem:[%s4268 + $0x754] sm:%s4260] %v5207
          %v5209 = vld [vmem:[%s4267 + $0x74c] sm:%s4260]
          %5210 = vst [vmem:[%s4268 + $0x758] sm:%s4260] %v5209
          %v5211 = vld [vmem:[%s4267 + $0x75c] sm:%s4260]
          %5212 = vst [vmem:[%s4268 + $0x75c] sm:%s4260] %v5211
          %v5213 = vld [vmem:[%s4267 + $0x760] sm:%s4260]
          %5214 = vst [vmem:[%s4268 + $0x760] sm:%s4260] %v5213
          %v5215 = vld [vmem:[%s4267 + $0x770] sm:%s4260]
          %5216 = vst [vmem:[%s4268 + $0x764] sm:%s4260] %v5215
          %v5217 = vld [vmem:[%s4267 + $0x764] sm:%s4260]
          %5218 = vst [vmem:[%s4268 + $0x768] sm:%s4260] %v5217
          %v5219 = vld [vmem:[%s4267 + $0x774] sm:%s4260]
          %5220 = vst [vmem:[%s4268 + $0x76c] sm:%s4260] %v5219
          %v5221 = vld [vmem:[%s4267 + $0x768] sm:%s4260]
          %5222 = vst [vmem:[%s4268 + $0x770] sm:%s4260] %v5221
          %v5223 = vld [vmem:[%s4267 + $0x778] sm:%s4260]
          %5224 = vst [vmem:[%s4268 + $0x774] sm:%s4260] %v5223
          %v5225 = vld [vmem:[%s4267 + $0x76c] sm:%s4260]
          %5226 = vst [vmem:[%s4268 + $0x778] sm:%s4260] %v5225
          %v5227 = vld [vmem:[%s4267 + $0x77c] sm:%s4260]
          %5228 = vst [vmem:[%s4268 + $0x77c] sm:%s4260] %v5227
          %v5229 = vld [vmem:[%s4267 + $0x780] sm:%s4260]
          %5230 = vst [vmem:[%s4268 + $0x780] sm:%s4260] %v5229
          %v5231 = vld [vmem:[%s4267 + $0x790] sm:%s4260]
          %5232 = vst [vmem:[%s4268 + $0x784] sm:%s4260] %v5231
          %v5233 = vld [vmem:[%s4267 + $0x784] sm:%s4260]
          %5234 = vst [vmem:[%s4268 + $0x788] sm:%s4260] %v5233
          %v5235 = vld [vmem:[%s4267 + $0x794] sm:%s4260]
          %5236 = vst [vmem:[%s4268 + $0x78c] sm:%s4260] %v5235
          %v5237 = vld [vmem:[%s4267 + $0x788] sm:%s4260]
          %5238 = vst [vmem:[%s4268 + $0x790] sm:%s4260] %v5237
          %v5239 = vld [vmem:[%s4267 + $0x798] sm:%s4260]
          %5240 = vst [vmem:[%s4268 + $0x794] sm:%s4260] %v5239
          %v5241 = vld [vmem:[%s4267 + $0x78c] sm:%s4260]
          %5242 = vst [vmem:[%s4268 + $0x798] sm:%s4260] %v5241
          %v5243 = vld [vmem:[%s4267 + $0x79c] sm:%s4260]
          %5244 = vst [vmem:[%s4268 + $0x79c] sm:%s4260] %v5243
          %v5245 = vld [vmem:[%s4267 + $0x7a0] sm:%s4260]
          %5246 = vst [vmem:[%s4268 + $0x7a0] sm:%s4260] %v5245
          %v5247 = vld [vmem:[%s4267 + $0x7b0] sm:%s4260]
          %5248 = vst [vmem:[%s4268 + $0x7a4] sm:%s4260] %v5247
          %v5249 = vld [vmem:[%s4267 + $0x7a4] sm:%s4260]
          %5250 = vst [vmem:[%s4268 + $0x7a8] sm:%s4260] %v5249
          %v5251 = vld [vmem:[%s4267 + $0x7b4] sm:%s4260]
          %5252 = vst [vmem:[%s4268 + $0x7ac] sm:%s4260] %v5251
          %v5253 = vld [vmem:[%s4267 + $0x7a8] sm:%s4260]
          %5254 = vst [vmem:[%s4268 + $0x7b0] sm:%s4260] %v5253
          %v5255 = vld [vmem:[%s4267 + $0x7b8] sm:%s4260]
          %5256 = vst [vmem:[%s4268 + $0x7b4] sm:%s4260] %v5255
          %v5257 = vld [vmem:[%s4267 + $0x7ac] sm:%s4260]
          %5258 = vst [vmem:[%s4268 + $0x7b8] sm:%s4260] %v5257
          %v5259 = vld [vmem:[%s4267 + $0x7bc] sm:%s4260]
          %5260 = vst [vmem:[%s4268 + $0x7bc] sm:%s4260] %v5259
          %v5261 = vld [vmem:[%s4267 + $0x7c0] sm:%s4260]
          %5262 = vst [vmem:[%s4268 + $0x7c0] sm:%s4260] %v5261
          %v5263 = vld [vmem:[%s4267 + $0x7d0] sm:%s4260]
          %5264 = vst [vmem:[%s4268 + $0x7c4] sm:%s4260] %v5263
          %v5265 = vld [vmem:[%s4267 + $0x7c4] sm:%s4260]
          %5266 = vst [vmem:[%s4268 + $0x7c8] sm:%s4260] %v5265
          %v5267 = vld [vmem:[%s4267 + $0x7d4] sm:%s4260]
          %5268 = vst [vmem:[%s4268 + $0x7cc] sm:%s4260] %v5267
          %v5269 = vld [vmem:[%s4267 + $0x7c8] sm:%s4260]
          %5270 = vst [vmem:[%s4268 + $0x7d0] sm:%s4260] %v5269
          %v5271 = vld [vmem:[%s4267 + $0x7d8] sm:%s4260]
          %5272 = vst [vmem:[%s4268 + $0x7d4] sm:%s4260] %v5271
          %v5273 = vld [vmem:[%s4267 + $0x7cc] sm:%s4260]
          %5274 = vst [vmem:[%s4268 + $0x7d8] sm:%s4260] %v5273
          %v5275 = vld [vmem:[%s4267 + $0x7dc] sm:%s4260]
          %5276 = vst [vmem:[%s4268 + $0x7dc] sm:%s4260] %v5275
          %v5277 = vld [vmem:[%s4267 + $0x7e0] sm:%s4260]
          %5278 = vst [vmem:[%s4268 + $0x7e0] sm:%s4260] %v5277
          %v5279 = vld [vmem:[%s4267 + $0x7f0] sm:%s4260]
          %5280 = vst [vmem:[%s4268 + $0x7e4] sm:%s4260] %v5279
          %v5281 = vld [vmem:[%s4267 + $0x7e4] sm:%s4260]
          %5282 = vst [vmem:[%s4268 + $0x7e8] sm:%s4260] %v5281
          %v5283 = vld [vmem:[%s4267 + $0x7f4] sm:%s4260]
          %5284 = vst [vmem:[%s4268 + $0x7ec] sm:%s4260] %v5283
          %v5285 = vld [vmem:[%s4267 + $0x7e8] sm:%s4260]
          %5286 = vst [vmem:[%s4268 + $0x7f0] sm:%s4260] %v5285
          %v5287 = vld [vmem:[%s4267 + $0x7f8] sm:%s4260]
          %5288 = vst [vmem:[%s4268 + $0x7f4] sm:%s4260] %v5287
          %v5289 = vld [vmem:[%s4267 + $0x7ec] sm:%s4260]
          %5290 = vst [vmem:[%s4268 + $0x7f8] sm:%s4260] %v5289
          %v5291 = vld [vmem:[%s4267 + $0x7fc] sm:%s4260]
          %5292 = vst [vmem:[%s4268 + $0x7fc] sm:%s4260] %v5291
        $region132: #{pose_encoder_forward.1} parent=119 // loop_footer
          %s4266 = sadd.s32 1, %s4262
        $region133: #{pose_encoder_forward.1} parent=119 // loop_footer_branch
          %4261 = sbr.rel target = $region129
        $region134: #{pose_encoder_forward.1} parent=119 // loop_exit
          _
      $region120: #{pose_encoder_forward.1} parent=93 // pred_fallthru
        _
    $region94: #{pose_encoder_forward.1} parent=1 // pred_fallthru
      _
    // Predicated region
    $region95: #{pose_encoder_forward.1} parent=1 // pred_check
      %p1125 = pneg %p1121
    $region96: #{pose_encoder_forward.1} parent=1 // pred_check_branch
      %1127 = sbr.rel (%p1125) target = $region98
    $region97: #{pose_encoder_forward.1} parent=1 // pred_region
      %s1128 = sshllo.u32 0, 4
      loop: start=0, step=1, limit=1
      $region99: #{pose_encoder_forward.1} parent=97 // loop_pre_header
        _
      $region100: #{pose_encoder_forward.1} parent=97 // loop_header
        %s1130 = sphi 0, %s1134
        %p1131 = scmp.ge.s32.totalorder %s1130, 1
        %s1135 = sphi %s13, %s13
        %s1136 = sphi [#allocation3], [#allocation3]
      $region101: #{pose_encoder_forward.1} parent=97 // loop_header_branch
        %1133 = sbr.rel (%p1131) target = $region105
      $region102: #{pose_encoder_forward.1} parent=97 // loop_body
        %v1137 = vld [vmem:[%s1135] sm:%s1128]
        %1138 = vst [vmem:[%s1136] sm:%s1128] %v1137
        %v1139 = vld [vmem:[%s1135 + $0x10] sm:%s1128]
        %1140 = vst [vmem:[%s1136 + $0x4] sm:%s1128] %v1139
        %v1141 = vld [vmem:[%s1135 + $0x4] sm:%s1128]
        %1142 = vst [vmem:[%s1136 + $0x8] sm:%s1128] %v1141
        %v1143 = vld [vmem:[%s1135 + $0x14] sm:%s1128]
        %1144 = vst [vmem:[%s1136 + $0xc] sm:%s1128] %v1143
        %v1145 = vld [vmem:[%s1135 + $0x8] sm:%s1128]
        %1146 = vst [vmem:[%s1136 + $0x10] sm:%s1128] %v1145
        %v1147 = vld [vmem:[%s1135 + $0x18] sm:%s1128]
        %1148 = vst [vmem:[%s1136 + $0x14] sm:%s1128] %v1147
        %v1149 = vld [vmem:[%s1135 + $0xc] sm:%s1128]
        %1150 = vst [vmem:[%s1136 + $0x18] sm:%s1128] %v1149
        %v1151 = vld [vmem:[%s1135 + $0x1c] sm:%s1128]
        %1152 = vst [vmem:[%s1136 + $0x1c] sm:%s1128] %v1151
        %v1153 = vld [vmem:[%s1135 + $0x20] sm:%s1128]
        %1154 = vst [vmem:[%s1136 + $0x20] sm:%s1128] %v1153
        %v1155 = vld [vmem:[%s1135 + $0x30] sm:%s1128]
        %1156 = vst [vmem:[%s1136 + $0x24] sm:%s1128] %v1155
        %v1157 = vld [vmem:[%s1135 + $0x24] sm:%s1128]
        %1158 = vst [vmem:[%s1136 + $0x28] sm:%s1128] %v1157
        %v1159 = vld [vmem:[%s1135 + $0x34] sm:%s1128]
        %1160 = vst [vmem:[%s1136 + $0x2c] sm:%s1128] %v1159
        %v1161 = vld [vmem:[%s1135 + $0x28] sm:%s1128]
        %1162 = vst [vmem:[%s1136 + $0x30] sm:%s1128] %v1161
        %v1163 = vld [vmem:[%s1135 + $0x38] sm:%s1128]
        %1164 = vst [vmem:[%s1136 + $0x34] sm:%s1128] %v1163
        %v1165 = vld [vmem:[%s1135 + $0x2c] sm:%s1128]
        %1166 = vst [vmem:[%s1136 + $0x38] sm:%s1128] %v1165
        %v1167 = vld [vmem:[%s1135 + $0x3c] sm:%s1128]
        %1168 = vst [vmem:[%s1136 + $0x3c] sm:%s1128] %v1167
        %v1169 = vld [vmem:[%s1135 + $0x40] sm:%s1128]
        %1170 = vst [vmem:[%s1136 + $0x40] sm:%s1128] %v1169
        %v1171 = vld [vmem:[%s1135 + $0x50] sm:%s1128]
        %1172 = vst [vmem:[%s1136 + $0x44] sm:%s1128] %v1171
        %v1173 = vld [vmem:[%s1135 + $0x44] sm:%s1128]
        %1174 = vst [vmem:[%s1136 + $0x48] sm:%s1128] %v1173
        %v1175 = vld [vmem:[%s1135 + $0x54] sm:%s1128]
        %1176 = vst [vmem:[%s1136 + $0x4c] sm:%s1128] %v1175
        %v1177 = vld [vmem:[%s1135 + $0x48] sm:%s1128]
        %1178 = vst [vmem:[%s1136 + $0x50] sm:%s1128] %v1177
        %v1179 = vld [vmem:[%s1135 + $0x58] sm:%s1128]
        %1180 = vst [vmem:[%s1136 + $0x54] sm:%s1128] %v1179
        %v1181 = vld [vmem:[%s1135 + $0x4c] sm:%s1128]
        %1182 = vst [vmem:[%s1136 + $0x58] sm:%s1128] %v1181
        %v1183 = vld [vmem:[%s1135 + $0x5c] sm:%s1128]
        %1184 = vst [vmem:[%s1136 + $0x5c] sm:%s1128] %v1183
        %v1185 = vld [vmem:[%s1135 + $0x60] sm:%s1128]
        %1186 = vst [vmem:[%s1136 + $0x60] sm:%s1128] %v1185
        %v1187 = vld [vmem:[%s1135 + $0x70] sm:%s1128]
        %1188 = vst [vmem:[%s1136 + $0x64] sm:%s1128] %v1187
        %v1189 = vld [vmem:[%s1135 + $0x64] sm:%s1128]
        %1190 = vst [vmem:[%s1136 + $0x68] sm:%s1128] %v1189
        %v1191 = vld [vmem:[%s1135 + $0x74] sm:%s1128]
        %1192 = vst [vmem:[%s1136 + $0x6c] sm:%s1128] %v1191
        %v1193 = vld [vmem:[%s1135 + $0x68] sm:%s1128]
        %1194 = vst [vmem:[%s1136 + $0x70] sm:%s1128] %v1193
        %v1195 = vld [vmem:[%s1135 + $0x78] sm:%s1128]
        %1196 = vst [vmem:[%s1136 + $0x74] sm:%s1128] %v1195
        %v1197 = vld [vmem:[%s1135 + $0x6c] sm:%s1128]
        %1198 = vst [vmem:[%s1136 + $0x78] sm:%s1128] %v1197
        %v1199 = vld [vmem:[%s1135 + $0x7c] sm:%s1128]
        %1200 = vst [vmem:[%s1136 + $0x7c] sm:%s1128] %v1199
        %v1201 = vld [vmem:[%s1135 + $0x80] sm:%s1128]
        %1202 = vst [vmem:[%s1136 + $0x80] sm:%s1128] %v1201
        %v1203 = vld [vmem:[%s1135 + $0x90] sm:%s1128]
        %1204 = vst [vmem:[%s1136 + $0x84] sm:%s1128] %v1203
        %v1205 = vld [vmem:[%s1135 + $0x84] sm:%s1128]
        %1206 = vst [vmem:[%s1136 + $0x88] sm:%s1128] %v1205
        %v1207 = vld [vmem:[%s1135 + $0x94] sm:%s1128]
        %1208 = vst [vmem:[%s1136 + $0x8c] sm:%s1128] %v1207
        %v1209 = vld [vmem:[%s1135 + $0x88] sm:%s1128]
        %1210 = vst [vmem:[%s1136 + $0x90] sm:%s1128] %v1209
        %v1211 = vld [vmem:[%s1135 + $0x98] sm:%s1128]
        %1212 = vst [vmem:[%s1136 + $0x94] sm:%s1128] %v1211
        %v1213 = vld [vmem:[%s1135 + $0x8c] sm:%s1128]
        %1214 = vst [vmem:[%s1136 + $0x98] sm:%s1128] %v1213
        %v1215 = vld [vmem:[%s1135 + $0x9c] sm:%s1128]
        %1216 = vst [vmem:[%s1136 + $0x9c] sm:%s1128] %v1215
        %v1217 = vld [vmem:[%s1135 + $0xa0] sm:%s1128]
        %1218 = vst [vmem:[%s1136 + $0xa0] sm:%s1128] %v1217
        %v1219 = vld [vmem:[%s1135 + $0xb0] sm:%s1128]
        %1220 = vst [vmem:[%s1136 + $0xa4] sm:%s1128] %v1219
        %v1221 = vld [vmem:[%s1135 + $0xa4] sm:%s1128]
        %1222 = vst [vmem:[%s1136 + $0xa8] sm:%s1128] %v1221
        %v1223 = vld [vmem:[%s1135 + $0xb4] sm:%s1128]
        %1224 = vst [vmem:[%s1136 + $0xac] sm:%s1128] %v1223
        %v1225 = vld [vmem:[%s1135 + $0xa8] sm:%s1128]
        %1226 = vst [vmem:[%s1136 + $0xb0] sm:%s1128] %v1225
        %v1227 = vld [vmem:[%s1135 + $0xb8] sm:%s1128]
        %1228 = vst [vmem:[%s1136 + $0xb4] sm:%s1128] %v1227
        %v1229 = vld [vmem:[%s1135 + $0xac] sm:%s1128]
        %1230 = vst [vmem:[%s1136 + $0xb8] sm:%s1128] %v1229
        %v1231 = vld [vmem:[%s1135 + $0xbc] sm:%s1128]
        %1232 = vst [vmem:[%s1136 + $0xbc] sm:%s1128] %v1231
        %v1233 = vld [vmem:[%s1135 + $0xc0] sm:%s1128]
        %1234 = vst [vmem:[%s1136 + $0xc0] sm:%s1128] %v1233
        %v1235 = vld [vmem:[%s1135 + $0xd0] sm:%s1128]
        %1236 = vst [vmem:[%s1136 + $0xc4] sm:%s1128] %v1235
        %v1237 = vld [vmem:[%s1135 + $0xc4] sm:%s1128]
        %1238 = vst [vmem:[%s1136 + $0xc8] sm:%s1128] %v1237
        %v1239 = vld [vmem:[%s1135 + $0xd4] sm:%s1128]
        %1240 = vst [vmem:[%s1136 + $0xcc] sm:%s1128] %v1239
        %v1241 = vld [vmem:[%s1135 + $0xc8] sm:%s1128]
        %1242 = vst [vmem:[%s1136 + $0xd0] sm:%s1128] %v1241
        %v1243 = vld [vmem:[%s1135 + $0xd8] sm:%s1128]
        %1244 = vst [vmem:[%s1136 + $0xd4] sm:%s1128] %v1243
        %v1245 = vld [vmem:[%s1135 + $0xcc] sm:%s1128]
        %1246 = vst [vmem:[%s1136 + $0xd8] sm:%s1128] %v1245
        %v1247 = vld [vmem:[%s1135 + $0xdc] sm:%s1128]
        %1248 = vst [vmem:[%s1136 + $0xdc] sm:%s1128] %v1247
        %v1249 = vld [vmem:[%s1135 + $0xe0] sm:%s1128]
        %1250 = vst [vmem:[%s1136 + $0xe0] sm:%s1128] %v1249
        %v1251 = vld [vmem:[%s1135 + $0xf0] sm:%s1128]
        %1252 = vst [vmem:[%s1136 + $0xe4] sm:%s1128] %v1251
        %v1253 = vld [vmem:[%s1135 + $0xe4] sm:%s1128]
        %1254 = vst [vmem:[%s1136 + $0xe8] sm:%s1128] %v1253
        %v1255 = vld [vmem:[%s1135 + $0xf4] sm:%s1128]
        %1256 = vst [vmem:[%s1136 + $0xec] sm:%s1128] %v1255
        %v1257 = vld [vmem:[%s1135 + $0xe8] sm:%s1128]
        %1258 = vst [vmem:[%s1136 + $0xf0] sm:%s1128] %v1257
        %v1259 = vld [vmem:[%s1135 + $0xf8] sm:%s1128]
        %1260 = vst [vmem:[%s1136 + $0xf4] sm:%s1128] %v1259
        %v1261 = vld [vmem:[%s1135 + $0xec] sm:%s1128]
        %1262 = vst [vmem:[%s1136 + $0xf8] sm:%s1128] %v1261
        %v1263 = vld [vmem:[%s1135 + $0xfc] sm:%s1128]
        %1264 = vst [vmem:[%s1136 + $0xfc] sm:%s1128] %v1263
        %v1265 = vld [vmem:[%s1135 + $0x100] sm:%s1128]
        %1266 = vst [vmem:[%s1136 + $0x100] sm:%s1128] %v1265
        %v1267 = vld [vmem:[%s1135 + $0x110] sm:%s1128]
        %1268 = vst [vmem:[%s1136 + $0x104] sm:%s1128] %v1267
        %v1269 = vld [vmem:[%s1135 + $0x104] sm:%s1128]
        %1270 = vst [vmem:[%s1136 + $0x108] sm:%s1128] %v1269
        %v1271 = vld [vmem:[%s1135 + $0x114] sm:%s1128]
        %1272 = vst [vmem:[%s1136 + $0x10c] sm:%s1128] %v1271
        %v1273 = vld [vmem:[%s1135 + $0x108] sm:%s1128]
        %1274 = vst [vmem:[%s1136 + $0x110] sm:%s1128] %v1273
        %v1275 = vld [vmem:[%s1135 + $0x118] sm:%s1128]
        %1276 = vst [vmem:[%s1136 + $0x114] sm:%s1128] %v1275
        %v1277 = vld [vmem:[%s1135 + $0x10c] sm:%s1128]
        %1278 = vst [vmem:[%s1136 + $0x118] sm:%s1128] %v1277
        %v1279 = vld [vmem:[%s1135 + $0x11c] sm:%s1128]
        %1280 = vst [vmem:[%s1136 + $0x11c] sm:%s1128] %v1279
        %v1281 = vld [vmem:[%s1135 + $0x120] sm:%s1128]
        %1282 = vst [vmem:[%s1136 + $0x120] sm:%s1128] %v1281
        %v1283 = vld [vmem:[%s1135 + $0x130] sm:%s1128]
        %1284 = vst [vmem:[%s1136 + $0x124] sm:%s1128] %v1283
        %v1285 = vld [vmem:[%s1135 + $0x124] sm:%s1128]
        %1286 = vst [vmem:[%s1136 + $0x128] sm:%s1128] %v1285
        %v1287 = vld [vmem:[%s1135 + $0x134] sm:%s1128]
        %1288 = vst [vmem:[%s1136 + $0x12c] sm:%s1128] %v1287
        %v1289 = vld [vmem:[%s1135 + $0x128] sm:%s1128]
        %1290 = vst [vmem:[%s1136 + $0x130] sm:%s1128] %v1289
        %v1291 = vld [vmem:[%s1135 + $0x138] sm:%s1128]
        %1292 = vst [vmem:[%s1136 + $0x134] sm:%s1128] %v1291
        %v1293 = vld [vmem:[%s1135 + $0x12c] sm:%s1128]
        %1294 = vst [vmem:[%s1136 + $0x138] sm:%s1128] %v1293
        %v1295 = vld [vmem:[%s1135 + $0x13c] sm:%s1128]
        %1296 = vst [vmem:[%s1136 + $0x13c] sm:%s1128] %v1295
        %v1297 = vld [vmem:[%s1135 + $0x140] sm:%s1128]
        %1298 = vst [vmem:[%s1136 + $0x140] sm:%s1128] %v1297
        %v1299 = vld [vmem:[%s1135 + $0x150] sm:%s1128]
        %1300 = vst [vmem:[%s1136 + $0x144] sm:%s1128] %v1299
        %v1301 = vld [vmem:[%s1135 + $0x144] sm:%s1128]
        %1302 = vst [vmem:[%s1136 + $0x148] sm:%s1128] %v1301
        %v1303 = vld [vmem:[%s1135 + $0x154] sm:%s1128]
        %1304 = vst [vmem:[%s1136 + $0x14c] sm:%s1128] %v1303
        %v1305 = vld [vmem:[%s1135 + $0x148] sm:%s1128]
        %1306 = vst [vmem:[%s1136 + $0x150] sm:%s1128] %v1305
        %v1307 = vld [vmem:[%s1135 + $0x158] sm:%s1128]
        %1308 = vst [vmem:[%s1136 + $0x154] sm:%s1128] %v1307
        %v1309 = vld [vmem:[%s1135 + $0x14c] sm:%s1128]
        %1310 = vst [vmem:[%s1136 + $0x158] sm:%s1128] %v1309
        %v1311 = vld [vmem:[%s1135 + $0x15c] sm:%s1128]
        %1312 = vst [vmem:[%s1136 + $0x15c] sm:%s1128] %v1311
        %v1313 = vld [vmem:[%s1135 + $0x160] sm:%s1128]
        %1314 = vst [vmem:[%s1136 + $0x160] sm:%s1128] %v1313
        %v1315 = vld [vmem:[%s1135 + $0x170] sm:%s1128]
        %1316 = vst [vmem:[%s1136 + $0x164] sm:%s1128] %v1315
        %v1317 = vld [vmem:[%s1135 + $0x164] sm:%s1128]
        %1318 = vst [vmem:[%s1136 + $0x168] sm:%s1128] %v1317
        %v1319 = vld [vmem:[%s1135 + $0x174] sm:%s1128]
        %1320 = vst [vmem:[%s1136 + $0x16c] sm:%s1128] %v1319
        %v1321 = vld [vmem:[%s1135 + $0x168] sm:%s1128]
        %1322 = vst [vmem:[%s1136 + $0x170] sm:%s1128] %v1321
        %v1323 = vld [vmem:[%s1135 + $0x178] sm:%s1128]
        %1324 = vst [vmem:[%s1136 + $0x174] sm:%s1128] %v1323
        %v1325 = vld [vmem:[%s1135 + $0x16c] sm:%s1128]
        %1326 = vst [vmem:[%s1136 + $0x178] sm:%s1128] %v1325
        %v1327 = vld [vmem:[%s1135 + $0x17c] sm:%s1128]
        %1328 = vst [vmem:[%s1136 + $0x17c] sm:%s1128] %v1327
        %v1329 = vld [vmem:[%s1135 + $0x180] sm:%s1128]
        %1330 = vst [vmem:[%s1136 + $0x180] sm:%s1128] %v1329
        %v1331 = vld [vmem:[%s1135 + $0x190] sm:%s1128]
        %1332 = vst [vmem:[%s1136 + $0x184] sm:%s1128] %v1331
        %v1333 = vld [vmem:[%s1135 + $0x184] sm:%s1128]
        %1334 = vst [vmem:[%s1136 + $0x188] sm:%s1128] %v1333
        %v1335 = vld [vmem:[%s1135 + $0x194] sm:%s1128]
        %1336 = vst [vmem:[%s1136 + $0x18c] sm:%s1128] %v1335
        %v1337 = vld [vmem:[%s1135 + $0x188] sm:%s1128]
        %1338 = vst [vmem:[%s1136 + $0x190] sm:%s1128] %v1337
        %v1339 = vld [vmem:[%s1135 + $0x198] sm:%s1128]
        %1340 = vst [vmem:[%s1136 + $0x194] sm:%s1128] %v1339
        %v1341 = vld [vmem:[%s1135 + $0x18c] sm:%s1128]
        %1342 = vst [vmem:[%s1136 + $0x198] sm:%s1128] %v1341
        %v1343 = vld [vmem:[%s1135 + $0x19c] sm:%s1128]
        %1344 = vst [vmem:[%s1136 + $0x19c] sm:%s1128] %v1343
        %v1345 = vld [vmem:[%s1135 + $0x1a0] sm:%s1128]
        %1346 = vst [vmem:[%s1136 + $0x1a0] sm:%s1128] %v1345
        %v1347 = vld [vmem:[%s1135 + $0x1b0] sm:%s1128]
        %1348 = vst [vmem:[%s1136 + $0x1a4] sm:%s1128] %v1347
        %v1349 = vld [vmem:[%s1135 + $0x1a4] sm:%s1128]
        %1350 = vst [vmem:[%s1136 + $0x1a8] sm:%s1128] %v1349
        %v1351 = vld [vmem:[%s1135 + $0x1b4] sm:%s1128]
        %1352 = vst [vmem:[%s1136 + $0x1ac] sm:%s1128] %v1351
        %v1353 = vld [vmem:[%s1135 + $0x1a8] sm:%s1128]
        %1354 = vst [vmem:[%s1136 + $0x1b0] sm:%s1128] %v1353
        %v1355 = vld [vmem:[%s1135 + $0x1b8] sm:%s1128]
        %1356 = vst [vmem:[%s1136 + $0x1b4] sm:%s1128] %v1355
        %v1357 = vld [vmem:[%s1135 + $0x1ac] sm:%s1128]
        %1358 = vst [vmem:[%s1136 + $0x1b8] sm:%s1128] %v1357
        %v1359 = vld [vmem:[%s1135 + $0x1bc] sm:%s1128]
        %1360 = vst [vmem:[%s1136 + $0x1bc] sm:%s1128] %v1359
        %v1361 = vld [vmem:[%s1135 + $0x1c0] sm:%s1128]
        %1362 = vst [vmem:[%s1136 + $0x1c0] sm:%s1128] %v1361
        %v1363 = vld [vmem:[%s1135 + $0x1d0] sm:%s1128]
        %1364 = vst [vmem:[%s1136 + $0x1c4] sm:%s1128] %v1363
        %v1365 = vld [vmem:[%s1135 + $0x1c4] sm:%s1128]
        %1366 = vst [vmem:[%s1136 + $0x1c8] sm:%s1128] %v1365
        %v1367 = vld [vmem:[%s1135 + $0x1d4] sm:%s1128]
        %1368 = vst [vmem:[%s1136 + $0x1cc] sm:%s1128] %v1367
        %v1369 = vld [vmem:[%s1135 + $0x1c8] sm:%s1128]
        %1370 = vst [vmem:[%s1136 + $0x1d0] sm:%s1128] %v1369
        %v1371 = vld [vmem:[%s1135 + $0x1d8] sm:%s1128]
        %1372 = vst [vmem:[%s1136 + $0x1d4] sm:%s1128] %v1371
        %v1373 = vld [vmem:[%s1135 + $0x1cc] sm:%s1128]
        %1374 = vst [vmem:[%s1136 + $0x1d8] sm:%s1128] %v1373
        %v1375 = vld [vmem:[%s1135 + $0x1dc] sm:%s1128]
        %1376 = vst [vmem:[%s1136 + $0x1dc] sm:%s1128] %v1375
        %v1377 = vld [vmem:[%s1135 + $0x1e0] sm:%s1128]
        %1378 = vst [vmem:[%s1136 + $0x1e0] sm:%s1128] %v1377
        %v1379 = vld [vmem:[%s1135 + $0x1f0] sm:%s1128]
        %1380 = vst [vmem:[%s1136 + $0x1e4] sm:%s1128] %v1379
        %v1381 = vld [vmem:[%s1135 + $0x1e4] sm:%s1128]
        %1382 = vst [vmem:[%s1136 + $0x1e8] sm:%s1128] %v1381
        %v1383 = vld [vmem:[%s1135 + $0x1f4] sm:%s1128]
        %1384 = vst [vmem:[%s1136 + $0x1ec] sm:%s1128] %v1383
        %v1385 = vld [vmem:[%s1135 + $0x1e8] sm:%s1128]
        %1386 = vst [vmem:[%s1136 + $0x1f0] sm:%s1128] %v1385
        %v1387 = vld [vmem:[%s1135 + $0x1f8] sm:%s1128]
        %1388 = vst [vmem:[%s1136 + $0x1f4] sm:%s1128] %v1387
        %v1389 = vld [vmem:[%s1135 + $0x1ec] sm:%s1128]
        %1390 = vst [vmem:[%s1136 + $0x1f8] sm:%s1128] %v1389
        %v1391 = vld [vmem:[%s1135 + $0x1fc] sm:%s1128]
        %1392 = vst [vmem:[%s1136 + $0x1fc] sm:%s1128] %v1391
        %v1393 = vld [vmem:[%s1135 + $0x200] sm:%s1128]
        %1394 = vst [vmem:[%s1136 + $0x200] sm:%s1128] %v1393
        %v1395 = vld [vmem:[%s1135 + $0x210] sm:%s1128]
        %1396 = vst [vmem:[%s1136 + $0x204] sm:%s1128] %v1395
        %v1397 = vld [vmem:[%s1135 + $0x204] sm:%s1128]
        %1398 = vst [vmem:[%s1136 + $0x208] sm:%s1128] %v1397
        %v1399 = vld [vmem:[%s1135 + $0x214] sm:%s1128]
        %1400 = vst [vmem:[%s1136 + $0x20c] sm:%s1128] %v1399
        %v1401 = vld [vmem:[%s1135 + $0x208] sm:%s1128]
        %1402 = vst [vmem:[%s1136 + $0x210] sm:%s1128] %v1401
        %v1403 = vld [vmem:[%s1135 + $0x218] sm:%s1128]
        %1404 = vst [vmem:[%s1136 + $0x214] sm:%s1128] %v1403
        %v1405 = vld [vmem:[%s1135 + $0x20c] sm:%s1128]
        %1406 = vst [vmem:[%s1136 + $0x218] sm:%s1128] %v1405
        %v1407 = vld [vmem:[%s1135 + $0x21c] sm:%s1128]
        %1408 = vst [vmem:[%s1136 + $0x21c] sm:%s1128] %v1407
        %v1409 = vld [vmem:[%s1135 + $0x220] sm:%s1128]
        %1410 = vst [vmem:[%s1136 + $0x220] sm:%s1128] %v1409
        %v1411 = vld [vmem:[%s1135 + $0x230] sm:%s1128]
        %1412 = vst [vmem:[%s1136 + $0x224] sm:%s1128] %v1411
        %v1413 = vld [vmem:[%s1135 + $0x224] sm:%s1128]
        %1414 = vst [vmem:[%s1136 + $0x228] sm:%s1128] %v1413
        %v1415 = vld [vmem:[%s1135 + $0x234] sm:%s1128]
        %1416 = vst [vmem:[%s1136 + $0x22c] sm:%s1128] %v1415
        %v1417 = vld [vmem:[%s1135 + $0x228] sm:%s1128]
        %1418 = vst [vmem:[%s1136 + $0x230] sm:%s1128] %v1417
        %v1419 = vld [vmem:[%s1135 + $0x238] sm:%s1128]
        %1420 = vst [vmem:[%s1136 + $0x234] sm:%s1128] %v1419
        %v1421 = vld [vmem:[%s1135 + $0x22c] sm:%s1128]
        %1422 = vst [vmem:[%s1136 + $0x238] sm:%s1128] %v1421
        %v1423 = vld [vmem:[%s1135 + $0x23c] sm:%s1128]
        %1424 = vst [vmem:[%s1136 + $0x23c] sm:%s1128] %v1423
        %v1425 = vld [vmem:[%s1135 + $0x240] sm:%s1128]
        %1426 = vst [vmem:[%s1136 + $0x240] sm:%s1128] %v1425
        %v1427 = vld [vmem:[%s1135 + $0x250] sm:%s1128]
        %1428 = vst [vmem:[%s1136 + $0x244] sm:%s1128] %v1427
        %v1429 = vld [vmem:[%s1135 + $0x244] sm:%s1128]
        %1430 = vst [vmem:[%s1136 + $0x248] sm:%s1128] %v1429
        %v1431 = vld [vmem:[%s1135 + $0x254] sm:%s1128]
        %1432 = vst [vmem:[%s1136 + $0x24c] sm:%s1128] %v1431
        %v1433 = vld [vmem:[%s1135 + $0x248] sm:%s1128]
        %1434 = vst [vmem:[%s1136 + $0x250] sm:%s1128] %v1433
        %v1435 = vld [vmem:[%s1135 + $0x258] sm:%s1128]
        %1436 = vst [vmem:[%s1136 + $0x254] sm:%s1128] %v1435
        %v1437 = vld [vmem:[%s1135 + $0x24c] sm:%s1128]
        %1438 = vst [vmem:[%s1136 + $0x258] sm:%s1128] %v1437
        %v1439 = vld [vmem:[%s1135 + $0x25c] sm:%s1128]
        %1440 = vst [vmem:[%s1136 + $0x25c] sm:%s1128] %v1439
        %v1441 = vld [vmem:[%s1135 + $0x260] sm:%s1128]
        %1442 = vst [vmem:[%s1136 + $0x260] sm:%s1128] %v1441
        %v1443 = vld [vmem:[%s1135 + $0x270] sm:%s1128]
        %1444 = vst [vmem:[%s1136 + $0x264] sm:%s1128] %v1443
        %v1445 = vld [vmem:[%s1135 + $0x264] sm:%s1128]
        %1446 = vst [vmem:[%s1136 + $0x268] sm:%s1128] %v1445
        %v1447 = vld [vmem:[%s1135 + $0x274] sm:%s1128]
        %1448 = vst [vmem:[%s1136 + $0x26c] sm:%s1128] %v1447
        %v1449 = vld [vmem:[%s1135 + $0x268] sm:%s1128]
        %1450 = vst [vmem:[%s1136 + $0x270] sm:%s1128] %v1449
        %v1451 = vld [vmem:[%s1135 + $0x278] sm:%s1128]
        %1452 = vst [vmem:[%s1136 + $0x274] sm:%s1128] %v1451
        %v1453 = vld [vmem:[%s1135 + $0x26c] sm:%s1128]
        %1454 = vst [vmem:[%s1136 + $0x278] sm:%s1128] %v1453
        %v1455 = vld [vmem:[%s1135 + $0x27c] sm:%s1128]
        %1456 = vst [vmem:[%s1136 + $0x27c] sm:%s1128] %v1455
        %v1457 = vld [vmem:[%s1135 + $0x280] sm:%s1128]
        %1458 = vst [vmem:[%s1136 + $0x280] sm:%s1128] %v1457
        %v1459 = vld [vmem:[%s1135 + $0x290] sm:%s1128]
        %1460 = vst [vmem:[%s1136 + $0x284] sm:%s1128] %v1459
        %v1461 = vld [vmem:[%s1135 + $0x284] sm:%s1128]
        %1462 = vst [vmem:[%s1136 + $0x288] sm:%s1128] %v1461
        %v1463 = vld [vmem:[%s1135 + $0x294] sm:%s1128]
        %1464 = vst [vmem:[%s1136 + $0x28c] sm:%s1128] %v1463
        %v1465 = vld [vmem:[%s1135 + $0x288] sm:%s1128]
        %1466 = vst [vmem:[%s1136 + $0x290] sm:%s1128] %v1465
        %v1467 = vld [vmem:[%s1135 + $0x298] sm:%s1128]
        %1468 = vst [vmem:[%s1136 + $0x294] sm:%s1128] %v1467
        %v1469 = vld [vmem:[%s1135 + $0x28c] sm:%s1128]
        %1470 = vst [vmem:[%s1136 + $0x298] sm:%s1128] %v1469
        %v1471 = vld [vmem:[%s1135 + $0x29c] sm:%s1128]
        %1472 = vst [vmem:[%s1136 + $0x29c] sm:%s1128] %v1471
        %v1473 = vld [vmem:[%s1135 + $0x2a0] sm:%s1128]
        %1474 = vst [vmem:[%s1136 + $0x2a0] sm:%s1128] %v1473
        %v1475 = vld [vmem:[%s1135 + $0x2b0] sm:%s1128]
        %1476 = vst [vmem:[%s1136 + $0x2a4] sm:%s1128] %v1475
        %v1477 = vld [vmem:[%s1135 + $0x2a4] sm:%s1128]
        %1478 = vst [vmem:[%s1136 + $0x2a8] sm:%s1128] %v1477
        %v1479 = vld [vmem:[%s1135 + $0x2b4] sm:%s1128]
        %1480 = vst [vmem:[%s1136 + $0x2ac] sm:%s1128] %v1479
        %v1481 = vld [vmem:[%s1135 + $0x2a8] sm:%s1128]
        %1482 = vst [vmem:[%s1136 + $0x2b0] sm:%s1128] %v1481
        %v1483 = vld [vmem:[%s1135 + $0x2b8] sm:%s1128]
        %1484 = vst [vmem:[%s1136 + $0x2b4] sm:%s1128] %v1483
        %v1485 = vld [vmem:[%s1135 + $0x2ac] sm:%s1128]
        %1486 = vst [vmem:[%s1136 + $0x2b8] sm:%s1128] %v1485
        %v1487 = vld [vmem:[%s1135 + $0x2bc] sm:%s1128]
        %1488 = vst [vmem:[%s1136 + $0x2bc] sm:%s1128] %v1487
        %v1489 = vld [vmem:[%s1135 + $0x2c0] sm:%s1128]
        %1490 = vst [vmem:[%s1136 + $0x2c0] sm:%s1128] %v1489
        %v1491 = vld [vmem:[%s1135 + $0x2d0] sm:%s1128]
        %1492 = vst [vmem:[%s1136 + $0x2c4] sm:%s1128] %v1491
        %v1493 = vld [vmem:[%s1135 + $0x2c4] sm:%s1128]
        %1494 = vst [vmem:[%s1136 + $0x2c8] sm:%s1128] %v1493
        %v1495 = vld [vmem:[%s1135 + $0x2d4] sm:%s1128]
        %1496 = vst [vmem:[%s1136 + $0x2cc] sm:%s1128] %v1495
        %v1497 = vld [vmem:[%s1135 + $0x2c8] sm:%s1128]
        %1498 = vst [vmem:[%s1136 + $0x2d0] sm:%s1128] %v1497
        %v1499 = vld [vmem:[%s1135 + $0x2d8] sm:%s1128]
        %1500 = vst [vmem:[%s1136 + $0x2d4] sm:%s1128] %v1499
        %v1501 = vld [vmem:[%s1135 + $0x2cc] sm:%s1128]
        %1502 = vst [vmem:[%s1136 + $0x2d8] sm:%s1128] %v1501
        %v1503 = vld [vmem:[%s1135 + $0x2dc] sm:%s1128]
        %1504 = vst [vmem:[%s1136 + $0x2dc] sm:%s1128] %v1503
        %v1505 = vld [vmem:[%s1135 + $0x2e0] sm:%s1128]
        %1506 = vst [vmem:[%s1136 + $0x2e0] sm:%s1128] %v1505
        %v1507 = vld [vmem:[%s1135 + $0x2f0] sm:%s1128]
        %1508 = vst [vmem:[%s1136 + $0x2e4] sm:%s1128] %v1507
        %v1509 = vld [vmem:[%s1135 + $0x2e4] sm:%s1128]
        %1510 = vst [vmem:[%s1136 + $0x2e8] sm:%s1128] %v1509
        %v1511 = vld [vmem:[%s1135 + $0x2f4] sm:%s1128]
        %1512 = vst [vmem:[%s1136 + $0x2ec] sm:%s1128] %v1511
        %v1513 = vld [vmem:[%s1135 + $0x2e8] sm:%s1128]
        %1514 = vst [vmem:[%s1136 + $0x2f0] sm:%s1128] %v1513
        %v1515 = vld [vmem:[%s1135 + $0x2f8] sm:%s1128]
        %1516 = vst [vmem:[%s1136 + $0x2f4] sm:%s1128] %v1515
        %v1517 = vld [vmem:[%s1135 + $0x2ec] sm:%s1128]
        %1518 = vst [vmem:[%s1136 + $0x2f8] sm:%s1128] %v1517
        %v1519 = vld [vmem:[%s1135 + $0x2fc] sm:%s1128]
        %1520 = vst [vmem:[%s1136 + $0x2fc] sm:%s1128] %v1519
        %v1521 = vld [vmem:[%s1135 + $0x300] sm:%s1128]
        %1522 = vst [vmem:[%s1136 + $0x300] sm:%s1128] %v1521
        %v1523 = vld [vmem:[%s1135 + $0x310] sm:%s1128]
        %1524 = vst [vmem:[%s1136 + $0x304] sm:%s1128] %v1523
        %v1525 = vld [vmem:[%s1135 + $0x304] sm:%s1128]
        %1526 = vst [vmem:[%s1136 + $0x308] sm:%s1128] %v1525
        %v1527 = vld [vmem:[%s1135 + $0x314] sm:%s1128]
        %1528 = vst [vmem:[%s1136 + $0x30c] sm:%s1128] %v1527
        %v1529 = vld [vmem:[%s1135 + $0x308] sm:%s1128]
        %1530 = vst [vmem:[%s1136 + $0x310] sm:%s1128] %v1529
        %v1531 = vld [vmem:[%s1135 + $0x318] sm:%s1128]
        %1532 = vst [vmem:[%s1136 + $0x314] sm:%s1128] %v1531
        %v1533 = vld [vmem:[%s1135 + $0x30c] sm:%s1128]
        %1534 = vst [vmem:[%s1136 + $0x318] sm:%s1128] %v1533
        %v1535 = vld [vmem:[%s1135 + $0x31c] sm:%s1128]
        %1536 = vst [vmem:[%s1136 + $0x31c] sm:%s1128] %v1535
        %v1537 = vld [vmem:[%s1135 + $0x320] sm:%s1128]
        %1538 = vst [vmem:[%s1136 + $0x320] sm:%s1128] %v1537
        %v1539 = vld [vmem:[%s1135 + $0x330] sm:%s1128]
        %1540 = vst [vmem:[%s1136 + $0x324] sm:%s1128] %v1539
        %v1541 = vld [vmem:[%s1135 + $0x324] sm:%s1128]
        %1542 = vst [vmem:[%s1136 + $0x328] sm:%s1128] %v1541
        %v1543 = vld [vmem:[%s1135 + $0x334] sm:%s1128]
        %1544 = vst [vmem:[%s1136 + $0x32c] sm:%s1128] %v1543
        %v1545 = vld [vmem:[%s1135 + $0x328] sm:%s1128]
        %1546 = vst [vmem:[%s1136 + $0x330] sm:%s1128] %v1545
        %v1547 = vld [vmem:[%s1135 + $0x338] sm:%s1128]
        %1548 = vst [vmem:[%s1136 + $0x334] sm:%s1128] %v1547
        %v1549 = vld [vmem:[%s1135 + $0x32c] sm:%s1128]
        %1550 = vst [vmem:[%s1136 + $0x338] sm:%s1128] %v1549
        %v1551 = vld [vmem:[%s1135 + $0x33c] sm:%s1128]
        %1552 = vst [vmem:[%s1136 + $0x33c] sm:%s1128] %v1551
        %v1553 = vld [vmem:[%s1135 + $0x340] sm:%s1128]
        %1554 = vst [vmem:[%s1136 + $0x340] sm:%s1128] %v1553
        %v1555 = vld [vmem:[%s1135 + $0x350] sm:%s1128]
        %1556 = vst [vmem:[%s1136 + $0x344] sm:%s1128] %v1555
        %v1557 = vld [vmem:[%s1135 + $0x344] sm:%s1128]
        %1558 = vst [vmem:[%s1136 + $0x348] sm:%s1128] %v1557
        %v1559 = vld [vmem:[%s1135 + $0x354] sm:%s1128]
        %1560 = vst [vmem:[%s1136 + $0x34c] sm:%s1128] %v1559
        %v1561 = vld [vmem:[%s1135 + $0x348] sm:%s1128]
        %1562 = vst [vmem:[%s1136 + $0x350] sm:%s1128] %v1561
        %v1563 = vld [vmem:[%s1135 + $0x358] sm:%s1128]
        %1564 = vst [vmem:[%s1136 + $0x354] sm:%s1128] %v1563
        %v1565 = vld [vmem:[%s1135 + $0x34c] sm:%s1128]
        %1566 = vst [vmem:[%s1136 + $0x358] sm:%s1128] %v1565
        %v1567 = vld [vmem:[%s1135 + $0x35c] sm:%s1128]
        %1568 = vst [vmem:[%s1136 + $0x35c] sm:%s1128] %v1567
        %v1569 = vld [vmem:[%s1135 + $0x360] sm:%s1128]
        %1570 = vst [vmem:[%s1136 + $0x360] sm:%s1128] %v1569
        %v1571 = vld [vmem:[%s1135 + $0x370] sm:%s1128]
        %1572 = vst [vmem:[%s1136 + $0x364] sm:%s1128] %v1571
        %v1573 = vld [vmem:[%s1135 + $0x364] sm:%s1128]
        %1574 = vst [vmem:[%s1136 + $0x368] sm:%s1128] %v1573
        %v1575 = vld [vmem:[%s1135 + $0x374] sm:%s1128]
        %1576 = vst [vmem:[%s1136 + $0x36c] sm:%s1128] %v1575
        %v1577 = vld [vmem:[%s1135 + $0x368] sm:%s1128]
        %1578 = vst [vmem:[%s1136 + $0x370] sm:%s1128] %v1577
        %v1579 = vld [vmem:[%s1135 + $0x378] sm:%s1128]
        %1580 = vst [vmem:[%s1136 + $0x374] sm:%s1128] %v1579
        %v1581 = vld [vmem:[%s1135 + $0x36c] sm:%s1128]
        %1582 = vst [vmem:[%s1136 + $0x378] sm:%s1128] %v1581
        %v1583 = vld [vmem:[%s1135 + $0x37c] sm:%s1128]
        %1584 = vst [vmem:[%s1136 + $0x37c] sm:%s1128] %v1583
        %v1585 = vld [vmem:[%s1135 + $0x380] sm:%s1128]
        %1586 = vst [vmem:[%s1136 + $0x380] sm:%s1128] %v1585
        %v1587 = vld [vmem:[%s1135 + $0x390] sm:%s1128]
        %1588 = vst [vmem:[%s1136 + $0x384] sm:%s1128] %v1587
        %v1589 = vld [vmem:[%s1135 + $0x384] sm:%s1128]
        %1590 = vst [vmem:[%s1136 + $0x388] sm:%s1128] %v1589
        %v1591 = vld [vmem:[%s1135 + $0x394] sm:%s1128]
        %1592 = vst [vmem:[%s1136 + $0x38c] sm:%s1128] %v1591
        %v1593 = vld [vmem:[%s1135 + $0x388] sm:%s1128]
        %1594 = vst [vmem:[%s1136 + $0x390] sm:%s1128] %v1593
        %v1595 = vld [vmem:[%s1135 + $0x398] sm:%s1128]
        %1596 = vst [vmem:[%s1136 + $0x394] sm:%s1128] %v1595
        %v1597 = vld [vmem:[%s1135 + $0x38c] sm:%s1128]
        %1598 = vst [vmem:[%s1136 + $0x398] sm:%s1128] %v1597
        %v1599 = vld [vmem:[%s1135 + $0x39c] sm:%s1128]
        %1600 = vst [vmem:[%s1136 + $0x39c] sm:%s1128] %v1599
        %v1601 = vld [vmem:[%s1135 + $0x3a0] sm:%s1128]
        %1602 = vst [vmem:[%s1136 + $0x3a0] sm:%s1128] %v1601
        %v1603 = vld [vmem:[%s1135 + $0x3b0] sm:%s1128]
        %1604 = vst [vmem:[%s1136 + $0x3a4] sm:%s1128] %v1603
        %v1605 = vld [vmem:[%s1135 + $0x3a4] sm:%s1128]
        %1606 = vst [vmem:[%s1136 + $0x3a8] sm:%s1128] %v1605
        %v1607 = vld [vmem:[%s1135 + $0x3b4] sm:%s1128]
        %1608 = vst [vmem:[%s1136 + $0x3ac] sm:%s1128] %v1607
        %v1609 = vld [vmem:[%s1135 + $0x3a8] sm:%s1128]
        %1610 = vst [vmem:[%s1136 + $0x3b0] sm:%s1128] %v1609
        %v1611 = vld [vmem:[%s1135 + $0x3b8] sm:%s1128]
        %1612 = vst [vmem:[%s1136 + $0x3b4] sm:%s1128] %v1611
        %v1613 = vld [vmem:[%s1135 + $0x3ac] sm:%s1128]
        %1614 = vst [vmem:[%s1136 + $0x3b8] sm:%s1128] %v1613
        %v1615 = vld [vmem:[%s1135 + $0x3bc] sm:%s1128]
        %1616 = vst [vmem:[%s1136 + $0x3bc] sm:%s1128] %v1615
        %v1617 = vld [vmem:[%s1135 + $0x3c0] sm:%s1128]
        %1618 = vst [vmem:[%s1136 + $0x3c0] sm:%s1128] %v1617
        %v1619 = vld [vmem:[%s1135 + $0x3d0] sm:%s1128]
        %1620 = vst [vmem:[%s1136 + $0x3c4] sm:%s1128] %v1619
        %v1621 = vld [vmem:[%s1135 + $0x3c4] sm:%s1128]
        %1622 = vst [vmem:[%s1136 + $0x3c8] sm:%s1128] %v1621
        %v1623 = vld [vmem:[%s1135 + $0x3d4] sm:%s1128]
        %1624 = vst [vmem:[%s1136 + $0x3cc] sm:%s1128] %v1623
        %v1625 = vld [vmem:[%s1135 + $0x3c8] sm:%s1128]
        %1626 = vst [vmem:[%s1136 + $0x3d0] sm:%s1128] %v1625
        %v1627 = vld [vmem:[%s1135 + $0x3d8] sm:%s1128]
        %1628 = vst [vmem:[%s1136 + $0x3d4] sm:%s1128] %v1627
        %v1629 = vld [vmem:[%s1135 + $0x3cc] sm:%s1128]
        %1630 = vst [vmem:[%s1136 + $0x3d8] sm:%s1128] %v1629
        %v1631 = vld [vmem:[%s1135 + $0x3dc] sm:%s1128]
        %1632 = vst [vmem:[%s1136 + $0x3dc] sm:%s1128] %v1631
        %v1633 = vld [vmem:[%s1135 + $0x3e0] sm:%s1128]
        %1634 = vst [vmem:[%s1136 + $0x3e0] sm:%s1128] %v1633
        %v1635 = vld [vmem:[%s1135 + $0x3f0] sm:%s1128]
        %1636 = vst [vmem:[%s1136 + $0x3e4] sm:%s1128] %v1635
        %v1637 = vld [vmem:[%s1135 + $0x3e4] sm:%s1128]
        %1638 = vst [vmem:[%s1136 + $0x3e8] sm:%s1128] %v1637
        %v1639 = vld [vmem:[%s1135 + $0x3f4] sm:%s1128]
        %1640 = vst [vmem:[%s1136 + $0x3ec] sm:%s1128] %v1639
        %v1641 = vld [vmem:[%s1135 + $0x3e8] sm:%s1128]
        %1642 = vst [vmem:[%s1136 + $0x3f0] sm:%s1128] %v1641
        %v1643 = vld [vmem:[%s1135 + $0x3f8] sm:%s1128]
        %1644 = vst [vmem:[%s1136 + $0x3f4] sm:%s1128] %v1643
        %v1645 = vld [vmem:[%s1135 + $0x3ec] sm:%s1128]
        %1646 = vst [vmem:[%s1136 + $0x3f8] sm:%s1128] %v1645
        %v1647 = vld [vmem:[%s1135 + $0x3fc] sm:%s1128]
        %1648 = vst [vmem:[%s1136 + $0x3fc] sm:%s1128] %v1647
        %v1649 = vld [vmem:[%s1135 + $0x400] sm:%s1128]
        %1650 = vst [vmem:[%s1136 + $0x400] sm:%s1128] %v1649
        %v1651 = vld [vmem:[%s1135 + $0x410] sm:%s1128]
        %1652 = vst [vmem:[%s1136 + $0x404] sm:%s1128] %v1651
        %v1653 = vld [vmem:[%s1135 + $0x404] sm:%s1128]
        %1654 = vst [vmem:[%s1136 + $0x408] sm:%s1128] %v1653
        %v1655 = vld [vmem:[%s1135 + $0x414] sm:%s1128]
        %1656 = vst [vmem:[%s1136 + $0x40c] sm:%s1128] %v1655
        %v1657 = vld [vmem:[%s1135 + $0x408] sm:%s1128]
        %1658 = vst [vmem:[%s1136 + $0x410] sm:%s1128] %v1657
        %v1659 = vld [vmem:[%s1135 + $0x418] sm:%s1128]
        %1660 = vst [vmem:[%s1136 + $0x414] sm:%s1128] %v1659
        %v1661 = vld [vmem:[%s1135 + $0x40c] sm:%s1128]
        %1662 = vst [vmem:[%s1136 + $0x418] sm:%s1128] %v1661
        %v1663 = vld [vmem:[%s1135 + $0x41c] sm:%s1128]
        %1664 = vst [vmem:[%s1136 + $0x41c] sm:%s1128] %v1663
        %v1665 = vld [vmem:[%s1135 + $0x420] sm:%s1128]
        %1666 = vst [vmem:[%s1136 + $0x420] sm:%s1128] %v1665
        %v1667 = vld [vmem:[%s1135 + $0x430] sm:%s1128]
        %1668 = vst [vmem:[%s1136 + $0x424] sm:%s1128] %v1667
        %v1669 = vld [vmem:[%s1135 + $0x424] sm:%s1128]
        %1670 = vst [vmem:[%s1136 + $0x428] sm:%s1128] %v1669
        %v1671 = vld [vmem:[%s1135 + $0x434] sm:%s1128]
        %1672 = vst [vmem:[%s1136 + $0x42c] sm:%s1128] %v1671
        %v1673 = vld [vmem:[%s1135 + $0x428] sm:%s1128]
        %1674 = vst [vmem:[%s1136 + $0x430] sm:%s1128] %v1673
        %v1675 = vld [vmem:[%s1135 + $0x438] sm:%s1128]
        %1676 = vst [vmem:[%s1136 + $0x434] sm:%s1128] %v1675
        %v1677 = vld [vmem:[%s1135 + $0x42c] sm:%s1128]
        %1678 = vst [vmem:[%s1136 + $0x438] sm:%s1128] %v1677
        %v1679 = vld [vmem:[%s1135 + $0x43c] sm:%s1128]
        %1680 = vst [vmem:[%s1136 + $0x43c] sm:%s1128] %v1679
        %v1681 = vld [vmem:[%s1135 + $0x440] sm:%s1128]
        %1682 = vst [vmem:[%s1136 + $0x440] sm:%s1128] %v1681
        %v1683 = vld [vmem:[%s1135 + $0x450] sm:%s1128]
        %1684 = vst [vmem:[%s1136 + $0x444] sm:%s1128] %v1683
        %v1685 = vld [vmem:[%s1135 + $0x444] sm:%s1128]
        %1686 = vst [vmem:[%s1136 + $0x448] sm:%s1128] %v1685
        %v1687 = vld [vmem:[%s1135 + $0x454] sm:%s1128]
        %1688 = vst [vmem:[%s1136 + $0x44c] sm:%s1128] %v1687
        %v1689 = vld [vmem:[%s1135 + $0x448] sm:%s1128]
        %1690 = vst [vmem:[%s1136 + $0x450] sm:%s1128] %v1689
        %v1691 = vld [vmem:[%s1135 + $0x458] sm:%s1128]
        %1692 = vst [vmem:[%s1136 + $0x454] sm:%s1128] %v1691
        %v1693 = vld [vmem:[%s1135 + $0x44c] sm:%s1128]
        %1694 = vst [vmem:[%s1136 + $0x458] sm:%s1128] %v1693
        %v1695 = vld [vmem:[%s1135 + $0x45c] sm:%s1128]
        %1696 = vst [vmem:[%s1136 + $0x45c] sm:%s1128] %v1695
        %v1697 = vld [vmem:[%s1135 + $0x460] sm:%s1128]
        %1698 = vst [vmem:[%s1136 + $0x460] sm:%s1128] %v1697
        %v1699 = vld [vmem:[%s1135 + $0x470] sm:%s1128]
        %1700 = vst [vmem:[%s1136 + $0x464] sm:%s1128] %v1699
        %v1701 = vld [vmem:[%s1135 + $0x464] sm:%s1128]
        %1702 = vst [vmem:[%s1136 + $0x468] sm:%s1128] %v1701
        %v1703 = vld [vmem:[%s1135 + $0x474] sm:%s1128]
        %1704 = vst [vmem:[%s1136 + $0x46c] sm:%s1128] %v1703
        %v1705 = vld [vmem:[%s1135 + $0x468] sm:%s1128]
        %1706 = vst [vmem:[%s1136 + $0x470] sm:%s1128] %v1705
        %v1707 = vld [vmem:[%s1135 + $0x478] sm:%s1128]
        %1708 = vst [vmem:[%s1136 + $0x474] sm:%s1128] %v1707
        %v1709 = vld [vmem:[%s1135 + $0x46c] sm:%s1128]
        %1710 = vst [vmem:[%s1136 + $0x478] sm:%s1128] %v1709
        %v1711 = vld [vmem:[%s1135 + $0x47c] sm:%s1128]
        %1712 = vst [vmem:[%s1136 + $0x47c] sm:%s1128] %v1711
        %v1713 = vld [vmem:[%s1135 + $0x480] sm:%s1128]
        %1714 = vst [vmem:[%s1136 + $0x480] sm:%s1128] %v1713
        %v1715 = vld [vmem:[%s1135 + $0x490] sm:%s1128]
        %1716 = vst [vmem:[%s1136 + $0x484] sm:%s1128] %v1715
        %v1717 = vld [vmem:[%s1135 + $0x484] sm:%s1128]
        %1718 = vst [vmem:[%s1136 + $0x488] sm:%s1128] %v1717
        %v1719 = vld [vmem:[%s1135 + $0x494] sm:%s1128]
        %1720 = vst [vmem:[%s1136 + $0x48c] sm:%s1128] %v1719
        %v1721 = vld [vmem:[%s1135 + $0x488] sm:%s1128]
        %1722 = vst [vmem:[%s1136 + $0x490] sm:%s1128] %v1721
        %v1723 = vld [vmem:[%s1135 + $0x498] sm:%s1128]
        %1724 = vst [vmem:[%s1136 + $0x494] sm:%s1128] %v1723
        %v1725 = vld [vmem:[%s1135 + $0x48c] sm:%s1128]
        %1726 = vst [vmem:[%s1136 + $0x498] sm:%s1128] %v1725
        %v1727 = vld [vmem:[%s1135 + $0x49c] sm:%s1128]
        %1728 = vst [vmem:[%s1136 + $0x49c] sm:%s1128] %v1727
        %v1729 = vld [vmem:[%s1135 + $0x4a0] sm:%s1128]
        %1730 = vst [vmem:[%s1136 + $0x4a0] sm:%s1128] %v1729
        %v1731 = vld [vmem:[%s1135 + $0x4b0] sm:%s1128]
        %1732 = vst [vmem:[%s1136 + $0x4a4] sm:%s1128] %v1731
        %v1733 = vld [vmem:[%s1135 + $0x4a4] sm:%s1128]
        %1734 = vst [vmem:[%s1136 + $0x4a8] sm:%s1128] %v1733
        %v1735 = vld [vmem:[%s1135 + $0x4b4] sm:%s1128]
        %1736 = vst [vmem:[%s1136 + $0x4ac] sm:%s1128] %v1735
        %v1737 = vld [vmem:[%s1135 + $0x4a8] sm:%s1128]
        %1738 = vst [vmem:[%s1136 + $0x4b0] sm:%s1128] %v1737
        %v1739 = vld [vmem:[%s1135 + $0x4b8] sm:%s1128]
        %1740 = vst [vmem:[%s1136 + $0x4b4] sm:%s1128] %v1739
        %v1741 = vld [vmem:[%s1135 + $0x4ac] sm:%s1128]
        %1742 = vst [vmem:[%s1136 + $0x4b8] sm:%s1128] %v1741
        %v1743 = vld [vmem:[%s1135 + $0x4bc] sm:%s1128]
        %1744 = vst [vmem:[%s1136 + $0x4bc] sm:%s1128] %v1743
        %v1745 = vld [vmem:[%s1135 + $0x4c0] sm:%s1128]
        %1746 = vst [vmem:[%s1136 + $0x4c0] sm:%s1128] %v1745
        %v1747 = vld [vmem:[%s1135 + $0x4d0] sm:%s1128]
        %1748 = vst [vmem:[%s1136 + $0x4c4] sm:%s1128] %v1747
        %v1749 = vld [vmem:[%s1135 + $0x4c4] sm:%s1128]
        %1750 = vst [vmem:[%s1136 + $0x4c8] sm:%s1128] %v1749
        %v1751 = vld [vmem:[%s1135 + $0x4d4] sm:%s1128]
        %1752 = vst [vmem:[%s1136 + $0x4cc] sm:%s1128] %v1751
        %v1753 = vld [vmem:[%s1135 + $0x4c8] sm:%s1128]
        %1754 = vst [vmem:[%s1136 + $0x4d0] sm:%s1128] %v1753
        %v1755 = vld [vmem:[%s1135 + $0x4d8] sm:%s1128]
        %1756 = vst [vmem:[%s1136 + $0x4d4] sm:%s1128] %v1755
        %v1757 = vld [vmem:[%s1135 + $0x4cc] sm:%s1128]
        %1758 = vst [vmem:[%s1136 + $0x4d8] sm:%s1128] %v1757
        %v1759 = vld [vmem:[%s1135 + $0x4dc] sm:%s1128]
        %1760 = vst [vmem:[%s1136 + $0x4dc] sm:%s1128] %v1759
        %v1761 = vld [vmem:[%s1135 + $0x4e0] sm:%s1128]
        %1762 = vst [vmem:[%s1136 + $0x4e0] sm:%s1128] %v1761
        %v1763 = vld [vmem:[%s1135 + $0x4f0] sm:%s1128]
        %1764 = vst [vmem:[%s1136 + $0x4e4] sm:%s1128] %v1763
        %v1765 = vld [vmem:[%s1135 + $0x4e4] sm:%s1128]
        %1766 = vst [vmem:[%s1136 + $0x4e8] sm:%s1128] %v1765
        %v1767 = vld [vmem:[%s1135 + $0x4f4] sm:%s1128]
        %1768 = vst [vmem:[%s1136 + $0x4ec] sm:%s1128] %v1767
        %v1769 = vld [vmem:[%s1135 + $0x4e8] sm:%s1128]
        %1770 = vst [vmem:[%s1136 + $0x4f0] sm:%s1128] %v1769
        %v1771 = vld [vmem:[%s1135 + $0x4f8] sm:%s1128]
        %1772 = vst [vmem:[%s1136 + $0x4f4] sm:%s1128] %v1771
        %v1773 = vld [vmem:[%s1135 + $0x4ec] sm:%s1128]
        %1774 = vst [vmem:[%s1136 + $0x4f8] sm:%s1128] %v1773
        %v1775 = vld [vmem:[%s1135 + $0x4fc] sm:%s1128]
        %1776 = vst [vmem:[%s1136 + $0x4fc] sm:%s1128] %v1775
        %v1777 = vld [vmem:[%s1135 + $0x500] sm:%s1128]
        %1778 = vst [vmem:[%s1136 + $0x500] sm:%s1128] %v1777
        %v1779 = vld [vmem:[%s1135 + $0x510] sm:%s1128]
        %1780 = vst [vmem:[%s1136 + $0x504] sm:%s1128] %v1779
        %v1781 = vld [vmem:[%s1135 + $0x504] sm:%s1128]
        %1782 = vst [vmem:[%s1136 + $0x508] sm:%s1128] %v1781
        %v1783 = vld [vmem:[%s1135 + $0x514] sm:%s1128]
        %1784 = vst [vmem:[%s1136 + $0x50c] sm:%s1128] %v1783
        %v1785 = vld [vmem:[%s1135 + $0x508] sm:%s1128]
        %1786 = vst [vmem:[%s1136 + $0x510] sm:%s1128] %v1785
        %v1787 = vld [vmem:[%s1135 + $0x518] sm:%s1128]
        %1788 = vst [vmem:[%s1136 + $0x514] sm:%s1128] %v1787
        %v1789 = vld [vmem:[%s1135 + $0x50c] sm:%s1128]
        %1790 = vst [vmem:[%s1136 + $0x518] sm:%s1128] %v1789
        %v1791 = vld [vmem:[%s1135 + $0x51c] sm:%s1128]
        %1792 = vst [vmem:[%s1136 + $0x51c] sm:%s1128] %v1791
        %v1793 = vld [vmem:[%s1135 + $0x520] sm:%s1128]
        %1794 = vst [vmem:[%s1136 + $0x520] sm:%s1128] %v1793
        %v1795 = vld [vmem:[%s1135 + $0x530] sm:%s1128]
        %1796 = vst [vmem:[%s1136 + $0x524] sm:%s1128] %v1795
        %v1797 = vld [vmem:[%s1135 + $0x524] sm:%s1128]
        %1798 = vst [vmem:[%s1136 + $0x528] sm:%s1128] %v1797
        %v1799 = vld [vmem:[%s1135 + $0x534] sm:%s1128]
        %1800 = vst [vmem:[%s1136 + $0x52c] sm:%s1128] %v1799
        %v1801 = vld [vmem:[%s1135 + $0x528] sm:%s1128]
        %1802 = vst [vmem:[%s1136 + $0x530] sm:%s1128] %v1801
        %v1803 = vld [vmem:[%s1135 + $0x538] sm:%s1128]
        %1804 = vst [vmem:[%s1136 + $0x534] sm:%s1128] %v1803
        %v1805 = vld [vmem:[%s1135 + $0x52c] sm:%s1128]
        %1806 = vst [vmem:[%s1136 + $0x538] sm:%s1128] %v1805
        %v1807 = vld [vmem:[%s1135 + $0x53c] sm:%s1128]
        %1808 = vst [vmem:[%s1136 + $0x53c] sm:%s1128] %v1807
        %v1809 = vld [vmem:[%s1135 + $0x540] sm:%s1128]
        %1810 = vst [vmem:[%s1136 + $0x540] sm:%s1128] %v1809
        %v1811 = vld [vmem:[%s1135 + $0x550] sm:%s1128]
        %1812 = vst [vmem:[%s1136 + $0x544] sm:%s1128] %v1811
        %v1813 = vld [vmem:[%s1135 + $0x544] sm:%s1128]
        %1814 = vst [vmem:[%s1136 + $0x548] sm:%s1128] %v1813
        %v1815 = vld [vmem:[%s1135 + $0x554] sm:%s1128]
        %1816 = vst [vmem:[%s1136 + $0x54c] sm:%s1128] %v1815
        %v1817 = vld [vmem:[%s1135 + $0x548] sm:%s1128]
        %1818 = vst [vmem:[%s1136 + $0x550] sm:%s1128] %v1817
        %v1819 = vld [vmem:[%s1135 + $0x558] sm:%s1128]
        %1820 = vst [vmem:[%s1136 + $0x554] sm:%s1128] %v1819
        %v1821 = vld [vmem:[%s1135 + $0x54c] sm:%s1128]
        %1822 = vst [vmem:[%s1136 + $0x558] sm:%s1128] %v1821
        %v1823 = vld [vmem:[%s1135 + $0x55c] sm:%s1128]
        %1824 = vst [vmem:[%s1136 + $0x55c] sm:%s1128] %v1823
        %v1825 = vld [vmem:[%s1135 + $0x560] sm:%s1128]
        %1826 = vst [vmem:[%s1136 + $0x560] sm:%s1128] %v1825
        %v1827 = vld [vmem:[%s1135 + $0x570] sm:%s1128]
        %1828 = vst [vmem:[%s1136 + $0x564] sm:%s1128] %v1827
        %v1829 = vld [vmem:[%s1135 + $0x564] sm:%s1128]
        %1830 = vst [vmem:[%s1136 + $0x568] sm:%s1128] %v1829
        %v1831 = vld [vmem:[%s1135 + $0x574] sm:%s1128]
        %1832 = vst [vmem:[%s1136 + $0x56c] sm:%s1128] %v1831
        %v1833 = vld [vmem:[%s1135 + $0x568] sm:%s1128]
        %1834 = vst [vmem:[%s1136 + $0x570] sm:%s1128] %v1833
        %v1835 = vld [vmem:[%s1135 + $0x578] sm:%s1128]
        %1836 = vst [vmem:[%s1136 + $0x574] sm:%s1128] %v1835
        %v1837 = vld [vmem:[%s1135 + $0x56c] sm:%s1128]
        %1838 = vst [vmem:[%s1136 + $0x578] sm:%s1128] %v1837
        %v1839 = vld [vmem:[%s1135 + $0x57c] sm:%s1128]
        %1840 = vst [vmem:[%s1136 + $0x57c] sm:%s1128] %v1839
        %v1841 = vld [vmem:[%s1135 + $0x580] sm:%s1128]
        %1842 = vst [vmem:[%s1136 + $0x580] sm:%s1128] %v1841
        %v1843 = vld [vmem:[%s1135 + $0x590] sm:%s1128]
        %1844 = vst [vmem:[%s1136 + $0x584] sm:%s1128] %v1843
        %v1845 = vld [vmem:[%s1135 + $0x584] sm:%s1128]
        %1846 = vst [vmem:[%s1136 + $0x588] sm:%s1128] %v1845
        %v1847 = vld [vmem:[%s1135 + $0x594] sm:%s1128]
        %1848 = vst [vmem:[%s1136 + $0x58c] sm:%s1128] %v1847
        %v1849 = vld [vmem:[%s1135 + $0x588] sm:%s1128]
        %1850 = vst [vmem:[%s1136 + $0x590] sm:%s1128] %v1849
        %v1851 = vld [vmem:[%s1135 + $0x598] sm:%s1128]
        %1852 = vst [vmem:[%s1136 + $0x594] sm:%s1128] %v1851
        %v1853 = vld [vmem:[%s1135 + $0x58c] sm:%s1128]
        %1854 = vst [vmem:[%s1136 + $0x598] sm:%s1128] %v1853
        %v1855 = vld [vmem:[%s1135 + $0x59c] sm:%s1128]
        %1856 = vst [vmem:[%s1136 + $0x59c] sm:%s1128] %v1855
        %v1857 = vld [vmem:[%s1135 + $0x5a0] sm:%s1128]
        %1858 = vst [vmem:[%s1136 + $0x5a0] sm:%s1128] %v1857
        %v1859 = vld [vmem:[%s1135 + $0x5b0] sm:%s1128]
        %1860 = vst [vmem:[%s1136 + $0x5a4] sm:%s1128] %v1859
        %v1861 = vld [vmem:[%s1135 + $0x5a4] sm:%s1128]
        %1862 = vst [vmem:[%s1136 + $0x5a8] sm:%s1128] %v1861
        %v1863 = vld [vmem:[%s1135 + $0x5b4] sm:%s1128]
        %1864 = vst [vmem:[%s1136 + $0x5ac] sm:%s1128] %v1863
        %v1865 = vld [vmem:[%s1135 + $0x5a8] sm:%s1128]
        %1866 = vst [vmem:[%s1136 + $0x5b0] sm:%s1128] %v1865
        %v1867 = vld [vmem:[%s1135 + $0x5b8] sm:%s1128]
        %1868 = vst [vmem:[%s1136 + $0x5b4] sm:%s1128] %v1867
        %v1869 = vld [vmem:[%s1135 + $0x5ac] sm:%s1128]
        %1870 = vst [vmem:[%s1136 + $0x5b8] sm:%s1128] %v1869
        %v1871 = vld [vmem:[%s1135 + $0x5bc] sm:%s1128]
        %1872 = vst [vmem:[%s1136 + $0x5bc] sm:%s1128] %v1871
        %v1873 = vld [vmem:[%s1135 + $0x5c0] sm:%s1128]
        %1874 = vst [vmem:[%s1136 + $0x5c0] sm:%s1128] %v1873
        %v1875 = vld [vmem:[%s1135 + $0x5d0] sm:%s1128]
        %1876 = vst [vmem:[%s1136 + $0x5c4] sm:%s1128] %v1875
        %v1877 = vld [vmem:[%s1135 + $0x5c4] sm:%s1128]
        %1878 = vst [vmem:[%s1136 + $0x5c8] sm:%s1128] %v1877
        %v1879 = vld [vmem:[%s1135 + $0x5d4] sm:%s1128]
        %1880 = vst [vmem:[%s1136 + $0x5cc] sm:%s1128] %v1879
        %v1881 = vld [vmem:[%s1135 + $0x5c8] sm:%s1128]
        %1882 = vst [vmem:[%s1136 + $0x5d0] sm:%s1128] %v1881
        %v1883 = vld [vmem:[%s1135 + $0x5d8] sm:%s1128]
        %1884 = vst [vmem:[%s1136 + $0x5d4] sm:%s1128] %v1883
        %v1885 = vld [vmem:[%s1135 + $0x5cc] sm:%s1128]
        %1886 = vst [vmem:[%s1136 + $0x5d8] sm:%s1128] %v1885
        %v1887 = vld [vmem:[%s1135 + $0x5dc] sm:%s1128]
        %1888 = vst [vmem:[%s1136 + $0x5dc] sm:%s1128] %v1887
        %v1889 = vld [vmem:[%s1135 + $0x5e0] sm:%s1128]
        %1890 = vst [vmem:[%s1136 + $0x5e0] sm:%s1128] %v1889
        %v1891 = vld [vmem:[%s1135 + $0x5f0] sm:%s1128]
        %1892 = vst [vmem:[%s1136 + $0x5e4] sm:%s1128] %v1891
        %v1893 = vld [vmem:[%s1135 + $0x5e4] sm:%s1128]
        %1894 = vst [vmem:[%s1136 + $0x5e8] sm:%s1128] %v1893
        %v1895 = vld [vmem:[%s1135 + $0x5f4] sm:%s1128]
        %1896 = vst [vmem:[%s1136 + $0x5ec] sm:%s1128] %v1895
        %v1897 = vld [vmem:[%s1135 + $0x5e8] sm:%s1128]
        %1898 = vst [vmem:[%s1136 + $0x5f0] sm:%s1128] %v1897
        %v1899 = vld [vmem:[%s1135 + $0x5f8] sm:%s1128]
        %1900 = vst [vmem:[%s1136 + $0x5f4] sm:%s1128] %v1899
        %v1901 = vld [vmem:[%s1135 + $0x5ec] sm:%s1128]
        %1902 = vst [vmem:[%s1136 + $0x5f8] sm:%s1128] %v1901
        %v1903 = vld [vmem:[%s1135 + $0x5fc] sm:%s1128]
        %1904 = vst [vmem:[%s1136 + $0x5fc] sm:%s1128] %v1903
        %v1905 = vld [vmem:[%s1135 + $0x600] sm:%s1128]
        %1906 = vst [vmem:[%s1136 + $0x600] sm:%s1128] %v1905
        %v1907 = vld [vmem:[%s1135 + $0x610] sm:%s1128]
        %1908 = vst [vmem:[%s1136 + $0x604] sm:%s1128] %v1907
        %v1909 = vld [vmem:[%s1135 + $0x604] sm:%s1128]
        %1910 = vst [vmem:[%s1136 + $0x608] sm:%s1128] %v1909
        %v1911 = vld [vmem:[%s1135 + $0x614] sm:%s1128]
        %1912 = vst [vmem:[%s1136 + $0x60c] sm:%s1128] %v1911
        %v1913 = vld [vmem:[%s1135 + $0x608] sm:%s1128]
        %1914 = vst [vmem:[%s1136 + $0x610] sm:%s1128] %v1913
        %v1915 = vld [vmem:[%s1135 + $0x618] sm:%s1128]
        %1916 = vst [vmem:[%s1136 + $0x614] sm:%s1128] %v1915
        %v1917 = vld [vmem:[%s1135 + $0x60c] sm:%s1128]
        %1918 = vst [vmem:[%s1136 + $0x618] sm:%s1128] %v1917
        %v1919 = vld [vmem:[%s1135 + $0x61c] sm:%s1128]
        %1920 = vst [vmem:[%s1136 + $0x61c] sm:%s1128] %v1919
        %v1921 = vld [vmem:[%s1135 + $0x620] sm:%s1128]
        %1922 = vst [vmem:[%s1136 + $0x620] sm:%s1128] %v1921
        %v1923 = vld [vmem:[%s1135 + $0x630] sm:%s1128]
        %1924 = vst [vmem:[%s1136 + $0x624] sm:%s1128] %v1923
        %v1925 = vld [vmem:[%s1135 + $0x624] sm:%s1128]
        %1926 = vst [vmem:[%s1136 + $0x628] sm:%s1128] %v1925
        %v1927 = vld [vmem:[%s1135 + $0x634] sm:%s1128]
        %1928 = vst [vmem:[%s1136 + $0x62c] sm:%s1128] %v1927
        %v1929 = vld [vmem:[%s1135 + $0x628] sm:%s1128]
        %1930 = vst [vmem:[%s1136 + $0x630] sm:%s1128] %v1929
        %v1931 = vld [vmem:[%s1135 + $0x638] sm:%s1128]
        %1932 = vst [vmem:[%s1136 + $0x634] sm:%s1128] %v1931
        %v1933 = vld [vmem:[%s1135 + $0x62c] sm:%s1128]
        %1934 = vst [vmem:[%s1136 + $0x638] sm:%s1128] %v1933
        %v1935 = vld [vmem:[%s1135 + $0x63c] sm:%s1128]
        %1936 = vst [vmem:[%s1136 + $0x63c] sm:%s1128] %v1935
        %v1937 = vld [vmem:[%s1135 + $0x640] sm:%s1128]
        %1938 = vst [vmem:[%s1136 + $0x640] sm:%s1128] %v1937
        %v1939 = vld [vmem:[%s1135 + $0x650] sm:%s1128]
        %1940 = vst [vmem:[%s1136 + $0x644] sm:%s1128] %v1939
        %v1941 = vld [vmem:[%s1135 + $0x644] sm:%s1128]
        %1942 = vst [vmem:[%s1136 + $0x648] sm:%s1128] %v1941
        %v1943 = vld [vmem:[%s1135 + $0x654] sm:%s1128]
        %1944 = vst [vmem:[%s1136 + $0x64c] sm:%s1128] %v1943
        %v1945 = vld [vmem:[%s1135 + $0x648] sm:%s1128]
        %1946 = vst [vmem:[%s1136 + $0x650] sm:%s1128] %v1945
        %v1947 = vld [vmem:[%s1135 + $0x658] sm:%s1128]
        %1948 = vst [vmem:[%s1136 + $0x654] sm:%s1128] %v1947
        %v1949 = vld [vmem:[%s1135 + $0x64c] sm:%s1128]
        %1950 = vst [vmem:[%s1136 + $0x658] sm:%s1128] %v1949
        %v1951 = vld [vmem:[%s1135 + $0x65c] sm:%s1128]
        %1952 = vst [vmem:[%s1136 + $0x65c] sm:%s1128] %v1951
        %v1953 = vld [vmem:[%s1135 + $0x660] sm:%s1128]
        %1954 = vst [vmem:[%s1136 + $0x660] sm:%s1128] %v1953
        %v1955 = vld [vmem:[%s1135 + $0x670] sm:%s1128]
        %1956 = vst [vmem:[%s1136 + $0x664] sm:%s1128] %v1955
        %v1957 = vld [vmem:[%s1135 + $0x664] sm:%s1128]
        %1958 = vst [vmem:[%s1136 + $0x668] sm:%s1128] %v1957
        %v1959 = vld [vmem:[%s1135 + $0x674] sm:%s1128]
        %1960 = vst [vmem:[%s1136 + $0x66c] sm:%s1128] %v1959
        %v1961 = vld [vmem:[%s1135 + $0x668] sm:%s1128]
        %1962 = vst [vmem:[%s1136 + $0x670] sm:%s1128] %v1961
        %v1963 = vld [vmem:[%s1135 + $0x678] sm:%s1128]
        %1964 = vst [vmem:[%s1136 + $0x674] sm:%s1128] %v1963
        %v1965 = vld [vmem:[%s1135 + $0x66c] sm:%s1128]
        %1966 = vst [vmem:[%s1136 + $0x678] sm:%s1128] %v1965
        %v1967 = vld [vmem:[%s1135 + $0x67c] sm:%s1128]
        %1968 = vst [vmem:[%s1136 + $0x67c] sm:%s1128] %v1967
        %v1969 = vld [vmem:[%s1135 + $0x680] sm:%s1128]
        %1970 = vst [vmem:[%s1136 + $0x680] sm:%s1128] %v1969
        %v1971 = vld [vmem:[%s1135 + $0x690] sm:%s1128]
        %1972 = vst [vmem:[%s1136 + $0x684] sm:%s1128] %v1971
        %v1973 = vld [vmem:[%s1135 + $0x684] sm:%s1128]
        %1974 = vst [vmem:[%s1136 + $0x688] sm:%s1128] %v1973
        %v1975 = vld [vmem:[%s1135 + $0x694] sm:%s1128]
        %1976 = vst [vmem:[%s1136 + $0x68c] sm:%s1128] %v1975
        %v1977 = vld [vmem:[%s1135 + $0x688] sm:%s1128]
        %1978 = vst [vmem:[%s1136 + $0x690] sm:%s1128] %v1977
        %v1979 = vld [vmem:[%s1135 + $0x698] sm:%s1128]
        %1980 = vst [vmem:[%s1136 + $0x694] sm:%s1128] %v1979
        %v1981 = vld [vmem:[%s1135 + $0x68c] sm:%s1128]
        %1982 = vst [vmem:[%s1136 + $0x698] sm:%s1128] %v1981
        %v1983 = vld [vmem:[%s1135 + $0x69c] sm:%s1128]
        %1984 = vst [vmem:[%s1136 + $0x69c] sm:%s1128] %v1983
        %v1985 = vld [vmem:[%s1135 + $0x6a0] sm:%s1128]
        %1986 = vst [vmem:[%s1136 + $0x6a0] sm:%s1128] %v1985
        %v1987 = vld [vmem:[%s1135 + $0x6b0] sm:%s1128]
        %1988 = vst [vmem:[%s1136 + $0x6a4] sm:%s1128] %v1987
        %v1989 = vld [vmem:[%s1135 + $0x6a4] sm:%s1128]
        %1990 = vst [vmem:[%s1136 + $0x6a8] sm:%s1128] %v1989
        %v1991 = vld [vmem:[%s1135 + $0x6b4] sm:%s1128]
        %1992 = vst [vmem:[%s1136 + $0x6ac] sm:%s1128] %v1991
        %v1993 = vld [vmem:[%s1135 + $0x6a8] sm:%s1128]
        %1994 = vst [vmem:[%s1136 + $0x6b0] sm:%s1128] %v1993
        %v1995 = vld [vmem:[%s1135 + $0x6b8] sm:%s1128]
        %1996 = vst [vmem:[%s1136 + $0x6b4] sm:%s1128] %v1995
        %v1997 = vld [vmem:[%s1135 + $0x6ac] sm:%s1128]
        %1998 = vst [vmem:[%s1136 + $0x6b8] sm:%s1128] %v1997
        %v1999 = vld [vmem:[%s1135 + $0x6bc] sm:%s1128]
        %2000 = vst [vmem:[%s1136 + $0x6bc] sm:%s1128] %v1999
        %v2001 = vld [vmem:[%s1135 + $0x6c0] sm:%s1128]
        %2002 = vst [vmem:[%s1136 + $0x6c0] sm:%s1128] %v2001
        %v2003 = vld [vmem:[%s1135 + $0x6d0] sm:%s1128]
        %2004 = vst [vmem:[%s1136 + $0x6c4] sm:%s1128] %v2003
        %v2005 = vld [vmem:[%s1135 + $0x6c4] sm:%s1128]
        %2006 = vst [vmem:[%s1136 + $0x6c8] sm:%s1128] %v2005
        %v2007 = vld [vmem:[%s1135 + $0x6d4] sm:%s1128]
        %2008 = vst [vmem:[%s1136 + $0x6cc] sm:%s1128] %v2007
        %v2009 = vld [vmem:[%s1135 + $0x6c8] sm:%s1128]
        %2010 = vst [vmem:[%s1136 + $0x6d0] sm:%s1128] %v2009
        %v2011 = vld [vmem:[%s1135 + $0x6d8] sm:%s1128]
        %2012 = vst [vmem:[%s1136 + $0x6d4] sm:%s1128] %v2011
        %v2013 = vld [vmem:[%s1135 + $0x6cc] sm:%s1128]
        %2014 = vst [vmem:[%s1136 + $0x6d8] sm:%s1128] %v2013
        %v2015 = vld [vmem:[%s1135 + $0x6dc] sm:%s1128]
        %2016 = vst [vmem:[%s1136 + $0x6dc] sm:%s1128] %v2015
        %v2017 = vld [vmem:[%s1135 + $0x6e0] sm:%s1128]
        %2018 = vst [vmem:[%s1136 + $0x6e0] sm:%s1128] %v2017
        %v2019 = vld [vmem:[%s1135 + $0x6f0] sm:%s1128]
        %2020 = vst [vmem:[%s1136 + $0x6e4] sm:%s1128] %v2019
        %v2021 = vld [vmem:[%s1135 + $0x6e4] sm:%s1128]
        %2022 = vst [vmem:[%s1136 + $0x6e8] sm:%s1128] %v2021
        %v2023 = vld [vmem:[%s1135 + $0x6f4] sm:%s1128]
        %2024 = vst [vmem:[%s1136 + $0x6ec] sm:%s1128] %v2023
        %v2025 = vld [vmem:[%s1135 + $0x6e8] sm:%s1128]
        %2026 = vst [vmem:[%s1136 + $0x6f0] sm:%s1128] %v2025
        %v2027 = vld [vmem:[%s1135 + $0x6f8] sm:%s1128]
        %2028 = vst [vmem:[%s1136 + $0x6f4] sm:%s1128] %v2027
        %v2029 = vld [vmem:[%s1135 + $0x6ec] sm:%s1128]
        %2030 = vst [vmem:[%s1136 + $0x6f8] sm:%s1128] %v2029
        %v2031 = vld [vmem:[%s1135 + $0x6fc] sm:%s1128]
        %2032 = vst [vmem:[%s1136 + $0x6fc] sm:%s1128] %v2031
        %v2033 = vld [vmem:[%s1135 + $0x700] sm:%s1128]
        %2034 = vst [vmem:[%s1136 + $0x700] sm:%s1128] %v2033
        %v2035 = vld [vmem:[%s1135 + $0x710] sm:%s1128]
        %2036 = vst [vmem:[%s1136 + $0x704] sm:%s1128] %v2035
        %v2037 = vld [vmem:[%s1135 + $0x704] sm:%s1128]
        %2038 = vst [vmem:[%s1136 + $0x708] sm:%s1128] %v2037
        %v2039 = vld [vmem:[%s1135 + $0x714] sm:%s1128]
        %2040 = vst [vmem:[%s1136 + $0x70c] sm:%s1128] %v2039
        %v2041 = vld [vmem:[%s1135 + $0x708] sm:%s1128]
        %2042 = vst [vmem:[%s1136 + $0x710] sm:%s1128] %v2041
        %v2043 = vld [vmem:[%s1135 + $0x718] sm:%s1128]
        %2044 = vst [vmem:[%s1136 + $0x714] sm:%s1128] %v2043
        %v2045 = vld [vmem:[%s1135 + $0x70c] sm:%s1128]
        %2046 = vst [vmem:[%s1136 + $0x718] sm:%s1128] %v2045
        %v2047 = vld [vmem:[%s1135 + $0x71c] sm:%s1128]
        %2048 = vst [vmem:[%s1136 + $0x71c] sm:%s1128] %v2047
        %v2049 = vld [vmem:[%s1135 + $0x720] sm:%s1128]
        %2050 = vst [vmem:[%s1136 + $0x720] sm:%s1128] %v2049
        %v2051 = vld [vmem:[%s1135 + $0x730] sm:%s1128]
        %2052 = vst [vmem:[%s1136 + $0x724] sm:%s1128] %v2051
        %v2053 = vld [vmem:[%s1135 + $0x724] sm:%s1128]
        %2054 = vst [vmem:[%s1136 + $0x728] sm:%s1128] %v2053
        %v2055 = vld [vmem:[%s1135 + $0x734] sm:%s1128]
        %2056 = vst [vmem:[%s1136 + $0x72c] sm:%s1128] %v2055
        %v2057 = vld [vmem:[%s1135 + $0x728] sm:%s1128]
        %2058 = vst [vmem:[%s1136 + $0x730] sm:%s1128] %v2057
        %v2059 = vld [vmem:[%s1135 + $0x738] sm:%s1128]
        %2060 = vst [vmem:[%s1136 + $0x734] sm:%s1128] %v2059
        %v2061 = vld [vmem:[%s1135 + $0x72c] sm:%s1128]
        %2062 = vst [vmem:[%s1136 + $0x738] sm:%s1128] %v2061
        %v2063 = vld [vmem:[%s1135 + $0x73c] sm:%s1128]
        %2064 = vst [vmem:[%s1136 + $0x73c] sm:%s1128] %v2063
        %v2065 = vld [vmem:[%s1135 + $0x740] sm:%s1128]
        %2066 = vst [vmem:[%s1136 + $0x740] sm:%s1128] %v2065
        %v2067 = vld [vmem:[%s1135 + $0x750] sm:%s1128]
        %2068 = vst [vmem:[%s1136 + $0x744] sm:%s1128] %v2067
        %v2069 = vld [vmem:[%s1135 + $0x744] sm:%s1128]
        %2070 = vst [vmem:[%s1136 + $0x748] sm:%s1128] %v2069
        %v2071 = vld [vmem:[%s1135 + $0x754] sm:%s1128]
        %2072 = vst [vmem:[%s1136 + $0x74c] sm:%s1128] %v2071
        %v2073 = vld [vmem:[%s1135 + $0x748] sm:%s1128]
        %2074 = vst [vmem:[%s1136 + $0x750] sm:%s1128] %v2073
        %v2075 = vld [vmem:[%s1135 + $0x758] sm:%s1128]
        %2076 = vst [vmem:[%s1136 + $0x754] sm:%s1128] %v2075
        %v2077 = vld [vmem:[%s1135 + $0x74c] sm:%s1128]
        %2078 = vst [vmem:[%s1136 + $0x758] sm:%s1128] %v2077
        %v2079 = vld [vmem:[%s1135 + $0x75c] sm:%s1128]
        %2080 = vst [vmem:[%s1136 + $0x75c] sm:%s1128] %v2079
        %v2081 = vld [vmem:[%s1135 + $0x760] sm:%s1128]
        %2082 = vst [vmem:[%s1136 + $0x760] sm:%s1128] %v2081
        %v2083 = vld [vmem:[%s1135 + $0x770] sm:%s1128]
        %2084 = vst [vmem:[%s1136 + $0x764] sm:%s1128] %v2083
        %v2085 = vld [vmem:[%s1135 + $0x764] sm:%s1128]
        %2086 = vst [vmem:[%s1136 + $0x768] sm:%s1128] %v2085
        %v2087 = vld [vmem:[%s1135 + $0x774] sm:%s1128]
        %2088 = vst [vmem:[%s1136 + $0x76c] sm:%s1128] %v2087
        %v2089 = vld [vmem:[%s1135 + $0x768] sm:%s1128]
        %2090 = vst [vmem:[%s1136 + $0x770] sm:%s1128] %v2089
        %v2091 = vld [vmem:[%s1135 + $0x778] sm:%s1128]
        %2092 = vst [vmem:[%s1136 + $0x774] sm:%s1128] %v2091
        %v2093 = vld [vmem:[%s1135 + $0x76c] sm:%s1128]
        %2094 = vst [vmem:[%s1136 + $0x778] sm:%s1128] %v2093
        %v2095 = vld [vmem:[%s1135 + $0x77c] sm:%s1128]
        %2096 = vst [vmem:[%s1136 + $0x77c] sm:%s1128] %v2095
        %v2097 = vld [vmem:[%s1135 + $0x780] sm:%s1128]
        %2098 = vst [vmem:[%s1136 + $0x780] sm:%s1128] %v2097
        %v2099 = vld [vmem:[%s1135 + $0x790] sm:%s1128]
        %2100 = vst [vmem:[%s1136 + $0x784] sm:%s1128] %v2099
        %v2101 = vld [vmem:[%s1135 + $0x784] sm:%s1128]
        %2102 = vst [vmem:[%s1136 + $0x788] sm:%s1128] %v2101
        %v2103 = vld [vmem:[%s1135 + $0x794] sm:%s1128]
        %2104 = vst [vmem:[%s1136 + $0x78c] sm:%s1128] %v2103
        %v2105 = vld [vmem:[%s1135 + $0x788] sm:%s1128]
        %2106 = vst [vmem:[%s1136 + $0x790] sm:%s1128] %v2105
        %v2107 = vld [vmem:[%s1135 + $0x798] sm:%s1128]
        %2108 = vst [vmem:[%s1136 + $0x794] sm:%s1128] %v2107
        %v2109 = vld [vmem:[%s1135 + $0x78c] sm:%s1128]
        %2110 = vst [vmem:[%s1136 + $0x798] sm:%s1128] %v2109
        %v2111 = vld [vmem:[%s1135 + $0x79c] sm:%s1128]
        %2112 = vst [vmem:[%s1136 + $0x79c] sm:%s1128] %v2111
        %v2113 = vld [vmem:[%s1135 + $0x7a0] sm:%s1128]
        %2114 = vst [vmem:[%s1136 + $0x7a0] sm:%s1128] %v2113
        %v2115 = vld [vmem:[%s1135 + $0x7b0] sm:%s1128]
        %2116 = vst [vmem:[%s1136 + $0x7a4] sm:%s1128] %v2115
        %v2117 = vld [vmem:[%s1135 + $0x7a4] sm:%s1128]
        %2118 = vst [vmem:[%s1136 + $0x7a8] sm:%s1128] %v2117
        %v2119 = vld [vmem:[%s1135 + $0x7b4] sm:%s1128]
        %2120 = vst [vmem:[%s1136 + $0x7ac] sm:%s1128] %v2119
        %v2121 = vld [vmem:[%s1135 + $0x7a8] sm:%s1128]
        %2122 = vst [vmem:[%s1136 + $0x7b0] sm:%s1128] %v2121
        %v2123 = vld [vmem:[%s1135 + $0x7b8] sm:%s1128]
        %2124 = vst [vmem:[%s1136 + $0x7b4] sm:%s1128] %v2123
        %v2125 = vld [vmem:[%s1135 + $0x7ac] sm:%s1128]
        %2126 = vst [vmem:[%s1136 + $0x7b8] sm:%s1128] %v2125
        %v2127 = vld [vmem:[%s1135 + $0x7bc] sm:%s1128]
        %2128 = vst [vmem:[%s1136 + $0x7bc] sm:%s1128] %v2127
        %v2129 = vld [vmem:[%s1135 + $0x7c0] sm:%s1128]
        %2130 = vst [vmem:[%s1136 + $0x7c0] sm:%s1128] %v2129
        %v2131 = vld [vmem:[%s1135 + $0x7d0] sm:%s1128]
        %2132 = vst [vmem:[%s1136 + $0x7c4] sm:%s1128] %v2131
        %v2133 = vld [vmem:[%s1135 + $0x7c4] sm:%s1128]
        %2134 = vst [vmem:[%s1136 + $0x7c8] sm:%s1128] %v2133
        %v2135 = vld [vmem:[%s1135 + $0x7d4] sm:%s1128]
        %2136 = vst [vmem:[%s1136 + $0x7cc] sm:%s1128] %v2135
        %v2137 = vld [vmem:[%s1135 + $0x7c8] sm:%s1128]
        %2138 = vst [vmem:[%s1136 + $0x7d0] sm:%s1128] %v2137
        %v2139 = vld [vmem:[%s1135 + $0x7d8] sm:%s1128]
        %2140 = vst [vmem:[%s1136 + $0x7d4] sm:%s1128] %v2139
        %v2141 = vld [vmem:[%s1135 + $0x7cc] sm:%s1128]
        %2142 = vst [vmem:[%s1136 + $0x7d8] sm:%s1128] %v2141
        %v2143 = vld [vmem:[%s1135 + $0x7dc] sm:%s1128]
        %2144 = vst [vmem:[%s1136 + $0x7dc] sm:%s1128] %v2143
        %v2145 = vld [vmem:[%s1135 + $0x7e0] sm:%s1128]
        %2146 = vst [vmem:[%s1136 + $0x7e0] sm:%s1128] %v2145
        %v2147 = vld [vmem:[%s1135 + $0x7f0] sm:%s1128]
        %2148 = vst [vmem:[%s1136 + $0x7e4] sm:%s1128] %v2147
        %v2149 = vld [vmem:[%s1135 + $0x7e4] sm:%s1128]
        %2150 = vst [vmem:[%s1136 + $0x7e8] sm:%s1128] %v2149
        %v2151 = vld [vmem:[%s1135 + $0x7f4] sm:%s1128]
        %2152 = vst [vmem:[%s1136 + $0x7ec] sm:%s1128] %v2151
        %v2153 = vld [vmem:[%s1135 + $0x7e8] sm:%s1128]
        %2154 = vst [vmem:[%s1136 + $0x7f0] sm:%s1128] %v2153
        %v2155 = vld [vmem:[%s1135 + $0x7f8] sm:%s1128]
        %2156 = vst [vmem:[%s1136 + $0x7f4] sm:%s1128] %v2155
        %v2157 = vld [vmem:[%s1135 + $0x7ec] sm:%s1128]
        %2158 = vst [vmem:[%s1136 + $0x7f8] sm:%s1128] %v2157
        %v2159 = vld [vmem:[%s1135 + $0x7fc] sm:%s1128]
        %2160 = vst [vmem:[%s1136 + $0x7fc] sm:%s1128] %v2159
      $region103: #{pose_encoder_forward.1} parent=97 // loop_footer
        %s1134 = sadd.s32 1, %s1130
      $region104: #{pose_encoder_forward.1} parent=97 // loop_footer_branch
        %1129 = sbr.rel target = $region100
      $region105: #{pose_encoder_forward.1} parent=97 // loop_exit
        _
    $region98: #{pose_encoder_forward.1} parent=1 // pred_fallthru
      _
    // Predicated region
    $region135: #{pose_encoder_forward.1} parent=1 // pred_check
      _
    $region136: #{pose_encoder_forward.1} parent=1 // pred_check_branch
      %5295 = sbr.rel (0) target = $region138
    $region137: #{pose_encoder_forward.1} parent=1 // pred_region
      %5296 = vsyncadd %s1119, 32768
    $region138: #{pose_encoder_forward.1} parent=1 // pred_fallthru
      _
    %v5297 = vld [vmem:[%s0] sm:$0xff]
    %v5298 = vmul.f32 %v5297, %v5297
    %vm5299 = vcmask 64512
    %v5300 = vsel %vm5299, %v5298, 0.0
    %5301 = vadd.xlane.f32.xlu0 %v5300
    %v5302 = vpop.xlane.xlu0 %5301
    %v5303 = vmax.f32 %v5302, 1e-24
    %v5304 = vrsqrt.pop %v5303
    %v5305 = vmul.f32 %v5297, %v5304
    %v5306 = vld [vmem:[%s1] sm:$0xff]
    %v5308 = vsel %vm5299, %v5305, 0
    %5310 = vmatprep.subr.mxu0 0.0
    %v5311 = vand.u32 %v5306, 4294901760
    %5312 = vmatpush1.msra.mxu0 %v5311
    %5313 = vmatprep.subr.mxu0 0.0
    %5314 = vmatpush1.msra.mxu0 0.0
    %5315 = vmatprep.subr.mxu0 0.0
    %5316 = vmatpush1.msra.mxu0 0.0
    %5317 = vmatprep.subr.mxu0 0.0
    %5318 = vmatpush1.msra.mxu0 0.0
    %5319 = vmatprep.subr.mxu0 0.0
    %5320 = vmatpush1.msra.mxu0 0.0
    %5321 = vmatprep.subr.mxu0 0.0
    %5322 = vmatpush1.msra.mxu0 0.0
    %5323 = vmatprep.subr.mxu0 0.0
    %5324 = vmatpush1.msra.mxu0 0.0
    %5325 = vmatprep.subr.mxu0 0.0
    %5326 = vmatpush1.msra.mxu0 0.0
    %5327 = vmatprep.subr.mxu0 0.0
    %5328 = vmatpush1.msra.mxu0 0.0
    %5329 = vmatprep.subr.mxu0 0.0
    %5330 = vmatpush1.msra.mxu0 0.0
    %5331 = vmatprep.subr.mxu0 0.0
    %5332 = vmatpush1.msra.mxu0 0.0
    %5333 = vmatprep.subr.mxu0 0.0
    %5334 = vmatpush1.msra.mxu0 0.0
    %5335 = vmatprep.subr.mxu0 0.0
    %5336 = vmatpush1.msra.mxu0 0.0
    %5337 = vmatprep.subr.mxu0 0.0
    %5338 = vmatpush1.msra.mxu0 0.0
    %5339 = vmatprep.subr.mxu0 0.0
    %5340 = vmatpush1.msra.mxu0 0.0
    %5341 = vmatprep.subr.mxu0 0.0
    %5342 = vmatpush1.msra.mxu0 0.0
    %5343 = vmatprep.subr.mxu0 0.0
    %5344 = vmatpush1.msra.mxu0 0.0
    %5345 = vmatprep.subr.mxu0 0.0
    %5346 = vmatpush1.msra.mxu0 0.0
    %5347 = vmatprep.subr.mxu0 0.0
    %5348 = vmatpush1.msra.mxu0 0.0
    %5349 = vmatprep.subr.mxu0 0.0
    %5350 = vmatpush1.msra.mxu0 0.0
    %5351 = vmatprep.subr.mxu0 0.0
    %5352 = vmatpush1.msra.mxu0 0.0
    %5353 = vmatprep.subr.mxu0 0.0
    %5354 = vmatpush1.msra.mxu0 0.0
    %5355 = vmatprep.subr.mxu0 0.0
    %5356 = vmatpush1.msra.mxu0 0.0
    %5357 = vmatprep.subr.mxu0 0.0
    %5358 = vmatpush1.msra.mxu0 0.0
    %5359 = vmatprep.subr.mxu0 0.0
    %5360 = vmatpush1.msra.mxu0 0.0
    %5361 = vmatprep.subr.mxu0 0.0
    %5362 = vmatpush1.msra.mxu0 0.0
    %5363 = vmatprep.subr.mxu0 0.0
    %5364 = vmatpush1.msra.mxu0 0.0
    %5365 = vmatprep.subr.mxu0 0.0
    %5366 = vmatpush1.msra.mxu0 0.0
    %5367 = vmatprep.subr.mxu0 0.0
    %5368 = vmatpush1.msra.mxu0 0.0
    %5369 = vmatprep.subr.mxu0 0.0
    %5370 = vmatpush1.msra.mxu0 0.0
    %5371 = vmatprep.subr.mxu0 0.0
    %5372 = vmatpush1.msra.mxu0 0.0
    %5373 = vmatprep.subr.mxu0 0.0
    %5374 = vmatpush1.msra.mxu0 0.0
    %5375 = vmatprep.mubr.f32.mxu0 0.0
    %v5376 = vand.u32 %v5308, 4294901760
    %v5377 = vsub.f32 %v5308, %v5376
    %v5378 = vand.u32 %v5377, 4294901760
    %v5379 = vsub.f32 %v5377, %v5378
    %v5380 = vand.u32 %v5379, 4294901760
    %5381 = vmatmul.mubr.f32.gmra.mrb[0].mxu0 %v5380
    %v5382 = vpop.f32.mrb[0].mxu0
    %v5383 = vadd.f32 0.0, %v5382
    %v5384 = vpop.f32.mrb[0].mxu0
    %5385 = vdwg.mxu0
    %5386 = vmatprep.subr.mxu0 0.0
    %v5387 = vand.u32 %v5306, 4294901760
    %v5388 = vsub.f32 %v5306, %v5387
    %v5389 = vand.u32 %v5388, 4294901760
    %v5390 = vsub.f32 %v5388, %v5389
    %v5391 = vand.u32 %v5390, 4294901760
    %5392 = vmatpush1.msra.mxu0 %v5391
    %5393 = vmatprep.subr.mxu0 0.0
    %5394 = vmatpush1.msra.mxu0 0.0
    %5395 = vmatprep.subr.mxu0 0.0
    %5396 = vmatpush1.msra.mxu0 0.0
    %5397 = vmatprep.subr.mxu0 0.0
    %5398 = vmatpush1.msra.mxu0 0.0
    %5399 = vmatprep.subr.mxu0 0.0
    %5400 = vmatpush1.msra.mxu0 0.0
    %5401 = vmatprep.subr.mxu0 0.0
    %5402 = vmatpush1.msra.mxu0 0.0
    %5403 = vmatprep.subr.mxu0 0.0
    %5404 = vmatpush1.msra.mxu0 0.0
    %5405 = vmatprep.subr.mxu0 0.0
    %5406 = vmatpush1.msra.mxu0 0.0
    %5407 = vmatprep.subr.mxu0 0.0
    %5408 = vmatpush1.msra.mxu0 0.0
    %5409 = vmatprep.subr.mxu0 0.0
    %5410 = vmatpush1.msra.mxu0 0.0
    %5411 = vmatprep.subr.mxu0 0.0
    %5412 = vmatpush1.msra.mxu0 0.0
    %5413 = vmatprep.subr.mxu0 0.0
    %5414 = vmatpush1.msra.mxu0 0.0
    %5415 = vmatprep.subr.mxu0 0.0
    %5416 = vmatpush1.msra.mxu0 0.0
    %5417 = vmatprep.subr.mxu0 0.0
    %5418 = vmatpush1.msra.mxu0 0.0
    %5419 = vmatprep.subr.mxu0 0.0
    %5420 = vmatpush1.msra.mxu0 0.0
    %5421 = vmatprep.subr.mxu0 0.0
    %5422 = vmatpush1.msra.mxu0 0.0
    %5423 = vmatprep.subr.mxu0 0.0
    %5424 = vmatpush1.msra.mxu0 0.0
    %5425 = vmatprep.subr.mxu0 0.0
    %5426 = vmatpush1.msra.mxu0 0.0
    %5427 = vmatprep.subr.mxu0 0.0
    %5428 = vmatpush1.msra.mxu0 0.0
    %5429 = vmatprep.subr.mxu0 0.0
    %5430 = vmatpush1.msra.mxu0 0.0
    %5431 = vmatprep.subr.mxu0 0.0
    %5432 = vmatpush1.msra.mxu0 0.0
    %5433 = vmatprep.subr.mxu0 0.0
    %5434 = vmatpush1.msra.mxu0 0.0
    %5435 = vmatprep.subr.mxu0 0.0
    %5436 = vmatpush1.msra.mxu0 0.0
    %5437 = vmatprep.subr.mxu0 0.0
    %5438 = vmatpush1.msra.mxu0 0.0
    %5439 = vmatprep.subr.mxu0 0.0
    %5440 = vmatpush1.msra.mxu0 0.0
    %5441 = vmatprep.subr.mxu0 0.0
    %5442 = vmatpush1.msra.mxu0 0.0
    %5443 = vmatprep.subr.mxu0 0.0
    %5444 = vmatpush1.msra.mxu0 0.0
    %5445 = vmatprep.subr.mxu0 0.0
    %5446 = vmatpush1.msra.mxu0 0.0
    %5447 = vmatprep.subr.mxu0 0.0
    %5448 = vmatpush1.msra.mxu0 0.0
    %5449 = vmatprep.subr.mxu0 0.0
    %5450 = vmatpush1.msra.mxu0 0.0
    %5451 = vmatprep.subr.mxu0 0.0
    %5452 = vmatpush1.msra.mxu0 0.0
    %5453 = vmatprep.subr.mxu0 0.0
    %5454 = vmatpush1.msra.mxu0 0.0
    %5455 = vmatprep.mubr.f32.mxu0 0.0
    %v5456 = vand.u32 %v5308, 4294901760
    %5457 = vmatmul.mubr.f32.gmra.mrb[0].mxu0 %v5456
    %v5458 = vpop.f32.mrb[0].mxu0
    %v5459 = vadd.f32 %v5383, %v5458
    %v5460 = vpop.f32.mrb[0].mxu0
    %5461 = vdwg.mxu0
    %5462 = vmatprep.subr.mxu0 0.0
    %v5463 = vand.u32 %v5306, 4294901760
    %v5464 = vsub.f32 %v5306, %v5463
    %5465 = vmatpush1.msra.mxu0 %v5464
    %5466 = vmatprep.subr.mxu0 0.0
    %5467 = vmatpush1.msra.mxu0 0.0
    %5468 = vmatprep.subr.mxu0 0.0
    %5469 = vmatpush1.msra.mxu0 0.0
    %5470 = vmatprep.subr.mxu0 0.0
    %5471 = vmatpush1.msra.mxu0 0.0
    %5472 = vmatprep.subr.mxu0 0.0
    %5473 = vmatpush1.msra.mxu0 0.0
    %5474 = vmatprep.subr.mxu0 0.0
    %5475 = vmatpush1.msra.mxu0 0.0
    %5476 = vmatprep.subr.mxu0 0.0
    %5477 = vmatpush1.msra.mxu0 0.0
    %5478 = vmatprep.subr.mxu0 0.0
    %5479 = vmatpush1.msra.mxu0 0.0
    %5480 = vmatprep.subr.mxu0 0.0
    %5481 = vmatpush1.msra.mxu0 0.0
    %5482 = vmatprep.subr.mxu0 0.0
    %5483 = vmatpush1.msra.mxu0 0.0
    %5484 = vmatprep.subr.mxu0 0.0
    %5485 = vmatpush1.msra.mxu0 0.0
    %5486 = vmatprep.subr.mxu0 0.0
    %5487 = vmatpush1.msra.mxu0 0.0
    %5488 = vmatprep.subr.mxu0 0.0
    %5489 = vmatpush1.msra.mxu0 0.0
    %5490 = vmatprep.subr.mxu0 0.0
    %5491 = vmatpush1.msra.mxu0 0.0
    %5492 = vmatprep.subr.mxu0 0.0
    %5493 = vmatpush1.msra.mxu0 0.0
    %5494 = vmatprep.subr.mxu0 0.0
    %5495 = vmatpush1.msra.mxu0 0.0
    %5496 = vmatprep.subr.mxu0 0.0
    %5497 = vmatpush1.msra.mxu0 0.0
    %5498 = vmatprep.subr.mxu0 0.0
    %5499 = vmatpush1.msra.mxu0 0.0
    %5500 = vmatprep.subr.mxu0 0.0
    %5501 = vmatpush1.msra.mxu0 0.0
    %5502 = vmatprep.subr.mxu0 0.0
    %5503 = vmatpush1.msra.mxu0 0.0
    %5504 = vmatprep.subr.mxu0 0.0
    %5505 = vmatpush1.msra.mxu0 0.0
    %5506 = vmatprep.subr.mxu0 0.0
    %5507 = vmatpush1.msra.mxu0 0.0
    %5508 = vmatprep.subr.mxu0 0.0
    %5509 = vmatpush1.msra.mxu0 0.0
    %5510 = vmatprep.subr.mxu0 0.0
    %5511 = vmatpush1.msra.mxu0 0.0
    %5512 = vmatprep.subr.mxu0 0.0
    %5513 = vmatpush1.msra.mxu0 0.0
    %5514 = vmatprep.subr.mxu0 0.0
    %5515 = vmatpush1.msra.mxu0 0.0
    %5516 = vmatprep.subr.mxu0 0.0
    %5517 = vmatpush1.msra.mxu0 0.0
    %5518 = vmatprep.subr.mxu0 0.0
    %5519 = vmatpush1.msra.mxu0 0.0
    %5520 = vmatprep.subr.mxu0 0.0
    %5521 = vmatpush1.msra.mxu0 0.0
    %5522 = vmatprep.subr.mxu0 0.0
    %5523 = vmatpush1.msra.mxu0 0.0
    %5524 = vmatprep.subr.mxu0 0.0
    %5525 = vmatpush1.msra.mxu0 0.0
    %5526 = vmatprep.subr.mxu0 0.0
    %5527 = vmatpush1.msra.mxu0 0.0
    %5528 = vmatprep.mubr.f32.mxu0 0.0
    %v5529 = vand.u32 %v5308, 4294901760
    %v5530 = vsub.f32 %v5308, %v5529
    %5531 = vmatmul.mubr.f32.gmra.mrb[0].mxu0 %v5530
    %v5532 = vpop.f32.mrb[0].mxu0
    %v5533 = vadd.f32 %v5459, %v5532
    %v5534 = vpop.f32.mrb[0].mxu0
    %5535 = vdwg.mxu0
    %5536 = vmatprep.subr.mxu0 0.0
    %v5537 = vand.u32 %v5306, 4294901760
    %5538 = vmatpush1.msra.mxu0 %v5537
    %5539 = vmatprep.subr.mxu0 0.0
    %5540 = vmatpush1.msra.mxu0 0.0
    %5541 = vmatprep.subr.mxu0 0.0
    %5542 = vmatpush1.msra.mxu0 0.0
    %5543 = vmatprep.subr.mxu0 0.0
    %5544 = vmatpush1.msra.mxu0 0.0
    %5545 = vmatprep.subr.mxu0 0.0
    %5546 = vmatpush1.msra.mxu0 0.0
    %5547 = vmatprep.subr.mxu0 0.0
    %5548 = vmatpush1.msra.mxu0 0.0
    %5549 = vmatprep.subr.mxu0 0.0
    %5550 = vmatpush1.msra.mxu0 0.0
    %5551 = vmatprep.subr.mxu0 0.0
    %5552 = vmatpush1.msra.mxu0 0.0
    %5553 = vmatprep.subr.mxu0 0.0
    %5554 = vmatpush1.msra.mxu0 0.0
    %5555 = vmatprep.subr.mxu0 0.0
    %5556 = vmatpush1.msra.mxu0 0.0
    %5557 = vmatprep.subr.mxu0 0.0
    %5558 = vmatpush1.msra.mxu0 0.0
    %5559 = vmatprep.subr.mxu0 0.0
    %5560 = vmatpush1.msra.mxu0 0.0
    %5561 = vmatprep.subr.mxu0 0.0
    %5562 = vmatpush1.msra.mxu0 0.0
    %5563 = vmatprep.subr.mxu0 0.0
    %5564 = vmatpush1.msra.mxu0 0.0
    %5565 = vmatprep.subr.mxu0 0.0
    %5566 = vmatpush1.msra.mxu0 0.0
    %5567 = vmatprep.subr.mxu0 0.0
    %5568 = vmatpush1.msra.mxu0 0.0
    %5569 = vmatprep.subr.mxu0 0.0
    %5570 = vmatpush1.msra.mxu0 0.0
    %5571 = vmatprep.subr.mxu0 0.0
    %5572 = vmatpush1.msra.mxu0 0.0
    %5573 = vmatprep.subr.mxu0 0.0
    %5574 = vmatpush1.msra.mxu0 0.0
    %5575 = vmatprep.subr.mxu0 0.0
    %5576 = vmatpush1.msra.mxu0 0.0
    %5577 = vmatprep.subr.mxu0 0.0
    %5578 = vmatpush1.msra.mxu0 0.0
    %5579 = vmatprep.subr.mxu0 0.0
    %5580 = vmatpush1.msra.mxu0 0.0
    %5581 = vmatprep.subr.mxu0 0.0
    %5582 = vmatpush1.msra.mxu0 0.0
    %5583 = vmatprep.subr.mxu0 0.0
    %5584 = vmatpush1.msra.mxu0 0.0
    %5585 = vmatprep.subr.mxu0 0.0
    %5586 = vmatpush1.msra.mxu0 0.0
    %5587 = vmatprep.subr.mxu0 0.0
    %5588 = vmatpush1.msra.mxu0 0.0
    %5589 = vmatprep.subr.mxu0 0.0
    %5590 = vmatpush1.msra.mxu0 0.0
    %5591 = vmatprep.subr.mxu0 0.0
    %5592 = vmatpush1.msra.mxu0 0.0
    %5593 = vmatprep.subr.mxu0 0.0
    %5594 = vmatpush1.msra.mxu0 0.0
    %5595 = vmatprep.subr.mxu0 0.0
    %5596 = vmatpush1.msra.mxu0 0.0
    %5597 = vmatprep.subr.mxu0 0.0
    %5598 = vmatpush1.msra.mxu0 0.0
    %5599 = vmatprep.subr.mxu0 0.0
    %5600 = vmatpush1.msra.mxu0 0.0
    %5601 = vmatprep.mubr.f32.mxu0 0.0
    %v5602 = vand.u32 %v5308, 4294901760
    %v5603 = vsub.f32 %v5308, %v5602
    %v5604 = vand.u32 %v5603, 4294901760
    %5605 = vmatmul.mubr.f32.gmra.mrb[0].mxu0 %v5604
    %v5606 = vpop.f32.mrb[0].mxu0
    %v5607 = vadd.f32 %v5533, %v5606
    %v5608 = vpop.f32.mrb[0].mxu0
    %5609 = vdwg.mxu0
    %5610 = vmatprep.subr.mxu0 0.0
    %v5611 = vand.u32 %v5306, 4294901760
    %v5612 = vsub.f32 %v5306, %v5611
    %v5613 = vand.u32 %v5612, 4294901760
    %5614 = vmatpush1.msra.mxu0 %v5613
    %5615 = vmatprep.subr.mxu0 0.0
    %5616 = vmatpush1.msra.mxu0 0.0
    %5617 = vmatprep.subr.mxu0 0.0
    %5618 = vmatpush1.msra.mxu0 0.0
    %5619 = vmatprep.subr.mxu0 0.0
    %5620 = vmatpush1.msra.mxu0 0.0
    %5621 = vmatprep.subr.mxu0 0.0
    %5622 = vmatpush1.msra.mxu0 0.0
    %5623 = vmatprep.subr.mxu0 0.0
    %5624 = vmatpush1.msra.mxu0 0.0
    %5625 = vmatprep.subr.mxu0 0.0
    %5626 = vmatpush1.msra.mxu0 0.0
    %5627 = vmatprep.subr.mxu0 0.0
    %5628 = vmatpush1.msra.mxu0 0.0
    %5629 = vmatprep.subr.mxu0 0.0
    %5630 = vmatpush1.msra.mxu0 0.0
    %5631 = vmatprep.subr.mxu0 0.0
    %5632 = vmatpush1.msra.mxu0 0.0
    %5633 = vmatprep.subr.mxu0 0.0
    %5634 = vmatpush1.msra.mxu0 0.0
    %5635 = vmatprep.subr.mxu0 0.0
    %5636 = vmatpush1.msra.mxu0 0.0
    %5637 = vmatprep.subr.mxu0 0.0
    %5638 = vmatpush1.msra.mxu0 0.0
    %5639 = vmatprep.subr.mxu0 0.0
    %5640 = vmatpush1.msra.mxu0 0.0
    %5641 = vmatprep.subr.mxu0 0.0
    %5642 = vmatpush1.msra.mxu0 0.0
    %5643 = vmatprep.subr.mxu0 0.0
    %5644 = vmatpush1.msra.mxu0 0.0
    %5645 = vmatprep.subr.mxu0 0.0
    %5646 = vmatpush1.msra.mxu0 0.0
    %5647 = vmatprep.subr.mxu0 0.0
    %5648 = vmatpush1.msra.mxu0 0.0
    %5649 = vmatprep.subr.mxu0 0.0
    %5650 = vmatpush1.msra.mxu0 0.0
    %5651 = vmatprep.subr.mxu0 0.0
    %5652 = vmatpush1.msra.mxu0 0.0
    %5653 = vmatprep.subr.mxu0 0.0
    %5654 = vmatpush1.msra.mxu0 0.0
    %5655 = vmatprep.subr.mxu0 0.0
    %5656 = vmatpush1.msra.mxu0 0.0
    %5657 = vmatprep.subr.mxu0 0.0
    %5658 = vmatpush1.msra.mxu0 0.0
    %5659 = vmatprep.subr.mxu0 0.0
    %5660 = vmatpush1.msra.mxu0 0.0
    %5661 = vmatprep.subr.mxu0 0.0
    %5662 = vmatpush1.msra.mxu0 0.0
    %5663 = vmatprep.subr.mxu0 0.0
    %5664 = vmatpush1.msra.mxu0 0.0
    %5665 = vmatprep.subr.mxu0 0.0
    %5666 = vmatpush1.msra.mxu0 0.0
    %5667 = vmatprep.subr.mxu0 0.0
    %5668 = vmatpush1.msra.mxu0 0.0
    %5669 = vmatprep.subr.mxu0 0.0
    %5670 = vmatpush1.msra.mxu0 0.0
    %5671 = vmatprep.subr.mxu0 0.0
    %5672 = vmatpush1.msra.mxu0 0.0
    %5673 = vmatprep.subr.mxu0 0.0
    %5674 = vmatpush1.msra.mxu0 0.0
    %5675 = vmatprep.subr.mxu0 0.0
    %5676 = vmatpush1.msra.mxu0 0.0
    %5677 = vmatprep.mubr.f32.mxu0 0.0
    %v5678 = vand.u32 %v5308, 4294901760
    %5679 = vmatmul.mubr.f32.gmra.mrb[0].mxu0 %v5678
    %v5680 = vpop.f32.mrb[0].mxu0
    %v5681 = vadd.f32 %v5607, %v5680
    %v5682 = vpop.f32.mrb[0].mxu0
    %5683 = vdwg.mxu0
    %5684 = vmatprep.subr.mxu0 0.0
    %v5685 = vand.u32 %v5306, 4294901760
    %5686 = vmatpush1.msra.mxu0 %v5685
    %5687 = vmatprep.subr.mxu0 0.0
    %5688 = vmatpush1.msra.mxu0 0.0
    %5689 = vmatprep.subr.mxu0 0.0
    %5690 = vmatpush1.msra.mxu0 0.0
    %5691 = vmatprep.subr.mxu0 0.0
    %5692 = vmatpush1.msra.mxu0 0.0
    %5693 = vmatprep.subr.mxu0 0.0
    %5694 = vmatpush1.msra.mxu0 0.0
    %5695 = vmatprep.subr.mxu0 0.0
    %5696 = vmatpush1.msra.mxu0 0.0
    %5697 = vmatprep.subr.mxu0 0.0
    %5698 = vmatpush1.msra.mxu0 0.0
    %5699 = vmatprep.subr.mxu0 0.0
    %5700 = vmatpush1.msra.mxu0 0.0
    %5701 = vmatprep.subr.mxu0 0.0
    %5702 = vmatpush1.msra.mxu0 0.0
    %5703 = vmatprep.subr.mxu0 0.0
    %5704 = vmatpush1.msra.mxu0 0.0
    %5705 = vmatprep.subr.mxu0 0.0
    %5706 = vmatpush1.msra.mxu0 0.0
    %5707 = vmatprep.subr.mxu0 0.0
    %5708 = vmatpush1.msra.mxu0 0.0
    %5709 = vmatprep.subr.mxu0 0.0
    %5710 = vmatpush1.msra.mxu0 0.0
    %5711 = vmatprep.subr.mxu0 0.0
    %5712 = vmatpush1.msra.mxu0 0.0
    %5713 = vmatprep.subr.mxu0 0.0
    %5714 = vmatpush1.msra.mxu0 0.0
    %5715 = vmatprep.subr.mxu0 0.0
    %5716 = vmatpush1.msra.mxu0 0.0
    %5717 = vmatprep.subr.mxu0 0.0
    %5718 = vmatpush1.msra.mxu0 0.0
    %5719 = vmatprep.subr.mxu0 0.0
    %5720 = vmatpush1.msra.mxu0 0.0
    %5721 = vmatprep.subr.mxu0 0.0
    %5722 = vmatpush1.msra.mxu0 0.0
    %5723 = vmatprep.subr.mxu0 0.0
    %5724 = vmatpush1.msra.mxu0 0.0
    %5725 = vmatprep.subr.mxu0 0.0
    %5726 = vmatpush1.msra.mxu0 0.0
    %5727 = vmatprep.subr.mxu0 0.0
    %5728 = vmatpush1.msra.mxu0 0.0
    %5729 = vmatprep.subr.mxu0 0.0
    %5730 = vmatpush1.msra.mxu0 0.0
    %5731 = vmatprep.subr.mxu0 0.0
    %5732 = vmatpush1.msra.mxu0 0.0
    %5733 = vmatprep.subr.mxu0 0.0
    %5734 = vmatpush1.msra.mxu0 0.0
    %5735 = vmatprep.subr.mxu0 0.0
    %5736 = vmatpush1.msra.mxu0 0.0
    %5737 = vmatprep.subr.mxu0 0.0
    %5738 = vmatpush1.msra.mxu0 0.0
    %5739 = vmatprep.subr.mxu0 0.0
    %5740 = vmatpush1.msra.mxu0 0.0
    %5741 = vmatprep.subr.mxu0 0.0
    %5742 = vmatpush1.msra.mxu0 0.0
    %5743 = vmatprep.subr.mxu0 0.0
    %5744 = vmatpush1.msra.mxu0 0.0
    %5745 = vmatprep.subr.mxu0 0.0
    %5746 = vmatpush1.msra.mxu0 0.0
    %5747 = vmatprep.subr.mxu0 0.0
    %5748 = vmatpush1.msra.mxu0 0.0
    %5749 = vmatprep.mubr.f32.mxu0 0.0
    %v5750 = vand.u32 %v5308, 4294901760
    %5751 = vmatmul.mubr.f32.gmra.mrb[0].mxu0 %v5750
    %v5752 = vpop.f32.mrb[0].mxu0
    %v5753 = vadd.f32 %v5681, %v5752
    %v5754 = vpop.f32.mrb[0].mxu0
    %5755 = vdwg.mxu0
    %v5756 = vld [vmem:[%s2] sm:$0x1]
    %v5758 = vlaneseq
    %v5759 = vshrl.u32 %v5758, 7
    %v5760 = vsub.s32 0, %v5759
    %v5761 = vrot.slane %v5756, %v5760
    %v5763 = vmul.f32 %v5753, %v5761
    %v5764 = vld [vmem:[%s3] sm:$0x1]
    %v5766 = vlaneseq
    %v5767 = vshrl.u32 %v5766, 7
    %v5768 = vsub.s32 0, %v5767
    %v5769 = vrot.slane %v5764, %v5768
    %v5771 = vadd.f32 %v5763, %v5769
    %v5772 = vlaneseq
    %v5773 = vand.u32 %v5772, 127
    %vm5774 = vcmp.lt.s32.totalorder %v5773, 6
    %v5775 = vand.u32 2147483647, %v5771
    %vm5776 = vcmp.le.f32.partialorder %v5775, 0.7853982
    %vm5777 = vcmp.lt.s32.totalorder %v5771, 0
    %v5778 = vand.u32 %v5771, 2139095040
    %v5779 = vshrl.u32 %v5778, 23
    %v5780 = vsub.s32 %v5779, 127
    %v5781 = vand.u32 2147483647, %v5771
    %v5782 = vand.u32 %v5781, 8388607
    %v5783 = vor.u32 %v5782, 8388608
    %v5784 = vsub.s32 0, %v5783
    %v5785 = vadd.s32 %v5780, 1
    %vm5786 = vcmp.gt.s32.totalorder %v5785, 0
    %v5787 = vsel %vm5786, %v5785, 0
    %v5788 = vshrl.u32 %v5787, 5
    %v5789 = vand.u32 %v5787, 31
    %v5790 = vsub.s32 32, %v5789
    %v5791 = vshrl.u32 683565275, %v5790
    %v5792 = vshll.u32 683565275, %v5789
    %v5793 = vshrl.u32 2475754826, %v5790
    %v5794 = vor.u32 %v5792, %v5793
    %v5795 = vshll.u32 2475754826, %v5789
    %v5796 = vshrl.u32 2131351028, %v5790
    %v5797 = vor.u32 %v5795, %v5796
    %v5798 = vshll.u32 2131351028, %v5789
    %v5799 = vshrl.u32 2102212464, %v5790
    %v5800 = vor.u32 %v5798, %v5799
    %v5801 = vshll.u32 2102212464, %v5789
    %v5802 = vshrl.u32 920167782, %v5790
    %v5803 = vor.u32 %v5801, %v5802
    %v5804 = vshll.u32 920167782, %v5789
    %v5805 = vshrl.u32 1326507024, %v5790
    %v5806 = vor.u32 %v5804, %v5805
    %vm5807 = vcmp.lt.s32.totalorder %v5788, 1
    %vm5808 = vcmp.lt.s32.totalorder %v5788, 2
    %vm5809 = vcmp.lt.s32.totalorder %v5788, 3
    %vm5810 = vcmp.lt.s32.totalorder %v5788, 4
    %v5811 = vsel %vm5807, %v5791, %v5794
    %v5812 = vsel %vm5810, %v5800, 2102212464
    %v5813 = vsel %vm5809, %v5797, %v5812
    %v5814 = vsel %vm5808, %v5811, %v5813
    %v5815 = vsel %vm5807, %v5794, %v5797
    %v5816 = vsel %vm5810, %v5803, 920167782
    %v5817 = vsel %vm5809, %v5800, %v5816
    %v5818 = vsel %vm5808, %v5815, %v5817
    %v5819 = vsel %vm5807, %v5797, %v5800
    %v5820 = vsel %vm5810, %v5806, 1326507024
    %v5821 = vsel %vm5809, %v5803, %v5820
    %v5822 = vsel %vm5808, %v5819, %v5821
    %v5823 = vshll.u32 %v5783, 8
    %v5824 = vmul.u32.u64.compose %v5823, %v5822
    %v5825 = vextract.low.u32 %v5824
    %v5826 = vextract.high.u32 %v5824
    %v5827 = vmul.u32.u64.compose %v5823, %v5818
    %v5828 = vextract.low.u32 %v5827
    %v5829 = vextract.high.u32 %v5827
    %v5830 = vmul.u32 %v5823, %v5814
    %v5831 = vadd.s32 %v5826, %v5828
    %vm5832 = vc.u32 %v5826, %v5828
    %v5833 = vadd.s32 %v5829, 1
    %v5834 = vsel %vm5832, %v5833, %v5829
    %v5835 = vadd.s32 %v5830, %v5834
    %v5836 = vadd.s32 %v5835, 536870912
    %v5837 = vshrl.u32 %v5836, 30
    %v5838 = vshll.u32 %v5837, 30
    %v5839 = vsub.s32 %v5835, %v5838
    %vm5840 = vcmp.lt.s32.totalorder %v5839, 0
    %v5841 = vsub.s32 0, %v5839
    %v5842 = vsel %vm5840, %v5841, %v5839
    %v5843 = vclz %v5842
    %v5844 = vsub.s32 %v5843, 2
    %vm5845 = vcmp.gt.s32.totalorder 0, %v5844
    %v5846 = vsel %vm5845, 0, %v5844
    %v5847 = vsub.s32 32, %v5846
    %v5848 = vshll.u32 %v5839, %v5846
    %v5849 = vshrl.u32 %v5831, %v5847
    %v5850 = vor.u32 %v5848, %v5849
    %v5851 = vsub.s32 4294967266, %v5846
    %v5852 = vadd.s32 %v5851, 127
    %v5853 = vshll.u32 %v5852, 23
    %v5854 = vor.u32 4788187, %v5853
    %v5855 = vand.u32 2147483647, %v5854
    %v5857 = vcvt.s32.f32 %v5850
    %v5858 = vmul.f32 %v5857, %v5855
    %v5859 = vxor.u32 %v5858, 2147483648
    %v5860 = vsel %vm5777, %v5859, %v5858
    %v5861 = vsub.s32 4, %v5837
    %v5862 = vsel %vm5777, %v5861, %v5837
    %v5863 = vsel %vm5776, %v5771, %v5860
    %v5864 = vsel %vm5776, 0, %v5862
    %v5865 = vcosq.f32.pop %v5863
    %v5866 = vsinq.f32.pop %v5863
    %vm5867 = vweird.f32 %v5771
    %v5868 = vadd.s32 %v5864, 3
    %v5869 = vand.u32 %v5868, 3
    %vm5870 = vcmp.lt.s32.totalorder %v5869, 2
    %vm5871 = vcmp.eq.s32.totalorder %v5869, 0
    %v5872 = vxor.u32 %v5866, 2147483648
    %v5873 = vsel %vm5871, %v5865, %v5872
    %vm5874 = vcmp.eq.s32.totalorder %v5869, 2
    %v5875 = vxor.u32 %v5865, 2147483648
    %v5876 = vsel %vm5874, %v5875, %v5866
    %v5877 = vsel %vm5870, %v5873, %v5876
    %v5878 = vsel %vm5867, nan, %v5877
    %v5879 = vsel %vm5774, %v5753, %v5878
    %v5880 = vld [vmem:[%s4] sm:$0xff]
    %v5881 = vld [vmem:[%s4 + $0x8] sm:$0xff]
    %v5882 = vld [vmem:[%s4 + $0x10] sm:$0xff]
    %v5883 = vld [vmem:[%s4 + $0x18] sm:$0xff]
    %v5884 = vld [vmem:[%s4 + $0x20] sm:$0xff]
    %v5885 = vld [vmem:[%s4 + $0x28] sm:$0xff]
    %v5886 = vld [vmem:[%s4 + $0x30] sm:$0xff]
    %v5887 = vld [vmem:[%s4 + $0x38] sm:$0xff]
    %v5888 = vld [vmem:[%s4 + $0x40] sm:$0xff]
    %v5889 = vld [vmem:[%s4 + $0x48] sm:$0xff]
    %v5890 = vld [vmem:[%s4 + $0x50] sm:$0xff]
    %v5891 = vld [vmem:[%s4 + $0x58] sm:$0xff]
    %v5892 = vld [vmem:[%s4 + $0x60] sm:$0xff]
    %v5893 = vld [vmem:[%s4 + $0x68] sm:$0xff]
    %v5894 = vld [vmem:[%s4 + $0x70] sm:$0xff]
    %v5895 = vld [vmem:[%s4 + $0x78] sm:$0xff]
    %5896 = vmatprep.subr.mxu0 0.0
    %5897 = vmatpush1.msra.mxu0 %v5880
    %5898 = vmatprep.subr.mxu0 0.0
    %5899 = vmatpush1.msra.mxu0 %v5881
    %5900 = vmatprep.subr.mxu0 0.0
    %5901 = vmatpush1.msra.mxu0 %v5882
    %5902 = vmatprep.subr.mxu0 0.0
    %5903 = vmatpush1.msra.mxu0 %v5883
    %5904 = vmatprep.subr.mxu0 0.0
    %5905 = vmatpush1.msra.mxu0 %v5884
    %5906 = vmatprep.subr.mxu0 0.0
    %5907 = vmatpush1.msra.mxu0 %v5885
    %5908 = vmatprep.subr.mxu0 0.0
    %5909 = vmatpush1.msra.mxu0 %v5886
    %5910 = vmatprep.subr.mxu0 0.0
    %5911 = vmatpush1.msra.mxu0 %v5887
    %5912 = vmatprep.subr.mxu0 0.0
    %5913 = vmatpush1.msra.mxu0 %v5888
    %5914 = vmatprep.subr.mxu0 0.0
    %5915 = vmatpush1.msra.mxu0 %v5889
    %5916 = vmatprep.subr.mxu0 0.0
    %5917 = vmatpush1.msra.mxu0 %v5890
    %5918 = vmatprep.subr.mxu0 0.0
    %5919 = vmatpush1.msra.mxu0 %v5891
    %5920 = vmatprep.subr.mxu0 0.0
    %5921 = vmatpush1.msra.mxu0 %v5892
    %5922 = vmatprep.subr.mxu0 0.0
    %5923 = vmatpush1.msra.mxu0 %v5893
    %5924 = vmatprep.subr.mxu0 0.0
    %5925 = vmatpush1.msra.mxu0 %v5894
    %5926 = vmatprep.subr.mxu0 0.0
    %5927 = vmatpush1.msra.mxu0 %v5895
    %5928 = vmatprep.subr.mxu0 0.0
    %5929 = vmatpush1.msra.mxu0 0.0
    %5930 = vmatprep.subr.mxu0 0.0
    %5931 = vmatpush1.msra.mxu0 0.0
    %5932 = vmatprep.subr.mxu0 0.0
    %5933 = vmatpush1.msra.mxu0 0.0
    %5934 = vmatprep.subr.mxu0 0.0
    %5935 = vmatpush1.msra.mxu0 0.0
    %5936 = vmatprep.subr.mxu0 0.0
    %5937 = vmatpush1.msra.mxu0 0.0
    %5938 = vmatprep.subr.mxu0 0.0
    %5939 = vmatpush1.msra.mxu0 0.0
    %5940 = vmatprep.subr.mxu0 0.0
    %5941 = vmatpush1.msra.mxu0 0.0
    %5942 = vmatprep.subr.mxu0 0.0
    %5943 = vmatpush1.msra.mxu0 0.0
    %5944 = vmatprep.subr.mxu0 0.0
    %5945 = vmatpush1.msra.mxu0 0.0
    %5946 = vmatprep.subr.mxu0 0.0
    %5947 = vmatpush1.msra.mxu0 0.0
    %5948 = vmatprep.subr.mxu0 0.0
    %5949 = vmatpush1.msra.mxu0 0.0
    %5950 = vmatprep.subr.mxu0 0.0
    %5951 = vmatpush1.msra.mxu0 0.0
    %5952 = vmatprep.subr.mxu0 0.0
    %5953 = vmatpush1.msra.mxu0 0.0
    %5954 = vmatprep.subr.mxu0 0.0
    %5955 = vmatpush1.msra.mxu0 0.0
    %5956 = vmatprep.subr.mxu0 0.0
    %5957 = vmatpush1.msra.mxu0 0.0
    %5958 = vmatprep.subr.mxu0 0.0
    %5959 = vmatpush1.msra.mxu0 0.0
    %5960 = vmatprep.mubr.f32.mxu0 0.0
    %5961 = vmatmul.mubr.f32.gmra.mrb[0].mxu0 %v5879
    %v5962 = vpop.f32.mrb[0].mxu0
    %v5963 = vadd.f32 0.0, %v5962
    %v5964 = vpop.f32.mrb[0].mxu0
    %5965 = vdwg.mxu0
    %v5966 = vld [vmem:[%s5] sm:$0x1]
    %v5967 = vld [vmem:[%s6] sm:$0x1]
    %vm5968 = vcmask 523264
    %v5969 = vsel %vm5968, %v5963, 0.0
    %v5970 = vrot.slane %v5969, 4
    %v5971 = vadd.f32 %v5969, %v5970
    %v5972 = vrot.slane %v5971, 2
    %v5973 = vadd.f32 %v5971, %v5972
    %v5974 = vrot.slane %v5973, 1
    %v5975 = vadd.f32 %v5973, %v5974
    %v5976 = vmul.f32 %v5963, %v5963
    %v5977 = vsel %vm5968, %v5976, 0.0
    %v5978 = vrot.slane %v5977, 4
    %v5979 = vadd.f32 %v5977, %v5978
    %v5980 = vrot.slane %v5979, 2
    %v5981 = vadd.f32 %v5979, %v5980
    %v5982 = vrot.slane %v5981, 1
    %v5983 = vadd.f32 %v5981, %v5982
    %v5984 = vmul.f32 %v5975, 0.125
    %v5985 = vmul.f32 %v5983, 0.125
    %v5986 = vmul.f32 %v5984, %v5984
    %v5987 = vsub.f32 %v5985, %v5986
    %v5988 = vmax.f32 %v5987, 0.0
    %v5989 = vadd.f32 %v5988, 1e-05
    %v5990 = vrsqrt.pop %v5989
    %v5991 = vmul.f32 %v5966, %v5990
    %v5992 = vmul.f32 %v5984, %v5991
    %v5993 = vsub.f32 %v5967, %v5992
    %v5995 = vlaneseq
    %v5996 = vshrl.u32 %v5995, 7
    %v5997 = vsub.s32 0, %v5996
    %v5998 = vrot.slane %v5991, %v5997
    %v6000 = vmul.f32 %v5963, %v5998
    %v6002 = vlaneseq
    %v6003 = vshrl.u32 %v6002, 7
    %v6004 = vsub.s32 0, %v6003
    %v6005 = vrot.slane %v5993, %v6004
    %v6007 = vadd.f32 %v6000, %v6005
    %v6008 = vmax.f32 %v6007, 0.0
    %v6009 = vld [vmem:[%s7] sm:$0xff]
    %v6010 = vld [vmem:[%s7 + $0x8] sm:$0xff]
    %v6011 = vld [vmem:[%s7 + $0x10] sm:$0xff]
    %v6012 = vld [vmem:[%s7 + $0x18] sm:$0xff]
    %v6013 = vld [vmem:[%s7 + $0x20] sm:$0xff]
    %v6014 = vld [vmem:[%s7 + $0x28] sm:$0xff]
    %v6015 = vld [vmem:[%s7 + $0x30] sm:$0xff]
    %v6016 = vld [vmem:[%s7 + $0x38] sm:$0xff]
    %v6017 = vld [vmem:[%s7 + $0x40] sm:$0xff]
    %v6018 = vld [vmem:[%s7 + $0x48] sm:$0xff]
    %v6019 = vld [vmem:[%s7 + $0x50] sm:$0xff]
    %v6020 = vld [vmem:[%s7 + $0x58] sm:$0xff]
    %v6021 = vld [vmem:[%s7 + $0x60] sm:$0xff]
    %v6022 = vld [vmem:[%s7 + $0x68] sm:$0xff]
    %v6023 = vld [vmem:[%s7 + $0x70] sm:$0xff]
    %v6024 = vld [vmem:[%s7 + $0x78] sm:$0xff]
    %v6026 = vsel %vm5968, %v6008, 0
    %6028 = vmatprep.subr.mxu0 %v6010
    %6029 = vmatpush1.msra.mxu0 %v6009
    %6030 = vmatprep.subr.mxu0 %v6012
    %6031 = vmatpush1.msra.mxu0 %v6011
    %6032 = vmatprep.subr.mxu0 %v6014
    %6033 = vmatpush1.msra.mxu0 %v6013
    %6034 = vmatprep.subr.mxu0 %v6016
    %6035 = vmatpush1.msra.mxu0 %v6015
    %6036 = vmatprep.subr.mxu0 %v6018
    %6037 = vmatpush1.msra.mxu0 %v6017
    %6038 = vmatprep.subr.mxu0 %v6020
    %6039 = vmatpush1.msra.mxu0 %v6019
    %6040 = vmatprep.subr.mxu0 %v6022
    %6041 = vmatpush1.msra.mxu0 %v6021
    %6042 = vmatprep.subr.mxu0 %v6024
    %6043 = vmatpush1.msra.mxu0 %v6023
    %6044 = vmatprep.subr.mxu0 0.0
    %6045 = vmatpush1.msra.mxu0 0.0
    %6046 = vmatprep.subr.mxu0 0.0
    %6047 = vmatpush1.msra.mxu0 0.0
    %6048 = vmatprep.subr.mxu0 0.0
    %6049 = vmatpush1.msra.mxu0 0.0
    %6050 = vmatprep.subr.mxu0 0.0
    %6051 = vmatpush1.msra.mxu0 0.0
    %6052 = vmatprep.subr.mxu0 0.0
    %6053 = vmatpush1.msra.mxu0 0.0
    %6054 = vmatprep.subr.mxu0 0.0
    %6055 = vmatpush1.msra.mxu0 0.0
    %6056 = vmatprep.subr.mxu0 0.0
    %6057 = vmatpush1.msra.mxu0 0.0
    %6058 = vmatprep.subr.mxu0 0.0
    %6059 = vmatpush1.msra.mxu0 0.0
    %6060 = vmatprep.subr.mxu0 0.0
    %6061 = vmatpush1.msra.mxu0 0.0
    %6062 = vmatprep.subr.mxu0 0.0
    %6063 = vmatpush1.msra.mxu0 0.0
    %6064 = vmatprep.subr.mxu0 0.0
    %6065 = vmatpush1.msra.mxu0 0.0
    %6066 = vmatprep.subr.mxu0 0.0
    %6067 = vmatpush1.msra.mxu0 0.0
    %6068 = vmatprep.subr.mxu0 0.0
    %6069 = vmatpush1.msra.mxu0 0.0
    %6070 = vmatprep.subr.mxu0 0.0
    %6071 = vmatpush1.msra.mxu0 0.0
    %6072 = vmatprep.subr.mxu0 0.0
    %6073 = vmatpush1.msra.mxu0 0.0
    %6074 = vmatprep.subr.mxu0 0.0
    %6075 = vmatpush1.msra.mxu0 0.0
    %6076 = vmatprep.subr.mxu0 0.0
    %6077 = vmatpush1.msra.mxu0 0.0
    %6078 = vmatprep.subr.mxu0 0.0
    %6079 = vmatpush1.msra.mxu0 0.0
    %6080 = vmatprep.subr.mxu0 0.0
    %6081 = vmatpush1.msra.mxu0 0.0
    %6082 = vmatprep.subr.mxu0 0.0
    %6083 = vmatpush1.msra.mxu0 0.0
    %6084 = vmatprep.subr.mxu0 0.0
    %6085 = vmatpush1.msra.mxu0 0.0
    %6086 = vmatprep.subr.mxu0 0.0
    %6087 = vmatpush1.msra.mxu0 0.0
    %6088 = vmatprep.subr.mxu0 0.0
    %6089 = vmatpush1.msra.mxu0 0.0
    %6090 = vmatprep.subr.mxu0 0.0
    %6091 = vmatpush1.msra.mxu0 0.0
    %6092 = vmatprep.mubr.f32.mxu0 0.0
    %6093 = vmatmul.mubr.f32.gmra.mrb[0].mxu0 %v6026
    %v6094 = vpop.f32.mrb[0].mxu0
    %v6095 = vadd.f32 0.0, %v6094
    %v6096 = vpop.f32.mrb[0].mxu0
    %v6097 = vadd.f32 0.0, %v6096
    %6098 = vdwg.mxu0
    %v6099 = vld [vmem:[%s8] sm:$0x3]
    %v6100 = vld [vmem:[%s9] sm:$0x3]
    %v6101 = vrot.slane %v6095, 4
    %v6102 = vadd.f32 %v6095, %v6101
    %v6103 = vrot.slane %v6102, 2
    %v6104 = vadd.f32 %v6102, %v6103
    %v6105 = vrot.slane %v6104, 1
    %v6106 = vadd.f32 %v6104, %v6105
    %v6107 = vrot.slane %v6097, 4
    %v6108 = vadd.f32 %v6097, %v6107
    %v6109 = vrot.slane %v6108, 2
    %v6110 = vadd.f32 %v6108, %v6109
    %v6111 = vrot.slane %v6110, 1
    %v6112 = vadd.f32 %v6110, %v6111
    %v6113 = vmul.f32 %v6095, %v6095
    %v6114 = vmul.f32 %v6097, %v6097
    %v6115 = vrot.slane %v6113, 4
    %v6116 = vadd.f32 %v6113, %v6115
    %v6117 = vrot.slane %v6116, 2
    %v6118 = vadd.f32 %v6116, %v6117
    %v6119 = vrot.slane %v6118, 1
    %v6120 = vadd.f32 %v6118, %v6119
    %v6121 = vrot.slane %v6114, 4
    %v6122 = vadd.f32 %v6114, %v6121
    %v6123 = vrot.slane %v6122, 2
    %v6124 = vadd.f32 %v6122, %v6123
    %v6125 = vrot.slane %v6124, 1
    %v6126 = vadd.f32 %v6124, %v6125
    %v6127 = vmul.f32 %v6106, 0.125
    %v6128 = vmul.f32 %v6112, 0.125
    %v6129 = vmul.f32 %v6120, 0.125
    %v6130 = vmul.f32 %v6126, 0.125
    %v6131 = vmul.f32 %v6127, %v6127
    %v6132 = vmul.f32 %v6128, %v6128
    %v6133 = vsub.f32 %v6129, %v6131
    %v6134 = vsub.f32 %v6130, %v6132
    %v6135 = vmax.f32 %v6133, 0.0
    %v6136 = vmax.f32 %v6134, 0.0
    %v6137 = vadd.f32 %v6135, 1e-05
    %v6138 = vadd.f32 %v6136, 1e-05
    %v6139 = vrsqrt.pop %v6137
    %v6140 = vrsqrt.pop %v6138
    %v6143 = vcombine.low %v6139, %v6140
    %v6145 = vunpack.c.l.s4 1966171168
    %v6146 = vunpack.c.0.s8 %v6145
    %v6147 = vlaneseq
    %v6148 = vshrl.u32 %v6147, 7
    %v6149 = vsub.s32 %v6146, %v6148
    %v6150 = vrot.slane %v6143, %v6149
    %v6152 = vunpack.c.l.s4 1966171168
    %v6153 = vunpack.c.0.s8 %v6152
    %v6154 = vlaneseq
    %v6155 = vshrl.u32 %v6154, 7
    %v6156 = vsub.s32 %v6153, %v6155
    %v6157 = vrot.slane %v6150, %v6156
    %v6159 = vmul.f32 %v6099, %v6157
    %v6161 = vlaneseq
    %v6162 = vshrl.u32 %v6161, 7
    %v6163 = vsub.s32 0, %v6162
    %v6164 = vrot.slane %v6159, %v6163
    %v6165 = vlaneseq
    %v6166 = vshrl.u32 %v6165, 7
    %v6167 = vsub.s32 1, %v6166
    %v6168 = vrot.slane %v6159, %v6167
    %v6171 = vmul.f32 %v6127, %v6164
    %v6172 = vmul.f32 %v6128, %v6168
    %v6175 = vcombine.low %v6171, %v6172
    %v6177 = vunpack.c.l.s4 1966171168
    %v6178 = vunpack.c.0.s8 %v6177
    %v6179 = vlaneseq
    %v6180 = vshrl.u32 %v6179, 7
    %v6181 = vsub.s32 %v6178, %v6180
    %v6182 = vrot.slane %v6175, %v6181
    %v6184 = vunpack.c.l.s4 1966171168
    %v6185 = vunpack.c.0.s8 %v6184
    %v6186 = vlaneseq
    %v6187 = vshrl.u32 %v6186, 7
    %v6188 = vsub.s32 %v6185, %v6187
    %v6189 = vrot.slane %v6182, %v6188
    %v6191 = vsub.f32 %v6100, %v6189
    %v6192 = vmul.f32 %v6095, %v6164
    %v6193 = vmul.f32 %v6097, %v6168
    %v6195 = vlaneseq
    %v6196 = vshrl.u32 %v6195, 7
    %v6197 = vsub.s32 0, %v6196
    %v6198 = vrot.slane %v6191, %v6197
    %v6199 = vlaneseq
    %v6200 = vshrl.u32 %v6199, 7
    %v6201 = vsub.s32 1, %v6200
    %v6202 = vrot.slane %v6191, %v6201
    %v6205 = vadd.f32 %v6192, %v6198
    %v6206 = vadd.f32 %v6193, %v6202
    %v6207 = vmax.f32 %v6205, 0.0
    %v6208 = vmax.f32 %v6206, 0.0
    %s6209 = smul.u32 4, 32
    %s6210 = smul.u32 %s6209, 8
    %s6211 = sshll.u32 %s6210, 4
    %6212 = dma.done [#allocation4], %s6211
    %v6213 = vpack.c.bf16 %v6207, %v6207
    %v6214 = vpack.c.bf16 %v6208, %v6208
    %v6215 = vld [vmem:[#allocation2] sm:$0xff]
    %v6216 = vld [vmem:[#allocation2 + $0x8] sm:$0xff]
    %v6217 = vld [vmem:[#allocation2 + $0x10] sm:$0xff]
    %v6218 = vld [vmem:[#allocation2 + $0x18] sm:$0xff]
    %v6219 = vld [vmem:[#allocation2 + $0x20] sm:$0xff]
    %v6220 = vld [vmem:[#allocation2 + $0x28] sm:$0xff]
    %v6221 = vld [vmem:[#allocation2 + $0x30] sm:$0xff]
    %v6222 = vld [vmem:[#allocation2 + $0x38] sm:$0xff]
    %v6223 = vld [vmem:[#allocation2 + $0x40] sm:$0xff]
    %v6224 = vld [vmem:[#allocation2 + $0x48] sm:$0xff]
    %v6225 = vld [vmem:[#allocation2 + $0x50] sm:$0xff]
    %v6226 = vld [vmem:[#allocation2 + $0x58] sm:$0xff]
    %v6227 = vld [vmem:[#allocation2 + $0x60] sm:$0xff]
    %v6228 = vld [vmem:[#allocation2 + $0x68] sm:$0xff]
    %v6229 = vld [vmem:[#allocation2 + $0x70] sm:$0xff]
    %v6230 = vld [vmem:[#allocation2 + $0x78] sm:$0xff]
    %v6231 = vld [vmem:[#allocation2 + $0x80] sm:$0xff]
    %v6232 = vld [vmem:[#allocation2 + $0x88] sm:$0xff]
    %v6233 = vld [vmem:[#allocation2 + $0x90] sm:$0xff]
    %v6234 = vld [vmem:[#allocation2 + $0x98] sm:$0xff]
    %v6235 = vld [vmem:[#allocation2 + $0xa0] sm:$0xff]
    %v6236 = vld [vmem:[#allocation2 + $0xa8] sm:$0xff]
    %v6237 = vld [vmem:[#allocation2 + $0xb0] sm:$0xff]
    %v6238 = vld [vmem:[#allocation2 + $0xb8] sm:$0xff]
    %v6239 = vld [vmem:[#allocation2 + $0xc0] sm:$0xff]
    %v6240 = vld [vmem:[#allocation2 + $0xc8] sm:$0xff]
    %v6241 = vld [vmem:[#allocation2 + $0xd0] sm:$0xff]
    %v6242 = vld [vmem:[#allocation2 + $0xd8] sm:$0xff]
    %v6243 = vld [vmem:[#allocation2 + $0xe0] sm:$0xff]
    %v6244 = vld [vmem:[#allocation2 + $0xe8] sm:$0xff]
    %v6245 = vld [vmem:[#allocation2 + $0xf0] sm:$0xff]
    %v6246 = vld [vmem:[#allocation2 + $0xf8] sm:$0xff]
    %v6247 = vld [vmem:[#allocation2 + $0x100] sm:$0xff]
    %v6248 = vld [vmem:[#allocation2 + $0x108] sm:$0xff]
    %v6249 = vld [vmem:[#allocation2 + $0x110] sm:$0xff]
    %v6250 = vld [vmem:[#allocation2 + $0x118] sm:$0xff]
    %v6251 = vld [vmem:[#allocation2 + $0x120] sm:$0xff]
    %v6252 = vld [vmem:[#allocation2 + $0x128] sm:$0xff]
    %v6253 = vld [vmem:[#allocation2 + $0x130] sm:$0xff]
    %v6254 = vld [vmem:[#allocation2 + $0x138] sm:$0xff]
    %v6255 = vld [vmem:[#allocation2 + $0x140] sm:$0xff]
    %v6256 = vld [vmem:[#allocation2 + $0x148] sm:$0xff]
    %v6257 = vld [vmem:[#allocation2 + $0x150] sm:$0xff]
    %v6258 = vld [vmem:[#allocation2 + $0x158] sm:$0xff]
    %v6259 = vld [vmem:[#allocation2 + $0x160] sm:$0xff]
    %v6260 = vld [vmem:[#allocation2 + $0x168] sm:$0xff]
    %v6261 = vld [vmem:[#allocation2 + $0x170] sm:$0xff]
    %v6262 = vld [vmem:[#allocation2 + $0x178] sm:$0xff]
    %v6263 = vld [vmem:[#allocation2 + $0x180] sm:$0xff]
    %v6264 = vld [vmem:[#allocation2 + $0x188] sm:$0xff]
    %v6265 = vld [vmem:[#allocation2 + $0x190] sm:$0xff]
    %v6266 = vld [vmem:[#allocation2 + $0x198] sm:$0xff]
    %v6267 = vld [vmem:[#allocation2 + $0x1a0] sm:$0xff]
    %v6268 = vld [vmem:[#allocation2 + $0x1a8] sm:$0xff]
    %v6269 = vld [vmem:[#allocation2 + $0x1b0] sm:$0xff]
    %v6270 = vld [vmem:[#allocation2 + $0x1b8] sm:$0xff]
    %v6271 = vld [vmem:[#allocation2 + $0x1c0] sm:$0xff]
    %v6272 = vld [vmem:[#allocation2 + $0x1c8] sm:$0xff]
    %v6273 = vld [vmem:[#allocation2 + $0x1d0] sm:$0xff]
    %v6274 = vld [vmem:[#allocation2 + $0x1d8] sm:$0xff]
    %v6275 = vld [vmem:[#allocation2 + $0x1e0] sm:$0xff]
    %v6276 = vld [vmem:[#allocation2 + $0x1e8] sm:$0xff]
    %v6277 = vld [vmem:[#allocation2 + $0x1f0] sm:$0xff]
    %v6278 = vld [vmem:[#allocation2 + $0x1f8] sm:$0xff]
    %v6279 = vld [vmem:[#allocation2 + $0x200] sm:$0xff]
    %v6280 = vld [vmem:[#allocation2 + $0x208] sm:$0xff]
    %v6281 = vld [vmem:[#allocation2 + $0x210] sm:$0xff]
    %v6282 = vld [vmem:[#allocation2 + $0x218] sm:$0xff]
    %v6283 = vld [vmem:[#allocation2 + $0x220] sm:$0xff]
    %v6284 = vld [vmem:[#allocation2 + $0x228] sm:$0xff]
    %v6285 = vld [vmem:[#allocation2 + $0x230] sm:$0xff]
    %v6286 = vld [vmem:[#allocation2 + $0x238] sm:$0xff]
    %v6287 = vld [vmem:[#allocation2 + $0x240] sm:$0xff]
    %v6288 = vld [vmem:[#allocation2 + $0x248] sm:$0xff]
    %v6289 = vld [vmem:[#allocation2 + $0x250] sm:$0xff]
    %v6290 = vld [vmem:[#allocation2 + $0x258] sm:$0xff]
    %v6291 = vld [vmem:[#allocation2 + $0x260] sm:$0xff]
    %v6292 = vld [vmem:[#allocation2 + $0x268] sm:$0xff]
    %v6293 = vld [vmem:[#allocation2 + $0x270] sm:$0xff]
    %v6294 = vld [vmem:[#allocation2 + $0x278] sm:$0xff]
    %v6295 = vld [vmem:[#allocation2 + $0x280] sm:$0xff]
    %v6296 = vld [vmem:[#allocation2 + $0x288] sm:$0xff]
    %v6297 = vld [vmem:[#allocation2 + $0x290] sm:$0xff]
    %v6298 = vld [vmem:[#allocation2 + $0x298] sm:$0xff]
    %v6299 = vld [vmem:[#allocation2 + $0x2a0] sm:$0xff]
    %v6300 = vld [vmem:[#allocation2 + $0x2a8] sm:$0xff]
    %v6301 = vld [vmem:[#allocation2 + $0x2b0] sm:$0xff]
    %v6302 = vld [vmem:[#allocation2 + $0x2b8] sm:$0xff]
    %v6303 = vld [vmem:[#allocation2 + $0x2c0] sm:$0xff]
    %v6304 = vld [vmem:[#allocation2 + $0x2c8] sm:$0xff]
    %v6305 = vld [vmem:[#allocation2 + $0x2d0] sm:$0xff]
    %v6306 = vld [vmem:[#allocation2 + $0x2d8] sm:$0xff]
    %v6307 = vld [vmem:[#allocation2 + $0x2e0] sm:$0xff]
    %v6308 = vld [vmem:[#allocation2 + $0x2e8] sm:$0xff]
    %v6309 = vld [vmem:[#allocation2 + $0x2f0] sm:$0xff]
    %v6310 = vld [vmem:[#allocation2 + $0x2f8] sm:$0xff]
    %v6311 = vld [vmem:[#allocation2 + $0x300] sm:$0xff]
    %v6312 = vld [vmem:[#allocation2 + $0x308] sm:$0xff]
    %v6313 = vld [vmem:[#allocation2 + $0x310] sm:$0xff]
    %v6314 = vld [vmem:[#allocation2 + $0x318] sm:$0xff]
    %v6315 = vld [vmem:[#allocation2 + $0x320] sm:$0xff]
    %v6316 = vld [vmem:[#allocation2 + $0x328] sm:$0xff]
    %v6317 = vld [vmem:[#allocation2 + $0x330] sm:$0xff]
    %v6318 = vld [vmem:[#allocation2 + $0x338] sm:$0xff]
    %v6319 = vld [vmem:[#allocation2 + $0x340] sm:$0xff]
    %v6320 = vld [vmem:[#allocation2 + $0x348] sm:$0xff]
    %v6321 = vld [vmem:[#allocation2 + $0x350] sm:$0xff]
    %v6322 = vld [vmem:[#allocation2 + $0x358] sm:$0xff]
    %v6323 = vld [vmem:[#allocation2 + $0x360] sm:$0xff]
    %v6324 = vld [vmem:[#allocation2 + $0x368] sm:$0xff]
    %v6325 = vld [vmem:[#allocation2 + $0x370] sm:$0xff]
    %v6326 = vld [vmem:[#allocation2 + $0x378] sm:$0xff]
    %v6327 = vld [vmem:[#allocation2 + $0x380] sm:$0xff]
    %v6328 = vld [vmem:[#allocation2 + $0x388] sm:$0xff]
    %v6329 = vld [vmem:[#allocation2 + $0x390] sm:$0xff]
    %v6330 = vld [vmem:[#allocation2 + $0x398] sm:$0xff]
    %v6331 = vld [vmem:[#allocation2 + $0x3a0] sm:$0xff]
    %v6332 = vld [vmem:[#allocation2 + $0x3a8] sm:$0xff]
    %v6333 = vld [vmem:[#allocation2 + $0x3b0] sm:$0xff]
    %v6334 = vld [vmem:[#allocation2 + $0x3b8] sm:$0xff]
    %v6335 = vld [vmem:[#allocation2 + $0x3c0] sm:$0xff]
    %v6336 = vld [vmem:[#allocation2 + $0x3c8] sm:$0xff]
    %v6337 = vld [vmem:[#allocation2 + $0x3d0] sm:$0xff]
    %v6338 = vld [vmem:[#allocation2 + $0x3d8] sm:$0xff]
    %v6339 = vld [vmem:[#allocation2 + $0x3e0] sm:$0xff]
    %v6340 = vld [vmem:[#allocation2 + $0x3e8] sm:$0xff]
    %v6341 = vld [vmem:[#allocation2 + $0x3f0] sm:$0xff]
    %v6342 = vld [vmem:[#allocation2 + $0x3f8] sm:$0xff]
    %6343 = vmatprep.subr.bf16.mxu0 %v6216
    %6344 = vmatpush1.bf16.msra.mxu0 %v6215
    %6345 = vmatprep.subr.bf16.mxu0 %v6224
    %6346 = vmatpush1.bf16.msra.mxu0 %v6223
    %6347 = vmatprep.subr.bf16.mxu0 %v6232
    %6348 = vmatpush1.bf16.msra.mxu0 %v6231
    %6349 = vmatprep.subr.bf16.mxu0 %v6240
    %6350 = vmatpush1.bf16.msra.mxu0 %v6239
    %6351 = vmatprep.subr.bf16.mxu0 %v6248
    %6352 = vmatpush1.bf16.msra.mxu0 %v6247
    %6353 = vmatprep.subr.bf16.mxu0 %v6256
    %6354 = vmatpush1.bf16.msra.mxu0 %v6255
    %6355 = vmatprep.subr.bf16.mxu0 %v6264
    %6356 = vmatpush1.bf16.msra.mxu0 %v6263
    %6357 = vmatprep.subr.bf16.mxu0 %v6272
    %6358 = vmatpush1.bf16.msra.mxu0 %v6271
    %6359 = vmatprep.subr.bf16.mxu0 %v6280
    %6360 = vmatpush1.bf16.msra.mxu0 %v6279
    %6361 = vmatprep.subr.bf16.mxu0 %v6288
    %6362 = vmatpush1.bf16.msra.mxu0 %v6287
    %6363 = vmatprep.subr.bf16.mxu0 %v6296
    %6364 = vmatpush1.bf16.msra.mxu0 %v6295
    %6365 = vmatprep.subr.bf16.mxu0 %v6304
    %6366 = vmatpush1.bf16.msra.mxu0 %v6303
    %6367 = vmatprep.subr.bf16.mxu0 %v6312
    %6368 = vmatpush1.bf16.msra.mxu0 %v6311
    %6369 = vmatprep.subr.bf16.mxu0 %v6320
    %6370 = vmatpush1.bf16.msra.mxu0 %v6319
    %6371 = vmatprep.subr.bf16.mxu0 %v6328
    %6372 = vmatpush1.bf16.msra.mxu0 %v6327
    %6373 = vmatprep.subr.bf16.mxu0 %v6336
    %6374 = vmatpush1.bf16.msra.mxu0 %v6335
    %6375 = vmatprep.mubr.bf16.mxu0 %v6214
    %6376 = vmatmul.mubr.bf16.gmra.mrb[0].mxu0 %v6213
    %v6377 = vpop.f32.mrb[0].mxu0
    %v6378 = vadd.f32 0.0, %v6377
    %v6379 = vpop.f32.mrb[0].mxu0
    %v6380 = vadd.f32 0.0, %v6379
    %v6381 = vpop.f32.mrb[0].mxu0
    %v6382 = vpop.f32.mrb[0].mxu0
    %6383 = vdwg.mxu0
    %6384 = vmatprep.subr.bf16.mxu0 %v6218
    %6385 = vmatpush1.bf16.msra.mxu0 %v6217
    %6386 = vmatprep.subr.bf16.mxu0 %v6226
    %6387 = vmatpush1.bf16.msra.mxu0 %v6225
    %6388 = vmatprep.subr.bf16.mxu0 %v6234
    %6389 = vmatpush1.bf16.msra.mxu0 %v6233
    %6390 = vmatprep.subr.bf16.mxu0 %v6242
    %6391 = vmatpush1.bf16.msra.mxu0 %v6241
    %6392 = vmatprep.subr.bf16.mxu0 %v6250
    %6393 = vmatpush1.bf16.msra.mxu0 %v6249
    %6394 = vmatprep.subr.bf16.mxu0 %v6258
    %6395 = vmatpush1.bf16.msra.mxu0 %v6257
    %6396 = vmatprep.subr.bf16.mxu0 %v6266
    %6397 = vmatpush1.bf16.msra.mxu0 %v6265
    %6398 = vmatprep.subr.bf16.mxu0 %v6274
    %6399 = vmatpush1.bf16.msra.mxu0 %v6273
    %6400 = vmatprep.subr.bf16.mxu0 %v6282
    %6401 = vmatpush1.bf16.msra.mxu0 %v6281
    %6402 = vmatprep.subr.bf16.mxu0 %v6290
    %6403 = vmatpush1.bf16.msra.mxu0 %v6289
    %6404 = vmatprep.subr.bf16.mxu0 %v6298
    %6405 = vmatpush1.bf16.msra.mxu0 %v6297
    %6406 = vmatprep.subr.bf16.mxu0 %v6306
    %6407 = vmatpush1.bf16.msra.mxu0 %v6305
    %6408 = vmatprep.subr.bf16.mxu0 %v6314
    %6409 = vmatpush1.bf16.msra.mxu0 %v6313
    %6410 = vmatprep.subr.bf16.mxu0 %v6322
    %6411 = vmatpush1.bf16.msra.mxu0 %v6321
    %6412 = vmatprep.subr.bf16.mxu0 %v6330
    %6413 = vmatpush1.bf16.msra.mxu0 %v6329
    %6414 = vmatprep.subr.bf16.mxu0 %v6338
    %6415 = vmatpush1.bf16.msra.mxu0 %v6337
    %6416 = vmatprep.mubr.bf16.mxu0 %v6214
    %6417 = vmatmul.mubr.bf16.gmra.mrb[0].mxu0 %v6213
    %v6418 = vpop.f32.mrb[0].mxu0
    %v6419 = vadd.f32 0.0, %v6418
    %v6420 = vpop.f32.mrb[0].mxu0
    %v6421 = vadd.f32 0.0, %v6420
    %v6422 = vpop.f32.mrb[0].mxu0
    %v6423 = vpop.f32.mrb[0].mxu0
    %6424 = vdwg.mxu0
    %6425 = vmatprep.subr.bf16.mxu0 %v6220
    %6426 = vmatpush1.bf16.msra.mxu0 %v6219
    %6427 = vmatprep.subr.bf16.mxu0 %v6228
    %6428 = vmatpush1.bf16.msra.mxu0 %v6227
    %6429 = vmatprep.subr.bf16.mxu0 %v6236
    %6430 = vmatpush1.bf16.msra.mxu0 %v6235
    %6431 = vmatprep.subr.bf16.mxu0 %v6244
    %6432 = vmatpush1.bf16.msra.mxu0 %v6243
    %6433 = vmatprep.subr.bf16.mxu0 %v6252
    %6434 = vmatpush1.bf16.msra.mxu0 %v6251
    %6435 = vmatprep.subr.bf16.mxu0 %v6260
    %6436 = vmatpush1.bf16.msra.mxu0 %v6259
    %6437 = vmatprep.subr.bf16.mxu0 %v6268
    %6438 = vmatpush1.bf16.msra.mxu0 %v6267
    %6439 = vmatprep.subr.bf16.mxu0 %v6276
    %6440 = vmatpush1.bf16.msra.mxu0 %v6275
    %6441 = vmatprep.subr.bf16.mxu0 %v6284
    %6442 = vmatpush1.bf16.msra.mxu0 %v6283
    %6443 = vmatprep.subr.bf16.mxu0 %v6292
    %6444 = vmatpush1.bf16.msra.mxu0 %v6291
    %6445 = vmatprep.subr.bf16.mxu0 %v6300
    %6446 = vmatpush1.bf16.msra.mxu0 %v6299
    %6447 = vmatprep.subr.bf16.mxu0 %v6308
    %6448 = vmatpush1.bf16.msra.mxu0 %v6307
    %6449 = vmatprep.subr.bf16.mxu0 %v6316
    %6450 = vmatpush1.bf16.msra.mxu0 %v6315
    %6451 = vmatprep.subr.bf16.mxu0 %v6324
    %6452 = vmatpush1.bf16.msra.mxu0 %v6323
    %6453 = vmatprep.subr.bf16.mxu0 %v6332
    %6454 = vmatpush1.bf16.msra.mxu0 %v6331
    %6455 = vmatprep.subr.bf16.mxu0 %v6340
    %6456 = vmatpush1.bf16.msra.mxu0 %v6339
    %6457 = vmatprep.mubr.bf16.mxu0 %v6214
    %6458 = vmatmul.mubr.bf16.gmra.mrb[0].mxu0 %v6213
    %v6459 = vpop.f32.mrb[0].mxu0
    %v6460 = vadd.f32 0.0, %v6459
    %v6461 = vpop.f32.mrb[0].mxu0
    %v6462 = vadd.f32 0.0, %v6461
    %v6463 = vpop.f32.mrb[0].mxu0
    %v6464 = vpop.f32.mrb[0].mxu0
    %6465 = vdwg.mxu0
    %6466 = vmatprep.subr.bf16.mxu0 %v6222
    %6467 = vmatpush1.bf16.msra.mxu0 %v6221
    %6468 = vmatprep.subr.bf16.mxu0 %v6230
    %6469 = vmatpush1.bf16.msra.mxu0 %v6229
    %6470 = vmatprep.subr.bf16.mxu0 %v6238
    %6471 = vmatpush1.bf16.msra.mxu0 %v6237
    %6472 = vmatprep.subr.bf16.mxu0 %v6246
    %6473 = vmatpush1.bf16.msra.mxu0 %v6245
    %6474 = vmatprep.subr.bf16.mxu0 %v6254
    %6475 = vmatpush1.bf16.msra.mxu0 %v6253
    %6476 = vmatprep.subr.bf16.mxu0 %v6262
    %6477 = vmatpush1.bf16.msra.mxu0 %v6261
    %6478 = vmatprep.subr.bf16.mxu0 %v6270
    %6479 = vmatpush1.bf16.msra.mxu0 %v6269
    %6480 = vmatprep.subr.bf16.mxu0 %v6278
    %6481 = vmatpush1.bf16.msra.mxu0 %v6277
    %6482 = vmatprep.subr.bf16.mxu0 %v6286
    %6483 = vmatpush1.bf16.msra.mxu0 %v6285
    %6484 = vmatprep.subr.bf16.mxu0 %v6294
    %6485 = vmatpush1.bf16.msra.mxu0 %v6293
    %6486 = vmatprep.subr.bf16.mxu0 %v6302
    %6487 = vmatpush1.bf16.msra.mxu0 %v6301
    %6488 = vmatprep.subr.bf16.mxu0 %v6310
    %6489 = vmatpush1.bf16.msra.mxu0 %v6309
    %6490 = vmatprep.subr.bf16.mxu0 %v6318
    %6491 = vmatpush1.bf16.msra.mxu0 %v6317
    %6492 = vmatprep.subr.bf16.mxu0 %v6326
    %6493 = vmatpush1.bf16.msra.mxu0 %v6325
    %6494 = vmatprep.subr.bf16.mxu0 %v6334
    %6495 = vmatpush1.bf16.msra.mxu0 %v6333
    %6496 = vmatprep.subr.bf16.mxu0 %v6342
    %6497 = vmatpush1.bf16.msra.mxu0 %v6341
    %6498 = vmatprep.mubr.bf16.mxu0 %v6214
    %6499 = vmatmul.mubr.bf16.gmra.mrb[0].mxu0 %v6213
    %v6500 = vpop.f32.mrb[0].mxu0
    %v6501 = vadd.f32 0.0, %v6500
    %v6502 = vpop.f32.mrb[0].mxu0
    %v6503 = vadd.f32 0.0, %v6502
    %v6504 = vpop.f32.mrb[0].mxu0
    %v6505 = vpop.f32.mrb[0].mxu0
    %6506 = vdwg.mxu0
    %v6507 = vld [vmem:[%s11] sm:$0xff]
    %v6508 = vld [vmem:[%s12] sm:$0xff]
    %v6509 = vrot.slane %v6378, 4
    %v6510 = vadd.f32 %v6378, %v6509
    %v6511 = vrot.slane %v6510, 2
    %v6512 = vadd.f32 %v6510, %v6511
    %v6513 = vrot.slane %v6512, 1
    %v6514 = vadd.f32 %v6512, %v6513
    %v6515 = vrot.slane %v6380, 4
    %v6516 = vadd.f32 %v6380, %v6515
    %v6517 = vrot.slane %v6516, 2
    %v6518 = vadd.f32 %v6516, %v6517
    %v6519 = vrot.slane %v6518, 1
    %v6520 = vadd.f32 %v6518, %v6519
    %v6521 = vrot.slane %v6419, 4
    %v6522 = vadd.f32 %v6419, %v6521
    %v6523 = vrot.slane %v6522, 2
    %v6524 = vadd.f32 %v6522, %v6523
    %v6525 = vrot.slane %v6524, 1
    %v6526 = vadd.f32 %v6524, %v6525
    %v6527 = vrot.slane %v6421, 4
    %v6528 = vadd.f32 %v6421, %v6527
    %v6529 = vrot.slane %v6528, 2
    %v6530 = vadd.f32 %v6528, %v6529
    %v6531 = vrot.slane %v6530, 1
    %v6532 = vadd.f32 %v6530, %v6531
    %v6533 = vrot.slane %v6460, 4
    %v6534 = vadd.f32 %v6460, %v6533
    %v6535 = vrot.slane %v6534, 2
    %v6536 = vadd.f32 %v6534, %v6535
    %v6537 = vrot.slane %v6536, 1
    %v6538 = vadd.f32 %v6536, %v6537
    %v6539 = vrot.slane %v6462, 4
    %v6540 = vadd.f32 %v6462, %v6539
    %v6541 = vrot.slane %v6540, 2
    %v6542 = vadd.f32 %v6540, %v6541
    %v6543 = vrot.slane %v6542, 1
    %v6544 = vadd.f32 %v6542, %v6543
    %v6545 = vrot.slane %v6501, 4
    %v6546 = vadd.f32 %v6501, %v6545
    %v6547 = vrot.slane %v6546, 2
    %v6548 = vadd.f32 %v6546, %v6547
    %v6549 = vrot.slane %v6548, 1
    %v6550 = vadd.f32 %v6548, %v6549
    %v6551 = vrot.slane %v6503, 4
    %v6552 = vadd.f32 %v6503, %v6551
    %v6553 = vrot.slane %v6552, 2
    %v6554 = vadd.f32 %v6552, %v6553
    %v6555 = vrot.slane %v6554, 1
    %v6556 = vadd.f32 %v6554, %v6555
    %v6557 = vmul.f32 %v6378, %v6378
    %v6558 = vmul.f32 %v6380, %v6380
    %v6559 = vmul.f32 %v6419, %v6419
    %v6560 = vmul.f32 %v6421, %v6421
    %v6561 = vmul.f32 %v6460, %v6460
    %v6562 = vmul.f32 %v6462, %v6462
    %v6563 = vmul.f32 %v6501, %v6501
    %v6564 = vmul.f32 %v6503, %v6503
    %v6565 = vrot.slane %v6557, 4
    %v6566 = vadd.f32 %v6557, %v6565
    %v6567 = vrot.slane %v6566, 2
    %v6568 = vadd.f32 %v6566, %v6567
    %v6569 = vrot.slane %v6568, 1
    %v6570 = vadd.f32 %v6568, %v6569
    %v6571 = vrot.slane %v6558, 4
    %v6572 = vadd.f32 %v6558, %v6571
    %v6573 = vrot.slane %v6572, 2
    %v6574 = vadd.f32 %v6572, %v6573
    %v6575 = vrot.slane %v6574, 1
    %v6576 = vadd.f32 %v6574, %v6575
    %v6577 = vrot.slane %v6559, 4
    %v6578 = vadd.f32 %v6559, %v6577
    %v6579 = vrot.slane %v6578, 2
    %v6580 = vadd.f32 %v6578, %v6579
    %v6581 = vrot.slane %v6580, 1
    %v6582 = vadd.f32 %v6580, %v6581
    %v6583 = vrot.slane %v6560, 4
    %v6584 = vadd.f32 %v6560, %v6583
    %v6585 = vrot.slane %v6584, 2
    %v6586 = vadd.f32 %v6584, %v6585
    %v6587 = vrot.slane %v6586, 1
    %v6588 = vadd.f32 %v6586, %v6587
    %v6589 = vrot.slane %v6561, 4
    %v6590 = vadd.f32 %v6561, %v6589
    %v6591 = vrot.slane %v6590, 2
    %v6592 = vadd.f32 %v6590, %v6591
    %v6593 = vrot.slane %v6592, 1
    %v6594 = vadd.f32 %v6592, %v6593
    %v6595 = vrot.slane %v6562, 4
    %v6596 = vadd.f32 %v6562, %v6595
    %v6597 = vrot.slane %v6596, 2
    %v6598 = vadd.f32 %v6596, %v6597
    %v6599 = vrot.slane %v6598, 1
    %v6600 = vadd.f32 %v6598, %v6599
    %v6601 = vrot.slane %v6563, 4
    %v6602 = vadd.f32 %v6563, %v6601
    %v6603 = vrot.slane %v6602, 2
    %v6604 = vadd.f32 %v6602, %v6603
    %v6605 = vrot.slane %v6604, 1
    %v6606 = vadd.f32 %v6604, %v6605
    %v6607 = vrot.slane %v6564, 4
    %v6608 = vadd.f32 %v6564, %v6607
    %v6609 = vrot.slane %v6608, 2
    %v6610 = vadd.f32 %v6608, %v6609
    %v6611 = vrot.slane %v6610, 1
    %v6612 = vadd.f32 %v6610, %v6611
    %v6613 = vmul.f32 %v6514, 0.125
    %v6614 = vmul.f32 %v6520, 0.125
    %v6615 = vmul.f32 %v6526, 0.125
    %v6616 = vmul.f32 %v6532, 0.125
    %v6617 = vmul.f32 %v6538, 0.125
    %v6618 = vmul.f32 %v6544, 0.125
    %v6619 = vmul.f32 %v6550, 0.125
    %v6620 = vmul.f32 %v6556, 0.125
    %v6621 = vmul.f32 %v6570, 0.125
    %v6622 = vmul.f32 %v6576, 0.125
    %v6623 = vmul.f32 %v6582, 0.125
    %v6624 = vmul.f32 %v6588, 0.125
    %v6625 = vmul.f32 %v6594, 0.125
    %v6626 = vmul.f32 %v6600, 0.125
    %v6627 = vmul.f32 %v6606, 0.125
    %v6628 = vmul.f32 %v6612, 0.125
    %v6629 = vmul.f32 %v6613, %v6613
    %v6630 = vmul.f32 %v6614, %v6614
    %v6631 = vmul.f32 %v6615, %v6615
    %v6632 = vmul.f32 %v6616, %v6616
    %v6633 = vmul.f32 %v6617, %v6617
    %v6634 = vmul.f32 %v6618, %v6618
    %v6635 = vmul.f32 %v6619, %v6619
    %v6636 = vmul.f32 %v6620, %v6620
    %v6637 = vsub.f32 %v6621, %v6629
    %v6638 = vsub.f32 %v6622, %v6630
    %v6639 = vsub.f32 %v6623, %v6631
    %v6640 = vsub.f32 %v6624, %v6632
    %v6641 = vsub.f32 %v6625, %v6633
    %v6642 = vsub.f32 %v6626, %v6634
    %v6643 = vsub.f32 %v6627, %v6635
    %v6644 = vsub.f32 %v6628, %v6636
    %v6645 = vmax.f32 %v6637, 0.0
    %v6646 = vmax.f32 %v6638, 0.0
    %v6647 = vmax.f32 %v6639, 0.0
    %v6648 = vmax.f32 %v6640, 0.0
    %v6649 = vmax.f32 %v6641, 0.0
    %v6650 = vmax.f32 %v6642, 0.0
    %v6651 = vmax.f32 %v6643, 0.0
    %v6652 = vmax.f32 %v6644, 0.0
    %v6653 = vadd.f32 %v6645, 1e-05
    %v6654 = vadd.f32 %v6646, 1e-05
    %v6655 = vadd.f32 %v6647, 1e-05
    %v6656 = vadd.f32 %v6648, 1e-05
    %v6657 = vadd.f32 %v6649, 1e-05
    %v6658 = vadd.f32 %v6650, 1e-05
    %v6659 = vadd.f32 %v6651, 1e-05
    %v6660 = vadd.f32 %v6652, 1e-05
    %v6661 = vrsqrt.pop %v6653
    %v6662 = vrsqrt.pop %v6654
    %v6663 = vrsqrt.pop %v6655
    %v6664 = vrsqrt.pop %v6656
    %v6665 = vrsqrt.pop %v6657
    %v6666 = vrsqrt.pop %v6658
    %v6667 = vrsqrt.pop %v6659
    %v6668 = vrsqrt.pop %v6660
    %v6677 = vcombine.low %v6661, %v6662
    %v6678 = vcombine.low %v6663, %v6664
    %v6679 = vcombine.low %v6665, %v6666
    %v6680 = vcombine.low %v6667, %v6668
    %v6682 = vunpack.c.l.s4 1966171168
    %v6683 = vunpack.c.0.s8 %v6682
    %v6684 = vlaneseq
    %v6685 = vshrl.u32 %v6684, 7
    %v6686 = vsub.s32 %v6683, %v6685
    %v6687 = vrot.slane %v6677, %v6686
    %v6689 = vunpack.c.l.s4 1966171168
    %v6690 = vunpack.c.0.s8 %v6689
    %v6691 = vlaneseq
    %v6692 = vshrl.u32 %v6691, 7
    %v6693 = vsub.s32 %v6690, %v6692
    %v6694 = vrot.slane %v6678, %v6693
    %v6696 = vunpack.c.l.s4 1966171168
    %v6697 = vunpack.c.0.s8 %v6696
    %v6698 = vlaneseq
    %v6699 = vshrl.u32 %v6698, 7
    %v6700 = vsub.s32 %v6697, %v6699
    %v6701 = vrot.slane %v6679, %v6700
    %v6703 = vunpack.c.l.s4 1966171168
    %v6704 = vunpack.c.0.s8 %v6703
    %v6705 = vlaneseq
    %v6706 = vshrl.u32 %v6705, 7
    %v6707 = vsub.s32 %v6704, %v6706
    %v6708 = vrot.slane %v6680, %v6707
    %v6709 = vcombine.low %v6687, %v6694
    %v6710 = vcombine.low %v6701, %v6708
    %v6712 = vunpack.c.l.s4 1966171168
    %v6713 = vunpack.c.0.s8 %v6712
    %v6714 = vlaneseq
    %v6715 = vshrl.u32 %v6714, 7
    %v6716 = vsub.s32 %v6713, %v6715
    %v6717 = vrot.slane %v6709, %v6716
    %v6719 = vunpack.c.l.s4 1966171168
    %v6720 = vunpack.c.0.s8 %v6719
    %v6721 = vlaneseq
    %v6722 = vshrl.u32 %v6721, 7
    %v6723 = vsub.s32 %v6720, %v6722
    %v6724 = vrot.slane %v6710, %v6723
    %v6725 = vcombine.low %v6717, %v6724
    %v6727 = vmul.f32 %v6507, %v6725
    %v6729 = vlaneseq
    %v6730 = vshrl.u32 %v6729, 7
    %v6731 = vsub.s32 0, %v6730
    %v6732 = vrot.slane %v6727, %v6731
    %v6733 = vlaneseq
    %v6734 = vshrl.u32 %v6733, 7
    %v6735 = vsub.s32 1, %v6734
    %v6736 = vrot.slane %v6727, %v6735
    %v6737 = vlaneseq
    %v6738 = vshrl.u32 %v6737, 7
    %v6739 = vsub.s32 2, %v6738
    %v6740 = vrot.slane %v6727, %v6739
    %v6741 = vlaneseq
    %v6742 = vshrl.u32 %v6741, 7
    %v6743 = vsub.s32 3, %v6742
    %v6744 = vrot.slane %v6727, %v6743
    %v6745 = vlaneseq
    %v6746 = vshrl.u32 %v6745, 7
    %v6747 = vsub.s32 4, %v6746
    %v6748 = vrot.slane %v6727, %v6747
    %v6749 = vlaneseq
    %v6750 = vshrl.u32 %v6749, 7
    %v6751 = vsub.s32 5, %v6750
    %v6752 = vrot.slane %v6727, %v6751
    %v6753 = vlaneseq
    %v6754 = vshrl.u32 %v6753, 7
    %v6755 = vsub.s32 6, %v6754
    %v6756 = vrot.slane %v6727, %v6755
    %v6757 = vlaneseq
    %v6758 = vshrl.u32 %v6757, 7
    %v6759 = vsub.s32 7, %v6758
    %v6760 = vrot.slane %v6727, %v6759
    %v6769 = vmul.f32 %v6613, %v6732
    %v6770 = vmul.f32 %v6614, %v6736
    %v6771 = vmul.f32 %v6615, %v6740
    %v6772 = vmul.f32 %v6616, %v6744
    %v6773 = vmul.f32 %v6617, %v6748
    %v6774 = vmul.f32 %v6618, %v6752
    %v6775 = vmul.f32 %v6619, %v6756
    %v6776 = vmul.f32 %v6620, %v6760
    %v6785 = vcombine.low %v6769, %v6770
    %v6786 = vcombine.low %v6771, %v6772
    %v6787 = vcombine.low %v6773, %v6774
    %v6788 = vcombine.low %v6775, %v6776
    %v6790 = vunpack.c.l.s4 1966171168
    %v6791 = vunpack.c.0.s8 %v6790
    %v6792 = vlaneseq
    %v6793 = vshrl.u32 %v6792, 7
    %v6794 = vsub.s32 %v6791, %v6793
    %v6795 = vrot.slane %v6785, %v6794
    %v6797 = vunpack.c.l.s4 1966171168
    %v6798 = vunpack.c.0.s8 %v6797
    %v6799 = vlaneseq
    %v6800 = vshrl.u32 %v6799, 7
    %v6801 = vsub.s32 %v6798, %v6800
    %v6802 = vrot.slane %v6786, %v6801
    %v6804 = vunpack.c.l.s4 1966171168
    %v6805 = vunpack.c.0.s8 %v6804
    %v6806 = vlaneseq
    %v6807 = vshrl.u32 %v6806, 7
    %v6808 = vsub.s32 %v6805, %v6807
    %v6809 = vrot.slane %v6787, %v6808
    %v6811 = vunpack.c.l.s4 1966171168
    %v6812 = vunpack.c.0.s8 %v6811
    %v6813 = vlaneseq
    %v6814 = vshrl.u32 %v6813, 7
    %v6815 = vsub.s32 %v6812, %v6814
    %v6816 = vrot.slane %v6788, %v6815
    %v6817 = vcombine.low %v6795, %v6802
    %v6818 = vcombine.low %v6809, %v6816
    %v6820 = vunpack.c.l.s4 1966171168
    %v6821 = vunpack.c.0.s8 %v6820
    %v6822 = vlaneseq
    %v6823 = vshrl.u32 %v6822, 7
    %v6824 = vsub.s32 %v6821, %v6823
    %v6825 = vrot.slane %v6817, %v6824
    %v6827 = vunpack.c.l.s4 1966171168
    %v6828 = vunpack.c.0.s8 %v6827
    %v6829 = vlaneseq
    %v6830 = vshrl.u32 %v6829, 7
    %v6831 = vsub.s32 %v6828, %v6830
    %v6832 = vrot.slane %v6818, %v6831
    %v6833 = vcombine.low %v6825, %v6832
    %v6835 = vsub.f32 %v6508, %v6833
    %v6836 = vmul.f32 %v6378, %v6732
    %v6837 = vmul.f32 %v6380, %v6736
    %v6838 = vmul.f32 %v6419, %v6740
    %v6839 = vmul.f32 %v6421, %v6744
    %v6840 = vmul.f32 %v6460, %v6748
    %v6841 = vmul.f32 %v6462, %v6752
    %v6842 = vmul.f32 %v6501, %v6756
    %v6843 = vmul.f32 %v6503, %v6760
    %v6845 = vlaneseq
    %v6846 = vshrl.u32 %v6845, 7
    %v6847 = vsub.s32 0, %v6846
    %v6848 = vrot.slane %v6835, %v6847
    %v6849 = vlaneseq
    %v6850 = vshrl.u32 %v6849, 7
    %v6851 = vsub.s32 1, %v6850
    %v6852 = vrot.slane %v6835, %v6851
    %v6853 = vlaneseq
    %v6854 = vshrl.u32 %v6853, 7
    %v6855 = vsub.s32 2, %v6854
    %v6856 = vrot.slane %v6835, %v6855
    %v6857 = vlaneseq
    %v6858 = vshrl.u32 %v6857, 7
    %v6859 = vsub.s32 3, %v6858
    %v6860 = vrot.slane %v6835, %v6859
    %v6861 = vlaneseq
    %v6862 = vshrl.u32 %v6861, 7
    %v6863 = vsub.s32 4, %v6862
    %v6864 = vrot.slane %v6835, %v6863
    %v6865 = vlaneseq
    %v6866 = vshrl.u32 %v6865, 7
    %v6867 = vsub.s32 5, %v6866
    %v6868 = vrot.slane %v6835, %v6867
    %v6869 = vlaneseq
    %v6870 = vshrl.u32 %v6869, 7
    %v6871 = vsub.s32 6, %v6870
    %v6872 = vrot.slane %v6835, %v6871
    %v6873 = vlaneseq
    %v6874 = vshrl.u32 %v6873, 7
    %v6875 = vsub.s32 7, %v6874
    %v6876 = vrot.slane %v6835, %v6875
    %v6885 = vadd.f32 %v6836, %v6848
    %v6886 = vadd.f32 %v6837, %v6852
    %v6887 = vadd.f32 %v6838, %v6856
    %v6888 = vadd.f32 %v6839, %v6860
    %v6889 = vadd.f32 %v6840, %v6864
    %v6890 = vadd.f32 %v6841, %v6868
    %v6891 = vadd.f32 %v6842, %v6872
    %v6892 = vadd.f32 %v6843, %v6876
    %v6893 = vmax.f32 %v6885, 0.0
    %v6894 = vmax.f32 %v6886, 0.0
    %v6895 = vmax.f32 %v6887, 0.0
    %v6896 = vmax.f32 %v6888, 0.0
    %v6897 = vmax.f32 %v6889, 0.0
    %v6898 = vmax.f32 %v6890, 0.0
    %v6899 = vmax.f32 %v6891, 0.0
    %v6900 = vmax.f32 %v6892, 0.0
    %s6901 = smul.u32 4, 128
    %s6902 = smul.u32 %s6901, 4
    %s6903 = sshll.u32 %s6902, 4
    %6904 = dma.done %s1119, %s6903
    %v6905 = vpack.c.bf16 %v6893, %v6893
    %v6906 = vpack.c.bf16 %v6894, %v6894
    %v6907 = vpack.c.bf16 %v6895, %v6895
    %v6908 = vpack.c.bf16 %v6896, %v6896
    %v6909 = vpack.c.bf16 %v6897, %v6897
    %v6910 = vpack.c.bf16 %v6898, %v6898
    %v6911 = vpack.c.bf16 %v6899, %v6899
    %v6912 = vpack.c.bf16 %v6900, %v6900
    %v6913 = vld [vmem:[#allocation3] sm:$0xff]
    %v6914 = vld [vmem:[#allocation3 + $0x8] sm:$0xff]
    %v6915 = vld [vmem:[#allocation3 + $0x10] sm:$0xff]
    %v6916 = vld [vmem:[#allocation3 + $0x18] sm:$0xff]
    %v6917 = vld [vmem:[#allocation3 + $0x20] sm:$0xff]
    %v6918 = vld [vmem:[#allocation3 + $0x28] sm:$0xff]
    %v6919 = vld [vmem:[#allocation3 + $0x30] sm:$0xff]
    %v6920 = vld [vmem:[#allocation3 + $0x38] sm:$0xff]
    %v6921 = vld [vmem:[#allocation3 + $0x40] sm:$0xff]
    %v6922 = vld [vmem:[#allocation3 + $0x48] sm:$0xff]
    %v6923 = vld [vmem:[#allocation3 + $0x50] sm:$0xff]
    %v6924 = vld [vmem:[#allocation3 + $0x58] sm:$0xff]
    %v6925 = vld [vmem:[#allocation3 + $0x60] sm:$0xff]
    %v6926 = vld [vmem:[#allocation3 + $0x68] sm:$0xff]
    %v6927 = vld [vmem:[#allocation3 + $0x70] sm:$0xff]
    %v6928 = vld [vmem:[#allocation3 + $0x78] sm:$0xff]
    %v6929 = vld [vmem:[#allocation3 + $0x80] sm:$0xff]
    %v6930 = vld [vmem:[#allocation3 + $0x88] sm:$0xff]
    %v6931 = vld [vmem:[#allocation3 + $0x90] sm:$0xff]
    %v6932 = vld [vmem:[#allocation3 + $0x98] sm:$0xff]
    %v6933 = vld [vmem:[#allocation3 + $0xa0] sm:$0xff]
    %v6934 = vld [vmem:[#allocation3 + $0xa8] sm:$0xff]
    %v6935 = vld [vmem:[#allocation3 + $0xb0] sm:$0xff]
    %v6936 = vld [vmem:[#allocation3 + $0xb8] sm:$0xff]
    %v6937 = vld [vmem:[#allocation3 + $0xc0] sm:$0xff]
    %v6938 = vld [vmem:[#allocation3 + $0xc8] sm:$0xff]
    %v6939 = vld [vmem:[#allocation3 + $0xd0] sm:$0xff]
    %v6940 = vld [vmem:[#allocation3 + $0xd8] sm:$0xff]
    %v6941 = vld [vmem:[#allocation3 + $0xe0] sm:$0xff]
    %v6942 = vld [vmem:[#allocation3 + $0xe8] sm:$0xff]
    %v6943 = vld [vmem:[#allocation3 + $0xf0] sm:$0xff]
    %v6944 = vld [vmem:[#allocation3 + $0xf8] sm:$0xff]
    %v6945 = vld [vmem:[#allocation3 + $0x100] sm:$0xff]
    %v6946 = vld [vmem:[#allocation3 + $0x108] sm:$0xff]
    %v6947 = vld [vmem:[#allocation3 + $0x110] sm:$0xff]
    %v6948 = vld [vmem:[#allocation3 + $0x118] sm:$0xff]
    %v6949 = vld [vmem:[#allocation3 + $0x120] sm:$0xff]
    %v6950 = vld [vmem:[#allocation3 + $0x128] sm:$0xff]
    %v6951 = vld [vmem:[#allocation3 + $0x130] sm:$0xff]
    %v6952 = vld [vmem:[#allocation3 + $0x138] sm:$0xff]
    %v6953 = vld [vmem:[#allocation3 + $0x140] sm:$0xff]
    %v6954 = vld [vmem:[#allocation3 + $0x148] sm:$0xff]
    %v6955 = vld [vmem:[#allocation3 + $0x150] sm:$0xff]
    %v6956 = vld [vmem:[#allocation3 + $0x158] sm:$0xff]
    %v6957 = vld [vmem:[#allocation3 + $0x160] sm:$0xff]
    %v6958 = vld [vmem:[#allocation3 + $0x168] sm:$0xff]
    %v6959 = vld [vmem:[#allocation3 + $0x170] sm:$0xff]
    %v6960 = vld [vmem:[#allocation3 + $0x178] sm:$0xff]
    %v6961 = vld [vmem:[#allocation3 + $0x180] sm:$0xff]
    %v6962 = vld [vmem:[#allocation3 + $0x188] sm:$0xff]
    %v6963 = vld [vmem:[#allocation3 + $0x190] sm:$0xff]
    %v6964 = vld [vmem:[#allocation3 + $0x198] sm:$0xff]
    %v6965 = vld [vmem:[#allocation3 + $0x1a0] sm:$0xff]
    %v6966 = vld [vmem:[#allocation3 + $0x1a8] sm:$0xff]
    %v6967 = vld [vmem:[#allocation3 + $0x1b0] sm:$0xff]
    %v6968 = vld [vmem:[#allocation3 + $0x1b8] sm:$0xff]
    %v6969 = vld [vmem:[#allocation3 + $0x1c0] sm:$0xff]
    %v6970 = vld [vmem:[#allocation3 + $0x1c8] sm:$0xff]
    %v6971 = vld [vmem:[#allocation3 + $0x1d0] sm:$0xff]
    %v6972 = vld [vmem:[#allocation3 + $0x1d8] sm:$0xff]
    %v6973 = vld [vmem:[#allocation3 + $0x1e0] sm:$0xff]
    %v6974 = vld [vmem:[#allocation3 + $0x1e8] sm:$0xff]
    %v6975 = vld [vmem:[#allocation3 + $0x1f0] sm:$0xff]
    %v6976 = vld [vmem:[#allocation3 + $0x1f8] sm:$0xff]
    %v6977 = vld [vmem:[#allocation3 + $0x200] sm:$0xff]
    %v6978 = vld [vmem:[#allocation3 + $0x208] sm:$0xff]
    %v6979 = vld [vmem:[#allocation3 + $0x210] sm:$0xff]
    %v6980 = vld [vmem:[#allocation3 + $0x218] sm:$0xff]
    %v6981 = vld [vmem:[#allocation3 + $0x220] sm:$0xff]
    %v6982 = vld [vmem:[#allocation3 + $0x228] sm:$0xff]
    %v6983 = vld [vmem:[#allocation3 + $0x230] sm:$0xff]
    %v6984 = vld [vmem:[#allocation3 + $0x238] sm:$0xff]
    %v6985 = vld [vmem:[#allocation3 + $0x240] sm:$0xff]
    %v6986 = vld [vmem:[#allocation3 + $0x248] sm:$0xff]
    %v6987 = vld [vmem:[#allocation3 + $0x250] sm:$0xff]
    %v6988 = vld [vmem:[#allocation3 + $0x258] sm:$0xff]
    %v6989 = vld [vmem:[#allocation3 + $0x260] sm:$0xff]
    %v6990 = vld [vmem:[#allocation3 + $0x268] sm:$0xff]
    %v6991 = vld [vmem:[#allocation3 + $0x270] sm:$0xff]
    %v6992 = vld [vmem:[#allocation3 + $0x278] sm:$0xff]
    %v6993 = vld [vmem:[#allocation3 + $0x280] sm:$0xff]
    %v6994 = vld [vmem:[#allocation3 + $0x288] sm:$0xff]
    %v6995 = vld [vmem:[#allocation3 + $0x290] sm:$0xff]
    %v6996 = vld [vmem:[#allocation3 + $0x298] sm:$0xff]
    %v6997 = vld [vmem:[#allocation3 + $0x2a0] sm:$0xff]
    %v6998 = vld [vmem:[#allocation3 + $0x2a8] sm:$0xff]
    %v6999 = vld [vmem:[#allocation3 + $0x2b0] sm:$0xff]
    %v7000 = vld [vmem:[#allocation3 + $0x2b8] sm:$0xff]
    %v7001 = vld [vmem:[#allocation3 + $0x2c0] sm:$0xff]
    %v7002 = vld [vmem:[#allocation3 + $0x2c8] sm:$0xff]
    %v7003 = vld [vmem:[#allocation3 + $0x2d0] sm:$0xff]
    %v7004 = vld [vmem:[#allocation3 + $0x2d8] sm:$0xff]
    %v7005 = vld [vmem:[#allocation3 + $0x2e0] sm:$0xff]
    %v7006 = vld [vmem:[#allocation3 + $0x2e8] sm:$0xff]
    %v7007 = vld [vmem:[#allocation3 + $0x2f0] sm:$0xff]
    %v7008 = vld [vmem:[#allocation3 + $0x2f8] sm:$0xff]
    %v7009 = vld [vmem:[#allocation3 + $0x300] sm:$0xff]
    %v7010 = vld [vmem:[#allocation3 + $0x308] sm:$0xff]
    %v7011 = vld [vmem:[#allocation3 + $0x310] sm:$0xff]
    %v7012 = vld [vmem:[#allocation3 + $0x318] sm:$0xff]
    %v7013 = vld [vmem:[#allocation3 + $0x320] sm:$0xff]
    %v7014 = vld [vmem:[#allocation3 + $0x328] sm:$0xff]
    %v7015 = vld [vmem:[#allocation3 + $0x330] sm:$0xff]
    %v7016 = vld [vmem:[#allocation3 + $0x338] sm:$0xff]
    %v7017 = vld [vmem:[#allocation3 + $0x340] sm:$0xff]
    %v7018 = vld [vmem:[#allocation3 + $0x348] sm:$0xff]
    %v7019 = vld [vmem:[#allocation3 + $0x350] sm:$0xff]
    %v7020 = vld [vmem:[#allocation3 + $0x358] sm:$0xff]
    %v7021 = vld [vmem:[#allocation3 + $0x360] sm:$0xff]
    %v7022 = vld [vmem:[#allocation3 + $0x368] sm:$0xff]
    %v7023 = vld [vmem:[#allocation3 + $0x370] sm:$0xff]
    %v7024 = vld [vmem:[#allocation3 + $0x378] sm:$0xff]
    %v7025 = vld [vmem:[#allocation3 + $0x380] sm:$0xff]
    %v7026 = vld [vmem:[#allocation3 + $0x388] sm:$0xff]
    %v7027 = vld [vmem:[#allocation3 + $0x390] sm:$0xff]
    %v7028 = vld [vmem:[#allocation3 + $0x398] sm:$0xff]
    %v7029 = vld [vmem:[#allocation3 + $0x3a0] sm:$0xff]
    %v7030 = vld [vmem:[#allocation3 + $0x3a8] sm:$0xff]
    %v7031 = vld [vmem:[#allocation3 + $0x3b0] sm:$0xff]
    %v7032 = vld [vmem:[#allocation3 + $0x3b8] sm:$0xff]
    %v7033 = vld [vmem:[#allocation3 + $0x3c0] sm:$0xff]
    %v7034 = vld [vmem:[#allocation3 + $0x3c8] sm:$0xff]
    %v7035 = vld [vmem:[#allocation3 + $0x3d0] sm:$0xff]
    %v7036 = vld [vmem:[#allocation3 + $0x3d8] sm:$0xff]
    %v7037 = vld [vmem:[#allocation3 + $0x3e0] sm:$0xff]
    %v7038 = vld [vmem:[#allocation3 + $0x3e8] sm:$0xff]
    %v7039 = vld [vmem:[#allocation3 + $0x3f0] sm:$0xff]
    %v7040 = vld [vmem:[#allocation3 + $0x3f8] sm:$0xff]
    %v7041 = vld [vmem:[#allocation3 + $0x400] sm:$0xff]
    %v7042 = vld [vmem:[#allocation3 + $0x408] sm:$0xff]
    %v7043 = vld [vmem:[#allocation3 + $0x410] sm:$0xff]
    %v7044 = vld [vmem:[#allocation3 + $0x418] sm:$0xff]
    %v7045 = vld [vmem:[#allocation3 + $0x420] sm:$0xff]
    %v7046 = vld [vmem:[#allocation3 + $0x428] sm:$0xff]
    %v7047 = vld [vmem:[#allocation3 + $0x430] sm:$0xff]
    %v7048 = vld [vmem:[#allocation3 + $0x438] sm:$0xff]
    %v7049 = vld [vmem:[#allocation3 + $0x440] sm:$0xff]
    %v7050 = vld [vmem:[#allocation3 + $0x448] sm:$0xff]
    %v7051 = vld [vmem:[#allocation3 + $0x450] sm:$0xff]
    %v7052 = vld [vmem:[#allocation3 + $0x458] sm:$0xff]
    %v7053 = vld [vmem:[#allocation3 + $0x460] sm:$0xff]
    %v7054 = vld [vmem:[#allocation3 + $0x468] sm:$0xff]
    %v7055 = vld [vmem:[#allocation3 + $0x470] sm:$0xff]
    %v7056 = vld [vmem:[#allocation3 + $0x478] sm:$0xff]
    %v7057 = vld [vmem:[#allocation3 + $0x480] sm:$0xff]
    %v7058 = vld [vmem:[#allocation3 + $0x488] sm:$0xff]
    %v7059 = vld [vmem:[#allocation3 + $0x490] sm:$0xff]
    %v7060 = vld [vmem:[#allocation3 + $0x498] sm:$0xff]
    %v7061 = vld [vmem:[#allocation3 + $0x4a0] sm:$0xff]
    %v7062 = vld [vmem:[#allocation3 + $0x4a8] sm:$0xff]
    %v7063 = vld [vmem:[#allocation3 + $0x4b0] sm:$0xff]
    %v7064 = vld [vmem:[#allocation3 + $0x4b8] sm:$0xff]
    %v7065 = vld [vmem:[#allocation3 + $0x4c0] sm:$0xff]
    %v7066 = vld [vmem:[#allocation3 + $0x4c8] sm:$0xff]
    %v7067 = vld [vmem:[#allocation3 + $0x4d0] sm:$0xff]
    %v7068 = vld [vmem:[#allocation3 + $0x4d8] sm:$0xff]
    %v7069 = vld [vmem:[#allocation3 + $0x4e0] sm:$0xff]
    %v7070 = vld [vmem:[#allocation3 + $0x4e8] sm:$0xff]
    %v7071 = vld [vmem:[#allocation3 + $0x4f0] sm:$0xff]
    %v7072 = vld [vmem:[#allocation3 + $0x4f8] sm:$0xff]
    %v7073 = vld [vmem:[#allocation3 + $0x500] sm:$0xff]
    %v7074 = vld [vmem:[#allocation3 + $0x508] sm:$0xff]
    %v7075 = vld [vmem:[#allocation3 + $0x510] sm:$0xff]
    %v7076 = vld [vmem:[#allocation3 + $0x518] sm:$0xff]
    %v7077 = vld [vmem:[#allocation3 + $0x520] sm:$0xff]
    %v7078 = vld [vmem:[#allocation3 + $0x528] sm:$0xff]
    %v7079 = vld [vmem:[#allocation3 + $0x530] sm:$0xff]
    %v7080 = vld [vmem:[#allocation3 + $0x538] sm:$0xff]
    %v7081 = vld [vmem:[#allocation3 + $0x540] sm:$0xff]
    %v7082 = vld [vmem:[#allocation3 + $0x548] sm:$0xff]
    %v7083 = vld [vmem:[#allocation3 + $0x550] sm:$0xff]
    %v7084 = vld [vmem:[#allocation3 + $0x558] sm:$0xff]
    %v7085 = vld [vmem:[#allocation3 + $0x560] sm:$0xff]
    %v7086 = vld [vmem:[#allocation3 + $0x568] sm:$0xff]
    %v7087 = vld [vmem:[#allocation3 + $0x570] sm:$0xff]
    %v7088 = vld [vmem:[#allocation3 + $0x578] sm:$0xff]
    %v7089 = vld [vmem:[#allocation3 + $0x580] sm:$0xff]
    %v7090 = vld [vmem:[#allocation3 + $0x588] sm:$0xff]
    %v7091 = vld [vmem:[#allocation3 + $0x590] sm:$0xff]
    %v7092 = vld [vmem:[#allocation3 + $0x598] sm:$0xff]
    %v7093 = vld [vmem:[#allocation3 + $0x5a0] sm:$0xff]
    %v7094 = vld [vmem:[#allocation3 + $0x5a8] sm:$0xff]
    %v7095 = vld [vmem:[#allocation3 + $0x5b0] sm:$0xff]
    %v7096 = vld [vmem:[#allocation3 + $0x5b8] sm:$0xff]
    %v7097 = vld [vmem:[#allocation3 + $0x5c0] sm:$0xff]
    %v7098 = vld [vmem:[#allocation3 + $0x5c8] sm:$0xff]
    %v7099 = vld [vmem:[#allocation3 + $0x5d0] sm:$0xff]
    %v7100 = vld [vmem:[#allocation3 + $0x5d8] sm:$0xff]
    %v7101 = vld [vmem:[#allocation3 + $0x5e0] sm:$0xff]
    %v7102 = vld [vmem:[#allocation3 + $0x5e8] sm:$0xff]
    %v7103 = vld [vmem:[#allocation3 + $0x5f0] sm:$0xff]
    %v7104 = vld [vmem:[#allocation3 + $0x5f8] sm:$0xff]
    %v7105 = vld [vmem:[#allocation3 + $0x600] sm:$0xff]
    %v7106 = vld [vmem:[#allocation3 + $0x608] sm:$0xff]
    %v7107 = vld [vmem:[#allocation3 + $0x610] sm:$0xff]
    %v7108 = vld [vmem:[#allocation3 + $0x618] sm:$0xff]
    %v7109 = vld [vmem:[#allocation3 + $0x620] sm:$0xff]
    %v7110 = vld [vmem:[#allocation3 + $0x628] sm:$0xff]
    %v7111 = vld [vmem:[#allocation3 + $0x630] sm:$0xff]
    %v7112 = vld [vmem:[#allocation3 + $0x638] sm:$0xff]
    %v7113 = vld [vmem:[#allocation3 + $0x640] sm:$0xff]
    %v7114 = vld [vmem:[#allocation3 + $0x648] sm:$0xff]
    %v7115 = vld [vmem:[#allocation3 + $0x650] sm:$0xff]
    %v7116 = vld [vmem:[#allocation3 + $0x658] sm:$0xff]
    %v7117 = vld [vmem:[#allocation3 + $0x660] sm:$0xff]
    %v7118 = vld [vmem:[#allocation3 + $0x668] sm:$0xff]
    %v7119 = vld [vmem:[#allocation3 + $0x670] sm:$0xff]
    %v7120 = vld [vmem:[#allocation3 + $0x678] sm:$0xff]
    %v7121 = vld [vmem:[#allocation3 + $0x680] sm:$0xff]
    %v7122 = vld [vmem:[#allocation3 + $0x688] sm:$0xff]
    %v7123 = vld [vmem:[#allocation3 + $0x690] sm:$0xff]
    %v7124 = vld [vmem:[#allocation3 + $0x698] sm:$0xff]
    %v7125 = vld [vmem:[#allocation3 + $0x6a0] sm:$0xff]
    %v7126 = vld [vmem:[#allocation3 + $0x6a8] sm:$0xff]
    %v7127 = vld [vmem:[#allocation3 + $0x6b0] sm:$0xff]
    %v7128 = vld [vmem:[#allocation3 + $0x6b8] sm:$0xff]
    %v7129 = vld [vmem:[#allocation3 + $0x6c0] sm:$0xff]
    %v7130 = vld [vmem:[#allocation3 + $0x6c8] sm:$0xff]
    %v7131 = vld [vmem:[#allocation3 + $0x6d0] sm:$0xff]
    %v7132 = vld [vmem:[#allocation3 + $0x6d8] sm:$0xff]
    %v7133 = vld [vmem:[#allocation3 + $0x6e0] sm:$0xff]
    %v7134 = vld [vmem:[#allocation3 + $0x6e8] sm:$0xff]
    %v7135 = vld [vmem:[#allocation3 + $0x6f0] sm:$0xff]
    %v7136 = vld [vmem:[#allocation3 + $0x6f8] sm:$0xff]
    %v7137 = vld [vmem:[#allocation3 + $0x700] sm:$0xff]
    %v7138 = vld [vmem:[#allocation3 + $0x708] sm:$0xff]
    %v7139 = vld [vmem:[#allocation3 + $0x710] sm:$0xff]
    %v7140 = vld [vmem:[#allocation3 + $0x718] sm:$0xff]
    %v7141 = vld [vmem:[#allocation3 + $0x720] sm:$0xff]
    %v7142 = vld [vmem:[#allocation3 + $0x728] sm:$0xff]
    %v7143 = vld [vmem:[#allocation3 + $0x730] sm:$0xff]
    %v7144 = vld [vmem:[#allocation3 + $0x738] sm:$0xff]
    %v7145 = vld [vmem:[#allocation3 + $0x740] sm:$0xff]
    %v7146 = vld [vmem:[#allocation3 + $0x748] sm:$0xff]
    %v7147 = vld [vmem:[#allocation3 + $0x750] sm:$0xff]
    %v7148 = vld [vmem:[#allocation3 + $0x758] sm:$0xff]
    %v7149 = vld [vmem:[#allocation3 + $0x760] sm:$0xff]
    %v7150 = vld [vmem:[#allocation3 + $0x768] sm:$0xff]
    %v7151 = vld [vmem:[#allocation3 + $0x770] sm:$0xff]
    %v7152 = vld [vmem:[#allocation3 + $0x778] sm:$0xff]
    %v7153 = vld [vmem:[#allocation3 + $0x780] sm:$0xff]
    %v7154 = vld [vmem:[#allocation3 + $0x788] sm:$0xff]
    %v7155 = vld [vmem:[#allocation3 + $0x790] sm:$0xff]
    %v7156 = vld [vmem:[#allocation3 + $0x798] sm:$0xff]
    %v7157 = vld [vmem:[#allocation3 + $0x7a0] sm:$0xff]
    %v7158 = vld [vmem:[#allocation3 + $0x7a8] sm:$0xff]
    %v7159 = vld [vmem:[#allocation3 + $0x7b0] sm:$0xff]
    %v7160 = vld [vmem:[#allocation3 + $0x7b8] sm:$0xff]
    %v7161 = vld [vmem:[#allocation3 + $0x7c0] sm:$0xff]
    %v7162 = vld [vmem:[#allocation3 + $0x7c8] sm:$0xff]
    %v7163 = vld [vmem:[#allocation3 + $0x7d0] sm:$0xff]
    %v7164 = vld [vmem:[#allocation3 + $0x7d8] sm:$0xff]
    %v7165 = vld [vmem:[#allocation3 + $0x7e0] sm:$0xff]
    %v7166 = vld [vmem:[#allocation3 + $0x7e8] sm:$0xff]
    %v7167 = vld [vmem:[#allocation3 + $0x7f0] sm:$0xff]
    %v7168 = vld [vmem:[#allocation3 + $0x7f8] sm:$0xff]
    %v7169 = vld [vmem:[%s14] sm:$0xf]
    %v7171 = vlaneseq
    %v7172 = vshrl.u32 %v7171, 7
    %v7173 = vsub.s32 0, %v7172
    %v7174 = vrot.slane %v7169, %v7173
    %v7175 = vlaneseq
    %v7176 = vshrl.u32 %v7175, 7
    %v7177 = vsub.s32 1, %v7176
    %v7178 = vrot.slane %v7169, %v7177
    %v7179 = vlaneseq
    %v7180 = vshrl.u32 %v7179, 7
    %v7181 = vsub.s32 2, %v7180
    %v7182 = vrot.slane %v7169, %v7181
    %v7183 = vlaneseq
    %v7184 = vshrl.u32 %v7183, 7
    %v7185 = vsub.s32 3, %v7184
    %v7186 = vrot.slane %v7169, %v7185
    %7191 = vmatprep.subr.bf16.mxu0 %v6914
    %7192 = vmatpush1.bf16.msra.mxu0 %v6913
    %7193 = vmatprep.subr.bf16.mxu0 %v6918
    %7194 = vmatpush1.bf16.msra.mxu0 %v6917
    %7195 = vmatprep.subr.bf16.mxu0 %v6922
    %7196 = vmatpush1.bf16.msra.mxu0 %v6921
    %7197 = vmatprep.subr.bf16.mxu0 %v6926
    %7198 = vmatpush1.bf16.msra.mxu0 %v6925
    %7199 = vmatprep.subr.bf16.mxu0 %v6930
    %7200 = vmatpush1.bf16.msra.mxu0 %v6929
    %7201 = vmatprep.subr.bf16.mxu0 %v6934
    %7202 = vmatpush1.bf16.msra.mxu0 %v6933
    %7203 = vmatprep.subr.bf16.mxu0 %v6938
    %7204 = vmatpush1.bf16.msra.mxu0 %v6937
    %7205 = vmatprep.subr.bf16.mxu0 %v6942
    %7206 = vmatpush1.bf16.msra.mxu0 %v6941
    %7207 = vmatprep.subr.bf16.mxu0 %v6946
    %7208 = vmatpush1.bf16.msra.mxu0 %v6945
    %7209 = vmatprep.subr.bf16.mxu0 %v6950
    %7210 = vmatpush1.bf16.msra.mxu0 %v6949
    %7211 = vmatprep.subr.bf16.mxu0 %v6954
    %7212 = vmatpush1.bf16.msra.mxu0 %v6953
    %7213 = vmatprep.subr.bf16.mxu0 %v6958
    %7214 = vmatpush1.bf16.msra.mxu0 %v6957
    %7215 = vmatprep.subr.bf16.mxu0 %v6962
    %7216 = vmatpush1.bf16.msra.mxu0 %v6961
    %7217 = vmatprep.subr.bf16.mxu0 %v6966
    %7218 = vmatpush1.bf16.msra.mxu0 %v6965
    %7219 = vmatprep.subr.bf16.mxu0 %v6970
    %7220 = vmatpush1.bf16.msra.mxu0 %v6969
    %7221 = vmatprep.subr.bf16.mxu0 %v6974
    %7222 = vmatpush1.bf16.msra.mxu0 %v6973
    %7223 = vmatprep.mubr.bf16.mxu0 %v6906
    %7224 = vmatmul.mubr.bf16.gmra.mrb[0].mxu0 %v6905
    %v7225 = vpop.f32.mrb[0].mxu0
    %v7226 = vadd.f32 %v7174, %v7225
    %v7227 = vpop.f32.mrb[0].mxu0
    %v7228 = vadd.f32 %v7178, %v7227
    %v7229 = vpop.f32.mrb[0].mxu0
    %v7230 = vpop.f32.mrb[0].mxu0
    %7231 = vdwg.mxu0
    %7232 = vmatprep.subr.bf16.mxu0 %v6978
    %7233 = vmatpush1.bf16.msra.mxu0 %v6977
    %7234 = vmatprep.subr.bf16.mxu0 %v6982
    %7235 = vmatpush1.bf16.msra.mxu0 %v6981
    %7236 = vmatprep.subr.bf16.mxu0 %v6986
    %7237 = vmatpush1.bf16.msra.mxu0 %v6985
    %7238 = vmatprep.subr.bf16.mxu0 %v6990
    %7239 = vmatpush1.bf16.msra.mxu0 %v6989
    %7240 = vmatprep.subr.bf16.mxu0 %v6994
    %7241 = vmatpush1.bf16.msra.mxu0 %v6993
    %7242 = vmatprep.subr.bf16.mxu0 %v6998
    %7243 = vmatpush1.bf16.msra.mxu0 %v6997
    %7244 = vmatprep.subr.bf16.mxu0 %v7002
    %7245 = vmatpush1.bf16.msra.mxu0 %v7001
    %7246 = vmatprep.subr.bf16.mxu0 %v7006
    %7247 = vmatpush1.bf16.msra.mxu0 %v7005
    %7248 = vmatprep.subr.bf16.mxu0 %v7010
    %7249 = vmatpush1.bf16.msra.mxu0 %v7009
    %7250 = vmatprep.subr.bf16.mxu0 %v7014
    %7251 = vmatpush1.bf16.msra.mxu0 %v7013
    %7252 = vmatprep.subr.bf16.mxu0 %v7018
    %7253 = vmatpush1.bf16.msra.mxu0 %v7017
    %7254 = vmatprep.subr.bf16.mxu0 %v7022
    %7255 = vmatpush1.bf16.msra.mxu0 %v7021
    %7256 = vmatprep.subr.bf16.mxu0 %v7026
    %7257 = vmatpush1.bf16.msra.mxu0 %v7025
    %7258 = vmatprep.subr.bf16.mxu0 %v7030
    %7259 = vmatpush1.bf16.msra.mxu0 %v7029
    %7260 = vmatprep.subr.bf16.mxu0 %v7034
    %7261 = vmatpush1.bf16.msra.mxu0 %v7033
    %7262 = vmatprep.subr.bf16.mxu0 %v7038
    %7263 = vmatpush1.bf16.msra.mxu0 %v7037
    %7264 = vmatprep.mubr.bf16.mxu0 %v6908
    %7265 = vmatmul.mubr.bf16.gmra.mrb[0].mxu0 %v6907
    %v7266 = vpop.f32.mrb[0].mxu0
    %v7267 = vadd.f32 %v7226, %v7266
    %v7268 = vpop.f32.mrb[0].mxu0
    %v7269 = vadd.f32 %v7228, %v7268
    %v7270 = vpop.f32.mrb[0].mxu0
    %v7271 = vpop.f32.mrb[0].mxu0
    %7272 = vdwg.mxu0
    %7273 = vmatprep.subr.bf16.mxu0 %v7042
    %7274 = vmatpush1.bf16.msra.mxu0 %v7041
    %7275 = vmatprep.subr.bf16.mxu0 %v7046
    %7276 = vmatpush1.bf16.msra.mxu0 %v7045
    %7277 = vmatprep.subr.bf16.mxu0 %v7050
    %7278 = vmatpush1.bf16.msra.mxu0 %v7049
    %7279 = vmatprep.subr.bf16.mxu0 %v7054
    %7280 = vmatpush1.bf16.msra.mxu0 %v7053
    %7281 = vmatprep.subr.bf16.mxu0 %v7058
    %7282 = vmatpush1.bf16.msra.mxu0 %v7057
    %7283 = vmatprep.subr.bf16.mxu0 %v7062
    %7284 = vmatpush1.bf16.msra.mxu0 %v7061
    %7285 = vmatprep.subr.bf16.mxu0 %v7066
    %7286 = vmatpush1.bf16.msra.mxu0 %v7065
    %7287 = vmatprep.subr.bf16.mxu0 %v7070
    %7288 = vmatpush1.bf16.msra.mxu0 %v7069
    %7289 = vmatprep.subr.bf16.mxu0 %v7074
    %7290 = vmatpush1.bf16.msra.mxu0 %v7073
    %7291 = vmatprep.subr.bf16.mxu0 %v7078
    %7292 = vmatpush1.bf16.msra.mxu0 %v7077
    %7293 = vmatprep.subr.bf16.mxu0 %v7082
    %7294 = vmatpush1.bf16.msra.mxu0 %v7081
    %7295 = vmatprep.subr.bf16.mxu0 %v7086
    %7296 = vmatpush1.bf16.msra.mxu0 %v7085
    %7297 = vmatprep.subr.bf16.mxu0 %v7090
    %7298 = vmatpush1.bf16.msra.mxu0 %v7089
    %7299 = vmatprep.subr.bf16.mxu0 %v7094
    %7300 = vmatpush1.bf16.msra.mxu0 %v7093
    %7301 = vmatprep.subr.bf16.mxu0 %v7098
    %7302 = vmatpush1.bf16.msra.mxu0 %v7097
    %7303 = vmatprep.subr.bf16.mxu0 %v7102
    %7304 = vmatpush1.bf16.msra.mxu0 %v7101
    %7305 = vmatprep.mubr.bf16.mxu0 %v6910
    %7306 = vmatmul.mubr.bf16.gmra.mrb[0].mxu0 %v6909
    %v7307 = vpop.f32.mrb[0].mxu0
    %v7308 = vadd.f32 %v7267, %v7307
    %v7309 = vpop.f32.mrb[0].mxu0
    %v7310 = vadd.f32 %v7269, %v7309
    %v7311 = vpop.f32.mrb[0].mxu0
    %v7312 = vpop.f32.mrb[0].mxu0
    %7313 = vdwg.mxu0
    %7314 = vmatprep.subr.bf16.mxu0 %v7106
    %7315 = vmatpush1.bf16.msra.mxu0 %v7105
    %7316 = vmatprep.subr.bf16.mxu0 %v7110
    %7317 = vmatpush1.bf16.msra.mxu0 %v7109
    %7318 = vmatprep.subr.bf16.mxu0 %v7114
    %7319 = vmatpush1.bf16.msra.mxu0 %v7113
    %7320 = vmatprep.subr.bf16.mxu0 %v7118
    %7321 = vmatpush1.bf16.msra.mxu0 %v7117
    %7322 = vmatprep.subr.bf16.mxu0 %v7122
    %7323 = vmatpush1.bf16.msra.mxu0 %v7121
    %7324 = vmatprep.subr.bf16.mxu0 %v7126
    %7325 = vmatpush1.bf16.msra.mxu0 %v7125
    %7326 = vmatprep.subr.bf16.mxu0 %v7130
    %7327 = vmatpush1.bf16.msra.mxu0 %v7129
    %7328 = vmatprep.subr.bf16.mxu0 %v7134
    %7329 = vmatpush1.bf16.msra.mxu0 %v7133
    %7330 = vmatprep.subr.bf16.mxu0 %v7138
    %7331 = vmatpush1.bf16.msra.mxu0 %v7137
    %7332 = vmatprep.subr.bf16.mxu0 %v7142
    %7333 = vmatpush1.bf16.msra.mxu0 %v7141
    %7334 = vmatprep.subr.bf16.mxu0 %v7146
    %7335 = vmatpush1.bf16.msra.mxu0 %v7145
    %7336 = vmatprep.subr.bf16.mxu0 %v7150
    %7337 = vmatpush1.bf16.msra.mxu0 %v7149
    %7338 = vmatprep.subr.bf16.mxu0 %v7154
    %7339 = vmatpush1.bf16.msra.mxu0 %v7153
    %7340 = vmatprep.subr.bf16.mxu0 %v7158
    %7341 = vmatpush1.bf16.msra.mxu0 %v7157
    %7342 = vmatprep.subr.bf16.mxu0 %v7162
    %7343 = vmatpush1.bf16.msra.mxu0 %v7161
    %7344 = vmatprep.subr.bf16.mxu0 %v7166
    %7345 = vmatpush1.bf16.msra.mxu0 %v7165
    %7346 = vmatprep.mubr.bf16.mxu0 %v6912
    %7347 = vmatmul.mubr.bf16.gmra.mrb[0].mxu0 %v6911
    %v7348 = vpop.f32.mrb[0].mxu0
    %v7349 = vadd.f32 %v7308, %v7348
    %v7350 = vpop.f32.mrb[0].mxu0
    %v7351 = vadd.f32 %v7310, %v7350
    %v7352 = vpop.f32.mrb[0].mxu0
    %v7353 = vpop.f32.mrb[0].mxu0
    %7354 = vdwg.mxu0
    %7355 = vmatprep.subr.bf16.mxu0 %v6916
    %7356 = vmatpush1.bf16.msra.mxu0 %v6915
    %7357 = vmatprep.subr.bf16.mxu0 %v6920
    %7358 = vmatpush1.bf16.msra.mxu0 %v6919
    %7359 = vmatprep.subr.bf16.mxu0 %v6924
    %7360 = vmatpush1.bf16.msra.mxu0 %v6923
    %7361 = vmatprep.subr.bf16.mxu0 %v6928
    %7362 = vmatpush1.bf16.msra.mxu0 %v6927
    %7363 = vmatprep.subr.bf16.mxu0 %v6932
    %7364 = vmatpush1.bf16.msra.mxu0 %v6931
    %7365 = vmatprep.subr.bf16.mxu0 %v6936
    %7366 = vmatpush1.bf16.msra.mxu0 %v6935
    %7367 = vmatprep.subr.bf16.mxu0 %v6940
    %7368 = vmatpush1.bf16.msra.mxu0 %v6939
    %7369 = vmatprep.subr.bf16.mxu0 %v6944
    %7370 = vmatpush1.bf16.msra.mxu0 %v6943
    %7371 = vmatprep.subr.bf16.mxu0 %v6948
    %7372 = vmatpush1.bf16.msra.mxu0 %v6947
    %7373 = vmatprep.subr.bf16.mxu0 %v6952
    %7374 = vmatpush1.bf16.msra.mxu0 %v6951
    %7375 = vmatprep.subr.bf16.mxu0 %v6956
    %7376 = vmatpush1.bf16.msra.mxu0 %v6955
    %7377 = vmatprep.subr.bf16.mxu0 %v6960
    %7378 = vmatpush1.bf16.msra.mxu0 %v6959
    %7379 = vmatprep.subr.bf16.mxu0 %v6964
    %7380 = vmatpush1.bf16.msra.mxu0 %v6963
    %7381 = vmatprep.subr.bf16.mxu0 %v6968
    %7382 = vmatpush1.bf16.msra.mxu0 %v6967
    %7383 = vmatprep.subr.bf16.mxu0 %v6972
    %7384 = vmatpush1.bf16.msra.mxu0 %v6971
    %7385 = vmatprep.subr.bf16.mxu0 %v6976
    %7386 = vmatpush1.bf16.msra.mxu0 %v6975
    %7387 = vmatprep.mubr.bf16.mxu0 %v6906
    %7388 = vmatmul.mubr.bf16.gmra.mrb[0].mxu0 %v6905
    %v7389 = vpop.f32.mrb[0].mxu0
    %v7390 = vadd.f32 %v7182, %v7389
    %v7391 = vpop.f32.mrb[0].mxu0
    %v7392 = vadd.f32 %v7186, %v7391
    %v7393 = vpop.f32.mrb[0].mxu0
    %v7394 = vpop.f32.mrb[0].mxu0
    %7395 = vdwg.mxu0
    %7396 = vmatprep.subr.bf16.mxu0 %v6980
    %7397 = vmatpush1.bf16.msra.mxu0 %v6979
    %7398 = vmatprep.subr.bf16.mxu0 %v6984
    %7399 = vmatpush1.bf16.msra.mxu0 %v6983
    %7400 = vmatprep.subr.bf16.mxu0 %v6988
    %7401 = vmatpush1.bf16.msra.mxu0 %v6987
    %7402 = vmatprep.subr.bf16.mxu0 %v6992
    %7403 = vmatpush1.bf16.msra.mxu0 %v6991
    %7404 = vmatprep.subr.bf16.mxu0 %v6996
    %7405 = vmatpush1.bf16.msra.mxu0 %v6995
    %7406 = vmatprep.subr.bf16.mxu0 %v7000
    %7407 = vmatpush1.bf16.msra.mxu0 %v6999
    %7408 = vmatprep.subr.bf16.mxu0 %v7004
    %7409 = vmatpush1.bf16.msra.mxu0 %v7003
    %7410 = vmatprep.subr.bf16.mxu0 %v7008
    %7411 = vmatpush1.bf16.msra.mxu0 %v7007
    %7412 = vmatprep.subr.bf16.mxu0 %v7012
    %7413 = vmatpush1.bf16.msra.mxu0 %v7011
    %7414 = vmatprep.subr.bf16.mxu0 %v7016
    %7415 = vmatpush1.bf16.msra.mxu0 %v7015
    %7416 = vmatprep.subr.bf16.mxu0 %v7020
    %7417 = vmatpush1.bf16.msra.mxu0 %v7019
    %7418 = vmatprep.subr.bf16.mxu0 %v7024
    %7419 = vmatpush1.bf16.msra.mxu0 %v7023
    %7420 = vmatprep.subr.bf16.mxu0 %v7028
    %7421 = vmatpush1.bf16.msra.mxu0 %v7027
    %7422 = vmatprep.subr.bf16.mxu0 %v7032
    %7423 = vmatpush1.bf16.msra.mxu0 %v7031
    %7424 = vmatprep.subr.bf16.mxu0 %v7036
    %7425 = vmatpush1.bf16.msra.mxu0 %v7035
    %7426 = vmatprep.subr.bf16.mxu0 %v7040
    %7427 = vmatpush1.bf16.msra.mxu0 %v7039
    %7428 = vmatprep.mubr.bf16.mxu0 %v6908
    %7429 = vmatmul.mubr.bf16.gmra.mrb[0].mxu0 %v6907
    %v7430 = vpop.f32.mrb[0].mxu0
    %v7431 = vadd.f32 %v7390, %v7430
    %v7432 = vpop.f32.mrb[0].mxu0
    %v7433 = vadd.f32 %v7392, %v7432
    %v7434 = vpop.f32.mrb[0].mxu0
    %v7435 = vpop.f32.mrb[0].mxu0
    %7436 = vdwg.mxu0
    %7437 = vmatprep.subr.bf16.mxu0 %v7044
    %7438 = vmatpush1.bf16.msra.mxu0 %v7043
    %7439 = vmatprep.subr.bf16.mxu0 %v7048
    %7440 = vmatpush1.bf16.msra.mxu0 %v7047
    %7441 = vmatprep.subr.bf16.mxu0 %v7052
    %7442 = vmatpush1.bf16.msra.mxu0 %v7051
    %7443 = vmatprep.subr.bf16.mxu0 %v7056
    %7444 = vmatpush1.bf16.msra.mxu0 %v7055
    %7445 = vmatprep.subr.bf16.mxu0 %v7060
    %7446 = vmatpush1.bf16.msra.mxu0 %v7059
    %7447 = vmatprep.subr.bf16.mxu0 %v7064
    %7448 = vmatpush1.bf16.msra.mxu0 %v7063
    %7449 = vmatprep.subr.bf16.mxu0 %v7068
    %7450 = vmatpush1.bf16.msra.mxu0 %v7067
    %7451 = vmatprep.subr.bf16.mxu0 %v7072
    %7452 = vmatpush1.bf16.msra.mxu0 %v7071
    %7453 = vmatprep.subr.bf16.mxu0 %v7076
    %7454 = vmatpush1.bf16.msra.mxu0 %v7075
    %7455 = vmatprep.subr.bf16.mxu0 %v7080
    %7456 = vmatpush1.bf16.msra.mxu0 %v7079
    %7457 = vmatprep.subr.bf16.mxu0 %v7084
    %7458 = vmatpush1.bf16.msra.mxu0 %v7083
    %7459 = vmatprep.subr.bf16.mxu0 %v7088
    %7460 = vmatpush1.bf16.msra.mxu0 %v7087
    %7461 = vmatprep.subr.bf16.mxu0 %v7092
    %7462 = vmatpush1.bf16.msra.mxu0 %v7091
    %7463 = vmatprep.subr.bf16.mxu0 %v7096
    %7464 = vmatpush1.bf16.msra.mxu0 %v7095
    %7465 = vmatprep.subr.bf16.mxu0 %v7100
    %7466 = vmatpush1.bf16.msra.mxu0 %v7099
    %7467 = vmatprep.subr.bf16.mxu0 %v7104
    %7468 = vmatpush1.bf16.msra.mxu0 %v7103
    %7469 = vmatprep.mubr.bf16.mxu0 %v6910
    %7470 = vmatmul.mubr.bf16.gmra.mrb[0].mxu0 %v6909
    %v7471 = vpop.f32.mrb[0].mxu0
    %v7472 = vadd.f32 %v7431, %v7471
    %v7473 = vpop.f32.mrb[0].mxu0
    %v7474 = vadd.f32 %v7433, %v7473
    %v7475 = vpop.f32.mrb[0].mxu0
    %v7476 = vpop.f32.mrb[0].mxu0
    %7477 = vdwg.mxu0
    %7478 = vmatprep.subr.bf16.mxu0 %v7108
    %7479 = vmatpush1.bf16.msra.mxu0 %v7107
    %7480 = vmatprep.subr.bf16.mxu0 %v7112
    %7481 = vmatpush1.bf16.msra.mxu0 %v7111
    %7482 = vmatprep.subr.bf16.mxu0 %v7116
    %7483 = vmatpush1.bf16.msra.mxu0 %v7115
    %7484 = vmatprep.subr.bf16.mxu0 %v7120
    %7485 = vmatpush1.bf16.msra.mxu0 %v7119
    %7486 = vmatprep.subr.bf16.mxu0 %v7124
    %7487 = vmatpush1.bf16.msra.mxu0 %v7123
    %7488 = vmatprep.subr.bf16.mxu0 %v7128
    %7489 = vmatpush1.bf16.msra.mxu0 %v7127
    %7490 = vmatprep.subr.bf16.mxu0 %v7132
    %7491 = vmatpush1.bf16.msra.mxu0 %v7131
    %7492 = vmatprep.subr.bf16.mxu0 %v7136
    %7493 = vmatpush1.bf16.msra.mxu0 %v7135
    %7494 = vmatprep.subr.bf16.mxu0 %v7140
    %7495 = vmatpush1.bf16.msra.mxu0 %v7139
    %7496 = vmatprep.subr.bf16.mxu0 %v7144
    %7497 = vmatpush1.bf16.msra.mxu0 %v7143
    %7498 = vmatprep.subr.bf16.mxu0 %v7148
    %7499 = vmatpush1.bf16.msra.mxu0 %v7147
    %7500 = vmatprep.subr.bf16.mxu0 %v7152
    %7501 = vmatpush1.bf16.msra.mxu0 %v7151
    %7502 = vmatprep.subr.bf16.mxu0 %v7156
    %7503 = vmatpush1.bf16.msra.mxu0 %v7155
    %7504 = vmatprep.subr.bf16.mxu0 %v7160
    %7505 = vmatpush1.bf16.msra.mxu0 %v7159
    %7506 = vmatprep.subr.bf16.mxu0 %v7164
    %7507 = vmatpush1.bf16.msra.mxu0 %v7163
    %7508 = vmatprep.subr.bf16.mxu0 %v7168
    %7509 = vmatpush1.bf16.msra.mxu0 %v7167
    %7510 = vmatprep.mubr.bf16.mxu0 %v6912
    %7511 = vmatmul.mubr.bf16.gmra.mrb[0].mxu0 %v6911
    %v7512 = vpop.f32.mrb[0].mxu0
    %v7513 = vadd.f32 %v7472, %v7512
    %v7514 = vpop.f32.mrb[0].mxu0
    %v7515 = vadd.f32 %v7474, %v7514
    %v7516 = vpop.f32.mrb[0].mxu0
    %v7517 = vpop.f32.mrb[0].mxu0
    %7518 = vdwg.mxu0
    %7519 = vst [vmem:[#allocation5] sm:$0xff] %v7349
    %7520 = vst [vmem:[#allocation5 + $0x8] sm:$0xff] %v7351
    %7521 = vst [vmem:[#allocation5 + $0x10] sm:$0xff] %v7513
    %7522 = vst [vmem:[#allocation5 + $0x18] sm:$0xff] %v7515
    // Predicated region
    $region139: #{pose_encoder_forward.1} parent=1 // pred_check
      _
    $region140: #{pose_encoder_forward.1} parent=1 // pred_check_branch
      %7524 = sbr.rel (0) target = $region142
    $region141: #{pose_encoder_forward.1} parent=1 // pred_region
      %s7526 = ssub.s32 512, 512
      %7527 = vsyncadd [#allocation6], %s7526
      %s7529 = sshll.u32 [#allocation5], 4
      %s7530 = int_to_ptr.vmem [resolvable:$true] %s7529
      %7532 = dma.vmem_to_hbm [thread:$0]  %s7530, 512, %s15, [#allocation6]
    $region142: #{pose_encoder_forward.1} parent=1 // pred_fallthru
      _
    // Predicated region
    $region143: #{pose_encoder_forward.1} parent=1 // pred_check
      _
    $region144: #{pose_encoder_forward.1} parent=1 // pred_check_branch
      %7534 = sbr.rel (0) target = $region146
    $region145: #{pose_encoder_forward.1} parent=1 // pred_region
      %7535 = dma.done [#allocation6], 512
    $region146: #{pose_encoder_forward.1} parent=1 // pred_fallthru
      _
    %7536 = vsyncpa [#allocation6], 1
  %7537 = vsyncmov [#allocation4]
  %s7538 = vpop.sfrf %7537
  %p7539 = scmp.eq.s32.totalorder %s7538, 0
  %p7540 = pneg %p7539
  %7542 = shalt.err (%p7540)
  %s7543 = scalar_lea.sflag [#allocation4], 1
  %7544 = vsyncmov %s7543
  %s7545 = vpop.sfrf %7544
  %p7546 = scmp.eq.s32.totalorder %s7545, 0
  %p7547 = pneg %p7546
  %7549 = shalt.err (%p7547)

</llo_original>
